<compile_context>
chip_gen: v7x
topology: tpu7x:2x2x1
jax: 0.10.0
libtpu: 0.0.40
codegen_flags: <defaults>
</compile_context>

<pallas_src>
import functools
import math

import jax
import jax.numpy as jnp
from jax import lax
from jax.experimental import pallas as pl
from jax.experimental.pallas import tpu as pltpu


# -----------------------------------------------------------------------------
# In-kernel math helpers (operate on jnp values inside the Pallas kernels)
# -----------------------------------------------------------------------------
def _mm(a, b):
    """MXU matmul: bf16 operands, f32 accumulation."""
    return jnp.dot(a.astype(jnp.bfloat16), b.astype(jnp.bfloat16),
                   preferred_element_type=jnp.float32)


def _qkt(q, k):
    """q @ k^T via dot_general contracting the last dims (no explicit transpose)."""
    return lax.dot_general(q.astype(jnp.bfloat16), k.astype(jnp.bfloat16),
                           dimension_numbers=(((1,), (1,)), ((), ())),
                           preferred_element_type=jnp.float32)


def _ln(x, g, b, eps=1e-5):
    """LayerNorm over the last dim (biased variance, like torch)."""
    mean = jnp.mean(x, axis=-1, keepdims=True)
    xc = x - mean
    var = jnp.mean(xc * xc, axis=-1, keepdims=True)
    return xc * lax.rsqrt(var + eps) * g + b


_SQRT_2_OVER_PI = 0.7978845608028654


def _gelu(x):
    # tanh approximation of GELU (runs on the EUP slot).
    return 0.5 * x * (1.0 + jnp.tanh(_SQRT_2_OVER_PI * (x + 0.044715 * (x * x * x))))


def _attention(xn, l, num_heads, qkvw_ref, qkvb_ref, pjw_ref, pjb_ref):
    """Multi-head self-attention for one batch element.

    xn: [N, D] (already layer-normed). Weights are pre-split per head:
      qkvw_ref: [L, 3, H, D, Dh] (bf16)   qkvb_ref: [L, 3, H, 1, Dh]
      pjw_ref:  [L, H, Dh, D]    (bf16)   pjb_ref:  [L, 1, D]
    """
    d_head = qkvw_ref.shape[-1]
    scale = 1.0 / math.sqrt(d_head)
    out = None
    for h in range(num_heads):
        q = _mm(xn, qkvw_ref[l, 0, h]) + qkvb_ref[l, 0, h]      # [N, Dh]
        k = _mm(xn, qkvw_ref[l, 1, h]) + qkvb_ref[l, 1, h]      # [N, Dh]
        v = _mm(xn, qkvw_ref[l, 2, h]) + qkvb_ref[l, 2, h]      # [N, Dh]
        s = _qkt(q, k) * scale                                  # [N, N] f32
        s = s - jnp.max(s, axis=-1, keepdims=True)
        p = jnp.exp(s)
        p = p * pl.reciprocal(jnp.sum(p, axis=-1, keepdims=True), approx=True)
        oh = _mm(p, v)                                          # [N, Dh]
        contrib = _mm(oh, pjw_ref[l, h])                        # [N, D]
        out = contrib if out is None else out + contrib
    return out + pjb_ref[l]


def _transformer_block(x, l, num_heads,
                       n1g, n1b, qkvw, qkvb, pjw, pjb,
                       n2g, n2b, f1w, f1b, f2w, f2b):
    """timm-style pre-norm Block: x + attn(LN(x)); x + mlp(LN(x))."""
    h = _ln(x, n1g[l], n1b[l])
    h = _attention(h, l, num_heads, qkvw, qkvb, pjw, pjb)
    x = x + h
    h = _ln(x, n2g[l], n2b[l])
    h = _gelu(_mm(h, f1w[l]) + f1b[l])
    h = _mm(h, f2w[l]) + f2b[l]
    return x + h


# -----------------------------------------------------------------------------
# Fused kernels
# -----------------------------------------------------------------------------
def _encoder_kernel(
        tokens_ref, pos_ref,
        pe_w_ref, pe_b_ref, pe_g_ref, pe_bt_ref,
        me_w1_ref, me_b1_ref, me_w2_ref, me_b2_ref,
        n1g_ref, n1b_ref, qkvw_ref, qkvb_ref, pjw_ref, pjb_ref,
        n2g_ref, n2b_ref, f1w_ref, f1b_ref, f2w_ref, f2b_ref,
        nf_g_ref, nf_b_ref, de_w_ref, de_b_ref,
        info_ref, *, num_heads):
    """One batch element per grid step: patch_embed -> mlp_embed -> +pos ->
    encoder blocks -> norm -> decoder_embed."""
    tok = tokens_ref[0]                                          # [T, F]
    # PatchEmbed3D: Conv3d(kernel=stride=cube) == per-cube matmul, then LayerNorm.
    x = _mm(tok, pe_w_ref[...]) + pe_b_ref[...]                  # [T, E]
    x = _ln(x, pe_g_ref[...], pe_bt_ref[...])
    # mlp_embed (given_vector is None -> input is just x)
    h = _gelu(_mm(x, me_w1_ref[...]) + me_b1_ref[...])
    x = _mm(h, me_w2_ref[...]) + me_b2_ref[...]
    x = x + pos_ref[0]
    depth = n1g_ref.shape[0]
    for l in range(depth):                                       # static unroll
        x = _transformer_block(x, l, num_heads,
                               n1g_ref, n1b_ref, qkvw_ref, qkvb_ref,
                               pjw_ref, pjb_ref, n2g_ref, n2b_ref,
                               f1w_ref, f1b_ref, f2w_ref, f2b_ref)
    x = _ln(x, nf_g_ref[...], nf_b_ref[...])
    info = _mm(x, de_w_ref[...]) + de_b_ref[...]                 # [T, Dd]
    info_ref[0] = info.astype(info_ref.dtype)


def _decoder_kernel(
        pack_ref,
        n1g_ref, n1b_ref, qkvw_ref, qkvb_ref, pjw_ref, pjb_ref,
        n2g_ref, n2b_ref, f1w_ref, f1b_ref, f2w_ref, f2b_ref,
        pr_w_ref, pr_b_ref,
        pred_ref, *, num_heads):
    """One batch element per grid step: decoder blocks -> decoder_pred."""
    x = pack_ref[0]                                              # [T+Q, Dd]
    depth = n1g_ref.shape[0]
    for l in range(depth):                                       # static unroll
        x = _transformer_block(x, l, num_heads,
                               n1g_ref, n1b_ref, qkvw_ref, qkvb_ref,
                               pjw_ref, pjb_ref, n2g_ref, n2b_ref,
                               f1w_ref, f1b_ref, f2w_ref, f2b_ref)
    pred = _mm(x, pr_w_ref[...]) + pr_b_ref[...]                 # [T+Q, F]
    pred_ref[0] = pred.astype(pred_ref.dtype)


# -----------------------------------------------------------------------------
# pallas_call wrappers
# -----------------------------------------------------------------------------
def _batched_spec(shape):
    """Block = one batch element, full extent on the remaining dims."""
    nd = len(shape)

    def imap(b):
        return (b,) + (0,) * (nd - 1)

    return pl.BlockSpec((1,) + tuple(shape[1:]), imap)


def _full_spec(shape):
    """Whole-array block (weights); constant index_map keeps it VMEM-resident."""
    nd = len(shape)

    def imap(b):
        return (0,) * nd

    return pl.BlockSpec(tuple(shape), imap)


_BLOCK_KEYS = ("n1g", "n1b", "qkv_w", "qkv_b", "proj_w", "proj_b",
               "n2g", "n2b", "fc1_w", "fc1_b", "fc2_w", "fc2_b")


def _block_stack_args(stack):
    return [stack[k] for k in _BLOCK_KEYS]


def run_encoder(tokens, pos_embed, params, num_heads):
    B, T, _ = tokens.shape
    Dd = params["de_w"].shape[1]
    weights = [
        params["pe_w"], params["pe_b"], params["pe_g"], params["pe_bt"],
        params["me_w1"], params["me_b1"], params["me_w2"], params["me_b2"],
        *_block_stack_args(params["enc"]),
        params["nf_g"], params["nf_b"], params["de_w"], params["de_b"],
    ]
    in_specs = [_batched_spec(tokens.shape), _batched_spec(pos_embed.shape)]
    in_specs += [_full_spec(w.shape) for w in weights]
    return pl.pallas_call(
        functools.partial(_encoder_kernel, num_heads=num_heads),
        out_shape=jax.ShapeDtypeStruct((B, T, Dd), jnp.float32),
        grid=(B,),
        in_specs=in_specs,
        out_specs=_batched_spec((B, T, Dd)),
        compiler_params=pltpu.CompilerParams(dimension_semantics=("parallel",)),
    )(tokens, pos_embed, *weights)


def run_decoder(pack, params, num_heads):
    B, N, _ = pack.shape
    F = params["pr_w"].shape[1]
    weights = [*_block_stack_args(params["dec"]), params["pr_w"], params["pr_b"]]
    in_specs = [_batched_spec(pack.shape)] + [_full_spec(w.shape) for w in weights]
    return pl.pallas_call(
        functools.partial(_decoder_kernel, num_heads=num_heads),
        out_shape=jax.ShapeDtypeStruct((B, N, F), jnp.float32),
        grid=(B,),
        in_specs=in_specs,
        out_specs=_batched_spec((B, N, F)),
        compiler_params=pltpu.CompilerParams(dimension_semantics=("parallel",)),
    )(pack, *weights)


# -----------------------------------------------------------------------------
# Forward pass (plain-JAX glue around the two fused kernels)
# -----------------------------------------------------------------------------
def flatten_batch(batch_tensor, cube_size, in_chan):
    """[B, C, X, Y, cz*T] -> [B, T, C*X*Y*cz] (cube flattened in (C, X, Y, Z) order,
    matching Conv3d weight layout). Patching is along the Z*T axis only, as in the
    module docstring (X == cube_x, Y == cube_y)."""
    B, C, X, Y, ZT = batch_tensor.shape
    cx, cy, cz = cube_size
    assert X == cx and Y == cy and C == in_chan and ZT % cz == 0
    T = ZT // cz
    x = batch_tensor.reshape(B, C, X, Y, T, cz)
    x = x.transpose(0, 4, 1, 2, 3, 5)                            # [B, T, C, X, Y, cz]
    return x.reshape(B, T, C * X * Y * cz)


def mae_forward(params, batch_tensor, pos_embed_tensor, given_vector,
                query_vector, cfg, training=True):
    if given_vector is not None:
        # TODO(synk): given_vector concat path (given_dim > 0) not implemented.
        raise NotImplementedError("given_vector path not implemented (given_dim=0)")
    tokens = flatten_batch(batch_tensor, cfg["cube_size"], cfg["in_chan"])
    # forward_encoder + forward_mid (fused kernel 1)
    info = run_encoder(tokens, pos_embed_tensor, params, cfg["num_heads"])
    # forward_decoder (fused kernel 2); token concat is cheap XLA glue
    pack = jnp.concatenate([info, query_vector], axis=1)
    pred = run_decoder(pack, params, cfg["decoder_num_heads"])
    if not training:
        pred = pred[:, info.shape[1]:, :]
    return pred


# -----------------------------------------------------------------------------
# Deterministic synthetic parameters (shapes follow the PyTorch module)
# -----------------------------------------------------------------------------
def _rnd(key, shape, scale=0.02):
    return jax.random.normal(key, shape, jnp.float32) * scale


def _make_block_stack(key, L, D, num_heads, mlp_ratio):
    """Stack L timm Blocks; attention weights pre-split per head for the kernel."""
    Dm = int(D * mlp_ratio)
    Dh = D // num_heads
    ks = iter(jax.random.split(key, 8))
    zeros = lambda *s: jnp.zeros(s, jnp.float32)
    ones = lambda *s: jnp.ones(s, jnp.float32)
    qkv_w = _rnd(next(ks), (L, D, 3 * D))        # fused torch layout [in, 3*out]
    proj_w = _rnd(next(ks), (L, D, D))
    fc1_w = _rnd(next(ks), (L, D, Dm))
    fc2_w = _rnd(next(ks), (L, Dm, D))
    return {
        "n1g": ones(L, 1, D), "n1b": zeros(L, 1, D),
        "n2g": ones(L, 1, D), "n2b": zeros(L, 1, D),
        # fused qkv column = which*D + h*Dh + d  ->  [L, 3, H, D, Dh]
        "qkv_w": qkv_w.reshape(L, D, 3, num_heads, Dh)
                      .transpose(0, 2, 3, 1, 4).astype(jnp.bfloat16),
        "qkv_b": jnp.zeros((L, 3, num_heads, 1, Dh), jnp.float32),
        # proj input row = h*Dh + d  ->  [L, H, Dh, D]
        "proj_w": proj_w.reshape(L, num_heads, Dh, D).astype(jnp.bfloat16),
        "proj_b": zeros(L, 1, D),
        "fc1_w": fc1_w.astype(jnp.bfloat16), "fc1_b": zeros(L, 1, Dm),
        "fc2_w": fc2_w.astype(jnp.bfloat16), "fc2_b": zeros(L, 1, D),
    }


def init_params(key, cfg):
    E = cfg["embed_dim"]
    Dd = cfg["decoder_embed_dim"]
    mr = cfg["mlp_ratio"]
    gd = cfg["given_dim"]
    cx, cy, cz = cfg["cube_size"]
    C = cfg["in_chan"]
    F = cx * cy * cz * C
    Eh = int(E * mr)
    ks = iter(jax.random.split(key, 16))
    zeros = lambda *s: jnp.zeros(s, jnp.float32)
    ones = lambda *s: jnp.ones(s, jnp.float32)
    return {
        # PatchEmbed3D: Conv3d(kernel=stride=cube_size) flattened to [F, E] + LN
        "pe_w": _rnd(next(ks), (F, E)).astype(jnp.bfloat16), "pe_b": zeros(1, E),
        "pe_g": ones(1, E), "pe_bt": zeros(1, E),
        # mlp_embed: Mlp(E + given_dim -> int(E*mlp_ratio) -> E)
        "me_w1": _rnd(next(ks), (E + gd, Eh)).astype(jnp.bfloat16), "me_b1": zeros(1, Eh),
        "me_w2": _rnd(next(ks), (Eh, E)).astype(jnp.bfloat16), "me_b2": zeros(1, E),
        "enc": _make_block_stack(next(ks), cfg["depth"], E, cfg["num_heads"], mr),
        "nf_g": ones(1, E), "nf_b": zeros(1, E),
        "de_w": _rnd(next(ks), (E, Dd)).astype(jnp.bfloat16), "de_b": zeros(1, Dd),
        "dec": _make_block_stack(next(ks), cfg["decoder_depth"], Dd,
                                 cfg["decoder_num_heads"], mr),
        # decoder_norm exists in the module but is unused in forward_decoder
        "pr_w": _rnd(next(ks), (Dd, F)).astype(jnp.bfloat16), "pr_b": zeros(1, F),
    }


# -----------------------------------------------------------------------------
if __name__ == "__main__":
    cfg = dict(
        cube_size=(2, 2, 2),
        in_chan=1,
        embed_dim=48,             # 48 % (6 * num_heads) == 0
        given_dim=0,
        depth=2,
        num_heads=2,
        decoder_embed_dim=48,
        decoder_depth=2,
        decoder_num_heads=2,
        mlp_ratio=4.0,
    )
    assert cfg["embed_dim"] % int(6 * cfg["num_heads"]) == 0
    assert cfg["decoder_embed_dim"] % cfg["decoder_num_heads"] == 0
    num_output_voxel = (cfg["cube_size"][0] * cfg["cube_size"][1]
                        * cfg["cube_size"][2] * cfg["in_chan"])

    key = jax.random.PRNGKey(0)
    kp, k1, k2, k3 = jax.random.split(key, 4)
    params = init_params(kp, cfg)

    B, T, Q = 2, 4, 3
    batch_tensor = jax.random.normal(
        k1, (B, cfg["in_chan"], cfg["cube_size"][0], cfg["cube_size"][1],
             cfg["cube_size"][2] * T), jnp.float32)
    pos_embed_tensor = jax.random.normal(k2, (B, T, cfg["embed_dim"]), jnp.float32) * 0.02
    query_vector = jax.random.normal(k3, (B, Q, cfg["decoder_embed_dim"]), jnp.float32) * 0.02
    given_vector = None

    fwd = jax.jit(lambda p, bt, pe, qv: mae_forward(p, bt, pe, None, qv, cfg, training=True))
    out = fwd(params, batch_tensor, pos_embed_tensor, query_vector)
    out = jax.block_until_ready(out)

    assert out.shape == (B, T + Q, num_output_voxel), out.shape
    assert bool(jnp.all(jnp.isfinite(out)))
    print("KERNEL_OK")
</pallas_src>

<mosaic_0001>
module attributes {stable_mosaic.version = 11 : i64} {
  func.func @_decoder_kernel(%arg0: i32, %arg1: memref<1x7x48xf32, #tpu.memory_space<vmem>>, %arg2: memref<2x1x48xf32, #tpu.memory_space<vmem>>, %arg3: memref<2x1x48xf32, #tpu.memory_space<vmem>>, %arg4: memref<2x3x2x48x24xbf16, #tpu.memory_space<vmem>>, %arg5: memref<2x3x2x1x24xf32, #tpu.memory_space<vmem>>, %arg6: memref<2x2x24x48xbf16, #tpu.memory_space<vmem>>, %arg7: memref<2x1x48xf32, #tpu.memory_space<vmem>>, %arg8: memref<2x1x48xf32, #tpu.memory_space<vmem>>, %arg9: memref<2x1x48xf32, #tpu.memory_space<vmem>>, %arg10: memref<2x48x192xbf16, #tpu.memory_space<vmem>>, %arg11: memref<2x1x192xf32, #tpu.memory_space<vmem>>, %arg12: memref<2x192x48xbf16, #tpu.memory_space<vmem>>, %arg13: memref<2x1x48xf32, #tpu.memory_space<vmem>>, %arg14: memref<48x8xbf16, #tpu.memory_space<vmem>>, %arg15: memref<1x8xf32, #tpu.memory_space<vmem>>, %arg16: memref<1x7x8xf32, #tpu.memory_space<vmem>>) attributes {dimension_semantics = [#tpu.dimension_semantics<parallel>], iteration_bounds = array<i64: 2>, scalar_prefetch = 0 : i64, scratch_operands = 0 : i64, tpu.core_type = #tpu.core_type<tc>, window_params = [{transform_indices = @transform_0, window_bounds = array<i64: 1, 7, 48>}, {pipeline_mode = #tpu.pipeline_mode<synchronous>, transform_indices = @transform_1, window_bounds = array<i64: 2, 1, 48>}, {pipeline_mode = #tpu.pipeline_mode<synchronous>, transform_indices = @transform_2, window_bounds = array<i64: 2, 1, 48>}, {pipeline_mode = #tpu.pipeline_mode<synchronous>, transform_indices = @transform_3, window_bounds = array<i64: 2, 3, 2, 48, 24>}, {pipeline_mode = #tpu.pipeline_mode<synchronous>, transform_indices = @transform_4, window_bounds = array<i64: 2, 3, 2, 1, 24>}, {pipeline_mode = #tpu.pipeline_mode<synchronous>, transform_indices = @transform_5, window_bounds = array<i64: 2, 2, 24, 48>}, {pipeline_mode = #tpu.pipeline_mode<synchronous>, transform_indices = @transform_6, window_bounds = array<i64: 2, 1, 48>}, {pipeline_mode = #tpu.pipeline_mode<synchronous>, transform_indices = @transform_7, window_bounds = array<i64: 2, 1, 48>}, {pipeline_mode = #tpu.pipeline_mode<synchronous>, transform_indices = @transform_8, window_bounds = array<i64: 2, 1, 48>}, {pipeline_mode = #tpu.pipeline_mode<synchronous>, transform_indices = @transform_9, window_bounds = array<i64: 2, 48, 192>}, {pipeline_mode = #tpu.pipeline_mode<synchronous>, transform_indices = @transform_10, window_bounds = array<i64: 2, 1, 192>}, {pipeline_mode = #tpu.pipeline_mode<synchronous>, transform_indices = @transform_11, window_bounds = array<i64: 2, 192, 48>}, {pipeline_mode = #tpu.pipeline_mode<synchronous>, transform_indices = @transform_12, window_bounds = array<i64: 2, 1, 48>}, {pipeline_mode = #tpu.pipeline_mode<synchronous>, transform_indices = @transform_13, window_bounds = array<i64: 48, 8>}, {pipeline_mode = #tpu.pipeline_mode<synchronous>, transform_indices = @transform_14, window_bounds = array<i64: 1, 8>}, {transform_indices = @transform_15, window_bounds = array<i64: 1, 7, 8>}]} {
    %c0 = arith.constant 0 : index
    %c0_0 = arith.constant 0 : index
    %c0_1 = arith.constant 0 : index
    %0 = vector.load %arg1[%c0, %c0_0, %c0_1] : memref<1x7x48xf32, #tpu.memory_space<vmem>>, vector<1x7x48xf32>
    %1 = vector.shape_cast %0 : vector<1x7x48xf32> to vector<7x48xf32>
    %c0_2 = arith.constant 0 : index
    %c0_3 = arith.constant 0 : index
    %c0_4 = arith.constant 0 : index
    %2 = vector.load %arg2[%c0_2, %c0_3, %c0_4] : memref<2x1x48xf32, #tpu.memory_space<vmem>>, vector<1x1x48xf32>
    %3 = vector.shape_cast %2 : vector<1x1x48xf32> to vector<1x48xf32>
    %c0_5 = arith.constant 0 : index
    %c0_6 = arith.constant 0 : index
    %c0_7 = arith.constant 0 : index
    %4 = vector.load %arg3[%c0_5, %c0_6, %c0_7] : memref<2x1x48xf32, #tpu.memory_space<vmem>>, vector<1x1x48xf32>
    %5 = vector.shape_cast %4 : vector<1x1x48xf32> to vector<1x48xf32>
    %cst = arith.constant dense<0.000000e+00> : vector<7xf32>
    %6 = vector.multi_reduction <add>, %1, %cst [1] : vector<7x48xf32> to vector<7xf32>
    %7 = vector.shape_cast %6 : vector<7xf32> to vector<7x1xf32>
    %cst_8 = arith.constant 4.800000e+01 : f32
    %8 = vector.broadcast %cst_8 : f32 to vector<7x1xf32>
    %9 = arith.divf %7, %8 : vector<7x1xf32>
    %10 = vector.broadcast %9 : vector<7x1xf32> to vector<7x48xf32>
    %11 = arith.subf %1, %10 : vector<7x48xf32>
    %12 = arith.mulf %11, %11 : vector<7x48xf32>
    %cst_9 = arith.constant dense<0.000000e+00> : vector<7xf32>
    %13 = vector.multi_reduction <add>, %12, %cst_9 [1] : vector<7x48xf32> to vector<7xf32>
    %14 = vector.shape_cast %13 : vector<7xf32> to vector<7x1xf32>
    %cst_10 = arith.constant 4.800000e+01 : f32
    %15 = vector.broadcast %cst_10 : f32 to vector<7x1xf32>
    %16 = arith.divf %14, %15 : vector<7x1xf32>
    %cst_11 = arith.constant 9.99999974E-6 : f32
    %17 = vector.broadcast %cst_11 : f32 to vector<7x1xf32>
    %18 = arith.addf %16, %17 : vector<7x1xf32>
    %19 = math.rsqrt %18 : vector<7x1xf32>
    %20 = vector.broadcast %19 : vector<7x1xf32> to vector<7x48xf32>
    %21 = arith.mulf %11, %20 : vector<7x48xf32>
    %22 = vector.broadcast %3 : vector<1x48xf32> to vector<7x48xf32>
    %23 = arith.mulf %21, %22 : vector<7x48xf32>
    %24 = vector.broadcast %5 : vector<1x48xf32> to vector<7x48xf32>
    %25 = arith.addf %23, %24 : vector<7x48xf32>
    %c0_12 = arith.constant 0 : index
    %c0_13 = arith.constant 0 : index
    %c0_14 = arith.constant 0 : index
    %c0_15 = arith.constant 0 : index
    %c0_16 = arith.constant 0 : index
    %26 = vector.load %arg4[%c0_12, %c0_13, %c0_14, %c0_15, %c0_16] : memref<2x3x2x48x24xbf16, #tpu.memory_space<vmem>>, vector<1x1x1x48x24xbf16>
    %27 = vector.shape_cast %26 : vector<1x1x1x48x24xbf16> to vector<48x24xbf16>
    %28 = arith.truncf %25 : vector<7x48xf32> to vector<7x48xbf16>
    %cst_17 = arith.constant dense<0.000000e+00> : vector<7x24xf32>
    %29 = tpu.matmul %28, %27, %cst_17 {dimension_numbers = #tpu.dot_dimension_numbers<[1], [0], [0], [1], [0, 0, 1, 1], [], []>} : vector<7x48xbf16>, vector<48x24xbf16>, vector<7x24xf32> -> vector<7x24xf32>
    %c0_18 = arith.constant 0 : index
    %c0_19 = arith.constant 0 : index
    %c0_20 = arith.constant 0 : index
    %c0_21 = arith.constant 0 : index
    %c0_22 = arith.constant 0 : index
    %30 = vector.load %arg5[%c0_18, %c0_19, %c0_20, %c0_21, %c0_22] : memref<2x3x2x1x24xf32, #tpu.memory_space<vmem>>, vector<1x1x1x1x24xf32>
    %31 = vector.shape_cast %30 : vector<1x1x1x1x24xf32> to vector<1x24xf32>
    %32 = vector.broadcast %31 : vector<1x24xf32> to vector<7x24xf32>
    %33 = arith.addf %29, %32 : vector<7x24xf32>
    %c0_23 = arith.constant 0 : index
    %c1 = arith.constant 1 : index
    %c0_24 = arith.constant 0 : index
    %c0_25 = arith.constant 0 : index
    %c0_26 = arith.constant 0 : index
    %34 = vector.load %arg4[%c0_23, %c1, %c0_24, %c0_25, %c0_26] : memref<2x3x2x48x24xbf16, #tpu.memory_space<vmem>>, vector<1x1x1x48x24xbf16>
    %35 = vector.shape_cast %34 : vector<1x1x1x48x24xbf16> to vector<48x24xbf16>
    %36 = arith.truncf %25 : vector<7x48xf32> to vector<7x48xbf16>
    %cst_27 = arith.constant dense<0.000000e+00> : vector<7x24xf32>
    %37 = tpu.matmul %36, %35, %cst_27 {dimension_numbers = #tpu.dot_dimension_numbers<[1], [0], [0], [1], [0, 0, 1, 1], [], []>} : vector<7x48xbf16>, vector<48x24xbf16>, vector<7x24xf32> -> vector<7x24xf32>
    %c0_28 = arith.constant 0 : index
    %c1_29 = arith.constant 1 : index
    %c0_30 = arith.constant 0 : index
    %c0_31 = arith.constant 0 : index
    %c0_32 = arith.constant 0 : index
    %38 = vector.load %arg5[%c0_28, %c1_29, %c0_30, %c0_31, %c0_32] : memref<2x3x2x1x24xf32, #tpu.memory_space<vmem>>, vector<1x1x1x1x24xf32>
    %39 = vector.shape_cast %38 : vector<1x1x1x1x24xf32> to vector<1x24xf32>
    %40 = vector.broadcast %39 : vector<1x24xf32> to vector<7x24xf32>
    %41 = arith.addf %37, %40 : vector<7x24xf32>
    %c0_33 = arith.constant 0 : index
    %c2 = arith.constant 2 : index
    %c0_34 = arith.constant 0 : index
    %c0_35 = arith.constant 0 : index
    %c0_36 = arith.constant 0 : index
    %42 = vector.load %arg4[%c0_33, %c2, %c0_34, %c0_35, %c0_36] : memref<2x3x2x48x24xbf16, #tpu.memory_space<vmem>>, vector<1x1x1x48x24xbf16>
    %43 = vector.shape_cast %42 : vector<1x1x1x48x24xbf16> to vector<48x24xbf16>
    %44 = arith.truncf %25 : vector<7x48xf32> to vector<7x48xbf16>
    %cst_37 = arith.constant dense<0.000000e+00> : vector<7x24xf32>
    %45 = tpu.matmul %44, %43, %cst_37 {dimension_numbers = #tpu.dot_dimension_numbers<[1], [0], [0], [1], [0, 0, 1, 1], [], []>} : vector<7x48xbf16>, vector<48x24xbf16>, vector<7x24xf32> -> vector<7x24xf32>
    %c0_38 = arith.constant 0 : index
    %c2_39 = arith.constant 2 : index
    %c0_40 = arith.constant 0 : index
    %c0_41 = arith.constant 0 : index
    %c0_42 = arith.constant 0 : index
    %46 = vector.load %arg5[%c0_38, %c2_39, %c0_40, %c0_41, %c0_42] : memref<2x3x2x1x24xf32, #tpu.memory_space<vmem>>, vector<1x1x1x1x24xf32>
    %47 = vector.shape_cast %46 : vector<1x1x1x1x24xf32> to vector<1x24xf32>
    %48 = vector.broadcast %47 : vector<1x24xf32> to vector<7x24xf32>
    %49 = arith.addf %45, %48 : vector<7x24xf32>
    %50 = arith.truncf %33 : vector<7x24xf32> to vector<7x24xbf16>
    %51 = arith.truncf %41 : vector<7x24xf32> to vector<7x24xbf16>
    %cst_43 = arith.constant dense<0.000000e+00> : vector<7x7xf32>
    %52 = tpu.matmul %50, %51, %cst_43 {dimension_numbers = #tpu.dot_dimension_numbers<[1], [1], [0], [0], [0, 0, 1, 0], [], []>} : vector<7x24xbf16>, vector<7x24xbf16>, vector<7x7xf32> -> vector<7x7xf32>
    %cst_44 = arith.constant 0.204124153 : f32
    %53 = vector.broadcast %cst_44 : f32 to vector<7x7xf32>
    %54 = arith.mulf %52, %53 : vector<7x7xf32>
    %cst_45 = arith.constant dense<0xFF800000> : vector<7xf32>
    %55 = vector.multi_reduction <maximumf>, %54, %cst_45 [1] : vector<7x7xf32> to vector<7xf32>
    %56 = vector.shape_cast %55 : vector<7xf32> to vector<7x1xf32>
    %57 = vector.broadcast %56 : vector<7x1xf32> to vector<7x7xf32>
    %58 = arith.subf %54, %57 : vector<7x7xf32>
    %59 = math.exp %58 : vector<7x7xf32>
    %cst_46 = arith.constant dense<0.000000e+00> : vector<7xf32>
    %60 = vector.multi_reduction <add>, %59, %cst_46 [1] : vector<7x7xf32> to vector<7xf32>
    %61 = vector.shape_cast %60 : vector<7xf32> to vector<7x1xf32>
    %62 = tpu.reciprocal %61 {approx = true} : vector<7x1xf32> -> vector<7x1xf32>
    %63 = vector.broadcast %62 : vector<7x1xf32> to vector<7x7xf32>
    %64 = arith.mulf %59, %63 : vector<7x7xf32>
    %65 = arith.truncf %64 : vector<7x7xf32> to vector<7x7xbf16>
    %66 = arith.truncf %49 : vector<7x24xf32> to vector<7x24xbf16>
    %cst_47 = arith.constant dense<0.000000e+00> : vector<7x24xf32>
    %67 = tpu.matmul %65, %66, %cst_47 {dimension_numbers = #tpu.dot_dimension_numbers<[1], [0], [0], [1], [0, 0, 1, 1], [], []>} : vector<7x7xbf16>, vector<7x24xbf16>, vector<7x24xf32> -> vector<7x24xf32>
    %c0_48 = arith.constant 0 : index
    %c0_49 = arith.constant 0 : index
    %c0_50 = arith.constant 0 : index
    %c0_51 = arith.constant 0 : index
    %68 = vector.load %arg6[%c0_48, %c0_49, %c0_50, %c0_51] : memref<2x2x24x48xbf16, #tpu.memory_space<vmem>>, vector<1x1x24x48xbf16>
    %69 = vector.shape_cast %68 : vector<1x1x24x48xbf16> to vector<24x48xbf16>
    %70 = arith.truncf %67 : vector<7x24xf32> to vector<7x24xbf16>
    %cst_52 = arith.constant dense<0.000000e+00> : vector<7x48xf32>
    %71 = tpu.matmul %70, %69, %cst_52 {dimension_numbers = #tpu.dot_dimension_numbers<[1], [0], [0], [1], [0, 0, 1, 1], [], []>} : vector<7x24xbf16>, vector<24x48xbf16>, vector<7x48xf32> -> vector<7x48xf32>
    %c0_53 = arith.constant 0 : index
    %c0_54 = arith.constant 0 : index
    %c1_55 = arith.constant 1 : index
    %c0_56 = arith.constant 0 : index
    %c0_57 = arith.constant 0 : index
    %72 = vector.load %arg4[%c0_53, %c0_54, %c1_55, %c0_56, %c0_57] : memref<2x3x2x48x24xbf16, #tpu.memory_space<vmem>>, vector<1x1x1x48x24xbf16>
    %73 = vector.shape_cast %72 : vector<1x1x1x48x24xbf16> to vector<48x24xbf16>
    %74 = arith.truncf %25 : vector<7x48xf32> to vector<7x48xbf16>
    %cst_58 = arith.constant dense<0.000000e+00> : vector<7x24xf32>
    %75 = tpu.matmul %74, %73, %cst_58 {dimension_numbers = #tpu.dot_dimension_numbers<[1], [0], [0], [1], [0, 0, 1, 1], [], []>} : vector<7x48xbf16>, vector<48x24xbf16>, vector<7x24xf32> -> vector<7x24xf32>
    %c0_59 = arith.constant 0 : index
    %c0_60 = arith.constant 0 : index
    %c1_61 = arith.constant 1 : index
    %c0_62 = arith.constant 0 : index
    %c0_63 = arith.constant 0 : index
    %76 = vector.load %arg5[%c0_59, %c0_60, %c1_61, %c0_62, %c0_63] : memref<2x3x2x1x24xf32, #tpu.memory_space<vmem>>, vector<1x1x1x1x24xf32>
    %77 = vector.shape_cast %76 : vector<1x1x1x1x24xf32> to vector<1x24xf32>
    %78 = vector.broadcast %77 : vector<1x24xf32> to vector<7x24xf32>
    %79 = arith.addf %75, %78 : vector<7x24xf32>
    %c0_64 = arith.constant 0 : index
    %c1_65 = arith.constant 1 : index
    %c1_66 = arith.constant 1 : index
    %c0_67 = arith.constant 0 : index
    %c0_68 = arith.constant 0 : index
    %80 = vector.load %arg4[%c0_64, %c1_65, %c1_66, %c0_67, %c0_68] : memref<2x3x2x48x24xbf16, #tpu.memory_space<vmem>>, vector<1x1x1x48x24xbf16>
    %81 = vector.shape_cast %80 : vector<1x1x1x48x24xbf16> to vector<48x24xbf16>
    %82 = arith.truncf %25 : vector<7x48xf32> to vector<7x48xbf16>
    %cst_69 = arith.constant dense<0.000000e+00> : vector<7x24xf32>
    %83 = tpu.matmul %82, %81, %cst_69 {dimension_numbers = #tpu.dot_dimension_numbers<[1], [0], [0], [1], [0, 0, 1, 1], [], []>} : vector<7x48xbf16>, vector<48x24xbf16>, vector<7x24xf32> -> vector<7x24xf32>
    %c0_70 = arith.constant 0 : index
    %c1_71 = arith.constant 1 : index
    %c1_72 = arith.constant 1 : index
    %c0_73 = arith.constant 0 : index
    %c0_74 = arith.constant 0 : index
    %84 = vector.load %arg5[%c0_70, %c1_71, %c1_72, %c0_73, %c0_74] : memref<2x3x2x1x24xf32, #tpu.memory_space<vmem>>, vector<1x1x1x1x24xf32>
    %85 = vector.shape_cast %84 : vector<1x1x1x1x24xf32> to vector<1x24xf32>
    %86 = vector.broadcast %85 : vector<1x24xf32> to vector<7x24xf32>
    %87 = arith.addf %83, %86 : vector<7x24xf32>
    %c0_75 = arith.constant 0 : index
    %c2_76 = arith.constant 2 : index
    %c1_77 = arith.constant 1 : index
    %c0_78 = arith.constant 0 : index
    %c0_79 = arith.constant 0 : index
    %88 = vector.load %arg4[%c0_75, %c2_76, %c1_77, %c0_78, %c0_79] : memref<2x3x2x48x24xbf16, #tpu.memory_space<vmem>>, vector<1x1x1x48x24xbf16>
    %89 = vector.shape_cast %88 : vector<1x1x1x48x24xbf16> to vector<48x24xbf16>
    %90 = arith.truncf %25 : vector<7x48xf32> to vector<7x48xbf16>
    %cst_80 = arith.constant dense<0.000000e+00> : vector<7x24xf32>
    %91 = tpu.matmul %90, %89, %cst_80 {dimension_numbers = #tpu.dot_dimension_numbers<[1], [0], [0], [1], [0, 0, 1, 1], [], []>} : vector<7x48xbf16>, vector<48x24xbf16>, vector<7x24xf32> -> vector<7x24xf32>
    %c0_81 = arith.constant 0 : index
    %c2_82 = arith.constant 2 : index
    %c1_83 = arith.constant 1 : index
    %c0_84 = arith.constant 0 : index
    %c0_85 = arith.constant 0 : index
    %92 = vector.load %arg5[%c0_81, %c2_82, %c1_83, %c0_84, %c0_85] : memref<2x3x2x1x24xf32, #tpu.memory_space<vmem>>, vector<1x1x1x1x24xf32>
    %93 = vector.shape_cast %92 : vector<1x1x1x1x24xf32> to vector<1x24xf32>
    %94 = vector.broadcast %93 : vector<1x24xf32> to vector<7x24xf32>
    %95 = arith.addf %91, %94 : vector<7x24xf32>
    %96 = arith.truncf %79 : vector<7x24xf32> to vector<7x24xbf16>
    %97 = arith.truncf %87 : vector<7x24xf32> to vector<7x24xbf16>
    %cst_86 = arith.constant dense<0.000000e+00> : vector<7x7xf32>
    %98 = tpu.matmul %96, %97, %cst_86 {dimension_numbers = #tpu.dot_dimension_numbers<[1], [1], [0], [0], [0, 0, 1, 0], [], []>} : vector<7x24xbf16>, vector<7x24xbf16>, vector<7x7xf32> -> vector<7x7xf32>
    %cst_87 = arith.constant 0.204124153 : f32
    %99 = vector.broadcast %cst_87 : f32 to vector<7x7xf32>
    %100 = arith.mulf %98, %99 : vector<7x7xf32>
    %cst_88 = arith.constant dense<0xFF800000> : vector<7xf32>
    %101 = vector.multi_reduction <maximumf>, %100, %cst_88 [1] : vector<7x7xf32> to vector<7xf32>
    %102 = vector.shape_cast %101 : vector<7xf32> to vector<7x1xf32>
    %103 = vector.broadcast %102 : vector<7x1xf32> to vector<7x7xf32>
    %104 = arith.subf %100, %103 : vector<7x7xf32>
    %105 = math.exp %104 : vector<7x7xf32>
    %cst_89 = arith.constant dense<0.000000e+00> : vector<7xf32>
    %106 = vector.multi_reduction <add>, %105, %cst_89 [1] : vector<7x7xf32> to vector<7xf32>
    %107 = vector.shape_cast %106 : vector<7xf32> to vector<7x1xf32>
    %108 = tpu.reciprocal %107 {approx = true} : vector<7x1xf32> -> vector<7x1xf32>
    %109 = vector.broadcast %108 : vector<7x1xf32> to vector<7x7xf32>
    %110 = arith.mulf %105, %109 : vector<7x7xf32>
    %111 = arith.truncf %110 : vector<7x7xf32> to vector<7x7xbf16>
    %112 = arith.truncf %95 : vector<7x24xf32> to vector<7x24xbf16>
    %cst_90 = arith.constant dense<0.000000e+00> : vector<7x24xf32>
    %113 = tpu.matmul %111, %112, %cst_90 {dimension_numbers = #tpu.dot_dimension_numbers<[1], [0], [0], [1], [0, 0, 1, 1], [], []>} : vector<7x7xbf16>, vector<7x24xbf16>, vector<7x24xf32> -> vector<7x24xf32>
    %c0_91 = arith.constant 0 : index
    %c1_92 = arith.constant 1 : index
    %c0_93 = arith.constant 0 : index
    %c0_94 = arith.constant 0 : index
    %114 = vector.load %arg6[%c0_91, %c1_92, %c0_93, %c0_94] : memref<2x2x24x48xbf16, #tpu.memory_space<vmem>>, vector<1x1x24x48xbf16>
    %115 = vector.shape_cast %114 : vector<1x1x24x48xbf16> to vector<24x48xbf16>
    %116 = arith.truncf %113 : vector<7x24xf32> to vector<7x24xbf16>
    %cst_95 = arith.constant dense<0.000000e+00> : vector<7x48xf32>
    %117 = tpu.matmul %116, %115, %cst_95 {dimension_numbers = #tpu.dot_dimension_numbers<[1], [0], [0], [1], [0, 0, 1, 1], [], []>} : vector<7x24xbf16>, vector<24x48xbf16>, vector<7x48xf32> -> vector<7x48xf32>
    %118 = arith.addf %71, %117 : vector<7x48xf32>
    %c0_96 = arith.constant 0 : index
    %c0_97 = arith.constant 0 : index
    %c0_98 = arith.constant 0 : index
    %119 = vector.load %arg7[%c0_96, %c0_97, %c0_98] : memref<2x1x48xf32, #tpu.memory_space<vmem>>, vector<1x1x48xf32>
    %120 = vector.shape_cast %119 : vector<1x1x48xf32> to vector<1x48xf32>
    %121 = vector.broadcast %120 : vector<1x48xf32> to vector<7x48xf32>
    %122 = arith.addf %118, %121 : vector<7x48xf32>
    %123 = arith.addf %1, %122 : vector<7x48xf32>
    %c0_99 = arith.constant 0 : index
    %c0_100 = arith.constant 0 : index
    %c0_101 = arith.constant 0 : index
    %124 = vector.load %arg8[%c0_99, %c0_100, %c0_101] : memref<2x1x48xf32, #tpu.memory_space<vmem>>, vector<1x1x48xf32>
    %125 = vector.shape_cast %124 : vector<1x1x48xf32> to vector<1x48xf32>
    %c0_102 = arith.constant 0 : index
    %c0_103 = arith.constant 0 : index
    %c0_104 = arith.constant 0 : index
    %126 = vector.load %arg9[%c0_102, %c0_103, %c0_104] : memref<2x1x48xf32, #tpu.memory_space<vmem>>, vector<1x1x48xf32>
    %127 = vector.shape_cast %126 : vector<1x1x48xf32> to vector<1x48xf32>
    %cst_105 = arith.constant dense<0.000000e+00> : vector<7xf32>
    %128 = vector.multi_reduction <add>, %123, %cst_105 [1] : vector<7x48xf32> to vector<7xf32>
    %129 = vector.shape_cast %128 : vector<7xf32> to vector<7x1xf32>
    %cst_106 = arith.constant 4.800000e+01 : f32
    %130 = vector.broadcast %cst_106 : f32 to vector<7x1xf32>
    %131 = arith.divf %129, %130 : vector<7x1xf32>
    %132 = vector.broadcast %131 : vector<7x1xf32> to vector<7x48xf32>
    %133 = arith.subf %123, %132 : vector<7x48xf32>
    %134 = arith.mulf %133, %133 : vector<7x48xf32>
    %cst_107 = arith.constant dense<0.000000e+00> : vector<7xf32>
    %135 = vector.multi_reduction <add>, %134, %cst_107 [1] : vector<7x48xf32> to vector<7xf32>
    %136 = vector.shape_cast %135 : vector<7xf32> to vector<7x1xf32>
    %cst_108 = arith.constant 4.800000e+01 : f32
    %137 = vector.broadcast %cst_108 : f32 to vector<7x1xf32>
    %138 = arith.divf %136, %137 : vector<7x1xf32>
    %cst_109 = arith.constant 9.99999974E-6 : f32
    %139 = vector.broadcast %cst_109 : f32 to vector<7x1xf32>
    %140 = arith.addf %138, %139 : vector<7x1xf32>
    %141 = math.rsqrt %140 : vector<7x1xf32>
    %142 = vector.broadcast %141 : vector<7x1xf32> to vector<7x48xf32>
    %143 = arith.mulf %133, %142 : vector<7x48xf32>
    %144 = vector.broadcast %125 : vector<1x48xf32> to vector<7x48xf32>
    %145 = arith.mulf %143, %144 : vector<7x48xf32>
    %146 = vector.broadcast %127 : vector<1x48xf32> to vector<7x48xf32>
    %147 = arith.addf %145, %146 : vector<7x48xf32>
    %c0_110 = arith.constant 0 : index
    %c0_111 = arith.constant 0 : index
    %c0_112 = arith.constant 0 : index
    %148 = vector.load %arg10[%c0_110, %c0_111, %c0_112] : memref<2x48x192xbf16, #tpu.memory_space<vmem>>, vector<1x48x192xbf16>
    %149 = vector.shape_cast %148 : vector<1x48x192xbf16> to vector<48x192xbf16>
    %150 = arith.truncf %147 : vector<7x48xf32> to vector<7x48xbf16>
    %cst_113 = arith.constant dense<0.000000e+00> : vector<7x192xf32>
    %151 = tpu.matmul %150, %149, %cst_113 {dimension_numbers = #tpu.dot_dimension_numbers<[1], [0], [0], [1], [0, 0, 1, 1], [], []>} : vector<7x48xbf16>, vector<48x192xbf16>, vector<7x192xf32> -> vector<7x192xf32>
    %c0_114 = arith.constant 0 : index
    %c0_115 = arith.constant 0 : index
    %c0_116 = arith.constant 0 : index
    %152 = vector.load %arg11[%c0_114, %c0_115, %c0_116] : memref<2x1x192xf32, #tpu.memory_space<vmem>>, vector<1x1x192xf32>
    %153 = vector.shape_cast %152 : vector<1x1x192xf32> to vector<1x192xf32>
    %154 = vector.broadcast %153 : vector<1x192xf32> to vector<7x192xf32>
    %155 = arith.addf %151, %154 : vector<7x192xf32>
    %cst_117 = arith.constant 5.000000e-01 : f32
    %156 = vector.broadcast %cst_117 : f32 to vector<7x192xf32>
    %157 = arith.mulf %156, %155 : vector<7x192xf32>
    %158 = arith.mulf %155, %155 : vector<7x192xf32>
    %159 = arith.mulf %158, %155 : vector<7x192xf32>
    %cst_118 = arith.constant 4.471500e-02 : f32
    %160 = vector.broadcast %cst_118 : f32 to vector<7x192xf32>
    %161 = arith.mulf %160, %159 : vector<7x192xf32>
    %162 = arith.addf %155, %161 : vector<7x192xf32>
    %cst_119 = arith.constant 0.797884583 : f32
    %163 = vector.broadcast %cst_119 : f32 to vector<7x192xf32>
    %164 = arith.mulf %163, %162 : vector<7x192xf32>
    %165 = math.tanh %164 : vector<7x192xf32>
    %cst_120 = arith.constant 1.000000e+00 : f32
    %166 = vector.broadcast %cst_120 : f32 to vector<7x192xf32>
    %167 = arith.addf %166, %165 : vector<7x192xf32>
    %168 = arith.mulf %157, %167 : vector<7x192xf32>
    %c0_121 = arith.constant 0 : index
    %c0_122 = arith.constant 0 : index
    %c0_123 = arith.constant 0 : index
    %169 = vector.load %arg12[%c0_121, %c0_122, %c0_123] : memref<2x192x48xbf16, #tpu.memory_space<vmem>>, vector<1x192x48xbf16>
    %170 = vector.shape_cast %169 : vector<1x192x48xbf16> to vector<192x48xbf16>
    %171 = arith.truncf %168 : vector<7x192xf32> to vector<7x192xbf16>
    %cst_124 = arith.constant dense<0.000000e+00> : vector<7x48xf32>
    %172 = tpu.matmul %171, %170, %cst_124 {dimension_numbers = #tpu.dot_dimension_numbers<[1], [0], [0], [1], [0, 0, 1, 1], [], []>} : vector<7x192xbf16>, vector<192x48xbf16>, vector<7x48xf32> -> vector<7x48xf32>
    %c0_125 = arith.constant 0 : index
    %c0_126 = arith.constant 0 : index
    %c0_127 = arith.constant 0 : index
    %173 = vector.load %arg13[%c0_125, %c0_126, %c0_127] : memref<2x1x48xf32, #tpu.memory_space<vmem>>, vector<1x1x48xf32>
    %174 = vector.shape_cast %173 : vector<1x1x48xf32> to vector<1x48xf32>
    %175 = vector.broadcast %174 : vector<1x48xf32> to vector<7x48xf32>
    %176 = arith.addf %172, %175 : vector<7x48xf32>
    %177 = arith.addf %123, %176 : vector<7x48xf32>
    %c1_128 = arith.constant 1 : index
    %c0_129 = arith.constant 0 : index
    %c0_130 = arith.constant 0 : index
    %178 = vector.load %arg2[%c1_128, %c0_129, %c0_130] : memref<2x1x48xf32, #tpu.memory_space<vmem>>, vector<1x1x48xf32>
    %179 = vector.shape_cast %178 : vector<1x1x48xf32> to vector<1x48xf32>
    %c1_131 = arith.constant 1 : index
    %c0_132 = arith.constant 0 : index
    %c0_133 = arith.constant 0 : index
    %180 = vector.load %arg3[%c1_131, %c0_132, %c0_133] : memref<2x1x48xf32, #tpu.memory_space<vmem>>, vector<1x1x48xf32>
    %181 = vector.shape_cast %180 : vector<1x1x48xf32> to vector<1x48xf32>
    %cst_134 = arith.constant dense<0.000000e+00> : vector<7xf32>
    %182 = vector.multi_reduction <add>, %177, %cst_134 [1] : vector<7x48xf32> to vector<7xf32>
    %183 = vector.shape_cast %182 : vector<7xf32> to vector<7x1xf32>
    %cst_135 = arith.constant 4.800000e+01 : f32
    %184 = vector.broadcast %cst_135 : f32 to vector<7x1xf32>
    %185 = arith.divf %183, %184 : vector<7x1xf32>
    %186 = vector.broadcast %185 : vector<7x1xf32> to vector<7x48xf32>
    %187 = arith.subf %177, %186 : vector<7x48xf32>
    %188 = arith.mulf %187, %187 : vector<7x48xf32>
    %cst_136 = arith.constant dense<0.000000e+00> : vector<7xf32>
    %189 = vector.multi_reduction <add>, %188, %cst_136 [1] : vector<7x48xf32> to vector<7xf32>
    %190 = vector.shape_cast %189 : vector<7xf32> to vector<7x1xf32>
    %cst_137 = arith.constant 4.800000e+01 : f32
    %191 = vector.broadcast %cst_137 : f32 to vector<7x1xf32>
    %192 = arith.divf %190, %191 : vector<7x1xf32>
    %cst_138 = arith.constant 9.99999974E-6 : f32
    %193 = vector.broadcast %cst_138 : f32 to vector<7x1xf32>
    %194 = arith.addf %192, %193 : vector<7x1xf32>
    %195 = math.rsqrt %194 : vector<7x1xf32>
    %196 = vector.broadcast %195 : vector<7x1xf32> to vector<7x48xf32>
    %197 = arith.mulf %187, %196 : vector<7x48xf32>
    %198 = vector.broadcast %179 : vector<1x48xf32> to vector<7x48xf32>
    %199 = arith.mulf %197, %198 : vector<7x48xf32>
    %200 = vector.broadcast %181 : vector<1x48xf32> to vector<7x48xf32>
    %201 = arith.addf %199, %200 : vector<7x48xf32>
    %c1_139 = arith.constant 1 : index
    %c0_140 = arith.constant 0 : index
    %c0_141 = arith.constant 0 : index
    %c0_142 = arith.constant 0 : index
    %c0_143 = arith.constant 0 : index
    %202 = vector.load %arg4[%c1_139, %c0_140, %c0_141, %c0_142, %c0_143] : memref<2x3x2x48x24xbf16, #tpu.memory_space<vmem>>, vector<1x1x1x48x24xbf16>
    %203 = vector.shape_cast %202 : vector<1x1x1x48x24xbf16> to vector<48x24xbf16>
    %204 = arith.truncf %201 : vector<7x48xf32> to vector<7x48xbf16>
    %cst_144 = arith.constant dense<0.000000e+00> : vector<7x24xf32>
    %205 = tpu.matmul %204, %203, %cst_144 {dimension_numbers = #tpu.dot_dimension_numbers<[1], [0], [0], [1], [0, 0, 1, 1], [], []>} : vector<7x48xbf16>, vector<48x24xbf16>, vector<7x24xf32> -> vector<7x24xf32>
    %c1_145 = arith.constant 1 : index
    %c0_146 = arith.constant 0 : index
    %c0_147 = arith.constant 0 : index
    %c0_148 = arith.constant 0 : index
    %c0_149 = arith.constant 0 : index
    %206 = vector.load %arg5[%c1_145, %c0_146, %c0_147, %c0_148, %c0_149] : memref<2x3x2x1x24xf32, #tpu.memory_space<vmem>>, vector<1x1x1x1x24xf32>
    %207 = vector.shape_cast %206 : vector<1x1x1x1x24xf32> to vector<1x24xf32>
    %208 = vector.broadcast %207 : vector<1x24xf32> to vector<7x24xf32>
    %209 = arith.addf %205, %208 : vector<7x24xf32>
    %c1_150 = arith.constant 1 : index
    %c1_151 = arith.constant 1 : index
    %c0_152 = arith.constant 0 : index
    %c0_153 = arith.constant 0 : index
    %c0_154 = arith.constant 0 : index
    %210 = vector.load %arg4[%c1_150, %c1_151, %c0_152, %c0_153, %c0_154] : memref<2x3x2x48x24xbf16, #tpu.memory_space<vmem>>, vector<1x1x1x48x24xbf16>
    %211 = vector.shape_cast %210 : vector<1x1x1x48x24xbf16> to vector<48x24xbf16>
    %212 = arith.truncf %201 : vector<7x48xf32> to vector<7x48xbf16>
    %cst_155 = arith.constant dense<0.000000e+00> : vector<7x24xf32>
    %213 = tpu.matmul %212, %211, %cst_155 {dimension_numbers = #tpu.dot_dimension_numbers<[1], [0], [0], [1], [0, 0, 1, 1], [], []>} : vector<7x48xbf16>, vector<48x24xbf16>, vector<7x24xf32> -> vector<7x24xf32>
    %c1_156 = arith.constant 1 : index
    %c1_157 = arith.constant 1 : index
    %c0_158 = arith.constant 0 : index
    %c0_159 = arith.constant 0 : index
    %c0_160 = arith.constant 0 : index
    %214 = vector.load %arg5[%c1_156, %c1_157, %c0_158, %c0_159, %c0_160] : memref<2x3x2x1x24xf32, #tpu.memory_space<vmem>>, vector<1x1x1x1x24xf32>
    %215 = vector.shape_cast %214 : vector<1x1x1x1x24xf32> to vector<1x24xf32>
    %216 = vector.broadcast %215 : vector<1x24xf32> to vector<7x24xf32>
    %217 = arith.addf %213, %216 : vector<7x24xf32>
    %c1_161 = arith.constant 1 : index
    %c2_162 = arith.constant 2 : index
    %c0_163 = arith.constant 0 : index
    %c0_164 = arith.constant 0 : index
    %c0_165 = arith.constant 0 : index
    %218 = vector.load %arg4[%c1_161, %c2_162, %c0_163, %c0_164, %c0_165] : memref<2x3x2x48x24xbf16, #tpu.memory_space<vmem>>, vector<1x1x1x48x24xbf16>
    %219 = vector.shape_cast %218 : vector<1x1x1x48x24xbf16> to vector<48x24xbf16>
    %220 = arith.truncf %201 : vector<7x48xf32> to vector<7x48xbf16>
    %cst_166 = arith.constant dense<0.000000e+00> : vector<7x24xf32>
    %221 = tpu.matmul %220, %219, %cst_166 {dimension_numbers = #tpu.dot_dimension_numbers<[1], [0], [0], [1], [0, 0, 1, 1], [], []>} : vector<7x48xbf16>, vector<48x24xbf16>, vector<7x24xf32> -> vector<7x24xf32>
    %c1_167 = arith.constant 1 : index
    %c2_168 = arith.constant 2 : index
    %c0_169 = arith.constant 0 : index
    %c0_170 = arith.constant 0 : index
    %c0_171 = arith.constant 0 : index
    %222 = vector.load %arg5[%c1_167, %c2_168, %c0_169, %c0_170, %c0_171] : memref<2x3x2x1x24xf32, #tpu.memory_space<vmem>>, vector<1x1x1x1x24xf32>
    %223 = vector.shape_cast %222 : vector<1x1x1x1x24xf32> to vector<1x24xf32>
    %224 = vector.broadcast %223 : vector<1x24xf32> to vector<7x24xf32>
    %225 = arith.addf %221, %224 : vector<7x24xf32>
    %226 = arith.truncf %209 : vector<7x24xf32> to vector<7x24xbf16>
    %227 = arith.truncf %217 : vector<7x24xf32> to vector<7x24xbf16>
    %cst_172 = arith.constant dense<0.000000e+00> : vector<7x7xf32>
    %228 = tpu.matmul %226, %227, %cst_172 {dimension_numbers = #tpu.dot_dimension_numbers<[1], [1], [0], [0], [0, 0, 1, 0], [], []>} : vector<7x24xbf16>, vector<7x24xbf16>, vector<7x7xf32> -> vector<7x7xf32>
    %cst_173 = arith.constant 0.204124153 : f32
    %229 = vector.broadcast %cst_173 : f32 to vector<7x7xf32>
    %230 = arith.mulf %228, %229 : vector<7x7xf32>
    %cst_174 = arith.constant dense<0xFF800000> : vector<7xf32>
    %231 = vector.multi_reduction <maximumf>, %230, %cst_174 [1] : vector<7x7xf32> to vector<7xf32>
    %232 = vector.shape_cast %231 : vector<7xf32> to vector<7x1xf32>
    %233 = vector.broadcast %232 : vector<7x1xf32> to vector<7x7xf32>
    %234 = arith.subf %230, %233 : vector<7x7xf32>
    %235 = math.exp %234 : vector<7x7xf32>
    %cst_175 = arith.constant dense<0.000000e+00> : vector<7xf32>
    %236 = vector.multi_reduction <add>, %235, %cst_175 [1] : vector<7x7xf32> to vector<7xf32>
    %237 = vector.shape_cast %236 : vector<7xf32> to vector<7x1xf32>
    %238 = tpu.reciprocal %237 {approx = true} : vector<7x1xf32> -> vector<7x1xf32>
    %239 = vector.broadcast %238 : vector<7x1xf32> to vector<7x7xf32>
    %240 = arith.mulf %235, %239 : vector<7x7xf32>
    %241 = arith.truncf %240 : vector<7x7xf32> to vector<7x7xbf16>
    %242 = arith.truncf %225 : vector<7x24xf32> to vector<7x24xbf16>
    %cst_176 = arith.constant dense<0.000000e+00> : vector<7x24xf32>
    %243 = tpu.matmul %241, %242, %cst_176 {dimension_numbers = #tpu.dot_dimension_numbers<[1], [0], [0], [1], [0, 0, 1, 1], [], []>} : vector<7x7xbf16>, vector<7x24xbf16>, vector<7x24xf32> -> vector<7x24xf32>
    %c1_177 = arith.constant 1 : index
    %c0_178 = arith.constant 0 : index
    %c0_179 = arith.constant 0 : index
    %c0_180 = arith.constant 0 : index
    %244 = vector.load %arg6[%c1_177, %c0_178, %c0_179, %c0_180] : memref<2x2x24x48xbf16, #tpu.memory_space<vmem>>, vector<1x1x24x48xbf16>
    %245 = vector.shape_cast %244 : vector<1x1x24x48xbf16> to vector<24x48xbf16>
    %246 = arith.truncf %243 : vector<7x24xf32> to vector<7x24xbf16>
    %cst_181 = arith.constant dense<0.000000e+00> : vector<7x48xf32>
    %247 = tpu.matmul %246, %245, %cst_181 {dimension_numbers = #tpu.dot_dimension_numbers<[1], [0], [0], [1], [0, 0, 1, 1], [], []>} : vector<7x24xbf16>, vector<24x48xbf16>, vector<7x48xf32> -> vector<7x48xf32>
    %c1_182 = arith.constant 1 : index
    %c0_183 = arith.constant 0 : index
    %c1_184 = arith.constant 1 : index
    %c0_185 = arith.constant 0 : index
    %c0_186 = arith.constant 0 : index
    %248 = vector.load %arg4[%c1_182, %c0_183, %c1_184, %c0_185, %c0_186] : memref<2x3x2x48x24xbf16, #tpu.memory_space<vmem>>, vector<1x1x1x48x24xbf16>
    %249 = vector.shape_cast %248 : vector<1x1x1x48x24xbf16> to vector<48x24xbf16>
    %250 = arith.truncf %201 : vector<7x48xf32> to vector<7x48xbf16>
    %cst_187 = arith.constant dense<0.000000e+00> : vector<7x24xf32>
    %251 = tpu.matmul %250, %249, %cst_187 {dimension_numbers = #tpu.dot_dimension_numbers<[1], [0], [0], [1], [0, 0, 1, 1], [], []>} : vector<7x48xbf16>, vector<48x24xbf16>, vector<7x24xf32> -> vector<7x24xf32>
    %c1_188 = arith.constant 1 : index
    %c0_189 = arith.constant 0 : index
    %c1_190 = arith.constant 1 : index
    %c0_191 = arith.constant 0 : index
    %c0_192 = arith.constant 0 : index
    %252 = vector.load %arg5[%c1_188, %c0_189, %c1_190, %c0_191, %c0_192] : memref<2x3x2x1x24xf32, #tpu.memory_space<vmem>>, vector<1x1x1x1x24xf32>
    %253 = vector.shape_cast %252 : vector<1x1x1x1x24xf32> to vector<1x24xf32>
    %254 = vector.broadcast %253 : vector<1x24xf32> to vector<7x24xf32>
    %255 = arith.addf %251, %254 : vector<7x24xf32>
    %c1_193 = arith.constant 1 : index
    %c1_194 = arith.constant 1 : index
    %c1_195 = arith.constant 1 : index
    %c0_196 = arith.constant 0 : index
    %c0_197 = arith.constant 0 : index
    %256 = vector.load %arg4[%c1_193, %c1_194, %c1_195, %c0_196, %c0_197] : memref<2x3x2x48x24xbf16, #tpu.memory_space<vmem>>, vector<1x1x1x48x24xbf16>
    %257 = vector.shape_cast %256 : vector<1x1x1x48x24xbf16> to vector<48x24xbf16>
    %258 = arith.truncf %201 : vector<7x48xf32> to vector<7x48xbf16>
    %cst_198 = arith.constant dense<0.000000e+00> : vector<7x24xf32>
    %259 = tpu.matmul %258, %257, %cst_198 {dimension_numbers = #tpu.dot_dimension_numbers<[1], [0], [0], [1], [0, 0, 1, 1], [], []>} : vector<7x48xbf16>, vector<48x24xbf16>, vector<7x24xf32> -> vector<7x24xf32>
    %c1_199 = arith.constant 1 : index
    %c1_200 = arith.constant 1 : index
    %c1_201 = arith.constant 1 : index
    %c0_202 = arith.constant 0 : index
    %c0_203 = arith.constant 0 : index
    %260 = vector.load %arg5[%c1_199, %c1_200, %c1_201, %c0_202, %c0_203] : memref<2x3x2x1x24xf32, #tpu.memory_space<vmem>>, vector<1x1x1x1x24xf32>
    %261 = vector.shape_cast %260 : vector<1x1x1x1x24xf32> to vector<1x24xf32>
    %262 = vector.broadcast %261 : vector<1x24xf32> to vector<7x24xf32>
    %263 = arith.addf %259, %262 : vector<7x24xf32>
    %c1_204 = arith.constant 1 : index
    %c2_205 = arith.constant 2 : index
    %c1_206 = arith.constant 1 : index
    %c0_207 = arith.constant 0 : index
    %c0_208 = arith.constant 0 : index
    %264 = vector.load %arg4[%c1_204, %c2_205, %c1_206, %c0_207, %c0_208] : memref<2x3x2x48x24xbf16, #tpu.memory_space<vmem>>, vector<1x1x1x48x24xbf16>
    %265 = vector.shape_cast %264 : vector<1x1x1x48x24xbf16> to vector<48x24xbf16>
    %266 = arith.truncf %201 : vector<7x48xf32> to vector<7x48xbf16>
    %cst_209 = arith.constant dense<0.000000e+00> : vector<7x24xf32>
    %267 = tpu.matmul %266, %265, %cst_209 {dimension_numbers = #tpu.dot_dimension_numbers<[1], [0], [0], [1], [0, 0, 1, 1], [], []>} : vector<7x48xbf16>, vector<48x24xbf16>, vector<7x24xf32> -> vector<7x24xf32>
    %c1_210 = arith.constant 1 : index
    %c2_211 = arith.constant 2 : index
    %c1_212 = arith.constant 1 : index
    %c0_213 = arith.constant 0 : index
    %c0_214 = arith.constant 0 : index
    %268 = vector.load %arg5[%c1_210, %c2_211, %c1_212, %c0_213, %c0_214] : memref<2x3x2x1x24xf32, #tpu.memory_space<vmem>>, vector<1x1x1x1x24xf32>
    %269 = vector.shape_cast %268 : vector<1x1x1x1x24xf32> to vector<1x24xf32>
    %270 = vector.broadcast %269 : vector<1x24xf32> to vector<7x24xf32>
    %271 = arith.addf %267, %270 : vector<7x24xf32>
    %272 = arith.truncf %255 : vector<7x24xf32> to vector<7x24xbf16>
    %273 = arith.truncf %263 : vector<7x24xf32> to vector<7x24xbf16>
    %cst_215 = arith.constant dense<0.000000e+00> : vector<7x7xf32>
    %274 = tpu.matmul %272, %273, %cst_215 {dimension_numbers = #tpu.dot_dimension_numbers<[1], [1], [0], [0], [0, 0, 1, 0], [], []>} : vector<7x24xbf16>, vector<7x24xbf16>, vector<7x7xf32> -> vector<7x7xf32>
    %cst_216 = arith.constant 0.204124153 : f32
    %275 = vector.broadcast %cst_216 : f32 to vector<7x7xf32>
    %276 = arith.mulf %274, %275 : vector<7x7xf32>
    %cst_217 = arith.constant dense<0xFF800000> : vector<7xf32>
    %277 = vector.multi_reduction <maximumf>, %276, %cst_217 [1] : vector<7x7xf32> to vector<7xf32>
    %278 = vector.shape_cast %277 : vector<7xf32> to vector<7x1xf32>
    %279 = vector.broadcast %278 : vector<7x1xf32> to vector<7x7xf32>
    %280 = arith.subf %276, %279 : vector<7x7xf32>
    %281 = math.exp %280 : vector<7x7xf32>
    %cst_218 = arith.constant dense<0.000000e+00> : vector<7xf32>
    %282 = vector.multi_reduction <add>, %281, %cst_218 [1] : vector<7x7xf32> to vector<7xf32>
    %283 = vector.shape_cast %282 : vector<7xf32> to vector<7x1xf32>
    %284 = tpu.reciprocal %283 {approx = true} : vector<7x1xf32> -> vector<7x1xf32>
    %285 = vector.broadcast %284 : vector<7x1xf32> to vector<7x7xf32>
    %286 = arith.mulf %281, %285 : vector<7x7xf32>
    %287 = arith.truncf %286 : vector<7x7xf32> to vector<7x7xbf16>
    %288 = arith.truncf %271 : vector<7x24xf32> to vector<7x24xbf16>
    %cst_219 = arith.constant dense<0.000000e+00> : vector<7x24xf32>
    %289 = tpu.matmul %287, %288, %cst_219 {dimension_numbers = #tpu.dot_dimension_numbers<[1], [0], [0], [1], [0, 0, 1, 1], [], []>} : vector<7x7xbf16>, vector<7x24xbf16>, vector<7x24xf32> -> vector<7x24xf32>
    %c1_220 = arith.constant 1 : index
    %c1_221 = arith.constant 1 : index
    %c0_222 = arith.constant 0 : index
    %c0_223 = arith.constant 0 : index
    %290 = vector.load %arg6[%c1_220, %c1_221, %c0_222, %c0_223] : memref<2x2x24x48xbf16, #tpu.memory_space<vmem>>, vector<1x1x24x48xbf16>
    %291 = vector.shape_cast %290 : vector<1x1x24x48xbf16> to vector<24x48xbf16>
    %292 = arith.truncf %289 : vector<7x24xf32> to vector<7x24xbf16>
    %cst_224 = arith.constant dense<0.000000e+00> : vector<7x48xf32>
    %293 = tpu.matmul %292, %291, %cst_224 {dimension_numbers = #tpu.dot_dimension_numbers<[1], [0], [0], [1], [0, 0, 1, 1], [], []>} : vector<7x24xbf16>, vector<24x48xbf16>, vector<7x48xf32> -> vector<7x48xf32>
    %294 = arith.addf %247, %293 : vector<7x48xf32>
    %c1_225 = arith.constant 1 : index
    %c0_226 = arith.constant 0 : index
    %c0_227 = arith.constant 0 : index
    %295 = vector.load %arg7[%c1_225, %c0_226, %c0_227] : memref<2x1x48xf32, #tpu.memory_space<vmem>>, vector<1x1x48xf32>
    %296 = vector.shape_cast %295 : vector<1x1x48xf32> to vector<1x48xf32>
    %297 = vector.broadcast %296 : vector<1x48xf32> to vector<7x48xf32>
    %298 = arith.addf %294, %297 : vector<7x48xf32>
    %299 = arith.addf %177, %298 : vector<7x48xf32>
    %c1_228 = arith.constant 1 : index
    %c0_229 = arith.constant 0 : index
    %c0_230 = arith.constant 0 : index
    %300 = vector.load %arg8[%c1_228, %c0_229, %c0_230] : memref<2x1x48xf32, #tpu.memory_space<vmem>>, vector<1x1x48xf32>
    %301 = vector.shape_cast %300 : vector<1x1x48xf32> to vector<1x48xf32>
    %c1_231 = arith.constant 1 : index
    %c0_232 = arith.constant 0 : index
    %c0_233 = arith.constant 0 : index
    %302 = vector.load %arg9[%c1_231, %c0_232, %c0_233] : memref<2x1x48xf32, #tpu.memory_space<vmem>>, vector<1x1x48xf32>
    %303 = vector.shape_cast %302 : vector<1x1x48xf32> to vector<1x48xf32>
    %cst_234 = arith.constant dense<0.000000e+00> : vector<7xf32>
    %304 = vector.multi_reduction <add>, %299, %cst_234 [1] : vector<7x48xf32> to vector<7xf32>
    %305 = vector.shape_cast %304 : vector<7xf32> to vector<7x1xf32>
    %cst_235 = arith.constant 4.800000e+01 : f32
    %306 = vector.broadcast %cst_235 : f32 to vector<7x1xf32>
    %307 = arith.divf %305, %306 : vector<7x1xf32>
    %308 = vector.broadcast %307 : vector<7x1xf32> to vector<7x48xf32>
    %309 = arith.subf %299, %308 : vector<7x48xf32>
    %310 = arith.mulf %309, %309 : vector<7x48xf32>
    %cst_236 = arith.constant dense<0.000000e+00> : vector<7xf32>
    %311 = vector.multi_reduction <add>, %310, %cst_236 [1] : vector<7x48xf32> to vector<7xf32>
    %312 = vector.shape_cast %311 : vector<7xf32> to vector<7x1xf32>
    %cst_237 = arith.constant 4.800000e+01 : f32
    %313 = vector.broadcast %cst_237 : f32 to vector<7x1xf32>
    %314 = arith.divf %312, %313 : vector<7x1xf32>
    %cst_238 = arith.constant 9.99999974E-6 : f32
    %315 = vector.broadcast %cst_238 : f32 to vector<7x1xf32>
    %316 = arith.addf %314, %315 : vector<7x1xf32>
    %317 = math.rsqrt %316 : vector<7x1xf32>
    %318 = vector.broadcast %317 : vector<7x1xf32> to vector<7x48xf32>
    %319 = arith.mulf %309, %318 : vector<7x48xf32>
    %320 = vector.broadcast %301 : vector<1x48xf32> to vector<7x48xf32>
    %321 = arith.mulf %319, %320 : vector<7x48xf32>
    %322 = vector.broadcast %303 : vector<1x48xf32> to vector<7x48xf32>
    %323 = arith.addf %321, %322 : vector<7x48xf32>
    %c1_239 = arith.constant 1 : index
    %c0_240 = arith.constant 0 : index
    %c0_241 = arith.constant 0 : index
    %324 = vector.load %arg10[%c1_239, %c0_240, %c0_241] : memref<2x48x192xbf16, #tpu.memory_space<vmem>>, vector<1x48x192xbf16>
    %325 = vector.shape_cast %324 : vector<1x48x192xbf16> to vector<48x192xbf16>
    %326 = arith.truncf %323 : vector<7x48xf32> to vector<7x48xbf16>
    %cst_242 = arith.constant dense<0.000000e+00> : vector<7x192xf32>
    %327 = tpu.matmul %326, %325, %cst_242 {dimension_numbers = #tpu.dot_dimension_numbers<[1], [0], [0], [1], [0, 0, 1, 1], [], []>} : vector<7x48xbf16>, vector<48x192xbf16>, vector<7x192xf32> -> vector<7x192xf32>
    %c1_243 = arith.constant 1 : index
    %c0_244 = arith.constant 0 : index
    %c0_245 = arith.constant 0 : index
    %328 = vector.load %arg11[%c1_243, %c0_244, %c0_245] : memref<2x1x192xf32, #tpu.memory_space<vmem>>, vector<1x1x192xf32>
    %329 = vector.shape_cast %328 : vector<1x1x192xf32> to vector<1x192xf32>
    %330 = vector.broadcast %329 : vector<1x192xf32> to vector<7x192xf32>
    %331 = arith.addf %327, %330 : vector<7x192xf32>
    %cst_246 = arith.constant 5.000000e-01 : f32
    %332 = vector.broadcast %cst_246 : f32 to vector<7x192xf32>
    %333 = arith.mulf %332, %331 : vector<7x192xf32>
    %334 = arith.mulf %331, %331 : vector<7x192xf32>
    %335 = arith.mulf %334, %331 : vector<7x192xf32>
    %cst_247 = arith.constant 4.471500e-02 : f32
    %336 = vector.broadcast %cst_247 : f32 to vector<7x192xf32>
    %337 = arith.mulf %336, %335 : vector<7x192xf32>
    %338 = arith.addf %331, %337 : vector<7x192xf32>
    %cst_248 = arith.constant 0.797884583 : f32
    %339 = vector.broadcast %cst_248 : f32 to vector<7x192xf32>
    %340 = arith.mulf %339, %338 : vector<7x192xf32>
    %341 = math.tanh %340 : vector<7x192xf32>
    %cst_249 = arith.constant 1.000000e+00 : f32
    %342 = vector.broadcast %cst_249 : f32 to vector<7x192xf32>
    %343 = arith.addf %342, %341 : vector<7x192xf32>
    %344 = arith.mulf %333, %343 : vector<7x192xf32>
    %c1_250 = arith.constant 1 : index
    %c0_251 = arith.constant 0 : index
    %c0_252 = arith.constant 0 : index
    %345 = vector.load %arg12[%c1_250, %c0_251, %c0_252] : memref<2x192x48xbf16, #tpu.memory_space<vmem>>, vector<1x192x48xbf16>
    %346 = vector.shape_cast %345 : vector<1x192x48xbf16> to vector<192x48xbf16>
    %347 = arith.truncf %344 : vector<7x192xf32> to vector<7x192xbf16>
    %cst_253 = arith.constant dense<0.000000e+00> : vector<7x48xf32>
    %348 = tpu.matmul %347, %346, %cst_253 {dimension_numbers = #tpu.dot_dimension_numbers<[1], [0], [0], [1], [0, 0, 1, 1], [], []>} : vector<7x192xbf16>, vector<192x48xbf16>, vector<7x48xf32> -> vector<7x48xf32>
    %c1_254 = arith.constant 1 : index
    %c0_255 = arith.constant 0 : index
    %c0_256 = arith.constant 0 : index
    %349 = vector.load %arg13[%c1_254, %c0_255, %c0_256] : memref<2x1x48xf32, #tpu.memory_space<vmem>>, vector<1x1x48xf32>
    %350 = vector.shape_cast %349 : vector<1x1x48xf32> to vector<1x48xf32>
    %351 = vector.broadcast %350 : vector<1x48xf32> to vector<7x48xf32>
    %352 = arith.addf %348, %351 : vector<7x48xf32>
    %353 = arith.addf %299, %352 : vector<7x48xf32>
    %c0_257 = arith.constant 0 : index
    %c0_258 = arith.constant 0 : index
    %354 = vector.load %arg14[%c0_257, %c0_258] : memref<48x8xbf16, #tpu.memory_space<vmem>>, vector<48x8xbf16>
    %355 = arith.truncf %353 : vector<7x48xf32> to vector<7x48xbf16>
    %cst_259 = arith.constant dense<0.000000e+00> : vector<7x8xf32>
    %356 = tpu.matmul %355, %354, %cst_259 {dimension_numbers = #tpu.dot_dimension_numbers<[1], [0], [0], [1], [0, 0, 1, 1], [], []>} : vector<7x48xbf16>, vector<48x8xbf16>, vector<7x8xf32> -> vector<7x8xf32>
    %c0_260 = arith.constant 0 : index
    %c0_261 = arith.constant 0 : index
    %357 = vector.load %arg15[%c0_260, %c0_261] : memref<1x8xf32, #tpu.memory_space<vmem>>, vector<1x8xf32>
    %358 = vector.broadcast %357 : vector<1x8xf32> to vector<7x8xf32>
    %359 = arith.addf %356, %358 : vector<7x8xf32>
    %c0_262 = arith.constant 0 : index
    %c0_263 = arith.constant 0 : index
    %c0_264 = arith.constant 0 : index
    %360 = vector.load %arg16[%c0_262, %c0_263, %c0_264] : memref<1x7x8xf32, #tpu.memory_space<vmem>>, vector<1x7x8xf32>
    %361 = vector.shape_cast %360 : vector<1x7x8xf32> to vector<7x8xf32>
    %362 = vector.shape_cast %359 : vector<7x8xf32> to vector<1x7x8xf32>
    tpu.vector_store %arg16[%c0_262, %c0_263, %c0_264], %362 {strides = array<i32>} : memref<1x7x8xf32, #tpu.memory_space<vmem>>, vector<1x7x8xf32>,
    return
  }
  func.func @transform_0(%arg0: i32) -> (i32, i32, i32) {
    %c0_i32 = arith.constant 0 : i32
    %c0_i32_0 = arith.constant 0 : i32
    %c0_i32_1 = arith.constant 0 : i32
    return %arg0, %c0_i32, %c0_i32_0 : i32, i32, i32
  }
  func.func @transform_1(%arg0: i32) -> (i32, i32, i32) {
    %c0_i32 = arith.constant 0 : i32
    %c0_i32_0 = arith.constant 0 : i32
    %c0_i32_1 = arith.constant 0 : i32
    %c0_i32_2 = arith.constant 0 : i32
    return %c0_i32, %c0_i32_0, %c0_i32_1 : i32, i32, i32
  }
  func.func @transform_2(%arg0: i32) -> (i32, i32, i32) {
    %c0_i32 = arith.constant 0 : i32
    %c0_i32_0 = arith.constant 0 : i32
    %c0_i32_1 = arith.constant 0 : i32
    %c0_i32_2 = arith.constant 0 : i32
    return %c0_i32, %c0_i32_0, %c0_i32_1 : i32, i32, i32
  }
  func.func @transform_3(%arg0: i32) -> (i32, i32, i32, i32, i32) {
    %c0_i32 = arith.constant 0 : i32
    %c0_i32_0 = arith.constant 0 : i32
    %c0_i32_1 = arith.constant 0 : i32
    %c0_i32_2 = arith.constant 0 : i32
    %c0_i32_3 = arith.constant 0 : i32
    %c0_i32_4 = arith.constant 0 : i32
    return %c0_i32, %c0_i32_0, %c0_i32_1, %c0_i32_2, %c0_i32_3 : i32, i32, i32, i32, i32
  }
  func.func @transform_4(%arg0: i32) -> (i32, i32, i32, i32, i32) {
    %c0_i32 = arith.constant 0 : i32
    %c0_i32_0 = arith.constant 0 : i32
    %c0_i32_1 = arith.constant 0 : i32
    %c0_i32_2 = arith.constant 0 : i32
    %c0_i32_3 = arith.constant 0 : i32
    %c0_i32_4 = arith.constant 0 : i32
    return %c0_i32, %c0_i32_0, %c0_i32_1, %c0_i32_2, %c0_i32_3 : i32, i32, i32, i32, i32
  }
  func.func @transform_5(%arg0: i32) -> (i32, i32, i32, i32) {
    %c0_i32 = arith.constant 0 : i32
    %c0_i32_0 = arith.constant 0 : i32
    %c0_i32_1 = arith.constant 0 : i32
    %c0_i32_2 = arith.constant 0 : i32
    %c0_i32_3 = arith.constant 0 : i32
    return %c0_i32, %c0_i32_0, %c0_i32_1, %c0_i32_2 : i32, i32, i32, i32
  }
  func.func @transform_6(%arg0: i32) -> (i32, i32, i32) {
    %c0_i32 = arith.constant 0 : i32
    %c0_i32_0 = arith.constant 0 : i32
    %c0_i32_1 = arith.constant 0 : i32
    %c0_i32_2 = arith.constant 0 : i32
    return %c0_i32, %c0_i32_0, %c0_i32_1 : i32, i32, i32
  }
  func.func @transform_7(%arg0: i32) -> (i32, i32, i32) {
    %c0_i32 = arith.constant 0 : i32
    %c0_i32_0 = arith.constant 0 : i32
    %c0_i32_1 = arith.constant 0 : i32
    %c0_i32_2 = arith.constant 0 : i32
    return %c0_i32, %c0_i32_0, %c0_i32_1 : i32, i32, i32
  }
  func.func @transform_8(%arg0: i32) -> (i32, i32, i32) {
    %c0_i32 = arith.constant 0 : i32
    %c0_i32_0 = arith.constant 0 : i32
    %c0_i32_1 = arith.constant 0 : i32
    %c0_i32_2 = arith.constant 0 : i32
    return %c0_i32, %c0_i32_0, %c0_i32_1 : i32, i32, i32
  }
  func.func @transform_9(%arg0: i32) -> (i32, i32, i32) {
    %c0_i32 = arith.constant 0 : i32
    %c0_i32_0 = arith.constant 0 : i32
    %c0_i32_1 = arith.constant 0 : i32
    %c0_i32_2 = arith.constant 0 : i32
    return %c0_i32, %c0_i32_0, %c0_i32_1 : i32, i32, i32
  }
  func.func @transform_10(%arg0: i32) -> (i32, i32, i32) {
    %c0_i32 = arith.constant 0 : i32
    %c0_i32_0 = arith.constant 0 : i32
    %c0_i32_1 = arith.constant 0 : i32
    %c0_i32_2 = arith.constant 0 : i32
    return %c0_i32, %c0_i32_0, %c0_i32_1 : i32, i32, i32
  }
  func.func @transform_11(%arg0: i32) -> (i32, i32, i32) {
    %c0_i32 = arith.constant 0 : i32
    %c0_i32_0 = arith.constant 0 : i32
    %c0_i32_1 = arith.constant 0 : i32
    %c0_i32_2 = arith.constant 0 : i32
    return %c0_i32, %c0_i32_0, %c0_i32_1 : i32, i32, i32
  }
  func.func @transform_12(%arg0: i32) -> (i32, i32, i32) {
    %c0_i32 = arith.constant 0 : i32
    %c0_i32_0 = arith.constant 0 : i32
    %c0_i32_1 = arith.constant 0 : i32
    %c0_i32_2 = arith.constant 0 : i32
    return %c0_i32, %c0_i32_0, %c0_i32_1 : i32, i32, i32
  }
  func.func @transform_13(%arg0: i32) -> (i32, i32) {
    %c0_i32 = arith.constant 0 : i32
    %c0_i32_0 = arith.constant 0 : i32
    %c0_i32_1 = arith.constant 0 : i32
    return %c0_i32, %c0_i32_0 : i32, i32
  }
  func.func @transform_14(%arg0: i32) -> (i32, i32) {
    %c0_i32 = arith.constant 0 : i32
    %c0_i32_0 = arith.constant 0 : i32
    %c0_i32_1 = arith.constant 0 : i32
    return %c0_i32, %c0_i32_0 : i32, i32
  }
  func.func @transform_15(%arg0: i32) -> (i32, i32, i32) {
    %c0_i32 = arith.constant 0 : i32
    %c0_i32_0 = arith.constant 0 : i32
    %c0_i32_1 = arith.constant 0 : i32
    return %arg0, %c0_i32, %c0_i32_0 : i32, i32, i32
  }
}

module attributes {stable_mosaic.version = 11 : i64} {
  func.func @_encoder_kernel(%arg0: i32, %arg1: memref<1x4x8xf32, #tpu.memory_space<vmem>>, %arg2: memref<1x4x48xf32, #tpu.memory_space<vmem>>, %arg3: memref<8x48xbf16, #tpu.memory_space<vmem>>, %arg4: memref<1x48xf32, #tpu.memory_space<vmem>>, %arg5: memref<1x48xf32, #tpu.memory_space<vmem>>, %arg6: memref<1x48xf32, #tpu.memory_space<vmem>>, %arg7: memref<48x192xbf16, #tpu.memory_space<vmem>>, %arg8: memref<1x192xf32, #tpu.memory_space<vmem>>, %arg9: memref<192x48xbf16, #tpu.memory_space<vmem>>, %arg10: memref<1x48xf32, #tpu.memory_space<vmem>>, %arg11: memref<2x1x48xf32, #tpu.memory_space<vmem>>, %arg12: memref<2x1x48xf32, #tpu.memory_space<vmem>>, %arg13: memref<2x3x2x48x24xbf16, #tpu.memory_space<vmem>>, %arg14: memref<2x3x2x1x24xf32, #tpu.memory_space<vmem>>, %arg15: memref<2x2x24x48xbf16, #tpu.memory_space<vmem>>, %arg16: memref<2x1x48xf32, #tpu.memory_space<vmem>>, %arg17: memref<2x1x48xf32, #tpu.memory_space<vmem>>, %arg18: memref<2x1x48xf32, #tpu.memory_space<vmem>>, %arg19: memref<2x48x192xbf16, #tpu.memory_space<vmem>>, %arg20: memref<2x1x192xf32, #tpu.memory_space<vmem>>, %arg21: memref<2x192x48xbf16, #tpu.memory_space<vmem>>, %arg22: memref<2x1x48xf32, #tpu.memory_space<vmem>>, %arg23: memref<1x48xf32, #tpu.memory_space<vmem>>, %arg24: memref<1x48xf32, #tpu.memory_space<vmem>>, %arg25: memref<48x48xbf16, #tpu.memory_space<vmem>>, %arg26: memref<1x48xf32, #tpu.memory_space<vmem>>, %arg27: memref<1x4x48xf32, #tpu.memory_space<vmem>>) attributes {dimension_semantics = [#tpu.dimension_semantics<parallel>], iteration_bounds = array<i64: 2>, scalar_prefetch = 0 : i64, scratch_operands = 0 : i64, tpu.core_type = #tpu.core_type<tc>, window_params = [{transform_indices = @transform_0, window_bounds = array<i64: 1, 4, 8>}, {transform_indices = @transform_1, window_bounds = array<i64: 1, 4, 48>}, {pipeline_mode = #tpu.pipeline_mode<synchronous>, transform_indices = @transform_2, window_bounds = array<i64: 8, 48>}, {pipeline_mode = #tpu.pipeline_mode<synchronous>, transform_indices = @transform_3, window_bounds = array<i64: 1, 48>}, {pipeline_mode = #tpu.pipeline_mode<synchronous>, transform_indices = @transform_4, window_bounds = array<i64: 1, 48>}, {pipeline_mode = #tpu.pipeline_mode<synchronous>, transform_indices = @transform_5, window_bounds = array<i64: 1, 48>}, {pipeline_mode = #tpu.pipeline_mode<synchronous>, transform_indices = @transform_6, window_bounds = array<i64: 48, 192>}, {pipeline_mode = #tpu.pipeline_mode<synchronous>, transform_indices = @transform_7, window_bounds = array<i64: 1, 192>}, {pipeline_mode = #tpu.pipeline_mode<synchronous>, transform_indices = @transform_8, window_bounds = array<i64: 192, 48>}, {pipeline_mode = #tpu.pipeline_mode<synchronous>, transform_indices = @transform_9, window_bounds = array<i64: 1, 48>}, {pipeline_mode = #tpu.pipeline_mode<synchronous>, transform_indices = @transform_10, window_bounds = array<i64: 2, 1, 48>}, {pipeline_mode = #tpu.pipeline_mode<synchronous>, transform_indices = @transform_11, window_bounds = array<i64: 2, 1, 48>}, {pipeline_mode = #tpu.pipeline_mode<synchronous>, transform_indices = @transform_12, window_bounds = array<i64: 2, 3, 2, 48, 24>}, {pipeline_mode = #tpu.pipeline_mode<synchronous>, transform_indices = @transform_13, window_bounds = array<i64: 2, 3, 2, 1, 24>}, {pipeline_mode = #tpu.pipeline_mode<synchronous>, transform_indices = @transform_14, window_bounds = array<i64: 2, 2, 24, 48>}, {pipeline_mode = #tpu.pipeline_mode<synchronous>, transform_indices = @transform_15, window_bounds = array<i64: 2, 1, 48>}, {pipeline_mode = #tpu.pipeline_mode<synchronous>, transform_indices = @transform_16, window_bounds = array<i64: 2, 1, 48>}, {pipeline_mode = #tpu.pipeline_mode<synchronous>, transform_indices = @transform_17, window_bounds = array<i64: 2, 1, 48>}, {pipeline_mode = #tpu.pipeline_mode<synchronous>, transform_indices = @transform_18, window_bounds = array<i64: 2, 48, 192>}, {pipeline_mode = #tpu.pipeline_mode<synchronous>, transform_indices = @transform_19, window_bounds = array<i64: 2, 1, 192>}, {pipeline_mode = #tpu.pipeline_mode<synchronous>, transform_indices = @transform_20, window_bounds = array<i64: 2, 192, 48>}, {pipeline_mode = #tpu.pipeline_mode<synchronous>, transform_indices = @transform_21, window_bounds = array<i64: 2, 1, 48>}, {pipeline_mode = #tpu.pipeline_mode<synchronous>, transform_indices = @transform_22, window_bounds = array<i64: 1, 48>}, {pipeline_mode = #tpu.pipeline_mode<synchronous>, transform_indices = @transform_23, window_bounds = array<i64: 1, 48>}, {pipeline_mode = #tpu.pipeline_mode<synchronous>, transform_indices = @transform_24, window_bounds = array<i64: 48, 48>}, {pipeline_mode = #tpu.pipeline_mode<synchronous>, transform_indices = @transform_25, window_bounds = array<i64: 1, 48>}, {transform_indices = @transform_26, window_bounds = array<i64: 1, 4, 48>}]} {
    %c0 = arith.constant 0 : index
    %c0_0 = arith.constant 0 : index
    %c0_1 = arith.constant 0 : index
    %0 = vector.load %arg1[%c0, %c0_0, %c0_1] : memref<1x4x8xf32, #tpu.memory_space<vmem>>, vector<1x4x8xf32>
    %1 = vector.shape_cast %0 : vector<1x4x8xf32> to vector<4x8xf32>
    %c0_2 = arith.constant 0 : index
    %c0_3 = arith.constant 0 : index
    %2 = vector.load %arg3[%c0_2, %c0_3] : memref<8x48xbf16, #tpu.memory_space<vmem>>, vector<8x48xbf16>
    %3 = arith.truncf %1 : vector<4x8xf32> to vector<4x8xbf16>
    %cst = arith.constant dense<0.000000e+00> : vector<4x48xf32>
    %4 = tpu.matmul %3, %2, %cst {dimension_numbers = #tpu.dot_dimension_numbers<[1], [0], [0], [1], [0, 0, 1, 1], [], []>} : vector<4x8xbf16>, vector<8x48xbf16>, vector<4x48xf32> -> vector<4x48xf32>
    %c0_4 = arith.constant 0 : index
    %c0_5 = arith.constant 0 : index
    %5 = vector.load %arg4[%c0_4, %c0_5] : memref<1x48xf32, #tpu.memory_space<vmem>>, vector<1x48xf32>
    %6 = vector.broadcast %5 : vector<1x48xf32> to vector<4x48xf32>
    %7 = arith.addf %4, %6 : vector<4x48xf32>
    %c0_6 = arith.constant 0 : index
    %c0_7 = arith.constant 0 : index
    %8 = vector.load %arg5[%c0_6, %c0_7] : memref<1x48xf32, #tpu.memory_space<vmem>>, vector<1x48xf32>
    %c0_8 = arith.constant 0 : index
    %c0_9 = arith.constant 0 : index
    %9 = vector.load %arg6[%c0_8, %c0_9] : memref<1x48xf32, #tpu.memory_space<vmem>>, vector<1x48xf32>
    %cst_10 = arith.constant dense<0.000000e+00> : vector<4xf32>
    %10 = vector.multi_reduction <add>, %7, %cst_10 [1] : vector<4x48xf32> to vector<4xf32>
    %11 = vector.shape_cast %10 : vector<4xf32> to vector<4x1xf32>
    %cst_11 = arith.constant 4.800000e+01 : f32
    %12 = vector.broadcast %cst_11 : f32 to vector<4x1xf32>
    %13 = arith.divf %11, %12 : vector<4x1xf32>
    %14 = vector.broadcast %13 : vector<4x1xf32> to vector<4x48xf32>
    %15 = arith.subf %7, %14 : vector<4x48xf32>
    %16 = arith.mulf %15, %15 : vector<4x48xf32>
    %cst_12 = arith.constant dense<0.000000e+00> : vector<4xf32>
    %17 = vector.multi_reduction <add>, %16, %cst_12 [1] : vector<4x48xf32> to vector<4xf32>
    %18 = vector.shape_cast %17 : vector<4xf32> to vector<4x1xf32>
    %cst_13 = arith.constant 4.800000e+01 : f32
    %19 = vector.broadcast %cst_13 : f32 to vector<4x1xf32>
    %20 = arith.divf %18, %19 : vector<4x1xf32>
    %cst_14 = arith.constant 9.99999974E-6 : f32
    %21 = vector.broadcast %cst_14 : f32 to vector<4x1xf32>
    %22 = arith.addf %20, %21 : vector<4x1xf32>
    %23 = math.rsqrt %22 : vector<4x1xf32>
    %24 = vector.broadcast %23 : vector<4x1xf32> to vector<4x48xf32>
    %25 = arith.mulf %15, %24 : vector<4x48xf32>
    %26 = vector.broadcast %8 : vector<1x48xf32> to vector<4x48xf32>
    %27 = arith.mulf %25, %26 : vector<4x48xf32>
    %28 = vector.broadcast %9 : vector<1x48xf32> to vector<4x48xf32>
    %29 = arith.addf %27, %28 : vector<4x48xf32>
    %c0_15 = arith.constant 0 : index
    %c0_16 = arith.constant 0 : index
    %30 = vector.load %arg7[%c0_15, %c0_16] : memref<48x192xbf16, #tpu.memory_space<vmem>>, vector<48x192xbf16>
    %31 = arith.truncf %29 : vector<4x48xf32> to vector<4x48xbf16>
    %cst_17 = arith.constant dense<0.000000e+00> : vector<4x192xf32>
    %32 = tpu.matmul %31, %30, %cst_17 {dimension_numbers = #tpu.dot_dimension_numbers<[1], [0], [0], [1], [0, 0, 1, 1], [], []>} : vector<4x48xbf16>, vector<48x192xbf16>, vector<4x192xf32> -> vector<4x192xf32>
    %c0_18 = arith.constant 0 : index
    %c0_19 = arith.constant 0 : index
    %33 = vector.load %arg8[%c0_18, %c0_19] : memref<1x192xf32, #tpu.memory_space<vmem>>, vector<1x192xf32>
    %34 = vector.broadcast %33 : vector<1x192xf32> to vector<4x192xf32>
    %35 = arith.addf %32, %34 : vector<4x192xf32>
    %cst_20 = arith.constant 5.000000e-01 : f32
    %36 = vector.broadcast %cst_20 : f32 to vector<4x192xf32>
    %37 = arith.mulf %36, %35 : vector<4x192xf32>
    %38 = arith.mulf %35, %35 : vector<4x192xf32>
    %39 = arith.mulf %38, %35 : vector<4x192xf32>
    %cst_21 = arith.constant 4.471500e-02 : f32
    %40 = vector.broadcast %cst_21 : f32 to vector<4x192xf32>
    %41 = arith.mulf %40, %39 : vector<4x192xf32>
    %42 = arith.addf %35, %41 : vector<4x192xf32>
    %cst_22 = arith.constant 0.797884583 : f32
    %43 = vector.broadcast %cst_22 : f32 to vector<4x192xf32>
    %44 = arith.mulf %43, %42 : vector<4x192xf32>
    %45 = math.tanh %44 : vector<4x192xf32>
    %cst_23 = arith.constant 1.000000e+00 : f32
    %46 = vector.broadcast %cst_23 : f32 to vector<4x192xf32>
    %47 = arith.addf %46, %45 : vector<4x192xf32>
    %48 = arith.mulf %37, %47 : vector<4x192xf32>
    %c0_24 = arith.constant 0 : index
    %c0_25 = arith.constant 0 : index
    %49 = vector.load %arg9[%c0_24, %c0_25] : memref<192x48xbf16, #tpu.memory_space<vmem>>, vector<192x48xbf16>
    %50 = arith.truncf %48 : vector<4x192xf32> to vector<4x192xbf16>
    %cst_26 = arith.constant dense<0.000000e+00> : vector<4x48xf32>
    %51 = tpu.matmul %50, %49, %cst_26 {dimension_numbers = #tpu.dot_dimension_numbers<[1], [0], [0], [1], [0, 0, 1, 1], [], []>} : vector<4x192xbf16>, vector<192x48xbf16>, vector<4x48xf32> -> vector<4x48xf32>
    %c0_27 = arith.constant 0 : index
    %c0_28 = arith.constant 0 : index
    %52 = vector.load %arg10[%c0_27, %c0_28] : memref<1x48xf32, #tpu.memory_space<vmem>>, vector<1x48xf32>
    %53 = vector.broadcast %52 : vector<1x48xf32> to vector<4x48xf32>
    %54 = arith.addf %51, %53 : vector<4x48xf32>
    %c0_29 = arith.constant 0 : index
    %c0_30 = arith.constant 0 : index
    %c0_31 = arith.constant 0 : index
    %55 = vector.load %arg2[%c0_29, %c0_30, %c0_31] : memref<1x4x48xf32, #tpu.memory_space<vmem>>, vector<1x4x48xf32>
    %56 = vector.shape_cast %55 : vector<1x4x48xf32> to vector<4x48xf32>
    %57 = arith.addf %54, %56 : vector<4x48xf32>
    %c0_32 = arith.constant 0 : index
    %c0_33 = arith.constant 0 : index
    %c0_34 = arith.constant 0 : index
    %58 = vector.load %arg11[%c0_32, %c0_33, %c0_34] : memref<2x1x48xf32, #tpu.memory_space<vmem>>, vector<1x1x48xf32>
    %59 = vector.shape_cast %58 : vector<1x1x48xf32> to vector<1x48xf32>
    %c0_35 = arith.constant 0 : index
    %c0_36 = arith.constant 0 : index
    %c0_37 = arith.constant 0 : index
    %60 = vector.load %arg12[%c0_35, %c0_36, %c0_37] : memref<2x1x48xf32, #tpu.memory_space<vmem>>, vector<1x1x48xf32>
    %61 = vector.shape_cast %60 : vector<1x1x48xf32> to vector<1x48xf32>
    %cst_38 = arith.constant dense<0.000000e+00> : vector<4xf32>
    %62 = vector.multi_reduction <add>, %57, %cst_38 [1] : vector<4x48xf32> to vector<4xf32>
    %63 = vector.shape_cast %62 : vector<4xf32> to vector<4x1xf32>
    %cst_39 = arith.constant 4.800000e+01 : f32
    %64 = vector.broadcast %cst_39 : f32 to vector<4x1xf32>
    %65 = arith.divf %63, %64 : vector<4x1xf32>
    %66 = vector.broadcast %65 : vector<4x1xf32> to vector<4x48xf32>
    %67 = arith.subf %57, %66 : vector<4x48xf32>
    %68 = arith.mulf %67, %67 : vector<4x48xf32>
    %cst_40 = arith.constant dense<0.000000e+00> : vector<4xf32>
    %69 = vector.multi_reduction <add>, %68, %cst_40 [1] : vector<4x48xf32> to vector<4xf32>
    %70 = vector.shape_cast %69 : vector<4xf32> to vector<4x1xf32>
    %cst_41 = arith.constant 4.800000e+01 : f32
    %71 = vector.broadcast %cst_41 : f32 to vector<4x1xf32>
    %72 = arith.divf %70, %71 : vector<4x1xf32>
    %cst_42 = arith.constant 9.99999974E-6 : f32
    %73 = vector.broadcast %cst_42 : f32 to vector<4x1xf32>
    %74 = arith.addf %72, %73 : vector<4x1xf32>
    %75 = math.rsqrt %74 : vector<4x1xf32>
    %76 = vector.broadcast %75 : vector<4x1xf32> to vector<4x48xf32>
    %77 = arith.mulf %67, %76 : vector<4x48xf32>
    %78 = vector.broadcast %59 : vector<1x48xf32> to vector<4x48xf32>
    %79 = arith.mulf %77, %78 : vector<4x48xf32>
    %80 = vector.broadcast %61 : vector<1x48xf32> to vector<4x48xf32>
    %81 = arith.addf %79, %80 : vector<4x48xf32>
    %c0_43 = arith.constant 0 : index
    %c0_44 = arith.constant 0 : index
    %c0_45 = arith.constant 0 : index
    %c0_46 = arith.constant 0 : index
    %c0_47 = arith.constant 0 : index
    %82 = vector.load %arg13[%c0_43, %c0_44, %c0_45, %c0_46, %c0_47] : memref<2x3x2x48x24xbf16, #tpu.memory_space<vmem>>, vector<1x1x1x48x24xbf16>
    %83 = vector.shape_cast %82 : vector<1x1x1x48x24xbf16> to vector<48x24xbf16>
    %84 = arith.truncf %81 : vector<4x48xf32> to vector<4x48xbf16>
    %cst_48 = arith.constant dense<0.000000e+00> : vector<4x24xf32>
    %85 = tpu.matmul %84, %83, %cst_48 {dimension_numbers = #tpu.dot_dimension_numbers<[1], [0], [0], [1], [0, 0, 1, 1], [], []>} : vector<4x48xbf16>, vector<48x24xbf16>, vector<4x24xf32> -> vector<4x24xf32>
    %c0_49 = arith.constant 0 : index
    %c0_50 = arith.constant 0 : index
    %c0_51 = arith.constant 0 : index
    %c0_52 = arith.constant 0 : index
    %c0_53 = arith.constant 0 : index
    %86 = vector.load %arg14[%c0_49, %c0_50, %c0_51, %c0_52, %c0_53] : memref<2x3x2x1x24xf32, #tpu.memory_space<vmem>>, vector<1x1x1x1x24xf32>
    %87 = vector.shape_cast %86 : vector<1x1x1x1x24xf32> to vector<1x24xf32>
    %88 = vector.broadcast %87 : vector<1x24xf32> to vector<4x24xf32>
    %89 = arith.addf %85, %88 : vector<4x24xf32>
    %c0_54 = arith.constant 0 : index
    %c1 = arith.constant 1 : index
    %c0_55 = arith.constant 0 : index
    %c0_56 = arith.constant 0 : index
    %c0_57 = arith.constant 0 : index
    %90 = vector.load %arg13[%c0_54, %c1, %c0_55, %c0_56, %c0_57] : memref<2x3x2x48x24xbf16, #tpu.memory_space<vmem>>, vector<1x1x1x48x24xbf16>
    %91 = vector.shape_cast %90 : vector<1x1x1x48x24xbf16> to vector<48x24xbf16>
    %92 = arith.truncf %81 : vector<4x48xf32> to vector<4x48xbf16>
    %cst_58 = arith.constant dense<0.000000e+00> : vector<4x24xf32>
    %93 = tpu.matmul %92, %91, %cst_58 {dimension_numbers = #tpu.dot_dimension_numbers<[1], [0], [0], [1], [0, 0, 1, 1], [], []>} : vector<4x48xbf16>, vector<48x24xbf16>, vector<4x24xf32> -> vector<4x24xf32>
    %c0_59 = arith.constant 0 : index
    %c1_60 = arith.constant 1 : index
    %c0_61 = arith.constant 0 : index
    %c0_62 = arith.constant 0 : index
    %c0_63 = arith.constant 0 : index
    %94 = vector.load %arg14[%c0_59, %c1_60, %c0_61, %c0_62, %c0_63] : memref<2x3x2x1x24xf32, #tpu.memory_space<vmem>>, vector<1x1x1x1x24xf32>
    %95 = vector.shape_cast %94 : vector<1x1x1x1x24xf32> to vector<1x24xf32>
    %96 = vector.broadcast %95 : vector<1x24xf32> to vector<4x24xf32>
    %97 = arith.addf %93, %96 : vector<4x24xf32>
    %c0_64 = arith.constant 0 : index
    %c2 = arith.constant 2 : index
    %c0_65 = arith.constant 0 : index
    %c0_66 = arith.constant 0 : index
    %c0_67 = arith.constant 0 : index
    %98 = vector.load %arg13[%c0_64, %c2, %c0_65, %c0_66, %c0_67] : memref<2x3x2x48x24xbf16, #tpu.memory_space<vmem>>, vector<1x1x1x48x24xbf16>
    %99 = vector.shape_cast %98 : vector<1x1x1x48x24xbf16> to vector<48x24xbf16>
    %100 = arith.truncf %81 : vector<4x48xf32> to vector<4x48xbf16>
    %cst_68 = arith.constant dense<0.000000e+00> : vector<4x24xf32>
    %101 = tpu.matmul %100, %99, %cst_68 {dimension_numbers = #tpu.dot_dimension_numbers<[1], [0], [0], [1], [0, 0, 1, 1], [], []>} : vector<4x48xbf16>, vector<48x24xbf16>, vector<4x24xf32> -> vector<4x24xf32>
    %c0_69 = arith.constant 0 : index
    %c2_70 = arith.constant 2 : index
    %c0_71 = arith.constant 0 : index
    %c0_72 = arith.constant 0 : index
    %c0_73 = arith.constant 0 : index
    %102 = vector.load %arg14[%c0_69, %c2_70, %c0_71, %c0_72, %c0_73] : memref<2x3x2x1x24xf32, #tpu.memory_space<vmem>>, vector<1x1x1x1x24xf32>
    %103 = vector.shape_cast %102 : vector<1x1x1x1x24xf32> to vector<1x24xf32>
    %104 = vector.broadcast %103 : vector<1x24xf32> to vector<4x24xf32>
    %105 = arith.addf %101, %104 : vector<4x24xf32>
    %106 = arith.truncf %89 : vector<4x24xf32> to vector<4x24xbf16>
    %107 = arith.truncf %97 : vector<4x24xf32> to vector<4x24xbf16>
    %cst_74 = arith.constant dense<0.000000e+00> : vector<4x4xf32>
    %108 = tpu.matmul %106, %107, %cst_74 {dimension_numbers = #tpu.dot_dimension_numbers<[1], [1], [0], [0], [0, 0, 1, 0], [], []>} : vector<4x24xbf16>, vector<4x24xbf16>, vector<4x4xf32> -> vector<4x4xf32>
    %cst_75 = arith.constant 0.204124153 : f32
    %109 = vector.broadcast %cst_75 : f32 to vector<4x4xf32>
    %110 = arith.mulf %108, %109 : vector<4x4xf32>
    %cst_76 = arith.constant dense<0xFF800000> : vector<4xf32>
    %111 = vector.multi_reduction <maximumf>, %110, %cst_76 [1] : vector<4x4xf32> to vector<4xf32>
    %112 = vector.shape_cast %111 : vector<4xf32> to vector<4x1xf32>
    %113 = vector.broadcast %112 : vector<4x1xf32> to vector<4x4xf32>
    %114 = arith.subf %110, %113 : vector<4x4xf32>
    %115 = math.exp %114 : vector<4x4xf32>
    %cst_77 = arith.constant dense<0.000000e+00> : vector<4xf32>
    %116 = vector.multi_reduction <add>, %115, %cst_77 [1] : vector<4x4xf32> to vector<4xf32>
    %117 = vector.shape_cast %116 : vector<4xf32> to vector<4x1xf32>
    %118 = tpu.reciprocal %117 {approx = true} : vector<4x1xf32> -> vector<4x1xf32>
    %119 = vector.broadcast %118 : vector<4x1xf32> to vector<4x4xf32>
    %120 = arith.mulf %115, %119 : vector<4x4xf32>
    %121 = arith.truncf %120 : vector<4x4xf32> to vector<4x4xbf16>
    %122 = arith.truncf %105 : vector<4x24xf32> to vector<4x24xbf16>
    %cst_78 = arith.constant dense<0.000000e+00> : vector<4x24xf32>
    %123 = tpu.matmul %121, %122, %cst_78 {dimension_numbers = #tpu.dot_dimension_numbers<[1], [0], [0], [1], [0, 0, 1, 1], [], []>} : vector<4x4xbf16>, vector<4x24xbf16>, vector<4x24xf32> -> vector<4x24xf32>
    %c0_79 = arith.constant 0 : index
    %c0_80 = arith.constant 0 : index
    %c0_81 = arith.constant 0 : index
    %c0_82 = arith.constant 0 : index
    %124 = vector.load %arg15[%c0_79, %c0_80, %c0_81, %c0_82] : memref<2x2x24x48xbf16, #tpu.memory_space<vmem>>, vector<1x1x24x48xbf16>
    %125 = vector.shape_cast %124 : vector<1x1x24x48xbf16> to vector<24x48xbf16>
    %126 = arith.truncf %123 : vector<4x24xf32> to vector<4x24xbf16>
    %cst_83 = arith.constant dense<0.000000e+00> : vector<4x48xf32>
    %127 = tpu.matmul %126, %125, %cst_83 {dimension_numbers = #tpu.dot_dimension_numbers<[1], [0], [0], [1], [0, 0, 1, 1], [], []>} : vector<4x24xbf16>, vector<24x48xbf16>, vector<4x48xf32> -> vector<4x48xf32>
    %c0_84 = arith.constant 0 : index
    %c0_85 = arith.constant 0 : index
    %c1_86 = arith.constant 1 : index
    %c0_87 = arith.constant 0 : index
    %c0_88 = arith.constant 0 : index
    %128 = vector.load %arg13[%c0_84, %c0_85, %c1_86, %c0_87, %c0_88] : memref<2x3x2x48x24xbf16, #tpu.memory_space<vmem>>, vector<1x1x1x48x24xbf16>
    %129 = vector.shape_cast %128 : vector<1x1x1x48x24xbf16> to vector<48x24xbf16>
    %130 = arith.truncf %81 : vector<4x48xf32> to vector<4x48xbf16>
    %cst_89 = arith.constant dense<0.000000e+00> : vector<4x24xf32>
    %131 = tpu.matmul %130, %129, %cst_89 {dimension_numbers = #tpu.dot_dimension_numbers<[1], [0], [0], [1], [0, 0, 1, 1], [], []>} : vector<4x48xbf16>, vector<48x24xbf16>, vector<4x24xf32> -> vector<4x24xf32>
    %c0_90 = arith.constant 0 : index
    %c0_91 = arith.constant 0 : index
    %c1_92 = arith.constant 1 : index
    %c0_93 = arith.constant 0 : index
    %c0_94 = arith.constant 0 : index
    %132 = vector.load %arg14[%c0_90, %c0_91, %c1_92, %c0_93, %c0_94] : memref<2x3x2x1x24xf32, #tpu.memory_space<vmem>>, vector<1x1x1x1x24xf32>
    %133 = vector.shape_cast %132 : vector<1x1x1x1x24xf32> to vector<1x24xf32>
    %134 = vector.broadcast %133 : vector<1x24xf32> to vector<4x24xf32>
    %135 = arith.addf %131, %134 : vector<4x24xf32>
    %c0_95 = arith.constant 0 : index
    %c1_96 = arith.constant 1 : index
    %c1_97 = arith.constant 1 : index
    %c0_98 = arith.constant 0 : index
    %c0_99 = arith.constant 0 : index
    %136 = vector.load %arg13[%c0_95, %c1_96, %c1_97, %c0_98, %c0_99] : memref<2x3x2x48x24xbf16, #tpu.memory_space<vmem>>, vector<1x1x1x48x24xbf16>
    %137 = vector.shape_cast %136 : vector<1x1x1x48x24xbf16> to vector<48x24xbf16>
    %138 = arith.truncf %81 : vector<4x48xf32> to vector<4x48xbf16>
    %cst_100 = arith.constant dense<0.000000e+00> : vector<4x24xf32>
    %139 = tpu.matmul %138, %137, %cst_100 {dimension_numbers = #tpu.dot_dimension_numbers<[1], [0], [0], [1], [0, 0, 1, 1], [], []>} : vector<4x48xbf16>, vector<48x24xbf16>, vector<4x24xf32> -> vector<4x24xf32>
    %c0_101 = arith.constant 0 : index
    %c1_102 = arith.constant 1 : index
    %c1_103 = arith.constant 1 : index
    %c0_104 = arith.constant 0 : index
    %c0_105 = arith.constant 0 : index
    %140 = vector.load %arg14[%c0_101, %c1_102, %c1_103, %c0_104, %c0_105] : memref<2x3x2x1x24xf32, #tpu.memory_space<vmem>>, vector<1x1x1x1x24xf32>
    %141 = vector.shape_cast %140 : vector<1x1x1x1x24xf32> to vector<1x24xf32>
    %142 = vector.broadcast %141 : vector<1x24xf32> to vector<4x24xf32>
    %143 = arith.addf %139, %142 : vector<4x24xf32>
    %c0_106 = arith.constant 0 : index
    %c2_107 = arith.constant 2 : index
    %c1_108 = arith.constant 1 : index
    %c0_109 = arith.constant 0 : index
    %c0_110 = arith.constant 0 : index
    %144 = vector.load %arg13[%c0_106, %c2_107, %c1_108, %c0_109, %c0_110] : memref<2x3x2x48x24xbf16, #tpu.memory_space<vmem>>, vector<1x1x1x48x24xbf16>
    %145 = vector.shape_cast %144 : vector<1x1x1x48x24xbf16> to vector<48x24xbf16>
    %146 = arith.truncf %81 : vector<4x48xf32> to vector<4x48xbf16>
    %cst_111 = arith.constant dense<0.000000e+00> : vector<4x24xf32>
    %147 = tpu.matmul %146, %145, %cst_111 {dimension_numbers = #tpu.dot_dimension_numbers<[1], [0], [0], [1], [0, 0, 1, 1], [], []>} : vector<4x48xbf16>, vector<48x24xbf16>, vector<4x24xf32> -> vector<4x24xf32>
    %c0_112 = arith.constant 0 : index
    %c2_113 = arith.constant 2 : index
    %c1_114 = arith.constant 1 : index
    %c0_115 = arith.constant 0 : index
    %c0_116 = arith.constant 0 : index
    %148 = vector.load %arg14[%c0_112, %c2_113, %c1_114, %c0_115, %c0_116] : memref<2x3x2x1x24xf32, #tpu.memory_space<vmem>>, vector<1x1x1x1x24xf32>
    %149 = vector.shape_cast %148 : vector<1x1x1x1x24xf32> to vector<1x24xf32>
    %150 = vector.broadcast %149 : vector<1x24xf32> to vector<4x24xf32>
    %151 = arith.addf %147, %150 : vector<4x24xf32>
    %152 = arith.truncf %135 : vector<4x24xf32> to vector<4x24xbf16>
    %153 = arith.truncf %143 : vector<4x24xf32> to vector<4x24xbf16>
    %cst_117 = arith.constant dense<0.000000e+00> : vector<4x4xf32>
    %154 = tpu.matmul %152, %153, %cst_117 {dimension_numbers = #tpu.dot_dimension_numbers<[1], [1], [0], [0], [0, 0, 1, 0], [], []>} : vector<4x24xbf16>, vector<4x24xbf16>, vector<4x4xf32> -> vector<4x4xf32>
    %cst_118 = arith.constant 0.204124153 : f32
    %155 = vector.broadcast %cst_118 : f32 to vector<4x4xf32>
    %156 = arith.mulf %154, %155 : vector<4x4xf32>
    %cst_119 = arith.constant dense<0xFF800000> : vector<4xf32>
    %157 = vector.multi_reduction <maximumf>, %156, %cst_119 [1] : vector<4x4xf32> to vector<4xf32>
    %158 = vector.shape_cast %157 : vector<4xf32> to vector<4x1xf32>
    %159 = vector.broadcast %158 : vector<4x1xf32> to vector<4x4xf32>
    %160 = arith.subf %156, %159 : vector<4x4xf32>
    %161 = math.exp %160 : vector<4x4xf32>
    %cst_120 = arith.constant dense<0.000000e+00> : vector<4xf32>
    %162 = vector.multi_reduction <add>, %161, %cst_120 [1] : vector<4x4xf32> to vector<4xf32>
    %163 = vector.shape_cast %162 : vector<4xf32> to vector<4x1xf32>
    %164 = tpu.reciprocal %163 {approx = true} : vector<4x1xf32> -> vector<4x1xf32>
    %165 = vector.broadcast %164 : vector<4x1xf32> to vector<4x4xf32>
    %166 = arith.mulf %161, %165 : vector<4x4xf32>
    %167 = arith.truncf %166 : vector<4x4xf32> to vector<4x4xbf16>
    %168 = arith.truncf %151 : vector<4x24xf32> to vector<4x24xbf16>
    %cst_121 = arith.constant dense<0.000000e+00> : vector<4x24xf32>
    %169 = tpu.matmul %167, %168, %cst_121 {dimension_numbers = #tpu.dot_dimension_numbers<[1], [0], [0], [1], [0, 0, 1, 1], [], []>} : vector<4x4xbf16>, vector<4x24xbf16>, vector<4x24xf32> -> vector<4x24xf32>
    %c0_122 = arith.constant 0 : index
    %c1_123 = arith.constant 1 : index
    %c0_124 = arith.constant 0 : index
    %c0_125 = arith.constant 0 : index
    %170 = vector.load %arg15[%c0_122, %c1_123, %c0_124, %c0_125] : memref<2x2x24x48xbf16, #tpu.memory_space<vmem>>, vector<1x1x24x48xbf16>
    %171 = vector.shape_cast %170 : vector<1x1x24x48xbf16> to vector<24x48xbf16>
    %172 = arith.truncf %169 : vector<4x24xf32> to vector<4x24xbf16>
    %cst_126 = arith.constant dense<0.000000e+00> : vector<4x48xf32>
    %173 = tpu.matmul %172, %171, %cst_126 {dimension_numbers = #tpu.dot_dimension_numbers<[1], [0], [0], [1], [0, 0, 1, 1], [], []>} : vector<4x24xbf16>, vector<24x48xbf16>, vector<4x48xf32> -> vector<4x48xf32>
    %174 = arith.addf %127, %173 : vector<4x48xf32>
    %c0_127 = arith.constant 0 : index
    %c0_128 = arith.constant 0 : index
    %c0_129 = arith.constant 0 : index
    %175 = vector.load %arg16[%c0_127, %c0_128, %c0_129] : memref<2x1x48xf32, #tpu.memory_space<vmem>>, vector<1x1x48xf32>
    %176 = vector.shape_cast %175 : vector<1x1x48xf32> to vector<1x48xf32>
    %177 = vector.broadcast %176 : vector<1x48xf32> to vector<4x48xf32>
    %178 = arith.addf %174, %177 : vector<4x48xf32>
    %179 = arith.addf %57, %178 : vector<4x48xf32>
    %c0_130 = arith.constant 0 : index
    %c0_131 = arith.constant 0 : index
    %c0_132 = arith.constant 0 : index
    %180 = vector.load %arg17[%c0_130, %c0_131, %c0_132] : memref<2x1x48xf32, #tpu.memory_space<vmem>>, vector<1x1x48xf32>
    %181 = vector.shape_cast %180 : vector<1x1x48xf32> to vector<1x48xf32>
    %c0_133 = arith.constant 0 : index
    %c0_134 = arith.constant 0 : index
    %c0_135 = arith.constant 0 : index
    %182 = vector.load %arg18[%c0_133, %c0_134, %c0_135] : memref<2x1x48xf32, #tpu.memory_space<vmem>>, vector<1x1x48xf32>
    %183 = vector.shape_cast %182 : vector<1x1x48xf32> to vector<1x48xf32>
    %cst_136 = arith.constant dense<0.000000e+00> : vector<4xf32>
    %184 = vector.multi_reduction <add>, %179, %cst_136 [1] : vector<4x48xf32> to vector<4xf32>
    %185 = vector.shape_cast %184 : vector<4xf32> to vector<4x1xf32>
    %cst_137 = arith.constant 4.800000e+01 : f32
    %186 = vector.broadcast %cst_137 : f32 to vector<4x1xf32>
    %187 = arith.divf %185, %186 : vector<4x1xf32>
    %188 = vector.broadcast %187 : vector<4x1xf32> to vector<4x48xf32>
    %189 = arith.subf %179, %188 : vector<4x48xf32>
    %190 = arith.mulf %189, %189 : vector<4x48xf32>
    %cst_138 = arith.constant dense<0.000000e+00> : vector<4xf32>
    %191 = vector.multi_reduction <add>, %190, %cst_138 [1] : vector<4x48xf32> to vector<4xf32>
    %192 = vector.shape_cast %191 : vector<4xf32> to vector<4x1xf32>
    %cst_139 = arith.constant 4.800000e+01 : f32
    %193 = vector.broadcast %cst_139 : f32 to vector<4x1xf32>
    %194 = arith.divf %192, %193 : vector<4x1xf32>
    %cst_140 = arith.constant 9.99999974E-6 : f32
    %195 = vector.broadcast %cst_140 : f32 to vector<4x1xf32>
    %196 = arith.addf %194, %195 : vector<4x1xf32>
    %197 = math.rsqrt %196 : vector<4x1xf32>
    %198 = vector.broadcast %197 : vector<4x1xf32> to vector<4x48xf32>
    %199 = arith.mulf %189, %198 : vector<4x48xf32>
    %200 = vector.broadcast %181 : vector<1x48xf32> to vector<4x48xf32>
    %201 = arith.mulf %199, %200 : vector<4x48xf32>
    %202 = vector.broadcast %183 : vector<1x48xf32> to vector<4x48xf32>
    %203 = arith.addf %201, %202 : vector<4x48xf32>
    %c0_141 = arith.constant 0 : index
    %c0_142 = arith.constant 0 : index
    %c0_143 = arith.constant 0 : index
    %204 = vector.load %arg19[%c0_141, %c0_142, %c0_143] : memref<2x48x192xbf16, #tpu.memory_space<vmem>>, vector<1x48x192xbf16>
    %205 = vector.shape_cast %204 : vector<1x48x192xbf16> to vector<48x192xbf16>
    %206 = arith.truncf %203 : vector<4x48xf32> to vector<4x48xbf16>
    %cst_144 = arith.constant dense<0.000000e+00> : vector<4x192xf32>
    %207 = tpu.matmul %206, %205, %cst_144 {dimension_numbers = #tpu.dot_dimension_numbers<[1], [0], [0], [1], [0, 0, 1, 1], [], []>} : vector<4x48xbf16>, vector<48x192xbf16>, vector<4x192xf32> -> vector<4x192xf32>
    %c0_145 = arith.constant 0 : index
    %c0_146 = arith.constant 0 : index
    %c0_147 = arith.constant 0 : index
    %208 = vector.load %arg20[%c0_145, %c0_146, %c0_147] : memref<2x1x192xf32, #tpu.memory_space<vmem>>, vector<1x1x192xf32>
    %209 = vector.shape_cast %208 : vector<1x1x192xf32> to vector<1x192xf32>
    %210 = vector.broadcast %209 : vector<1x192xf32> to vector<4x192xf32>
    %211 = arith.addf %207, %210 : vector<4x192xf32>
    %cst_148 = arith.constant 5.000000e-01 : f32
    %212 = vector.broadcast %cst_148 : f32 to vector<4x192xf32>
    %213 = arith.mulf %212, %211 : vector<4x192xf32>
    %214 = arith.mulf %211, %211 : vector<4x192xf32>
    %215 = arith.mulf %214, %211 : vector<4x192xf32>
    %cst_149 = arith.constant 4.471500e-02 : f32
    %216 = vector.broadcast %cst_149 : f32 to vector<4x192xf32>
    %217 = arith.mulf %216, %215 : vector<4x192xf32>
    %218 = arith.addf %211, %217 : vector<4x192xf32>
    %cst_150 = arith.constant 0.797884583 : f32
    %219 = vector.broadcast %cst_150 : f32 to vector<4x192xf32>
    %220 = arith.mulf %219, %218 : vector<4x192xf32>
    %221 = math.tanh %220 : vector<4x192xf32>
    %cst_151 = arith.constant 1.000000e+00 : f32
    %222 = vector.broadcast %cst_151 : f32 to vector<4x192xf32>
    %223 = arith.addf %222, %221 : vector<4x192xf32>
    %224 = arith.mulf %213, %223 : vector<4x192xf32>
    %c0_152 = arith.constant 0 : index
    %c0_153 = arith.constant 0 : index
    %c0_154 = arith.constant 0 : index
    %225 = vector.load %arg21[%c0_152, %c0_153, %c0_154] : memref<2x192x48xbf16, #tpu.memory_space<vmem>>, vector<1x192x48xbf16>
    %226 = vector.shape_cast %225 : vector<1x192x48xbf16> to vector<192x48xbf16>
    %227 = arith.truncf %224 : vector<4x192xf32> to vector<4x192xbf16>
    %cst_155 = arith.constant dense<0.000000e+00> : vector<4x48xf32>
    %228 = tpu.matmul %227, %226, %cst_155 {dimension_numbers = #tpu.dot_dimension_numbers<[1], [0], [0], [1], [0, 0, 1, 1], [], []>} : vector<4x192xbf16>, vector<192x48xbf16>, vector<4x48xf32> -> vector<4x48xf32>
    %c0_156 = arith.constant 0 : index
    %c0_157 = arith.constant 0 : index
    %c0_158 = arith.constant 0 : index
    %229 = vector.load %arg22[%c0_156, %c0_157, %c0_158] : memref<2x1x48xf32, #tpu.memory_space<vmem>>, vector<1x1x48xf32>
    %230 = vector.shape_cast %229 : vector<1x1x48xf32> to vector<1x48xf32>
    %231 = vector.broadcast %230 : vector<1x48xf32> to vector<4x48xf32>
    %232 = arith.addf %228, %231 : vector<4x48xf32>
    %233 = arith.addf %179, %232 : vector<4x48xf32>
    %c1_159 = arith.constant 1 : index
    %c0_160 = arith.constant 0 : index
    %c0_161 = arith.constant 0 : index
    %234 = vector.load %arg11[%c1_159, %c0_160, %c0_161] : memref<2x1x48xf32, #tpu.memory_space<vmem>>, vector<1x1x48xf32>
    %235 = vector.shape_cast %234 : vector<1x1x48xf32> to vector<1x48xf32>
    %c1_162 = arith.constant 1 : index
    %c0_163 = arith.constant 0 : index
    %c0_164 = arith.constant 0 : index
    %236 = vector.load %arg12[%c1_162, %c0_163, %c0_164] : memref<2x1x48xf32, #tpu.memory_space<vmem>>, vector<1x1x48xf32>
    %237 = vector.shape_cast %236 : vector<1x1x48xf32> to vector<1x48xf32>
    %cst_165 = arith.constant dense<0.000000e+00> : vector<4xf32>
    %238 = vector.multi_reduction <add>, %233, %cst_165 [1] : vector<4x48xf32> to vector<4xf32>
    %239 = vector.shape_cast %238 : vector<4xf32> to vector<4x1xf32>
    %cst_166 = arith.constant 4.800000e+01 : f32
    %240 = vector.broadcast %cst_166 : f32 to vector<4x1xf32>
    %241 = arith.divf %239, %240 : vector<4x1xf32>
    %242 = vector.broadcast %241 : vector<4x1xf32> to vector<4x48xf32>
    %243 = arith.subf %233, %242 : vector<4x48xf32>
    %244 = arith.mulf %243, %243 : vector<4x48xf32>
    %cst_167 = arith.constant dense<0.000000e+00> : vector<4xf32>
    %245 = vector.multi_reduction <add>, %244, %cst_167 [1] : vector<4x48xf32> to vector<4xf32>
    %246 = vector.shape_cast %245 : vector<4xf32> to vector<4x1xf32>
    %cst_168 = arith.constant 4.800000e+01 : f32
    %247 = vector.broadcast %cst_168 : f32 to vector<4x1xf32>
    %248 = arith.divf %246, %247 : vector<4x1xf32>
    %cst_169 = arith.constant 9.99999974E-6 : f32
    %249 = vector.broadcast %cst_169 : f32 to vector<4x1xf32>
    %250 = arith.addf %248, %249 : vector<4x1xf32>
    %251 = math.rsqrt %250 : vector<4x1xf32>
    %252 = vector.broadcast %251 : vector<4x1xf32> to vector<4x48xf32>
    %253 = arith.mulf %243, %252 : vector<4x48xf32>
    %254 = vector.broadcast %235 : vector<1x48xf32> to vector<4x48xf32>
    %255 = arith.mulf %253, %254 : vector<4x48xf32>
    %256 = vector.broadcast %237 : vector<1x48xf32> to vector<4x48xf32>
    %257 = arith.addf %255, %256 : vector<4x48xf32>
    %c1_170 = arith.constant 1 : index
    %c0_171 = arith.constant 0 : index
    %c0_172 = arith.constant 0 : index
    %c0_173 = arith.constant 0 : index
    %c0_174 = arith.constant 0 : index
    %258 = vector.load %arg13[%c1_170, %c0_171, %c0_172, %c0_173, %c0_174] : memref<2x3x2x48x24xbf16, #tpu.memory_space<vmem>>, vector<1x1x1x48x24xbf16>
    %259 = vector.shape_cast %258 : vector<1x1x1x48x24xbf16> to vector<48x24xbf16>
    %260 = arith.truncf %257 : vector<4x48xf32> to vector<4x48xbf16>
    %cst_175 = arith.constant dense<0.000000e+00> : vector<4x24xf32>
    %261 = tpu.matmul %260, %259, %cst_175 {dimension_numbers = #tpu.dot_dimension_numbers<[1], [0], [0], [1], [0, 0, 1, 1], [], []>} : vector<4x48xbf16>, vector<48x24xbf16>, vector<4x24xf32> -> vector<4x24xf32>
    %c1_176 = arith.constant 1 : index
    %c0_177 = arith.constant 0 : index
    %c0_178 = arith.constant 0 : index
    %c0_179 = arith.constant 0 : index
    %c0_180 = arith.constant 0 : index
    %262 = vector.load %arg14[%c1_176, %c0_177, %c0_178, %c0_179, %c0_180] : memref<2x3x2x1x24xf32, #tpu.memory_space<vmem>>, vector<1x1x1x1x24xf32>
    %263 = vector.shape_cast %262 : vector<1x1x1x1x24xf32> to vector<1x24xf32>
    %264 = vector.broadcast %263 : vector<1x24xf32> to vector<4x24xf32>
    %265 = arith.addf %261, %264 : vector<4x24xf32>
    %c1_181 = arith.constant 1 : index
    %c1_182 = arith.constant 1 : index
    %c0_183 = arith.constant 0 : index
    %c0_184 = arith.constant 0 : index
    %c0_185 = arith.constant 0 : index
    %266 = vector.load %arg13[%c1_181, %c1_182, %c0_183, %c0_184, %c0_185] : memref<2x3x2x48x24xbf16, #tpu.memory_space<vmem>>, vector<1x1x1x48x24xbf16>
    %267 = vector.shape_cast %266 : vector<1x1x1x48x24xbf16> to vector<48x24xbf16>
    %268 = arith.truncf %257 : vector<4x48xf32> to vector<4x48xbf16>
    %cst_186 = arith.constant dense<0.000000e+00> : vector<4x24xf32>
    %269 = tpu.matmul %268, %267, %cst_186 {dimension_numbers = #tpu.dot_dimension_numbers<[1], [0], [0], [1], [0, 0, 1, 1], [], []>} : vector<4x48xbf16>, vector<48x24xbf16>, vector<4x24xf32> -> vector<4x24xf32>
    %c1_187 = arith.constant 1 : index
    %c1_188 = arith.constant 1 : index
    %c0_189 = arith.constant 0 : index
    %c0_190 = arith.constant 0 : index
    %c0_191 = arith.constant 0 : index
    %270 = vector.load %arg14[%c1_187, %c1_188, %c0_189, %c0_190, %c0_191] : memref<2x3x2x1x24xf32, #tpu.memory_space<vmem>>, vector<1x1x1x1x24xf32>
    %271 = vector.shape_cast %270 : vector<1x1x1x1x24xf32> to vector<1x24xf32>
    %272 = vector.broadcast %271 : vector<1x24xf32> to vector<4x24xf32>
    %273 = arith.addf %269, %272 : vector<4x24xf32>
    %c1_192 = arith.constant 1 : index
    %c2_193 = arith.constant 2 : index
    %c0_194 = arith.constant 0 : index
    %c0_195 = arith.constant 0 : index
    %c0_196 = arith.constant 0 : index
    %274 = vector.load %arg13[%c1_192, %c2_193, %c0_194, %c0_195, %c0_196] : memref<2x3x2x48x24xbf16, #tpu.memory_space<vmem>>, vector<1x1x1x48x24xbf16>
    %275 = vector.shape_cast %274 : vector<1x1x1x48x24xbf16> to vector<48x24xbf16>
    %276 = arith.truncf %257 : vector<4x48xf32> to vector<4x48xbf16>
    %cst_197 = arith.constant dense<0.000000e+00> : vector<4x24xf32>
    %277 = tpu.matmul %276, %275, %cst_197 {dimension_numbers = #tpu.dot_dimension_numbers<[1], [0], [0], [1], [0, 0, 1, 1], [], []>} : vector<4x48xbf16>, vector<48x24xbf16>, vector<4x24xf32> -> vector<4x24xf32>
    %c1_198 = arith.constant 1 : index
    %c2_199 = arith.constant 2 : index
    %c0_200 = arith.constant 0 : index
    %c0_201 = arith.constant 0 : index
    %c0_202 = arith.constant 0 : index
    %278 = vector.load %arg14[%c1_198, %c2_199, %c0_200, %c0_201, %c0_202] : memref<2x3x2x1x24xf32, #tpu.memory_space<vmem>>, vector<1x1x1x1x24xf32>
    %279 = vector.shape_cast %278 : vector<1x1x1x1x24xf32> to vector<1x24xf32>
    %280 = vector.broadcast %279 : vector<1x24xf32> to vector<4x24xf32>
    %281 = arith.addf %277, %280 : vector<4x24xf32>
    %282 = arith.truncf %265 : vector<4x24xf32> to vector<4x24xbf16>
    %283 = arith.truncf %273 : vector<4x24xf32> to vector<4x24xbf16>
    %cst_203 = arith.constant dense<0.000000e+00> : vector<4x4xf32>
    %284 = tpu.matmul %282, %283, %cst_203 {dimension_numbers = #tpu.dot_dimension_numbers<[1], [1], [0], [0], [0, 0, 1, 0], [], []>} : vector<4x24xbf16>, vector<4x24xbf16>, vector<4x4xf32> -> vector<4x4xf32>
    %cst_204 = arith.constant 0.204124153 : f32
    %285 = vector.broadcast %cst_204 : f32 to vector<4x4xf32>
    %286 = arith.mulf %284, %285 : vector<4x4xf32>
    %cst_205 = arith.constant dense<0xFF800000> : vector<4xf32>
    %287 = vector.multi_reduction <maximumf>, %286, %cst_205 [1] : vector<4x4xf32> to vector<4xf32>
    %288 = vector.shape_cast %287 : vector<4xf32> to vector<4x1xf32>
    %289 = vector.broadcast %288 : vector<4x1xf32> to vector<4x4xf32>
    %290 = arith.subf %286, %289 : vector<4x4xf32>
    %291 = math.exp %290 : vector<4x4xf32>
    %cst_206 = arith.constant dense<0.000000e+00> : vector<4xf32>
    %292 = vector.multi_reduction <add>, %291, %cst_206 [1] : vector<4x4xf32> to vector<4xf32>
    %293 = vector.shape_cast %292 : vector<4xf32> to vector<4x1xf32>
    %294 = tpu.reciprocal %293 {approx = true} : vector<4x1xf32> -> vector<4x1xf32>
    %295 = vector.broadcast %294 : vector<4x1xf32> to vector<4x4xf32>
    %296 = arith.mulf %291, %295 : vector<4x4xf32>
    %297 = arith.truncf %296 : vector<4x4xf32> to vector<4x4xbf16>
    %298 = arith.truncf %281 : vector<4x24xf32> to vector<4x24xbf16>
    %cst_207 = arith.constant dense<0.000000e+00> : vector<4x24xf32>
    %299 = tpu.matmul %297, %298, %cst_207 {dimension_numbers = #tpu.dot_dimension_numbers<[1], [0], [0], [1], [0, 0, 1, 1], [], []>} : vector<4x4xbf16>, vector<4x24xbf16>, vector<4x24xf32> -> vector<4x24xf32>
    %c1_208 = arith.constant 1 : index
    %c0_209 = arith.constant 0 : index
    %c0_210 = arith.constant 0 : index
    %c0_211 = arith.constant 0 : index
    %300 = vector.load %arg15[%c1_208, %c0_209, %c0_210, %c0_211] : memref<2x2x24x48xbf16, #tpu.memory_space<vmem>>, vector<1x1x24x48xbf16>
    %301 = vector.shape_cast %300 : vector<1x1x24x48xbf16> to vector<24x48xbf16>
    %302 = arith.truncf %299 : vector<4x24xf32> to vector<4x24xbf16>
    %cst_212 = arith.constant dense<0.000000e+00> : vector<4x48xf32>
    %303 = tpu.matmul %302, %301, %cst_212 {dimension_numbers = #tpu.dot_dimension_numbers<[1], [0], [0], [1], [0, 0, 1, 1], [], []>} : vector<4x24xbf16>, vector<24x48xbf16>, vector<4x48xf32> -> vector<4x48xf32>
    %c1_213 = arith.constant 1 : index
    %c0_214 = arith.constant 0 : index
    %c1_215 = arith.constant 1 : index
    %c0_216 = arith.constant 0 : index
    %c0_217 = arith.constant 0 : index
    %304 = vector.load %arg13[%c1_213, %c0_214, %c1_215, %c0_216, %c0_217] : memref<2x3x2x48x24xbf16, #tpu.memory_space<vmem>>, vector<1x1x1x48x24xbf16>
    %305 = vector.shape_cast %304 : vector<1x1x1x48x24xbf16> to vector<48x24xbf16>
    %306 = arith.truncf %257 : vector<4x48xf32> to vector<4x48xbf16>
    %cst_218 = arith.constant dense<0.000000e+00> : vector<4x24xf32>
    %307 = tpu.matmul %306, %305, %cst_218 {dimension_numbers = #tpu.dot_dimension_numbers<[1], [0], [0], [1], [0, 0, 1, 1], [], []>} : vector<4x48xbf16>, vector<48x24xbf16>, vector<4x24xf32> -> vector<4x24xf32>
    %c1_219 = arith.constant 1 : index
    %c0_220 = arith.constant 0 : index
    %c1_221 = arith.constant 1 : index
    %c0_222 = arith.constant 0 : index
    %c0_223 = arith.constant 0 : index
    %308 = vector.load %arg14[%c1_219, %c0_220, %c1_221, %c0_222, %c0_223] : memref<2x3x2x1x24xf32, #tpu.memory_space<vmem>>, vector<1x1x1x1x24xf32>
    %309 = vector.shape_cast %308 : vector<1x1x1x1x24xf32> to vector<1x24xf32>
    %310 = vector.broadcast %309 : vector<1x24xf32> to vector<4x24xf32>
    %311 = arith.addf %307, %310 : vector<4x24xf32>
    %c1_224 = arith.constant 1 : index
    %c1_225 = arith.constant 1 : index
    %c1_226 = arith.constant 1 : index
    %c0_227 = arith.constant 0 : index
    %c0_228 = arith.constant 0 : index
    %312 = vector.load %arg13[%c1_224, %c1_225, %c1_226, %c0_227, %c0_228] : memref<2x3x2x48x24xbf16, #tpu.memory_space<vmem>>, vector<1x1x1x48x24xbf16>
    %313 = vector.shape_cast %312 : vector<1x1x1x48x24xbf16> to vector<48x24xbf16>
    %314 = arith.truncf %257 : vector<4x48xf32> to vector<4x48xbf16>
    %cst_229 = arith.constant dense<0.000000e+00> : vector<4x24xf32>
    %315 = tpu.matmul %314, %313, %cst_229 {dimension_numbers = #tpu.dot_dimension_numbers<[1], [0], [0], [1], [0, 0, 1, 1], [], []>} : vector<4x48xbf16>, vector<48x24xbf16>, vector<4x24xf32> -> vector<4x24xf32>
    %c1_230 = arith.constant 1 : index
    %c1_231 = arith.constant 1 : index
    %c1_232 = arith.constant 1 : index
    %c0_233 = arith.constant 0 : index
    %c0_234 = arith.constant 0 : index
    %316 = vector.load %arg14[%c1_230, %c1_231, %c1_232, %c0_233, %c0_234] : memref<2x3x2x1x24xf32, #tpu.memory_space<vmem>>, vector<1x1x1x1x24xf32>
    %317 = vector.shape_cast %316 : vector<1x1x1x1x24xf32> to vector<1x24xf32>
    %318 = vector.broadcast %317 : vector<1x24xf32> to vector<4x24xf32>
    %319 = arith.addf %315, %318 : vector<4x24xf32>
    %c1_235 = arith.constant 1 : index
    %c2_236 = arith.constant 2 : index
    %c1_237 = arith.constant 1 : index
    %c0_238 = arith.constant 0 : index
    %c0_239 = arith.constant 0 : index
    %320 = vector.load %arg13[%c1_235, %c2_236, %c1_237, %c0_238, %c0_239] : memref<2x3x2x48x24xbf16, #tpu.memory_space<vmem>>, vector<1x1x1x48x24xbf16>
    %321 = vector.shape_cast %320 : vector<1x1x1x48x24xbf16> to vector<48x24xbf16>
    %322 = arith.truncf %257 : vector<4x48xf32> to vector<4x48xbf16>
    %cst_240 = arith.constant dense<0.000000e+00> : vector<4x24xf32>
    %323 = tpu.matmul %322, %321, %cst_240 {dimension_numbers = #tpu.dot_dimension_numbers<[1], [0], [0], [1], [0, 0, 1, 1], [], []>} : vector<4x48xbf16>, vector<48x24xbf16>, vector<4x24xf32> -> vector<4x24xf32>
    %c1_241 = arith.constant 1 : index
    %c2_242 = arith.constant 2 : index
    %c1_243 = arith.constant 1 : index
    %c0_244 = arith.constant 0 : index
    %c0_245 = arith.constant 0 : index
    %324 = vector.load %arg14[%c1_241, %c2_242, %c1_243, %c0_244, %c0_245] : memref<2x3x2x1x24xf32, #tpu.memory_space<vmem>>, vector<1x1x1x1x24xf32>
    %325 = vector.shape_cast %324 : vector<1x1x1x1x24xf32> to vector<1x24xf32>
    %326 = vector.broadcast %325 : vector<1x24xf32> to vector<4x24xf32>
    %327 = arith.addf %323, %326 : vector<4x24xf32>
    %328 = arith.truncf %311 : vector<4x24xf32> to vector<4x24xbf16>
    %329 = arith.truncf %319 : vector<4x24xf32> to vector<4x24xbf16>
    %cst_246 = arith.constant dense<0.000000e+00> : vector<4x4xf32>
    %330 = tpu.matmul %328, %329, %cst_246 {dimension_numbers = #tpu.dot_dimension_numbers<[1], [1], [0], [0], [0, 0, 1, 0], [], []>} : vector<4x24xbf16>, vector<4x24xbf16>, vector<4x4xf32> -> vector<4x4xf32>
    %cst_247 = arith.constant 0.204124153 : f32
    %331 = vector.broadcast %cst_247 : f32 to vector<4x4xf32>
    %332 = arith.mulf %330, %331 : vector<4x4xf32>
    %cst_248 = arith.constant dense<0xFF800000> : vector<4xf32>
    %333 = vector.multi_reduction <maximumf>, %332, %cst_248 [1] : vector<4x4xf32> to vector<4xf32>
    %334 = vector.shape_cast %333 : vector<4xf32> to vector<4x1xf32>
    %335 = vector.broadcast %334 : vector<4x1xf32> to vector<4x4xf32>
    %336 = arith.subf %332, %335 : vector<4x4xf32>
    %337 = math.exp %336 : vector<4x4xf32>
    %cst_249 = arith.constant dense<0.000000e+00> : vector<4xf32>
    %338 = vector.multi_reduction <add>, %337, %cst_249 [1] : vector<4x4xf32> to vector<4xf32>
    %339 = vector.shape_cast %338 : vector<4xf32> to vector<4x1xf32>
    %340 = tpu.reciprocal %339 {approx = true} : vector<4x1xf32> -> vector<4x1xf32>
    %341 = vector.broadcast %340 : vector<4x1xf32> to vector<4x4xf32>
    %342 = arith.mulf %337, %341 : vector<4x4xf32>
    %343 = arith.truncf %342 : vector<4x4xf32> to vector<4x4xbf16>
    %344 = arith.truncf %327 : vector<4x24xf32> to vector<4x24xbf16>
    %cst_250 = arith.constant dense<0.000000e+00> : vector<4x24xf32>
    %345 = tpu.matmul %343, %344, %cst_250 {dimension_numbers = #tpu.dot_dimension_numbers<[1], [0], [0], [1], [0, 0, 1, 1], [], []>} : vector<4x4xbf16>, vector<4x24xbf16>, vector<4x24xf32> -> vector<4x24xf32>
    %c1_251 = arith.constant 1 : index
    %c1_252 = arith.constant 1 : index
    %c0_253 = arith.constant 0 : index
    %c0_254 = arith.constant 0 : index
    %346 = vector.load %arg15[%c1_251, %c1_252, %c0_253, %c0_254] : memref<2x2x24x48xbf16, #tpu.memory_space<vmem>>, vector<1x1x24x48xbf16>
    %347 = vector.shape_cast %346 : vector<1x1x24x48xbf16> to vector<24x48xbf16>
    %348 = arith.truncf %345 : vector<4x24xf32> to vector<4x24xbf16>
    %cst_255 = arith.constant dense<0.000000e+00> : vector<4x48xf32>
    %349 = tpu.matmul %348, %347, %cst_255 {dimension_numbers = #tpu.dot_dimension_numbers<[1], [0], [0], [1], [0, 0, 1, 1], [], []>} : vector<4x24xbf16>, vector<24x48xbf16>, vector<4x48xf32> -> vector<4x48xf32>
    %350 = arith.addf %303, %349 : vector<4x48xf32>
    %c1_256 = arith.constant 1 : index
    %c0_257 = arith.constant 0 : index
    %c0_258 = arith.constant 0 : index
    %351 = vector.load %arg16[%c1_256, %c0_257, %c0_258] : memref<2x1x48xf32, #tpu.memory_space<vmem>>, vector<1x1x48xf32>
    %352 = vector.shape_cast %351 : vector<1x1x48xf32> to vector<1x48xf32>
    %353 = vector.broadcast %352 : vector<1x48xf32> to vector<4x48xf32>
    %354 = arith.addf %350, %353 : vector<4x48xf32>
    %355 = arith.addf %233, %354 : vector<4x48xf32>
    %c1_259 = arith.constant 1 : index
    %c0_260 = arith.constant 0 : index
    %c0_261 = arith.constant 0 : index
    %356 = vector.load %arg17[%c1_259, %c0_260, %c0_261] : memref<2x1x48xf32, #tpu.memory_space<vmem>>, vector<1x1x48xf32>
    %357 = vector.shape_cast %356 : vector<1x1x48xf32> to vector<1x48xf32>
    %c1_262 = arith.constant 1 : index
    %c0_263 = arith.constant 0 : index
    %c0_264 = arith.constant 0 : index
    %358 = vector.load %arg18[%c1_262, %c0_263, %c0_264] : memref<2x1x48xf32, #tpu.memory_space<vmem>>, vector<1x1x48xf32>
    %359 = vector.shape_cast %358 : vector<1x1x48xf32> to vector<1x48xf32>
    %cst_265 = arith.constant dense<0.000000e+00> : vector<4xf32>
    %360 = vector.multi_reduction <add>, %355, %cst_265 [1] : vector<4x48xf32> to vector<4xf32>
    %361 = vector.shape_cast %360 : vector<4xf32> to vector<4x1xf32>
    %cst_266 = arith.constant 4.800000e+01 : f32
    %362 = vector.broadcast %cst_266 : f32 to vector<4x1xf32>
    %363 = arith.divf %361, %362 : vector<4x1xf32>
    %364 = vector.broadcast %363 : vector<4x1xf32> to vector<4x48xf32>
    %365 = arith.subf %355, %364 : vector<4x48xf32>
    %366 = arith.mulf %365, %365 : vector<4x48xf32>
    %cst_267 = arith.constant dense<0.000000e+00> : vector<4xf32>
    %367 = vector.multi_reduction <add>, %366, %cst_267 [1] : vector<4x48xf32> to vector<4xf32>
    %368 = vector.shape_cast %367 : vector<4xf32> to vector<4x1xf32>
    %cst_268 = arith.constant 4.800000e+01 : f32
    %369 = vector.broadcast %cst_268 : f32 to vector<4x1xf32>
    %370 = arith.divf %368, %369 : vector<4x1xf32>
    %cst_269 = arith.constant 9.99999974E-6 : f32
    %371 = vector.broadcast %cst_269 : f32 to vector<4x1xf32>
    %372 = arith.addf %370, %371 : vector<4x1xf32>
    %373 = math.rsqrt %372 : vector<4x1xf32>
    %374 = vector.broadcast %373 : vector<4x1xf32> to vector<4x48xf32>
    %375 = arith.mulf %365, %374 : vector<4x48xf32>
    %376 = vector.broadcast %357 : vector<1x48xf32> to vector<4x48xf32>
    %377 = arith.mulf %375, %376 : vector<4x48xf32>
    %378 = vector.broadcast %359 : vector<1x48xf32> to vector<4x48xf32>
    %379 = arith.addf %377, %378 : vector<4x48xf32>
    %c1_270 = arith.constant 1 : index
    %c0_271 = arith.constant 0 : index
    %c0_272 = arith.constant 0 : index
    %380 = vector.load %arg19[%c1_270, %c0_271, %c0_272] : memref<2x48x192xbf16, #tpu.memory_space<vmem>>, vector<1x48x192xbf16>
    %381 = vector.shape_cast %380 : vector<1x48x192xbf16> to vector<48x192xbf16>
    %382 = arith.truncf %379 : vector<4x48xf32> to vector<4x48xbf16>
    %cst_273 = arith.constant dense<0.000000e+00> : vector<4x192xf32>
    %383 = tpu.matmul %382, %381, %cst_273 {dimension_numbers = #tpu.dot_dimension_numbers<[1], [0], [0], [1], [0, 0, 1, 1], [], []>} : vector<4x48xbf16>, vector<48x192xbf16>, vector<4x192xf32> -> vector<4x192xf32>
    %c1_274 = arith.constant 1 : index
    %c0_275 = arith.constant 0 : index
    %c0_276 = arith.constant 0 : index
    %384 = vector.load %arg20[%c1_274, %c0_275, %c0_276] : memref<2x1x192xf32, #tpu.memory_space<vmem>>, vector<1x1x192xf32>
    %385 = vector.shape_cast %384 : vector<1x1x192xf32> to vector<1x192xf32>
    %386 = vector.broadcast %385 : vector<1x192xf32> to vector<4x192xf32>
    %387 = arith.addf %383, %386 : vector<4x192xf32>
    %cst_277 = arith.constant 5.000000e-01 : f32
    %388 = vector.broadcast %cst_277 : f32 to vector<4x192xf32>
    %389 = arith.mulf %388, %387 : vector<4x192xf32>
    %390 = arith.mulf %387, %387 : vector<4x192xf32>
    %391 = arith.mulf %390, %387 : vector<4x192xf32>
    %cst_278 = arith.constant 4.471500e-02 : f32
    %392 = vector.broadcast %cst_278 : f32 to vector<4x192xf32>
    %393 = arith.mulf %392, %391 : vector<4x192xf32>
    %394 = arith.addf %387, %393 : vector<4x192xf32>
    %cst_279 = arith.constant 0.797884583 : f32
    %395 = vector.broadcast %cst_279 : f32 to vector<4x192xf32>
    %396 = arith.mulf %395, %394 : vector<4x192xf32>
    %397 = math.tanh %396 : vector<4x192xf32>
    %cst_280 = arith.constant 1.000000e+00 : f32
    %398 = vector.broadcast %cst_280 : f32 to vector<4x192xf32>
    %399 = arith.addf %398, %397 : vector<4x192xf32>
    %400 = arith.mulf %389, %399 : vector<4x192xf32>
    %c1_281 = arith.constant 1 : index
    %c0_282 = arith.constant 0 : index
    %c0_283 = arith.constant 0 : index
    %401 = vector.load %arg21[%c1_281, %c0_282, %c0_283] : memref<2x192x48xbf16, #tpu.memory_space<vmem>>, vector<1x192x48xbf16>
    %402 = vector.shape_cast %401 : vector<1x192x48xbf16> to vector<192x48xbf16>
    %403 = arith.truncf %400 : vector<4x192xf32> to vector<4x192xbf16>
    %cst_284 = arith.constant dense<0.000000e+00> : vector<4x48xf32>
    %404 = tpu.matmul %403, %402, %cst_284 {dimension_numbers = #tpu.dot_dimension_numbers<[1], [0], [0], [1], [0, 0, 1, 1], [], []>} : vector<4x192xbf16>, vector<192x48xbf16>, vector<4x48xf32> -> vector<4x48xf32>
    %c1_285 = arith.constant 1 : index
    %c0_286 = arith.constant 0 : index
    %c0_287 = arith.constant 0 : index
    %405 = vector.load %arg22[%c1_285, %c0_286, %c0_287] : memref<2x1x48xf32, #tpu.memory_space<vmem>>, vector<1x1x48xf32>
    %406 = vector.shape_cast %405 : vector<1x1x48xf32> to vector<1x48xf32>
    %407 = vector.broadcast %406 : vector<1x48xf32> to vector<4x48xf32>
    %408 = arith.addf %404, %407 : vector<4x48xf32>
    %409 = arith.addf %355, %408 : vector<4x48xf32>
    %c0_288 = arith.constant 0 : index
    %c0_289 = arith.constant 0 : index
    %410 = vector.load %arg23[%c0_288, %c0_289] : memref<1x48xf32, #tpu.memory_space<vmem>>, vector<1x48xf32>
    %c0_290 = arith.constant 0 : index
    %c0_291 = arith.constant 0 : index
    %411 = vector.load %arg24[%c0_290, %c0_291] : memref<1x48xf32, #tpu.memory_space<vmem>>, vector<1x48xf32>
    %cst_292 = arith.constant dense<0.000000e+00> : vector<4xf32>
    %412 = vector.multi_reduction <add>, %409, %cst_292 [1] : vector<4x48xf32> to vector<4xf32>
    %413 = vector.shape_cast %412 : vector<4xf32> to vector<4x1xf32>
    %cst_293 = arith.constant 4.800000e+01 : f32
    %414 = vector.broadcast %cst_293 : f32 to vector<4x1xf32>
    %415 = arith.divf %413, %414 : vector<4x1xf32>
    %416 = vector.broadcast %415 : vector<4x1xf32> to vector<4x48xf32>
    %417 = arith.subf %409, %416 : vector<4x48xf32>
    %418 = arith.mulf %417, %417 : vector<4x48xf32>
    %cst_294 = arith.constant dense<0.000000e+00> : vector<4xf32>
    %419 = vector.multi_reduction <add>, %418, %cst_294 [1] : vector<4x48xf32> to vector<4xf32>
    %420 = vector.shape_cast %419 : vector<4xf32> to vector<4x1xf32>
    %cst_295 = arith.constant 4.800000e+01 : f32
    %421 = vector.broadcast %cst_295 : f32 to vector<4x1xf32>
    %422 = arith.divf %420, %421 : vector<4x1xf32>
    %cst_296 = arith.constant 9.99999974E-6 : f32
    %423 = vector.broadcast %cst_296 : f32 to vector<4x1xf32>
    %424 = arith.addf %422, %423 : vector<4x1xf32>
    %425 = math.rsqrt %424 : vector<4x1xf32>
    %426 = vector.broadcast %425 : vector<4x1xf32> to vector<4x48xf32>
    %427 = arith.mulf %417, %426 : vector<4x48xf32>
    %428 = vector.broadcast %410 : vector<1x48xf32> to vector<4x48xf32>
    %429 = arith.mulf %427, %428 : vector<4x48xf32>
    %430 = vector.broadcast %411 : vector<1x48xf32> to vector<4x48xf32>
    %431 = arith.addf %429, %430 : vector<4x48xf32>
    %c0_297 = arith.constant 0 : index
    %c0_298 = arith.constant 0 : index
    %432 = vector.load %arg25[%c0_297, %c0_298] : memref<48x48xbf16, #tpu.memory_space<vmem>>, vector<48x48xbf16>
    %433 = arith.truncf %431 : vector<4x48xf32> to vector<4x48xbf16>
    %cst_299 = arith.constant dense<0.000000e+00> : vector<4x48xf32>
    %434 = tpu.matmul %433, %432, %cst_299 {dimension_numbers = #tpu.dot_dimension_numbers<[1], [0], [0], [1], [0, 0, 1, 1], [], []>} : vector<4x48xbf16>, vector<48x48xbf16>, vector<4x48xf32> -> vector<4x48xf32>
    %c0_300 = arith.constant 0 : index
    %c0_301 = arith.constant 0 : index
    %435 = vector.load %arg26[%c0_300, %c0_301] : memref<1x48xf32, #tpu.memory_space<vmem>>, vector<1x48xf32>
    %436 = vector.broadcast %435 : vector<1x48xf32> to vector<4x48xf32>
    %437 = arith.addf %434, %436 : vector<4x48xf32>
    %c0_302 = arith.constant 0 : index
    %c0_303 = arith.constant 0 : index
    %c0_304 = arith.constant 0 : index
    %438 = vector.load %arg27[%c0_302, %c0_303, %c0_304] : memref<1x4x48xf32, #tpu.memory_space<vmem>>, vector<1x4x48xf32>
    %439 = vector.shape_cast %438 : vector<1x4x48xf32> to vector<4x48xf32>
    %440 = vector.shape_cast %437 : vector<4x48xf32> to vector<1x4x48xf32>
    tpu.vector_store %arg27[%c0_302, %c0_303, %c0_304], %440 {strides = array<i32>} : memref<1x4x48xf32, #tpu.memory_space<vmem>>, vector<1x4x48xf32>,
    return
  }
  func.func @transform_0(%arg0: i32) -> (i32, i32, i32) {
    %c0_i32 = arith.constant 0 : i32
    %c0_i32_0 = arith.constant 0 : i32
    %c0_i32_1 = arith.constant 0 : i32
    return %arg0, %c0_i32, %c0_i32_0 : i32, i32, i32
  }
  func.func @transform_1(%arg0: i32) -> (i32, i32, i32) {
    %c0_i32 = arith.constant 0 : i32
    %c0_i32_0 = arith.constant 0 : i32
    %c0_i32_1 = arith.constant 0 : i32
    return %arg0, %c0_i32, %c0_i32_0 : i32, i32, i32
  }
  func.func @transform_2(%arg0: i32) -> (i32, i32) {
    %c0_i32 = arith.constant 0 : i32
    %c0_i32_0 = arith.constant 0 : i32
    %c0_i32_1 = arith.constant 0 : i32
    return %c0_i32, %c0_i32_0 : i32, i32
  }
  func.func @transform_3(%arg0: i32) -> (i32, i32) {
    %c0_i32 = arith.constant 0 : i32
    %c0_i32_0 = arith.constant 0 : i32
    %c0_i32_1 = arith.constant 0 : i32
    return %c0_i32, %c0_i32_0 : i32, i32
  }
  func.func @transform_4(%arg0: i32) -> (i32, i32) {
    %c0_i32 = arith.constant 0 : i32
    %c0_i32_0 = arith.constant 0 : i32
    %c0_i32_1 = arith.constant 0 : i32
    return %c0_i32, %c0_i32_0 : i32, i32
  }
  func.func @transform_5(%arg0: i32) -> (i32, i32) {
    %c0_i32 = arith.constant 0 : i32
    %c0_i32_0 = arith.constant 0 : i32
    %c0_i32_1 = arith.constant 0 : i32
    return %c0_i32, %c0_i32_0 : i32, i32
  }
  func.func @transform_6(%arg0: i32) -> (i32, i32) {
    %c0_i32 = arith.constant 0 : i32
    %c0_i32_0 = arith.constant 0 : i32
    %c0_i32_1 = arith.constant 0 : i32
    return %c0_i32, %c0_i32_0 : i32, i32
  }
  func.func @transform_7(%arg0: i32) -> (i32, i32) {
    %c0_i32 = arith.constant 0 : i32
    %c0_i32_0 = arith.constant 0 : i32
    %c0_i32_1 = arith.constant 0 : i32
    return %c0_i32, %c0_i32_0 : i32, i32
  }
  func.func @transform_8(%arg0: i32) -> (i32, i32) {
    %c0_i32 = arith.constant 0 : i32
    %c0_i32_0 = arith.constant 0 : i32
    %c0_i32_1 = arith.constant 0 : i32
    return %c0_i32, %c0_i32_0 : i32, i32
  }
  func.func @transform_9(%arg0: i32) -> (i32, i32) {
    %c0_i32 = arith.constant 0 : i32
    %c0_i32_0 = arith.constant 0 : i32
    %c0_i32_1 = arith.constant 0 : i32
    return %c0_i32, %c0_i32_0 : i32, i32
  }
  func.func @transform_10(%arg0: i32) -> (i32, i32, i32) {
    %c0_i32 = arith.constant 0 : i32
    %c0_i32_0 = arith.constant 0 : i32
    %c0_i32_1 = arith.constant 0 : i32
    %c0_i32_2 = arith.constant 0 : i32
    return %c0_i32, %c0_i32_0, %c0_i32_1 : i32, i32, i32
  }
  func.func @transform_11(%arg0: i32) -> (i32, i32, i32) {
    %c0_i32 = arith.constant 0 : i32
    %c0_i32_0 = arith.constant 0 : i32
    %c0_i32_1 = arith.constant 0 : i32
    %c0_i32_2 = arith.constant 0 : i32
    return %c0_i32, %c0_i32_0, %c0_i32_1 : i32, i32, i32
  }
  func.func @transform_12(%arg0: i32) -> (i32, i32, i32, i32, i32) {
    %c0_i32 = arith.constant 0 : i32
    %c0_i32_0 = arith.constant 0 : i32
    %c0_i32_1 = arith.constant 0 : i32
    %c0_i32_2 = arith.constant 0 : i32
    %c0_i32_3 = arith.constant 0 : i32
    %c0_i32_4 = arith.constant 0 : i32
    return %c0_i32, %c0_i32_0, %c0_i32_1, %c0_i32_2, %c0_i32_3 : i32, i32, i32, i32, i32
  }
  func.func @transform_13(%arg0: i32) -> (i32, i32, i32, i32, i32) {
    %c0_i32 = arith.constant 0 : i32
    %c0_i32_0 = arith.constant 0 : i32
    %c0_i32_1 = arith.constant 0 : i32
    %c0_i32_2 = arith.constant 0 : i32
    %c0_i32_3 = arith.constant 0 : i32
    %c0_i32_4 = arith.constant 0 : i32
    return %c0_i32, %c0_i32_0, %c0_i32_1, %c0_i32_2, %c0_i32_3 : i32, i32, i32, i32, i32
  }
  func.func @transform_14(%arg0: i32) -> (i32, i32, i32, i32) {
    %c0_i32 = arith.constant 0 : i32
    %c0_i32_0 = arith.constant 0 : i32
    %c0_i32_1 = arith.constant 0 : i32
    %c0_i32_2 = arith.constant 0 : i32
    %c0_i32_3 = arith.constant 0 : i32
    return %c0_i32, %c0_i32_0, %c0_i32_1, %c0_i32_2 : i32, i32, i32, i32
  }
  func.func @transform_15(%arg0: i32) -> (i32, i32, i32) {
    %c0_i32 = arith.constant 0 : i32
    %c0_i32_0 = arith.constant 0 : i32
    %c0_i32_1 = arith.constant 0 : i32
    %c0_i32_2 = arith.constant 0 : i32
    return %c0_i32, %c0_i32_0, %c0_i32_1 : i32, i32, i32
  }
  func.func @transform_16(%arg0: i32) -> (i32, i32, i32) {
    %c0_i32 = arith.constant 0 : i32
    %c0_i32_0 = arith.constant 0 : i32
    %c0_i32_1 = arith.constant 0 : i32
    %c0_i32_2 = arith.constant 0 : i32
    return %c0_i32, %c0_i32_0, %c0_i32_1 : i32, i32, i32
  }
  func.func @transform_17(%arg0: i32) -> (i32, i32, i32) {
    %c0_i32 = arith.constant 0 : i32
    %c0_i32_0 = arith.constant 0 : i32
    %c0_i32_1 = arith.constant 0 : i32
    %c0_i32_2 = arith.constant 0 : i32
    return %c0_i32, %c0_i32_0, %c0_i32_1 : i32, i32, i32
  }
  func.func @transform_18(%arg0: i32) -> (i32, i32, i32) {
    %c0_i32 = arith.constant 0 : i32
    %c0_i32_0 = arith.constant 0 : i32
    %c0_i32_1 = arith.constant 0 : i32
    %c0_i32_2 = arith.constant 0 : i32
    return %c0_i32, %c0_i32_0, %c0_i32_1 : i32, i32, i32
  }
  func.func @transform_19(%arg0: i32) -> (i32, i32, i32) {
    %c0_i32 = arith.constant 0 : i32
    %c0_i32_0 = arith.constant 0 : i32
    %c0_i32_1 = arith.constant 0 : i32
    %c0_i32_2 = arith.constant 0 : i32
    return %c0_i32, %c0_i32_0, %c0_i32_1 : i32, i32, i32
  }
  func.func @transform_20(%arg0: i32) -> (i32, i32, i32) {
    %c0_i32 = arith.constant 0 : i32
    %c0_i32_0 = arith.constant 0 : i32
    %c0_i32_1 = arith.constant 0 : i32
    %c0_i32_2 = arith.constant 0 : i32
    return %c0_i32, %c0_i32_0, %c0_i32_1 : i32, i32, i32
  }
  func.func @transform_21(%arg0: i32) -> (i32, i32, i32) {
    %c0_i32 = arith.constant 0 : i32
    %c0_i32_0 = arith.constant 0 : i32
    %c0_i32_1 = arith.constant 0 : i32
    %c0_i32_2 = arith.constant 0 : i32
    return %c0_i32, %c0_i32_0, %c0_i32_1 : i32, i32, i32
  }
  func.func @transform_22(%arg0: i32) -> (i32, i32) {
    %c0_i32 = arith.constant 0 : i32
    %c0_i32_0 = arith.constant 0 : i32
    %c0_i32_1 = arith.constant 0 : i32
    return %c0_i32, %c0_i32_0 : i32, i32
  }
  func.func @transform_23(%arg0: i32) -> (i32, i32) {
    %c0_i32 = arith.constant 0 : i32
    %c0_i32_0 = arith.constant 0 : i32
    %c0_i32_1 = arith.constant 0 : i32
    return %c0_i32, %c0_i32_0 : i32, i32
  }
  func.func @transform_24(%arg0: i32) -> (i32, i32) {
    %c0_i32 = arith.constant 0 : i32
    %c0_i32_0 = arith.constant 0 : i32
    %c0_i32_1 = arith.constant 0 : i32
    return %c0_i32, %c0_i32_0 : i32, i32
  }
  func.func @transform_25(%arg0: i32) -> (i32, i32) {
    %c0_i32 = arith.constant 0 : i32
    %c0_i32_0 = arith.constant 0 : i32
    %c0_i32_1 = arith.constant 0 : i32
    return %c0_i32, %c0_i32_0 : i32, i32
  }
  func.func @transform_26(%arg0: i32) -> (i32, i32, i32) {
    %c0_i32 = arith.constant 0 : i32
    %c0_i32_0 = arith.constant 0 : i32
    %c0_i32_1 = arith.constant 0 : i32
    return %arg0, %c0_i32, %c0_i32_0 : i32, i32, i32
  }
}

</mosaic_0001>

<llo_original>
// kernel: _lambda_.3
$region0: #{_lambda_.3}
  #allocation0 [shape = 'u32[]', space=smem, size = 0x4, offset = 0x4, fixed_abs, tag = 'smem constant byte address 0x4 - core index']
  #allocation1 [shape = 'u32[144,128]{1,0:T(1,128)}', space=vmem, size = 0x12000, scoped, tag = 'internal scratch']
  %s0 = inlined_call_operand.vmem [shape: f32[2,7,48], index: 0, kind: input, shape index: {}]
  %s1 = inlined_call_operand.vmem [shape: f32[2,1,48], index: 1, kind: input, shape index: {}]
  %s2 = inlined_call_operand.vmem [shape: f32[2,1,48], index: 2, kind: input, shape index: {}]
  %s3 = inlined_call_operand.vmem [shape: bf16[2,3,2,48,24], index: 3, kind: input, shape index: {}]
  %s4 = inlined_call_operand.vmem [shape: f32[2,3,2,1,24], index: 4, kind: input, shape index: {}]
  %s5 = inlined_call_operand.vmem [shape: bf16[2,2,24,48], index: 5, kind: input, shape index: {}]
  %s6 = inlined_call_operand.vmem [shape: f32[2,1,48], index: 6, kind: input, shape index: {}]
  %s7 = inlined_call_operand.vmem [shape: f32[2,1,48], index: 7, kind: input, shape index: {}]
  %s8 = inlined_call_operand.vmem [shape: f32[2,1,48], index: 8, kind: input, shape index: {}]
  %s9 = inlined_call_operand.vmem [shape: bf16[2,48,192], index: 9, kind: input, shape index: {}]
  %s10 = inlined_call_operand.vmem [shape: f32[2,1,192], index: 10, kind: input, shape index: {}]
  %s11 = inlined_call_operand.vmem [shape: bf16[2,192,48], index: 11, kind: input, shape index: {}]
  %s12 = inlined_call_operand.vmem [shape: f32[2,1,48], index: 12, kind: input, shape index: {}]
  %s13 = inlined_call_operand.vmem [shape: bf16[48,8], index: 13, kind: input, shape index: {}]
  %s14 = inlined_call_operand.vmem [shape: f32[1,8], index: 14, kind: input, shape index: {}]
  %s15 = inlined_call_operand.vmem [shape: f32[2,7,8], index: 15, kind: output, shape index: {}]
  %s16 = sld [smem:[#allocation0]]
  $region93: #{_lambda_.3} parent=0
    _
  %s18 = ssub.s32 1, %s16
  %s19 = scalar_select 0, %s18, %s16
  loop: start=0, step=1, limit=4
  $region2: #{_lambda_.3} parent=0 // loop_pre_header
    _
  $region3: #{_lambda_.3} parent=0 // loop_header
    %s21 = sphi 0, %s25
    %p22 = scmp.ge.s32.totalorder %s21, 4
    %s31 = sphi 0, %s33
    %s34 = sphi 0, %s31
    %s35 = sphi 0, %s34
    %s51 = sphi 0, %s35
    %s55 = sphi 0, %s55
    %s57 = sphi 0, %s55
    %s58 = sphi 0, %s57
    %s72 = sphi 0, %s58
    %s76 = sphi 0, %s76
    %s78 = sphi 0, %s76
    %s79 = sphi 0, %s78
    %s93 = sphi 0, %s79
    %s97 = sphi 0, %s97
    %s99 = sphi 0, %s97
    %s100 = sphi 0, %s99
    %s114 = sphi 0, %s100
    %s118 = sphi 0, %s118
    %s120 = sphi 0, %s118
    %s121 = sphi 0, %s120
    %s135 = sphi 0, %s121
    %s139 = sphi 0, %s139
    %s141 = sphi 0, %s139
    %s142 = sphi 0, %s141
    %s156 = sphi 0, %s142
    %s160 = sphi 0, %s160
    %s162 = sphi 0, %s160
    %s163 = sphi 0, %s162
    %s177 = sphi 0, %s163
    %s181 = sphi 0, %s181
    %s183 = sphi 0, %s181
    %s184 = sphi 0, %s183
    %s198 = sphi 0, %s184
    %s202 = sphi 0, %s202
    %s204 = sphi 0, %s202
    %s205 = sphi 0, %s204
    %s219 = sphi 0, %s205
    %s223 = sphi 0, %s223
    %s225 = sphi 0, %s223
    %s226 = sphi 0, %s225
    %s240 = sphi 0, %s226
    %s244 = sphi 0, %s244
    %s246 = sphi 0, %s244
    %s247 = sphi 0, %s246
    %s261 = sphi 0, %s247
    %s265 = sphi 0, %s265
    %s267 = sphi 0, %s265
    %s268 = sphi 0, %s267
    %s282 = sphi 0, %s268
    %s286 = sphi 0, %s286
    %s288 = sphi 0, %s286
    %s289 = sphi 0, %s288
    %s303 = sphi 0, %s289
    %s307 = sphi 0, %s307
    %s309 = sphi 0, %s307
    %s310 = sphi 0, %s309
    %s324 = sphi 0, %s310
    %s328 = sphi 0, %s328
    %s330 = sphi 0, %s328
    %s331 = sphi 0, %s330
    %s345 = sphi 0, %s331
    %s351 = sphi 0, %s353
    %s354 = sphi 0, %s351
    %s355 = sphi 0, %s354
    %s371 = sphi 0, %s355
  $region4: #{_lambda_.3} parent=0 // loop_header_branch
    %24 = sbr.rel (%p22) target = $region8
  $region5: #{_lambda_.3} parent=0 // loop_body
    %s26 = ssub.s32 %s21, 1
    %s27 = ssub.s32 %s21, 2
    %s28 = sadd.s32 %s21, 1
    %s29 = ssub.s32 %s21, %s28
    %p30 = scmp.eq.s32.totalorder %s29, 0
    %s32 = sadd.s32 %s31, 1
    %s33 = scalar_select %p30, %s31, %s32
    %p36 = pneg %p30
    %p37 = scmp.eq.s32.totalorder %s21, 1
    %p38 = por %p36, %p37
    %p39 = scmp.ne.s32.totalorder %s31, %s34
    %p40 = scmp.eq.s32.totalorder %s21, 0
    %p41 = por %p39, %p40
    %p42 = scmp.ne.s32.totalorder %s31, %s34
    %p43 = scmp.eq.s32.totalorder %s26, 1
    %p44 = por %p42, %p43
    %p45 = scmp.ne.s32.totalorder %s34, %s35
    %p46 = scmp.eq.s32.totalorder %s26, 0
    %p47 = por %p45, %p46
    %p48 = scmp.ne.s32.totalorder %s34, %s35
    %p49 = scmp.eq.s32.totalorder %s27, 1
    %p50 = por %p48, %p49
    %p52 = scmp.ne.s32.totalorder %s35, %s51
    %p53 = scmp.eq.s32.totalorder %s27, 0
    %p54 = por %p52, %p53
    %s56 = sadd.s32 %s55, 1
    %p59 = scmp.eq.s32.totalorder %s21, 1
    %p60 = scmp.ne.s32.totalorder %s55, %s57
    %p61 = scmp.eq.s32.totalorder %s21, 0
    %p62 = por %p60, %p61
    %p63 = scmp.ne.s32.totalorder %s55, %s57
    %p64 = scmp.eq.s32.totalorder %s26, 1
    %p65 = por %p63, %p64
    %p66 = scmp.ne.s32.totalorder %s57, %s58
    %p67 = scmp.eq.s32.totalorder %s26, 0
    %p68 = por %p66, %p67
    %p69 = scmp.ne.s32.totalorder %s57, %s58
    %p70 = scmp.eq.s32.totalorder %s27, 1
    %p71 = por %p69, %p70
    %p73 = scmp.ne.s32.totalorder %s58, %s72
    %p74 = scmp.eq.s32.totalorder %s27, 0
    %p75 = por %p73, %p74
    %s77 = sadd.s32 %s76, 1
    %p80 = scmp.eq.s32.totalorder %s21, 1
    %p81 = scmp.ne.s32.totalorder %s76, %s78
    %p82 = scmp.eq.s32.totalorder %s21, 0
    %p83 = por %p81, %p82
    %p84 = scmp.ne.s32.totalorder %s76, %s78
    %p85 = scmp.eq.s32.totalorder %s26, 1
    %p86 = por %p84, %p85
    %p87 = scmp.ne.s32.totalorder %s78, %s79
    %p88 = scmp.eq.s32.totalorder %s26, 0
    %p89 = por %p87, %p88
    %p90 = scmp.ne.s32.totalorder %s78, %s79
    %p91 = scmp.eq.s32.totalorder %s27, 1
    %p92 = por %p90, %p91
    %p94 = scmp.ne.s32.totalorder %s79, %s93
    %p95 = scmp.eq.s32.totalorder %s27, 0
    %p96 = por %p94, %p95
    %s98 = sadd.s32 %s97, 1
    %p101 = scmp.eq.s32.totalorder %s21, 1
    %p102 = scmp.ne.s32.totalorder %s97, %s99
    %p103 = scmp.eq.s32.totalorder %s21, 0
    %p104 = por %p102, %p103
    %p105 = scmp.ne.s32.totalorder %s97, %s99
    %p106 = scmp.eq.s32.totalorder %s26, 1
    %p107 = por %p105, %p106
    %p108 = scmp.ne.s32.totalorder %s99, %s100
    %p109 = scmp.eq.s32.totalorder %s26, 0
    %p110 = por %p108, %p109
    %p111 = scmp.ne.s32.totalorder %s99, %s100
    %p112 = scmp.eq.s32.totalorder %s27, 1
    %p113 = por %p111, %p112
    %p115 = scmp.ne.s32.totalorder %s100, %s114
    %p116 = scmp.eq.s32.totalorder %s27, 0
    %p117 = por %p115, %p116
    %s119 = sadd.s32 %s118, 1
    %p122 = scmp.eq.s32.totalorder %s21, 1
    %p123 = scmp.ne.s32.totalorder %s118, %s120
    %p124 = scmp.eq.s32.totalorder %s21, 0
    %p125 = por %p123, %p124
    %p126 = scmp.ne.s32.totalorder %s118, %s120
    %p127 = scmp.eq.s32.totalorder %s26, 1
    %p128 = por %p126, %p127
    %p129 = scmp.ne.s32.totalorder %s120, %s121
    %p130 = scmp.eq.s32.totalorder %s26, 0
    %p131 = por %p129, %p130
    %p132 = scmp.ne.s32.totalorder %s120, %s121
    %p133 = scmp.eq.s32.totalorder %s27, 1
    %p134 = por %p132, %p133
    %p136 = scmp.ne.s32.totalorder %s121, %s135
    %p137 = scmp.eq.s32.totalorder %s27, 0
    %p138 = por %p136, %p137
    %s140 = sadd.s32 %s139, 1
    %p143 = scmp.eq.s32.totalorder %s21, 1
    %p144 = scmp.ne.s32.totalorder %s139, %s141
    %p145 = scmp.eq.s32.totalorder %s21, 0
    %p146 = por %p144, %p145
    %p147 = scmp.ne.s32.totalorder %s139, %s141
    %p148 = scmp.eq.s32.totalorder %s26, 1
    %p149 = por %p147, %p148
    %p150 = scmp.ne.s32.totalorder %s141, %s142
    %p151 = scmp.eq.s32.totalorder %s26, 0
    %p152 = por %p150, %p151
    %p153 = scmp.ne.s32.totalorder %s141, %s142
    %p154 = scmp.eq.s32.totalorder %s27, 1
    %p155 = por %p153, %p154
    %p157 = scmp.ne.s32.totalorder %s142, %s156
    %p158 = scmp.eq.s32.totalorder %s27, 0
    %p159 = por %p157, %p158
    %s161 = sadd.s32 %s160, 1
    %p164 = scmp.eq.s32.totalorder %s21, 1
    %p165 = scmp.ne.s32.totalorder %s160, %s162
    %p166 = scmp.eq.s32.totalorder %s21, 0
    %p167 = por %p165, %p166
    %p168 = scmp.ne.s32.totalorder %s160, %s162
    %p169 = scmp.eq.s32.totalorder %s26, 1
    %p170 = por %p168, %p169
    %p171 = scmp.ne.s32.totalorder %s162, %s163
    %p172 = scmp.eq.s32.totalorder %s26, 0
    %p173 = por %p171, %p172
    %p174 = scmp.ne.s32.totalorder %s162, %s163
    %p175 = scmp.eq.s32.totalorder %s27, 1
    %p176 = por %p174, %p175
    %p178 = scmp.ne.s32.totalorder %s163, %s177
    %p179 = scmp.eq.s32.totalorder %s27, 0
    %p180 = por %p178, %p179
    %s182 = sadd.s32 %s181, 1
    %p185 = scmp.eq.s32.totalorder %s21, 1
    %p186 = scmp.ne.s32.totalorder %s181, %s183
    %p187 = scmp.eq.s32.totalorder %s21, 0
    %p188 = por %p186, %p187
    %p189 = scmp.ne.s32.totalorder %s181, %s183
    %p190 = scmp.eq.s32.totalorder %s26, 1
    %p191 = por %p189, %p190
    %p192 = scmp.ne.s32.totalorder %s183, %s184
    %p193 = scmp.eq.s32.totalorder %s26, 0
    %p194 = por %p192, %p193
    %p195 = scmp.ne.s32.totalorder %s183, %s184
    %p196 = scmp.eq.s32.totalorder %s27, 1
    %p197 = por %p195, %p196
    %p199 = scmp.ne.s32.totalorder %s184, %s198
    %p200 = scmp.eq.s32.totalorder %s27, 0
    %p201 = por %p199, %p200
    %s203 = sadd.s32 %s202, 1
    %p206 = scmp.eq.s32.totalorder %s21, 1
    %p207 = scmp.ne.s32.totalorder %s202, %s204
    %p208 = scmp.eq.s32.totalorder %s21, 0
    %p209 = por %p207, %p208
    %p210 = scmp.ne.s32.totalorder %s202, %s204
    %p211 = scmp.eq.s32.totalorder %s26, 1
    %p212 = por %p210, %p211
    %p213 = scmp.ne.s32.totalorder %s204, %s205
    %p214 = scmp.eq.s32.totalorder %s26, 0
    %p215 = por %p213, %p214
    %p216 = scmp.ne.s32.totalorder %s204, %s205
    %p217 = scmp.eq.s32.totalorder %s27, 1
    %p218 = por %p216, %p217
    %p220 = scmp.ne.s32.totalorder %s205, %s219
    %p221 = scmp.eq.s32.totalorder %s27, 0
    %p222 = por %p220, %p221
    %s224 = sadd.s32 %s223, 1
    %p227 = scmp.eq.s32.totalorder %s21, 1
    %p228 = scmp.ne.s32.totalorder %s223, %s225
    %p229 = scmp.eq.s32.totalorder %s21, 0
    %p230 = por %p228, %p229
    %p231 = scmp.ne.s32.totalorder %s223, %s225
    %p232 = scmp.eq.s32.totalorder %s26, 1
    %p233 = por %p231, %p232
    %p234 = scmp.ne.s32.totalorder %s225, %s226
    %p235 = scmp.eq.s32.totalorder %s26, 0
    %p236 = por %p234, %p235
    %p237 = scmp.ne.s32.totalorder %s225, %s226
    %p238 = scmp.eq.s32.totalorder %s27, 1
    %p239 = por %p237, %p238
    %p241 = scmp.ne.s32.totalorder %s226, %s240
    %p242 = scmp.eq.s32.totalorder %s27, 0
    %p243 = por %p241, %p242
    %s245 = sadd.s32 %s244, 1
    %p248 = scmp.eq.s32.totalorder %s21, 1
    %p249 = scmp.ne.s32.totalorder %s244, %s246
    %p250 = scmp.eq.s32.totalorder %s21, 0
    %p251 = por %p249, %p250
    %p252 = scmp.ne.s32.totalorder %s244, %s246
    %p253 = scmp.eq.s32.totalorder %s26, 1
    %p254 = por %p252, %p253
    %p255 = scmp.ne.s32.totalorder %s246, %s247
    %p256 = scmp.eq.s32.totalorder %s26, 0
    %p257 = por %p255, %p256
    %p258 = scmp.ne.s32.totalorder %s246, %s247
    %p259 = scmp.eq.s32.totalorder %s27, 1
    %p260 = por %p258, %p259
    %p262 = scmp.ne.s32.totalorder %s247, %s261
    %p263 = scmp.eq.s32.totalorder %s27, 0
    %p264 = por %p262, %p263
    %s266 = sadd.s32 %s265, 1
    %p269 = scmp.eq.s32.totalorder %s21, 1
    %p270 = scmp.ne.s32.totalorder %s265, %s267
    %p271 = scmp.eq.s32.totalorder %s21, 0
    %p272 = por %p270, %p271
    %p273 = scmp.ne.s32.totalorder %s265, %s267
    %p274 = scmp.eq.s32.totalorder %s26, 1
    %p275 = por %p273, %p274
    %p276 = scmp.ne.s32.totalorder %s267, %s268
    %p277 = scmp.eq.s32.totalorder %s26, 0
    %p278 = por %p276, %p277
    %p279 = scmp.ne.s32.totalorder %s267, %s268
    %p280 = scmp.eq.s32.totalorder %s27, 1
    %p281 = por %p279, %p280
    %p283 = scmp.ne.s32.totalorder %s268, %s282
    %p284 = scmp.eq.s32.totalorder %s27, 0
    %p285 = por %p283, %p284
    %s287 = sadd.s32 %s286, 1
    %p290 = scmp.eq.s32.totalorder %s21, 1
    %p291 = scmp.ne.s32.totalorder %s286, %s288
    %p292 = scmp.eq.s32.totalorder %s21, 0
    %p293 = por %p291, %p292
    %p294 = scmp.ne.s32.totalorder %s286, %s288
    %p295 = scmp.eq.s32.totalorder %s26, 1
    %p296 = por %p294, %p295
    %p297 = scmp.ne.s32.totalorder %s288, %s289
    %p298 = scmp.eq.s32.totalorder %s26, 0
    %p299 = por %p297, %p298
    %p300 = scmp.ne.s32.totalorder %s288, %s289
    %p301 = scmp.eq.s32.totalorder %s27, 1
    %p302 = por %p300, %p301
    %p304 = scmp.ne.s32.totalorder %s289, %s303
    %p305 = scmp.eq.s32.totalorder %s27, 0
    %p306 = por %p304, %p305
    %s308 = sadd.s32 %s307, 1
    %p311 = scmp.eq.s32.totalorder %s21, 1
    %p312 = scmp.ne.s32.totalorder %s307, %s309
    %p313 = scmp.eq.s32.totalorder %s21, 0
    %p314 = por %p312, %p313
    %p315 = scmp.ne.s32.totalorder %s307, %s309
    %p316 = scmp.eq.s32.totalorder %s26, 1
    %p317 = por %p315, %p316
    %p318 = scmp.ne.s32.totalorder %s309, %s310
    %p319 = scmp.eq.s32.totalorder %s26, 0
    %p320 = por %p318, %p319
    %p321 = scmp.ne.s32.totalorder %s309, %s310
    %p322 = scmp.eq.s32.totalorder %s27, 1
    %p323 = por %p321, %p322
    %p325 = scmp.ne.s32.totalorder %s310, %s324
    %p326 = scmp.eq.s32.totalorder %s27, 0
    %p327 = por %p325, %p326
    %s329 = sadd.s32 %s328, 1
    %p332 = scmp.eq.s32.totalorder %s21, 1
    %p333 = scmp.ne.s32.totalorder %s328, %s330
    %p334 = scmp.eq.s32.totalorder %s21, 0
    %p335 = por %p333, %p334
    %p336 = scmp.ne.s32.totalorder %s328, %s330
    %p337 = scmp.eq.s32.totalorder %s26, 1
    %p338 = por %p336, %p337
    %p339 = scmp.ne.s32.totalorder %s330, %s331
    %p340 = scmp.eq.s32.totalorder %s26, 0
    %p341 = por %p339, %p340
    %p342 = scmp.ne.s32.totalorder %s330, %s331
    %p343 = scmp.eq.s32.totalorder %s27, 1
    %p344 = por %p342, %p343
    %p346 = scmp.ne.s32.totalorder %s331, %s345
    %p347 = scmp.eq.s32.totalorder %s27, 0
    %p348 = por %p346, %p347
    %s349 = ssub.s32 %s21, %s28
    %p350 = scmp.eq.s32.totalorder %s349, 0
    %s352 = sadd.s32 %s351, 1
    %s353 = scalar_select %p350, %s351, %s352
    %p356 = pneg %p350
    %p357 = scmp.eq.s32.totalorder %s21, 1
    %p358 = por %p356, %p357
    %p359 = scmp.ne.s32.totalorder %s351, %s354
    %p360 = scmp.eq.s32.totalorder %s21, 0
    %p361 = por %p359, %p360
    %p362 = scmp.ne.s32.totalorder %s351, %s354
    %p363 = scmp.eq.s32.totalorder %s26, 1
    %p364 = por %p362, %p363
    %p365 = scmp.ne.s32.totalorder %s354, %s355
    %p366 = scmp.eq.s32.totalorder %s26, 0
    %p367 = por %p365, %p366
    %p368 = scmp.ne.s32.totalorder %s354, %s355
    %p369 = scmp.eq.s32.totalorder %s27, 1
    %p370 = por %p368, %p369
    %p372 = scmp.ne.s32.totalorder %s355, %s371
    %p373 = scmp.eq.s32.totalorder %s27, 0
    %p374 = por %p372, %p373
    %p375 = scmp.le.s32.totalorder 1, %s21
    %p376 = scmp.lt.s32.totalorder %s21, 3
    %p377 = pnand %p375, %p376
    %p378 = pneg %p377
    // Predicated region
    $region9: #{_lambda_.3} parent=5 // pred_check
      _
    $region10: #{_lambda_.3} parent=5 // pred_check_branch
      %380 = sbr.rel (%p377) target = $region12
    $region11: #{_lambda_.3} parent=5 // pred_region
      %s381 = ssub.s32 %s21, 1
      // Predicated region
      $region13: #{_lambda_.3} parent=11 // pred_check
        %p382 = pneg %p68
      $region14: #{_lambda_.3} parent=11 // pred_check_branch
        %384 = sbr.rel (%p382) target = $region16
      $region15: #{_lambda_.3} parent=11 // pred_region
        _
      $region16: #{_lambda_.3} parent=11 // pred_fallthru
        _
      // Predicated region
      $region17: #{_lambda_.3} parent=11 // pred_check
        %p385 = pneg %p89
      $region18: #{_lambda_.3} parent=11 // pred_check_branch
        %387 = sbr.rel (%p385) target = $region20
      $region19: #{_lambda_.3} parent=11 // pred_region
        _
      $region20: #{_lambda_.3} parent=11 // pred_fallthru
        _
      // Predicated region
      $region21: #{_lambda_.3} parent=11 // pred_check
        %p388 = pneg %p110
      $region22: #{_lambda_.3} parent=11 // pred_check_branch
        %390 = sbr.rel (%p388) target = $region24
      $region23: #{_lambda_.3} parent=11 // pred_region
        _
      $region24: #{_lambda_.3} parent=11 // pred_fallthru
        _
      // Predicated region
      $region25: #{_lambda_.3} parent=11 // pred_check
        %p391 = pneg %p131
      $region26: #{_lambda_.3} parent=11 // pred_check_branch
        %393 = sbr.rel (%p391) target = $region28
      $region27: #{_lambda_.3} parent=11 // pred_region
        _
      $region28: #{_lambda_.3} parent=11 // pred_fallthru
        _
      // Predicated region
      $region29: #{_lambda_.3} parent=11 // pred_check
        %p394 = pneg %p152
      $region30: #{_lambda_.3} parent=11 // pred_check_branch
        %396 = sbr.rel (%p394) target = $region32
      $region31: #{_lambda_.3} parent=11 // pred_region
        _
      $region32: #{_lambda_.3} parent=11 // pred_fallthru
        _
      // Predicated region
      $region33: #{_lambda_.3} parent=11 // pred_check
        %p397 = pneg %p173
      $region34: #{_lambda_.3} parent=11 // pred_check_branch
        %399 = sbr.rel (%p397) target = $region36
      $region35: #{_lambda_.3} parent=11 // pred_region
        _
      $region36: #{_lambda_.3} parent=11 // pred_fallthru
        _
      // Predicated region
      $region37: #{_lambda_.3} parent=11 // pred_check
        %p400 = pneg %p194
      $region38: #{_lambda_.3} parent=11 // pred_check_branch
        %402 = sbr.rel (%p400) target = $region40
      $region39: #{_lambda_.3} parent=11 // pred_region
        _
      $region40: #{_lambda_.3} parent=11 // pred_fallthru
        _
      // Predicated region
      $region41: #{_lambda_.3} parent=11 // pred_check
        %p403 = pneg %p215
      $region42: #{_lambda_.3} parent=11 // pred_check_branch
        %405 = sbr.rel (%p403) target = $region44
      $region43: #{_lambda_.3} parent=11 // pred_region
        _
      $region44: #{_lambda_.3} parent=11 // pred_fallthru
        _
      // Predicated region
      $region45: #{_lambda_.3} parent=11 // pred_check
        %p406 = pneg %p236
      $region46: #{_lambda_.3} parent=11 // pred_check_branch
        %408 = sbr.rel (%p406) target = $region48
      $region47: #{_lambda_.3} parent=11 // pred_region
        _
      $region48: #{_lambda_.3} parent=11 // pred_fallthru
        _
      // Predicated region
      $region49: #{_lambda_.3} parent=11 // pred_check
        %p409 = pneg %p257
      $region50: #{_lambda_.3} parent=11 // pred_check_branch
        %411 = sbr.rel (%p409) target = $region52
      $region51: #{_lambda_.3} parent=11 // pred_region
        _
      $region52: #{_lambda_.3} parent=11 // pred_fallthru
        _
      // Predicated region
      $region53: #{_lambda_.3} parent=11 // pred_check
        %p412 = pneg %p278
      $region54: #{_lambda_.3} parent=11 // pred_check_branch
        %414 = sbr.rel (%p412) target = $region56
      $region55: #{_lambda_.3} parent=11 // pred_region
        _
      $region56: #{_lambda_.3} parent=11 // pred_fallthru
        _
      // Predicated region
      $region57: #{_lambda_.3} parent=11 // pred_check
        %p415 = pneg %p299
      $region58: #{_lambda_.3} parent=11 // pred_check_branch
        %417 = sbr.rel (%p415) target = $region60
      $region59: #{_lambda_.3} parent=11 // pred_region
        _
      $region60: #{_lambda_.3} parent=11 // pred_fallthru
        _
      // Predicated region
      $region61: #{_lambda_.3} parent=11 // pred_check
        %p418 = pneg %p320
      $region62: #{_lambda_.3} parent=11 // pred_check_branch
        %420 = sbr.rel (%p418) target = $region64
      $region63: #{_lambda_.3} parent=11 // pred_region
        _
      $region64: #{_lambda_.3} parent=11 // pred_fallthru
        _
      // Predicated region
      $region65: #{_lambda_.3} parent=11 // pred_check
        %p421 = pneg %p341
      $region66: #{_lambda_.3} parent=11 // pred_check_branch
        %423 = sbr.rel (%p421) target = $region68
      $region67: #{_lambda_.3} parent=11 // pred_region
        _
      $region68: #{_lambda_.3} parent=11 // pred_fallthru
        _
    $region12: #{_lambda_.3} parent=5 // pred_fallthru
      _
    %p424 = scmp.lt.s32.totalorder %s21, 2
    // Predicated region
    $region69: #{_lambda_.3} parent=5 // pred_check
      %p425 = pneg %p424
    $region70: #{_lambda_.3} parent=5 // pred_check_branch
      %427 = sbr.rel (%p425) target = $region72
    $region71: #{_lambda_.3} parent=5 // pred_region
      // Predicated region
      $region73: #{_lambda_.3} parent=71 // pred_check
        %p428 = pneg %p41
      $region74: #{_lambda_.3} parent=71 // pred_check_branch
        %430 = sbr.rel (%p428) target = $region76
      $region75: #{_lambda_.3} parent=71 // pred_region
        %p431 = scmp.lt.s32.totalorder %s21, 1
        %s432 = scalar_select %p431, %s21, 1
        %s433 = smul.addr %s432, 8
        %s434 = scalar_lea.vmem %s0, %s433
      $region76: #{_lambda_.3} parent=71 // pred_fallthru
        _
    $region72: #{_lambda_.3} parent=5 // pred_fallthru
      _
    %p435 = scmp.le.s32.totalorder 1, %s21
    %p436 = scmp.lt.s32.totalorder %s21, 3
    %p437 = pnand %p435, %p436
    %p438 = pneg %p437
    // Predicated region
    $region77: #{_lambda_.3} parent=5 // pred_check
      _
    $region78: #{_lambda_.3} parent=5 // pred_check_branch
      %440 = sbr.rel (%p437) target = $region80
    $region79: #{_lambda_.3} parent=5 // pred_region
      %s441 = ssub.s32 %s21, 1
      %p442 = scmp.lt.s32.totalorder %s26, 1
      %s443 = scalar_select %p442, %s26, 1
      %s444 = smul.addr %s443, 8
      %s445 = scalar_lea.vmem %s0, %s444
      %p446 = pneg %p47
      %p447 = pneg %p44
      %p448 = pneg %p68
      %p449 = pneg %p65
      %p450 = pneg %p89
      %p451 = pneg %p86
      %p452 = pneg %p110
      %p453 = pneg %p107
      %p454 = pneg %p131
      %p455 = pneg %p128
      %p456 = pneg %p152
      %p457 = pneg %p149
      %p458 = pneg %p173
      %p459 = pneg %p170
      %p460 = pneg %p194
      %p461 = pneg %p191
      %p462 = pneg %p215
      %p463 = pneg %p212
      %p464 = pneg %p236
      %p465 = pneg %p233
      %p466 = pneg %p257
      %p467 = pneg %p254
      %p468 = pneg %p278
      %p469 = pneg %p275
      %p470 = pneg %p299
      %p471 = pneg %p296
      %p472 = pneg %p320
      %p473 = pneg %p317
      %p474 = pneg %p341
      %p475 = pneg %p338
      %p476 = pneg %p367
      %p477 = pneg %p364
      %p478 = scmp.lt.s32.totalorder %s26, 1
      %s479 = scalar_select %p478, %s26, 1
      %s480 = smul.addr %s479, 8
      %s481 = scalar_lea.vmem %s15, %s480
      %p482 = scmp.lt.s32.totalorder %s26, 1
      %s483 = scalar_select %p482, %s26, 1
      %s484 = smul.addr %s483, 8
      %s485 = scalar_lea.vmem %s0, %s484
      %p486 = scmp.lt.s32.totalorder %s26, 1
      %s487 = scalar_select %p486, %s26, 1
      %s488 = smul.addr %s487, 8
      %s489 = scalar_lea.vmem %s15, %s488
      %v491 = vld [vmem:[%s485] sm:$0x7f]
      %v492 = vld [vmem:[%s1] sm:$0x1]
      %v493 = vld [vmem:[%s2] sm:$0x1]
      %vm494 = vcmask 391168
      %v495 = vsel %vm494, %v491, 0.0
      %496 = vadd.xlane.f32.xlu0 %v495
      %v497 = vpop.xlane.xlu0 %496
      %v498 = vrcp.pop 48.0
      %v499 = vmul.f32 %v497, %v498
      %v500 = vsub.f32 %v491, %v499
      %v501 = vmul.f32 %v500, %v500
      %v502 = vsel %vm494, %v501, 0.0
      %503 = vadd.xlane.f32.xlu0 %v502
      %v504 = vpop.xlane.xlu0 %503
      %v505 = vmul.f32 %v504, %v498
      %v506 = vadd.f32 %v505, 1e-05
      %v507 = vrsqrt.pop %v506
      %v508 = vmul.f32 %v500, %v507
      %v510 = vlaneseq
      %v511 = vshrl.u32 %v510, 7
      %v512 = vsub.s32 0, %v511
      %v513 = vrot.slane %v492, %v512
      %v515 = vmul.f32 %v508, %v513
      %v517 = vlaneseq
      %v518 = vshrl.u32 %v517, 7
      %v519 = vsub.s32 0, %v518
      %v520 = vrot.slane %v493, %v519
      %v522 = vadd.f32 %v515, %v520
      %v523 = vld [vmem:[%s3] sm:$0xf]
      %v524 = vld [vmem:[%s3 + $0x4] sm:$0xf]
      %v525 = vld [vmem:[%s3 + $0x8] sm:$0xf]
      %v526 = vld [vmem:[%s3 + $0xc] sm:$0xf]
      %v527 = vld [vmem:[%s3 + $0x10] sm:$0xf]
      %v528 = vld [vmem:[%s3 + $0x14] sm:$0xf]
      %v529 = vpack.c.bf16 %v522, %v522
      %v530 = vld [vmem:[%s4] sm:$0x1]
      %v532 = vlaneseq
      %v533 = vshrl.u32 %v532, 7
      %v534 = vsub.s32 0, %v533
      %v535 = vrot.slane %v530, %v534
      %v543 = vunpack.c.l.b16 %v523
      %v544 = vunpack.c.l.b16 %v524
      %v545 = vunpack.c.l.b16 %v525
      %v546 = vunpack.c.l.b16 %v526
      %v547 = vunpack.c.l.b16 %v527
      %v548 = vunpack.c.l.b16 %v528
      %v549 = vpack.c.b16 %v544, %v543
      %v550 = vpack.c.b16 %v546, %v545
      %v551 = vpack.c.b16 %v548, %v547
      %vm555 = vcmask 392192
      %v557 = vsel %vm555, %v529, 0
      %559 = vmatprep.subr.bf16.mxu0 0
      %560 = vmatpush1.bf16.msra.mxu0 %v549
      %561 = vmatprep.subr.bf16.mxu0 0
      %562 = vmatpush1.bf16.msra.mxu0 %v550
      %563 = vmatprep.subr.bf16.mxu0 0
      %564 = vmatpush1.bf16.msra.mxu0 %v551
      %565 = vmatprep.subr.bf16.mxu0 0
      %566 = vmatpush1.bf16.msra.mxu0 0
      %567 = vmatprep.subr.bf16.mxu0 0
      %568 = vmatpush1.bf16.msra.mxu0 0
      %569 = vmatprep.subr.bf16.mxu0 0
      %570 = vmatpush1.bf16.msra.mxu0 0
      %571 = vmatprep.subr.bf16.mxu0 0
      %572 = vmatpush1.bf16.msra.mxu0 0
      %573 = vmatprep.subr.bf16.mxu0 0
      %574 = vmatpush1.bf16.msra.mxu0 0
      %575 = vmatprep.subr.bf16.mxu0 0
      %576 = vmatpush1.bf16.msra.mxu0 0
      %577 = vmatprep.subr.bf16.mxu0 0
      %578 = vmatpush1.bf16.msra.mxu0 0
      %579 = vmatprep.subr.bf16.mxu0 0
      %580 = vmatpush1.bf16.msra.mxu0 0
      %581 = vmatprep.subr.bf16.mxu0 0
      %582 = vmatpush1.bf16.msra.mxu0 0
      %583 = vmatprep.subr.bf16.mxu0 0
      %584 = vmatpush1.bf16.msra.mxu0 0
      %585 = vmatprep.subr.bf16.mxu0 0
      %586 = vmatpush1.bf16.msra.mxu0 0
      %587 = vmatprep.subr.bf16.mxu0 0
      %588 = vmatpush1.bf16.msra.mxu0 0
      %589 = vmatprep.subr.bf16.mxu0 0
      %590 = vmatpush1.bf16.msra.mxu0 0
      %591 = vmatprep.mubr.bf16.mxu0 0
      %592 = vmatmul.mubr.bf16.gmra.mrb[0].mxu0 %v557
      %v593 = vpop.f32.mrb[0].mxu0
      %v594 = vadd.f32 %v535, %v593
      %v595 = vpop.f32.mrb[0].mxu0
      %v596 = vpop.f32.mrb[0].mxu0
      %v597 = vpop.f32.mrb[0].mxu0
      %598 = vdwg.mxu0
      %s599 = scalar_lea.vmem %s3, 48
      %v600 = vld [vmem:[%s599] sm:$0xf]
      %v601 = vld [vmem:[%s599 + $0x4] sm:$0xf]
      %v602 = vld [vmem:[%s599 + $0x8] sm:$0xf]
      %v603 = vld [vmem:[%s599 + $0xc] sm:$0xf]
      %v604 = vld [vmem:[%s599 + $0x10] sm:$0xf]
      %v605 = vld [vmem:[%s599 + $0x14] sm:$0xf]
      %s606 = scalar_lea.vmem %s4, 2
      %v607 = vld [vmem:[%s606] sm:$0x1]
      %v609 = vlaneseq
      %v610 = vshrl.u32 %v609, 7
      %v611 = vsub.s32 0, %v610
      %v612 = vrot.slane %v607, %v611
      %v620 = vunpack.c.l.b16 %v600
      %v621 = vunpack.c.l.b16 %v601
      %v622 = vunpack.c.l.b16 %v602
      %v623 = vunpack.c.l.b16 %v603
      %v624 = vunpack.c.l.b16 %v604
      %v625 = vunpack.c.l.b16 %v605
      %v626 = vpack.c.b16 %v621, %v620
      %v627 = vpack.c.b16 %v623, %v622
      %v628 = vpack.c.b16 %v625, %v624
      %632 = vmatprep.subr.bf16.mxu0 0
      %633 = vmatpush1.bf16.msra.mxu0 %v626
      %634 = vmatprep.subr.bf16.mxu0 0
      %635 = vmatpush1.bf16.msra.mxu0 %v627
      %636 = vmatprep.subr.bf16.mxu0 0
      %637 = vmatpush1.bf16.msra.mxu0 %v628
      %638 = vmatprep.subr.bf16.mxu0 0
      %639 = vmatpush1.bf16.msra.mxu0 0
      %640 = vmatprep.subr.bf16.mxu0 0
      %641 = vmatpush1.bf16.msra.mxu0 0
      %642 = vmatprep.subr.bf16.mxu0 0
      %643 = vmatpush1.bf16.msra.mxu0 0
      %644 = vmatprep.subr.bf16.mxu0 0
      %645 = vmatpush1.bf16.msra.mxu0 0
      %646 = vmatprep.subr.bf16.mxu0 0
      %647 = vmatpush1.bf16.msra.mxu0 0
      %648 = vmatprep.subr.bf16.mxu0 0
      %649 = vmatpush1.bf16.msra.mxu0 0
      %650 = vmatprep.subr.bf16.mxu0 0
      %651 = vmatpush1.bf16.msra.mxu0 0
      %652 = vmatprep.subr.bf16.mxu0 0
      %653 = vmatpush1.bf16.msra.mxu0 0
      %654 = vmatprep.subr.bf16.mxu0 0
      %655 = vmatpush1.bf16.msra.mxu0 0
      %656 = vmatprep.subr.bf16.mxu0 0
      %657 = vmatpush1.bf16.msra.mxu0 0
      %658 = vmatprep.subr.bf16.mxu0 0
      %659 = vmatpush1.bf16.msra.mxu0 0
      %660 = vmatprep.subr.bf16.mxu0 0
      %661 = vmatpush1.bf16.msra.mxu0 0
      %662 = vmatprep.subr.bf16.mxu0 0
      %663 = vmatpush1.bf16.msra.mxu0 0
      %664 = vmatprep.mubr.bf16.mxu0 0
      %665 = vmatmul.mubr.bf16.gmra.mrb[0].mxu0 %v557
      %v666 = vpop.f32.mrb[0].mxu0
      %v667 = vadd.f32 %v612, %v666
      %v668 = vpop.f32.mrb[0].mxu0
      %v669 = vpop.f32.mrb[0].mxu0
      %v670 = vpop.f32.mrb[0].mxu0
      %671 = vdwg.mxu0
      %s672 = scalar_lea.vmem %s3, 96
      %v673 = vld [vmem:[%s672] sm:$0xf]
      %v674 = vld [vmem:[%s672 + $0x4] sm:$0xf]
      %v675 = vld [vmem:[%s672 + $0x8] sm:$0xf]
      %v676 = vld [vmem:[%s672 + $0xc] sm:$0xf]
      %v677 = vld [vmem:[%s672 + $0x10] sm:$0xf]
      %v678 = vld [vmem:[%s672 + $0x14] sm:$0xf]
      %s679 = scalar_lea.vmem %s4, 4
      %v680 = vld [vmem:[%s679] sm:$0x1]
      %v682 = vlaneseq
      %v683 = vshrl.u32 %v682, 7
      %v684 = vsub.s32 0, %v683
      %v685 = vrot.slane %v680, %v684
      %v693 = vunpack.c.l.b16 %v673
      %v694 = vunpack.c.l.b16 %v674
      %v695 = vunpack.c.l.b16 %v675
      %v696 = vunpack.c.l.b16 %v676
      %v697 = vunpack.c.l.b16 %v677
      %v698 = vunpack.c.l.b16 %v678
      %v699 = vpack.c.b16 %v694, %v693
      %v700 = vpack.c.b16 %v696, %v695
      %v701 = vpack.c.b16 %v698, %v697
      %705 = vmatprep.subr.bf16.mxu0 0
      %706 = vmatpush1.bf16.msra.mxu0 %v699
      %707 = vmatprep.subr.bf16.mxu0 0
      %708 = vmatpush1.bf16.msra.mxu0 %v700
      %709 = vmatprep.subr.bf16.mxu0 0
      %710 = vmatpush1.bf16.msra.mxu0 %v701
      %711 = vmatprep.subr.bf16.mxu0 0
      %712 = vmatpush1.bf16.msra.mxu0 0
      %713 = vmatprep.subr.bf16.mxu0 0
      %714 = vmatpush1.bf16.msra.mxu0 0
      %715 = vmatprep.subr.bf16.mxu0 0
      %716 = vmatpush1.bf16.msra.mxu0 0
      %717 = vmatprep.subr.bf16.mxu0 0
      %718 = vmatpush1.bf16.msra.mxu0 0
      %719 = vmatprep.subr.bf16.mxu0 0
      %720 = vmatpush1.bf16.msra.mxu0 0
      %721 = vmatprep.subr.bf16.mxu0 0
      %722 = vmatpush1.bf16.msra.mxu0 0
      %723 = vmatprep.subr.bf16.mxu0 0
      %724 = vmatpush1.bf16.msra.mxu0 0
      %725 = vmatprep.subr.bf16.mxu0 0
      %726 = vmatpush1.bf16.msra.mxu0 0
      %727 = vmatprep.subr.bf16.mxu0 0
      %728 = vmatpush1.bf16.msra.mxu0 0
      %729 = vmatprep.subr.bf16.mxu0 0
      %730 = vmatpush1.bf16.msra.mxu0 0
      %731 = vmatprep.subr.bf16.mxu0 0
      %732 = vmatpush1.bf16.msra.mxu0 0
      %733 = vmatprep.subr.bf16.mxu0 0
      %734 = vmatpush1.bf16.msra.mxu0 0
      %735 = vmatprep.subr.bf16.mxu0 0
      %736 = vmatpush1.bf16.msra.mxu0 0
      %737 = vmatprep.mubr.bf16.mxu0 0
      %738 = vmatmul.mubr.bf16.gmra.mrb[0].mxu0 %v557
      %v739 = vpop.f32.mrb[0].mxu0
      %v740 = vadd.f32 %v685, %v739
      %v741 = vpop.f32.mrb[0].mxu0
      %v742 = vpop.f32.mrb[0].mxu0
      %v743 = vpop.f32.mrb[0].mxu0
      %744 = vdwg.mxu0
      %v745 = vpack.c.bf16 %v594, %v594
      %v746 = vpack.c.bf16 %v667, %v667
      %vm747 = vcmask 195584
      %v749 = vsel %vm747, %v745, 0
      %v752 = vsel %vm747, %v746, 0
      %754 = vmatprep.subr.bf16.mxu0 0
      %755 = vmatpush1.bf16.xpose.msra.mxu0 %v752
      %756 = vmatprep.subr.bf16.mxu0 0
      %757 = vmatpush1.bf16.xpose.msra.mxu0 0
      %758 = vmatprep.subr.bf16.mxu0 0
      %759 = vmatpush1.bf16.xpose.msra.mxu0 0
      %760 = vmatprep.subr.bf16.mxu0 0
      %761 = vmatpush1.bf16.xpose.msra.mxu0 0
      %762 = vmatprep.subr.bf16.mxu0 0
      %763 = vmatpush1.bf16.xpose.msra.mxu0 0
      %764 = vmatprep.subr.bf16.mxu0 0
      %765 = vmatpush1.bf16.xpose.msra.mxu0 0
      %766 = vmatprep.subr.bf16.mxu0 0
      %767 = vmatpush1.bf16.xpose.msra.mxu0 0
      %768 = vmatprep.subr.bf16.mxu0 0
      %769 = vmatpush1.bf16.xpose.msra.mxu0 0
      %770 = vmatprep.subr.bf16.mxu0 0
      %771 = vmatpush1.bf16.xpose.msra.mxu0 0
      %772 = vmatprep.subr.bf16.mxu0 0
      %773 = vmatpush1.bf16.xpose.msra.mxu0 0
      %774 = vmatprep.subr.bf16.mxu0 0
      %775 = vmatpush1.bf16.xpose.msra.mxu0 0
      %776 = vmatprep.subr.bf16.mxu0 0
      %777 = vmatpush1.bf16.xpose.msra.mxu0 0
      %778 = vmatprep.subr.bf16.mxu0 0
      %779 = vmatpush1.bf16.xpose.msra.mxu0 0
      %780 = vmatprep.subr.bf16.mxu0 0
      %781 = vmatpush1.bf16.xpose.msra.mxu0 0
      %782 = vmatprep.subr.bf16.mxu0 0
      %783 = vmatpush1.bf16.xpose.msra.mxu0 0
      %784 = vmatprep.subr.bf16.mxu0 0
      %785 = vmatpush1.bf16.xpose.msra.mxu0 0
      %786 = vmatprep.mubr.bf16.mxu0 0
      %787 = vmatmul.mubr.bf16.gmra.mrb[0].mxu0 %v749
      %v788 = vpop.f32.mrb[0].mxu0
      %v789 = vadd.f32 0.0, %v788
      %v790 = vpop.f32.mrb[0].mxu0
      %v791 = vpop.f32.mrb[0].mxu0
      %v792 = vpop.f32.mrb[0].mxu0
      %793 = vdwg.mxu0
      %v794 = vmul.f32 %v789, 0.20412415
      %vm795 = vcmask 55296
      %v796 = vsel %vm795, %v794, -inf
      %797 = vmax.xlane.f32.xlu0 %v796
      %v798 = vpop.xlane.xlu0 %797
      %v799 = vsub.f32 %v794, %v798
      %v800 = vmul.f32 %v799, 1.442695
      %v801 = vpow.pop %v800
      %v802 = vsel %vm795, %v801, 0.0
      %803 = vadd.xlane.f32.xlu0 %v802
      %v804 = vpop.xlane.xlu0 %803
      %v805 = vrcp.pop %v804
      %v806 = vmul.f32 %v801, %v805
      %v807 = vpack.c.bf16 %v806, %v806
      %v808 = vpack.c.bf16 %v740, %v740
      %vm809 = vcmask 56320
      %v811 = vsel %vm809, %v807, 0
      %vm813 = vcmask 1042432
      %vm814 = vcmask 1043456
      %v815 = vsel %vm813, 4294967295, 65535
      %v816 = vsel %vm814, %v815, 0
      %v818 = vand.u32 %v808, %v816
      %820 = vmatprep.subr.bf16.mxu0 0
      %821 = vmatpush1.bf16.msra.mxu0 %v818
      %822 = vmatprep.subr.bf16.mxu0 0
      %823 = vmatpush1.bf16.msra.mxu0 0
      %824 = vmatprep.subr.bf16.mxu0 0
      %825 = vmatpush1.bf16.msra.mxu0 0
      %826 = vmatprep.subr.bf16.mxu0 0
      %827 = vmatpush1.bf16.msra.mxu0 0
      %828 = vmatprep.subr.bf16.mxu0 0
      %829 = vmatpush1.bf16.msra.mxu0 0
      %830 = vmatprep.subr.bf16.mxu0 0
      %831 = vmatpush1.bf16.msra.mxu0 0
      %832 = vmatprep.subr.bf16.mxu0 0
      %833 = vmatpush1.bf16.msra.mxu0 0
      %834 = vmatprep.subr.bf16.mxu0 0
      %835 = vmatpush1.bf16.msra.mxu0 0
      %836 = vmatprep.subr.bf16.mxu0 0
      %837 = vmatpush1.bf16.msra.mxu0 0
      %838 = vmatprep.subr.bf16.mxu0 0
      %839 = vmatpush1.bf16.msra.mxu0 0
      %840 = vmatprep.subr.bf16.mxu0 0
      %841 = vmatpush1.bf16.msra.mxu0 0
      %842 = vmatprep.subr.bf16.mxu0 0
      %843 = vmatpush1.bf16.msra.mxu0 0
      %844 = vmatprep.subr.bf16.mxu0 0
      %845 = vmatpush1.bf16.msra.mxu0 0
      %846 = vmatprep.subr.bf16.mxu0 0
      %847 = vmatpush1.bf16.msra.mxu0 0
      %848 = vmatprep.subr.bf16.mxu0 0
      %849 = vmatpush1.bf16.msra.mxu0 0
      %850 = vmatprep.subr.bf16.mxu0 0
      %851 = vmatpush1.bf16.msra.mxu0 0
      %852 = vmatprep.mubr.bf16.mxu0 0
      %853 = vmatmul.mubr.bf16.gmra.mrb[0].mxu0 %v811
      %v854 = vpop.f32.mrb[0].mxu0
      %v855 = vadd.f32 0.0, %v854
      %v856 = vpop.f32.mrb[0].mxu0
      %v857 = vpop.f32.mrb[0].mxu0
      %v858 = vpop.f32.mrb[0].mxu0
      %859 = vdwg.mxu0
      %v860 = vld [vmem:[%s5] sm:$0xf]
      %v861 = vld [vmem:[%s5 + $0x4] sm:$0xf]
      %v862 = vld [vmem:[%s5 + $0x8] sm:$0xf]
      %v863 = vpack.c.bf16 %v855, %v855
      %s864 = scalar_lea.vmem %s3, 24
      %v865 = vld [vmem:[%s864] sm:$0xf]
      %v866 = vld [vmem:[%s864 + $0x4] sm:$0xf]
      %v867 = vld [vmem:[%s864 + $0x8] sm:$0xf]
      %v868 = vld [vmem:[%s864 + $0xc] sm:$0xf]
      %v869 = vld [vmem:[%s864 + $0x10] sm:$0xf]
      %v870 = vld [vmem:[%s864 + $0x14] sm:$0xf]
      %s871 = scalar_lea.vmem %s4, 1
      %v872 = vld [vmem:[%s871] sm:$0x1]
      %v874 = vlaneseq
      %v875 = vshrl.u32 %v874, 7
      %v876 = vsub.s32 0, %v875
      %v877 = vrot.slane %v872, %v876
      %v885 = vunpack.c.l.b16 %v865
      %v886 = vunpack.c.l.b16 %v866
      %v887 = vunpack.c.l.b16 %v867
      %v888 = vunpack.c.l.b16 %v868
      %v889 = vunpack.c.l.b16 %v869
      %v890 = vunpack.c.l.b16 %v870
      %v891 = vpack.c.b16 %v886, %v885
      %v892 = vpack.c.b16 %v888, %v887
      %v893 = vpack.c.b16 %v890, %v889
      %897 = vmatprep.subr.bf16.mxu0 0
      %898 = vmatpush1.bf16.msra.mxu0 %v891
      %899 = vmatprep.subr.bf16.mxu0 0
      %900 = vmatpush1.bf16.msra.mxu0 %v892
      %901 = vmatprep.subr.bf16.mxu0 0
      %902 = vmatpush1.bf16.msra.mxu0 %v893
      %903 = vmatprep.subr.bf16.mxu0 0
      %904 = vmatpush1.bf16.msra.mxu0 0
      %905 = vmatprep.subr.bf16.mxu0 0
      %906 = vmatpush1.bf16.msra.mxu0 0
      %907 = vmatprep.subr.bf16.mxu0 0
      %908 = vmatpush1.bf16.msra.mxu0 0
      %909 = vmatprep.subr.bf16.mxu0 0
      %910 = vmatpush1.bf16.msra.mxu0 0
      %911 = vmatprep.subr.bf16.mxu0 0
      %912 = vmatpush1.bf16.msra.mxu0 0
      %913 = vmatprep.subr.bf16.mxu0 0
      %914 = vmatpush1.bf16.msra.mxu0 0
      %915 = vmatprep.subr.bf16.mxu0 0
      %916 = vmatpush1.bf16.msra.mxu0 0
      %917 = vmatprep.subr.bf16.mxu0 0
      %918 = vmatpush1.bf16.msra.mxu0 0
      %919 = vmatprep.subr.bf16.mxu0 0
      %920 = vmatpush1.bf16.msra.mxu0 0
      %921 = vmatprep.subr.bf16.mxu0 0
      %922 = vmatpush1.bf16.msra.mxu0 0
      %923 = vmatprep.subr.bf16.mxu0 0
      %924 = vmatpush1.bf16.msra.mxu0 0
      %925 = vmatprep.subr.bf16.mxu0 0
      %926 = vmatpush1.bf16.msra.mxu0 0
      %927 = vmatprep.subr.bf16.mxu0 0
      %928 = vmatpush1.bf16.msra.mxu0 0
      %929 = vmatprep.mubr.bf16.mxu0 0
      %930 = vmatmul.mubr.bf16.gmra.mrb[0].mxu0 %v557
      %v931 = vpop.f32.mrb[0].mxu0
      %v932 = vadd.f32 %v877, %v931
      %v933 = vpop.f32.mrb[0].mxu0
      %v934 = vpop.f32.mrb[0].mxu0
      %v935 = vpop.f32.mrb[0].mxu0
      %936 = vdwg.mxu0
      %s937 = scalar_lea.vmem %s3, 72
      %v938 = vld [vmem:[%s937] sm:$0xf]
      %v939 = vld [vmem:[%s937 + $0x4] sm:$0xf]
      %v940 = vld [vmem:[%s937 + $0x8] sm:$0xf]
      %v941 = vld [vmem:[%s937 + $0xc] sm:$0xf]
      %v942 = vld [vmem:[%s937 + $0x10] sm:$0xf]
      %v943 = vld [vmem:[%s937 + $0x14] sm:$0xf]
      %s944 = scalar_lea.vmem %s4, 3
      %v945 = vld [vmem:[%s944] sm:$0x1]
      %v947 = vlaneseq
      %v948 = vshrl.u32 %v947, 7
      %v949 = vsub.s32 0, %v948
      %v950 = vrot.slane %v945, %v949
      %v958 = vunpack.c.l.b16 %v938
      %v959 = vunpack.c.l.b16 %v939
      %v960 = vunpack.c.l.b16 %v940
      %v961 = vunpack.c.l.b16 %v941
      %v962 = vunpack.c.l.b16 %v942
      %v963 = vunpack.c.l.b16 %v943
      %v964 = vpack.c.b16 %v959, %v958
      %v965 = vpack.c.b16 %v961, %v960
      %v966 = vpack.c.b16 %v963, %v962
      %970 = vmatprep.subr.bf16.mxu0 0
      %971 = vmatpush1.bf16.msra.mxu0 %v964
      %972 = vmatprep.subr.bf16.mxu0 0
      %973 = vmatpush1.bf16.msra.mxu0 %v965
      %974 = vmatprep.subr.bf16.mxu0 0
      %975 = vmatpush1.bf16.msra.mxu0 %v966
      %976 = vmatprep.subr.bf16.mxu0 0
      %977 = vmatpush1.bf16.msra.mxu0 0
      %978 = vmatprep.subr.bf16.mxu0 0
      %979 = vmatpush1.bf16.msra.mxu0 0
      %980 = vmatprep.subr.bf16.mxu0 0
      %981 = vmatpush1.bf16.msra.mxu0 0
      %982 = vmatprep.subr.bf16.mxu0 0
      %983 = vmatpush1.bf16.msra.mxu0 0
      %984 = vmatprep.subr.bf16.mxu0 0
      %985 = vmatpush1.bf16.msra.mxu0 0
      %986 = vmatprep.subr.bf16.mxu0 0
      %987 = vmatpush1.bf16.msra.mxu0 0
      %988 = vmatprep.subr.bf16.mxu0 0
      %989 = vmatpush1.bf16.msra.mxu0 0
      %990 = vmatprep.subr.bf16.mxu0 0
      %991 = vmatpush1.bf16.msra.mxu0 0
      %992 = vmatprep.subr.bf16.mxu0 0
      %993 = vmatpush1.bf16.msra.mxu0 0
      %994 = vmatprep.subr.bf16.mxu0 0
      %995 = vmatpush1.bf16.msra.mxu0 0
      %996 = vmatprep.subr.bf16.mxu0 0
      %997 = vmatpush1.bf16.msra.mxu0 0
      %998 = vmatprep.subr.bf16.mxu0 0
      %999 = vmatpush1.bf16.msra.mxu0 0
      %1000 = vmatprep.subr.bf16.mxu0 0
      %1001 = vmatpush1.bf16.msra.mxu0 0
      %1002 = vmatprep.mubr.bf16.mxu0 0
      %1003 = vmatmul.mubr.bf16.gmra.mrb[0].mxu0 %v557
      %v1004 = vpop.f32.mrb[0].mxu0
      %v1005 = vadd.f32 %v950, %v1004
      %v1006 = vpop.f32.mrb[0].mxu0
      %v1007 = vpop.f32.mrb[0].mxu0
      %v1008 = vpop.f32.mrb[0].mxu0
      %1009 = vdwg.mxu0
      %s1010 = scalar_lea.vmem %s3, 120
      %v1011 = vld [vmem:[%s1010] sm:$0xf]
      %v1012 = vld [vmem:[%s1010 + $0x4] sm:$0xf]
      %v1013 = vld [vmem:[%s1010 + $0x8] sm:$0xf]
      %v1014 = vld [vmem:[%s1010 + $0xc] sm:$0xf]
      %v1015 = vld [vmem:[%s1010 + $0x10] sm:$0xf]
      %v1016 = vld [vmem:[%s1010 + $0x14] sm:$0xf]
      %s1017 = scalar_lea.vmem %s4, 5
      %v1018 = vld [vmem:[%s1017] sm:$0x1]
      %v1020 = vlaneseq
      %v1021 = vshrl.u32 %v1020, 7
      %v1022 = vsub.s32 0, %v1021
      %v1023 = vrot.slane %v1018, %v1022
      %v1031 = vunpack.c.l.b16 %v1011
      %v1032 = vunpack.c.l.b16 %v1012
      %v1033 = vunpack.c.l.b16 %v1013
      %v1034 = vunpack.c.l.b16 %v1014
      %v1035 = vunpack.c.l.b16 %v1015
      %v1036 = vunpack.c.l.b16 %v1016
      %v1037 = vpack.c.b16 %v1032, %v1031
      %v1038 = vpack.c.b16 %v1034, %v1033
      %v1039 = vpack.c.b16 %v1036, %v1035
      %1043 = vmatprep.subr.bf16.mxu0 0
      %1044 = vmatpush1.bf16.msra.mxu0 %v1037
      %1045 = vmatprep.subr.bf16.mxu0 0
      %1046 = vmatpush1.bf16.msra.mxu0 %v1038
      %1047 = vmatprep.subr.bf16.mxu0 0
      %1048 = vmatpush1.bf16.msra.mxu0 %v1039
      %1049 = vmatprep.subr.bf16.mxu0 0
      %1050 = vmatpush1.bf16.msra.mxu0 0
      %1051 = vmatprep.subr.bf16.mxu0 0
      %1052 = vmatpush1.bf16.msra.mxu0 0
      %1053 = vmatprep.subr.bf16.mxu0 0
      %1054 = vmatpush1.bf16.msra.mxu0 0
      %1055 = vmatprep.subr.bf16.mxu0 0
      %1056 = vmatpush1.bf16.msra.mxu0 0
      %1057 = vmatprep.subr.bf16.mxu0 0
      %1058 = vmatpush1.bf16.msra.mxu0 0
      %1059 = vmatprep.subr.bf16.mxu0 0
      %1060 = vmatpush1.bf16.msra.mxu0 0
      %1061 = vmatprep.subr.bf16.mxu0 0
      %1062 = vmatpush1.bf16.msra.mxu0 0
      %1063 = vmatprep.subr.bf16.mxu0 0
      %1064 = vmatpush1.bf16.msra.mxu0 0
      %1065 = vmatprep.subr.bf16.mxu0 0
      %1066 = vmatpush1.bf16.msra.mxu0 0
      %1067 = vmatprep.subr.bf16.mxu0 0
      %1068 = vmatpush1.bf16.msra.mxu0 0
      %1069 = vmatprep.subr.bf16.mxu0 0
      %1070 = vmatpush1.bf16.msra.mxu0 0
      %1071 = vmatprep.subr.bf16.mxu0 0
      %1072 = vmatpush1.bf16.msra.mxu0 0
      %1073 = vmatprep.subr.bf16.mxu0 0
      %1074 = vmatpush1.bf16.msra.mxu0 0
      %1075 = vmatprep.mubr.bf16.mxu0 0
      %1076 = vmatmul.mubr.bf16.gmra.mrb[0].mxu0 %v557
      %v1077 = vpop.f32.mrb[0].mxu0
      %v1078 = vadd.f32 %v1023, %v1077
      %v1079 = vpop.f32.mrb[0].mxu0
      %v1080 = vpop.f32.mrb[0].mxu0
      %v1081 = vpop.f32.mrb[0].mxu0
      %1082 = vdwg.mxu0
      %v1083 = vpack.c.bf16 %v932, %v932
      %v1084 = vpack.c.bf16 %v1005, %v1005
      %v1086 = vsel %vm747, %v1083, 0
      %v1089 = vsel %vm747, %v1084, 0
      %1091 = vmatprep.subr.bf16.mxu0 0
      %1092 = vmatpush1.bf16.xpose.msra.mxu0 %v1089
      %1093 = vmatprep.subr.bf16.mxu0 0
      %1094 = vmatpush1.bf16.xpose.msra.mxu0 0
      %1095 = vmatprep.subr.bf16.mxu0 0
      %1096 = vmatpush1.bf16.xpose.msra.mxu0 0
      %1097 = vmatprep.subr.bf16.mxu0 0
      %1098 = vmatpush1.bf16.xpose.msra.mxu0 0
      %1099 = vmatprep.subr.bf16.mxu0 0
      %1100 = vmatpush1.bf16.xpose.msra.mxu0 0
      %1101 = vmatprep.subr.bf16.mxu0 0
      %1102 = vmatpush1.bf16.xpose.msra.mxu0 0
      %1103 = vmatprep.subr.bf16.mxu0 0
      %1104 = vmatpush1.bf16.xpose.msra.mxu0 0
      %1105 = vmatprep.subr.bf16.mxu0 0
      %1106 = vmatpush1.bf16.xpose.msra.mxu0 0
      %1107 = vmatprep.subr.bf16.mxu0 0
      %1108 = vmatpush1.bf16.xpose.msra.mxu0 0
      %1109 = vmatprep.subr.bf16.mxu0 0
      %1110 = vmatpush1.bf16.xpose.msra.mxu0 0
      %1111 = vmatprep.subr.bf16.mxu0 0
      %1112 = vmatpush1.bf16.xpose.msra.mxu0 0
      %1113 = vmatprep.subr.bf16.mxu0 0
      %1114 = vmatpush1.bf16.xpose.msra.mxu0 0
      %1115 = vmatprep.subr.bf16.mxu0 0
      %1116 = vmatpush1.bf16.xpose.msra.mxu0 0
      %1117 = vmatprep.subr.bf16.mxu0 0
      %1118 = vmatpush1.bf16.xpose.msra.mxu0 0
      %1119 = vmatprep.subr.bf16.mxu0 0
      %1120 = vmatpush1.bf16.xpose.msra.mxu0 0
      %1121 = vmatprep.subr.bf16.mxu0 0
      %1122 = vmatpush1.bf16.xpose.msra.mxu0 0
      %1123 = vmatprep.mubr.bf16.mxu0 0
      %1124 = vmatmul.mubr.bf16.gmra.mrb[0].mxu0 %v1086
      %v1125 = vpop.f32.mrb[0].mxu0
      %v1126 = vadd.f32 0.0, %v1125
      %v1127 = vpop.f32.mrb[0].mxu0
      %v1128 = vpop.f32.mrb[0].mxu0
      %v1129 = vpop.f32.mrb[0].mxu0
      %1130 = vdwg.mxu0
      %v1131 = vmul.f32 %v1126, 0.20412415
      %v1132 = vsel %vm795, %v1131, -inf
      %1133 = vmax.xlane.f32.xlu0 %v1132
      %v1134 = vpop.xlane.xlu0 %1133
      %v1135 = vsub.f32 %v1131, %v1134
      %v1136 = vmul.f32 %v1135, 1.442695
      %v1137 = vpow.pop %v1136
      %v1138 = vsel %vm795, %v1137, 0.0
      %1139 = vadd.xlane.f32.xlu0 %v1138
      %v1140 = vpop.xlane.xlu0 %1139
      %v1141 = vrcp.pop %v1140
      %v1142 = vmul.f32 %v1137, %v1141
      %v1143 = vpack.c.bf16 %v1142, %v1142
      %v1144 = vpack.c.bf16 %v1078, %v1078
      %v1146 = vsel %vm809, %v1143, 0
      %v1149 = vand.u32 %v1144, %v816
      %1151 = vmatprep.subr.bf16.mxu0 0
      %1152 = vmatpush1.bf16.msra.mxu0 %v1149
      %1153 = vmatprep.subr.bf16.mxu0 0
      %1154 = vmatpush1.bf16.msra.mxu0 0
      %1155 = vmatprep.subr.bf16.mxu0 0
      %1156 = vmatpush1.bf16.msra.mxu0 0
      %1157 = vmatprep.subr.bf16.mxu0 0
      %1158 = vmatpush1.bf16.msra.mxu0 0
      %1159 = vmatprep.subr.bf16.mxu0 0
      %1160 = vmatpush1.bf16.msra.mxu0 0
      %1161 = vmatprep.subr.bf16.mxu0 0
      %1162 = vmatpush1.bf16.msra.mxu0 0
      %1163 = vmatprep.subr.bf16.mxu0 0
      %1164 = vmatpush1.bf16.msra.mxu0 0
      %1165 = vmatprep.subr.bf16.mxu0 0
      %1166 = vmatpush1.bf16.msra.mxu0 0
      %1167 = vmatprep.subr.bf16.mxu0 0
      %1168 = vmatpush1.bf16.msra.mxu0 0
      %1169 = vmatprep.subr.bf16.mxu0 0
      %1170 = vmatpush1.bf16.msra.mxu0 0
      %1171 = vmatprep.subr.bf16.mxu0 0
      %1172 = vmatpush1.bf16.msra.mxu0 0
      %1173 = vmatprep.subr.bf16.mxu0 0
      %1174 = vmatpush1.bf16.msra.mxu0 0
      %1175 = vmatprep.subr.bf16.mxu0 0
      %1176 = vmatpush1.bf16.msra.mxu0 0
      %1177 = vmatprep.subr.bf16.mxu0 0
      %1178 = vmatpush1.bf16.msra.mxu0 0
      %1179 = vmatprep.subr.bf16.mxu0 0
      %1180 = vmatpush1.bf16.msra.mxu0 0
      %1181 = vmatprep.subr.bf16.mxu0 0
      %1182 = vmatpush1.bf16.msra.mxu0 0
      %1183 = vmatprep.mubr.bf16.mxu0 0
      %1184 = vmatmul.mubr.bf16.gmra.mrb[0].mxu0 %v1146
      %v1185 = vpop.f32.mrb[0].mxu0
      %v1186 = vadd.f32 0.0, %v1185
      %v1187 = vpop.f32.mrb[0].mxu0
      %v1188 = vpop.f32.mrb[0].mxu0
      %v1189 = vpop.f32.mrb[0].mxu0
      %1190 = vdwg.mxu0
      %s1191 = scalar_lea.vmem %s5, 12
      %v1192 = vld [vmem:[%s1191] sm:$0xf]
      %v1193 = vld [vmem:[%s1191 + $0x4] sm:$0xf]
      %v1194 = vld [vmem:[%s1191 + $0x8] sm:$0xf]
      %v1195 = vpack.c.bf16 %v1186, %v1186
      %v1199 = vunpack.c.l.b16 %v1192
      %v1200 = vunpack.c.l.b16 %v1193
      %v1201 = vunpack.c.l.b16 %v1194
      %v1202 = vpack.c.b16 %v1200, %v1199
      %v1203 = vpack.c.b16 %v1201, %v1201
      %v1206 = vsel %vm747, %v1195, 0
      %v1209 = vsel %vm814, %v1203, 0
      %1211 = vmatprep.subr.bf16.mxu0 0
      %1212 = vmatpush1.bf16.msra.mxu0 %v1202
      %1213 = vmatprep.subr.bf16.mxu0 0
      %1214 = vmatpush1.bf16.msra.mxu0 %v1209
      %1215 = vmatprep.subr.bf16.mxu0 0
      %1216 = vmatpush1.bf16.msra.mxu0 0
      %1217 = vmatprep.subr.bf16.mxu0 0
      %1218 = vmatpush1.bf16.msra.mxu0 0
      %1219 = vmatprep.subr.bf16.mxu0 0
      %1220 = vmatpush1.bf16.msra.mxu0 0
      %1221 = vmatprep.subr.bf16.mxu0 0
      %1222 = vmatpush1.bf16.msra.mxu0 0
      %1223 = vmatprep.subr.bf16.mxu0 0
      %1224 = vmatpush1.bf16.msra.mxu0 0
      %1225 = vmatprep.subr.bf16.mxu0 0
      %1226 = vmatpush1.bf16.msra.mxu0 0
      %1227 = vmatprep.subr.bf16.mxu0 0
      %1228 = vmatpush1.bf16.msra.mxu0 0
      %1229 = vmatprep.subr.bf16.mxu0 0
      %1230 = vmatpush1.bf16.msra.mxu0 0
      %1231 = vmatprep.subr.bf16.mxu0 0
      %1232 = vmatpush1.bf16.msra.mxu0 0
      %1233 = vmatprep.subr.bf16.mxu0 0
      %1234 = vmatpush1.bf16.msra.mxu0 0
      %1235 = vmatprep.subr.bf16.mxu0 0
      %1236 = vmatpush1.bf16.msra.mxu0 0
      %1237 = vmatprep.subr.bf16.mxu0 0
      %1238 = vmatpush1.bf16.msra.mxu0 0
      %1239 = vmatprep.subr.bf16.mxu0 0
      %1240 = vmatpush1.bf16.msra.mxu0 0
      %1241 = vmatprep.subr.bf16.mxu0 0
      %1242 = vmatpush1.bf16.msra.mxu0 0
      %1243 = vmatprep.mubr.bf16.mxu0 0
      %1244 = vmatmul.mubr.bf16.gmra.mrb[0].mxu0 %v1206
      %v1245 = vpop.f32.mrb[0].mxu0
      %v1246 = vadd.f32 0.0, %v1245
      %v1247 = vpop.f32.mrb[0].mxu0
      %v1248 = vpop.f32.mrb[0].mxu0
      %v1249 = vpop.f32.mrb[0].mxu0
      %1250 = vdwg.mxu0
      %v1254 = vunpack.c.l.b16 %v860
      %v1255 = vunpack.c.l.b16 %v861
      %v1256 = vunpack.c.l.b16 %v862
      %v1257 = vpack.c.b16 %v1255, %v1254
      %v1258 = vpack.c.b16 %v1256, %v1256
      %v1261 = vsel %vm747, %v863, 0
      %v1264 = vsel %vm814, %v1258, 0
      %1266 = vmatprep.subr.bf16.mxu0 0
      %1267 = vmatpush1.bf16.msra.mxu0 %v1257
      %1268 = vmatprep.subr.bf16.mxu0 0
      %1269 = vmatpush1.bf16.msra.mxu0 %v1264
      %1270 = vmatprep.subr.bf16.mxu0 0
      %1271 = vmatpush1.bf16.msra.mxu0 0
      %1272 = vmatprep.subr.bf16.mxu0 0
      %1273 = vmatpush1.bf16.msra.mxu0 0
      %1274 = vmatprep.subr.bf16.mxu0 0
      %1275 = vmatpush1.bf16.msra.mxu0 0
      %1276 = vmatprep.subr.bf16.mxu0 0
      %1277 = vmatpush1.bf16.msra.mxu0 0
      %1278 = vmatprep.subr.bf16.mxu0 0
      %1279 = vmatpush1.bf16.msra.mxu0 0
      %1280 = vmatprep.subr.bf16.mxu0 0
      %1281 = vmatpush1.bf16.msra.mxu0 0
      %1282 = vmatprep.subr.bf16.mxu0 0
      %1283 = vmatpush1.bf16.msra.mxu0 0
      %1284 = vmatprep.subr.bf16.mxu0 0
      %1285 = vmatpush1.bf16.msra.mxu0 0
      %1286 = vmatprep.subr.bf16.mxu0 0
      %1287 = vmatpush1.bf16.msra.mxu0 0
      %1288 = vmatprep.subr.bf16.mxu0 0
      %1289 = vmatpush1.bf16.msra.mxu0 0
      %1290 = vmatprep.subr.bf16.mxu0 0
      %1291 = vmatpush1.bf16.msra.mxu0 0
      %1292 = vmatprep.subr.bf16.mxu0 0
      %1293 = vmatpush1.bf16.msra.mxu0 0
      %1294 = vmatprep.subr.bf16.mxu0 0
      %1295 = vmatpush1.bf16.msra.mxu0 0
      %1296 = vmatprep.subr.bf16.mxu0 0
      %1297 = vmatpush1.bf16.msra.mxu0 0
      %1298 = vmatprep.mubr.bf16.mxu0 0
      %1299 = vmatmul.mubr.bf16.gmra.mrb[0].mxu0 %v1261
      %v1300 = vpop.f32.mrb[0].mxu0
      %v1301 = vadd.f32 %v1246, %v1300
      %v1302 = vpop.f32.mrb[0].mxu0
      %v1303 = vpop.f32.mrb[0].mxu0
      %v1304 = vpop.f32.mrb[0].mxu0
      %1305 = vdwg.mxu0
      %v1306 = vld [vmem:[%s6] sm:$0x1]
      %v1308 = vlaneseq
      %v1309 = vshrl.u32 %v1308, 7
      %v1310 = vsub.s32 0, %v1309
      %v1311 = vrot.slane %v1306, %v1310
      %v1313 = vadd.f32 %v1301, %v1311
      %v1314 = vadd.f32 %v491, %v1313
      %v1315 = vld [vmem:[%s7] sm:$0x1]
      %v1316 = vld [vmem:[%s8] sm:$0x1]
      %v1317 = vsel %vm494, %v1314, 0.0
      %1318 = vadd.xlane.f32.xlu0 %v1317
      %v1319 = vpop.xlane.xlu0 %1318
      %v1320 = vmul.f32 %v1319, %v498
      %v1321 = vsub.f32 %v1314, %v1320
      %v1322 = vmul.f32 %v1321, %v1321
      %v1323 = vsel %vm494, %v1322, 0.0
      %1324 = vadd.xlane.f32.xlu0 %v1323
      %v1325 = vpop.xlane.xlu0 %1324
      %v1326 = vmul.f32 %v1325, %v498
      %v1327 = vadd.f32 %v1326, 1e-05
      %v1328 = vrsqrt.pop %v1327
      %v1329 = vmul.f32 %v1321, %v1328
      %v1331 = vlaneseq
      %v1332 = vshrl.u32 %v1331, 7
      %v1333 = vsub.s32 0, %v1332
      %v1334 = vrot.slane %v1315, %v1333
      %v1336 = vmul.f32 %v1329, %v1334
      %v1338 = vlaneseq
      %v1339 = vshrl.u32 %v1338, 7
      %v1340 = vsub.s32 0, %v1339
      %v1341 = vrot.slane %v1316, %v1340
      %v1343 = vadd.f32 %v1336, %v1341
      %v1344 = vld [vmem:[%s9] sm:$0xff]
      %v1345 = vld [vmem:[%s9 + $0x8] sm:$0xff]
      %v1346 = vld [vmem:[%s9 + $0x10] sm:$0xff]
      %v1347 = vld [vmem:[%s9 + $0x18] sm:$0xff]
      %v1348 = vld [vmem:[%s9 + $0x20] sm:$0xff]
      %v1349 = vld [vmem:[%s9 + $0x28] sm:$0xff]
      %v1350 = vpack.c.bf16 %v1343, %v1343
      %v1351 = vld [vmem:[%s10] sm:$0x3]
      %v1353 = vlaneseq
      %v1354 = vshrl.u32 %v1353, 7
      %v1355 = vsub.s32 0, %v1354
      %v1356 = vrot.slane %v1351, %v1355
      %v1357 = vlaneseq
      %v1358 = vshrl.u32 %v1357, 7
      %v1359 = vsub.s32 1, %v1358
      %v1360 = vrot.slane %v1351, %v1359
      %v1369 = vunpack.c.l.b16 %v1344
      %v1370 = vunpack.c.h.b16 %v1344
      %v1371 = vunpack.c.l.b16 %v1345
      %v1372 = vunpack.c.h.b16 %v1345
      %v1373 = vunpack.c.l.b16 %v1346
      %v1374 = vunpack.c.h.b16 %v1346
      %v1375 = vunpack.c.l.b16 %v1347
      %v1376 = vunpack.c.h.b16 %v1347
      %v1377 = vunpack.c.l.b16 %v1348
      %v1378 = vunpack.c.h.b16 %v1348
      %v1379 = vunpack.c.l.b16 %v1349
      %v1380 = vunpack.c.h.b16 %v1349
      %v1381 = vpack.c.b16 %v1371, %v1369
      %v1382 = vpack.c.b16 %v1372, %v1370
      %v1383 = vpack.c.b16 %v1375, %v1373
      %v1384 = vpack.c.b16 %v1376, %v1374
      %v1385 = vpack.c.b16 %v1379, %v1377
      %v1386 = vpack.c.b16 %v1380, %v1378
      %v1394 = vsel %vm555, %v1350, 0
      %1396 = vmatprep.subr.bf16.mxu0 %v1382
      %1397 = vmatpush1.bf16.msra.mxu0 %v1381
      %1398 = vmatprep.subr.bf16.mxu0 %v1384
      %1399 = vmatpush1.bf16.msra.mxu0 %v1383
      %1400 = vmatprep.subr.bf16.mxu0 %v1386
      %1401 = vmatpush1.bf16.msra.mxu0 %v1385
      %1402 = vmatprep.subr.bf16.mxu0 0
      %1403 = vmatpush1.bf16.msra.mxu0 0
      %1404 = vmatprep.subr.bf16.mxu0 0
      %1405 = vmatpush1.bf16.msra.mxu0 0
      %1406 = vmatprep.subr.bf16.mxu0 0
      %1407 = vmatpush1.bf16.msra.mxu0 0
      %1408 = vmatprep.subr.bf16.mxu0 0
      %1409 = vmatpush1.bf16.msra.mxu0 0
      %1410 = vmatprep.subr.bf16.mxu0 0
      %1411 = vmatpush1.bf16.msra.mxu0 0
      %1412 = vmatprep.subr.bf16.mxu0 0
      %1413 = vmatpush1.bf16.msra.mxu0 0
      %1414 = vmatprep.subr.bf16.mxu0 0
      %1415 = vmatpush1.bf16.msra.mxu0 0
      %1416 = vmatprep.subr.bf16.mxu0 0
      %1417 = vmatpush1.bf16.msra.mxu0 0
      %1418 = vmatprep.subr.bf16.mxu0 0
      %1419 = vmatpush1.bf16.msra.mxu0 0
      %1420 = vmatprep.subr.bf16.mxu0 0
      %1421 = vmatpush1.bf16.msra.mxu0 0
      %1422 = vmatprep.subr.bf16.mxu0 0
      %1423 = vmatpush1.bf16.msra.mxu0 0
      %1424 = vmatprep.subr.bf16.mxu0 0
      %1425 = vmatpush1.bf16.msra.mxu0 0
      %1426 = vmatprep.subr.bf16.mxu0 0
      %1427 = vmatpush1.bf16.msra.mxu0 0
      %1428 = vmatprep.mubr.bf16.mxu0 0
      %1429 = vmatmul.mubr.bf16.gmra.mrb[0].mxu0 %v1394
      %v1430 = vpop.f32.mrb[0].mxu0
      %v1431 = vadd.f32 %v1356, %v1430
      %v1432 = vpop.f32.mrb[0].mxu0
      %v1433 = vadd.f32 %v1360, %v1432
      %v1434 = vpop.f32.mrb[0].mxu0
      %v1435 = vpop.f32.mrb[0].mxu0
      %1436 = vdwg.mxu0
      %v1437 = vmul.f32 %v1431, 0.5
      %v1438 = vmul.f32 %v1433, 0.5
      %v1439 = vmul.f32 %v1431, %v1431
      %v1440 = vmul.f32 %v1433, %v1433
      %v1441 = vmul.f32 %v1439, %v1431
      %v1442 = vmul.f32 %v1440, %v1433
      %v1443 = vmul.f32 %v1441, 0.044715
      %v1444 = vmul.f32 %v1442, 0.044715
      %v1445 = vadd.f32 %v1431, %v1443
      %v1446 = vadd.f32 %v1433, %v1444
      %v1447 = vmul.f32 %v1445, 0.7978846
      %v1448 = vmul.f32 %v1446, 0.7978846
      %v1449 = vtanh.pop %v1447
      %v1450 = vtanh.pop %v1448
      %v1451 = vadd.f32 %v1449, 1.0
      %v1452 = vadd.f32 %v1450, 1.0
      %v1453 = vmul.f32 %v1437, %v1451
      %v1454 = vmul.f32 %v1438, %v1452
      %v1455 = vld [vmem:[%s11] sm:$0xf]
      %v1456 = vld [vmem:[%s11 + $0x4] sm:$0xf]
      %v1457 = vld [vmem:[%s11 + $0x8] sm:$0xf]
      %v1458 = vld [vmem:[%s11 + $0xc] sm:$0xf]
      %v1459 = vld [vmem:[%s11 + $0x10] sm:$0xf]
      %v1460 = vld [vmem:[%s11 + $0x14] sm:$0xf]
      %v1461 = vld [vmem:[%s11 + $0x18] sm:$0xf]
      %v1462 = vld [vmem:[%s11 + $0x1c] sm:$0xf]
      %v1463 = vld [vmem:[%s11 + $0x20] sm:$0xf]
      %v1464 = vld [vmem:[%s11 + $0x24] sm:$0xf]
      %v1465 = vld [vmem:[%s11 + $0x28] sm:$0xf]
      %v1466 = vld [vmem:[%s11 + $0x2c] sm:$0xf]
      %v1467 = vld [vmem:[%s11 + $0x30] sm:$0xf]
      %v1468 = vld [vmem:[%s11 + $0x34] sm:$0xf]
      %v1469 = vld [vmem:[%s11 + $0x38] sm:$0xf]
      %v1470 = vld [vmem:[%s11 + $0x3c] sm:$0xf]
      %v1471 = vld [vmem:[%s11 + $0x40] sm:$0xf]
      %v1472 = vld [vmem:[%s11 + $0x44] sm:$0xf]
      %v1473 = vld [vmem:[%s11 + $0x48] sm:$0xf]
      %v1474 = vld [vmem:[%s11 + $0x4c] sm:$0xf]
      %v1475 = vld [vmem:[%s11 + $0x50] sm:$0xf]
      %v1476 = vld [vmem:[%s11 + $0x54] sm:$0xf]
      %v1477 = vld [vmem:[%s11 + $0x58] sm:$0xf]
      %v1478 = vld [vmem:[%s11 + $0x5c] sm:$0xf]
      %v1479 = vpack.c.bf16 %v1453, %v1453
      %v1480 = vpack.c.bf16 %v1454, %v1454
      %v1481 = vld [vmem:[%s12] sm:$0x1]
      %v1483 = vlaneseq
      %v1484 = vshrl.u32 %v1483, 7
      %v1485 = vsub.s32 0, %v1484
      %v1486 = vrot.slane %v1481, %v1485
      %v1512 = vunpack.c.l.b16 %v1455
      %v1513 = vunpack.c.l.b16 %v1456
      %v1514 = vunpack.c.l.b16 %v1457
      %v1515 = vunpack.c.l.b16 %v1458
      %v1516 = vunpack.c.l.b16 %v1459
      %v1517 = vunpack.c.l.b16 %v1460
      %v1518 = vunpack.c.l.b16 %v1461
      %v1519 = vunpack.c.l.b16 %v1462
      %v1520 = vunpack.c.l.b16 %v1463
      %v1521 = vunpack.c.l.b16 %v1464
      %v1522 = vunpack.c.l.b16 %v1465
      %v1523 = vunpack.c.l.b16 %v1466
      %v1524 = vunpack.c.l.b16 %v1467
      %v1525 = vunpack.c.l.b16 %v1468
      %v1526 = vunpack.c.l.b16 %v1469
      %v1527 = vunpack.c.l.b16 %v1470
      %v1528 = vunpack.c.l.b16 %v1471
      %v1529 = vunpack.c.l.b16 %v1472
      %v1530 = vunpack.c.l.b16 %v1473
      %v1531 = vunpack.c.l.b16 %v1474
      %v1532 = vunpack.c.l.b16 %v1475
      %v1533 = vunpack.c.l.b16 %v1476
      %v1534 = vunpack.c.l.b16 %v1477
      %v1535 = vunpack.c.l.b16 %v1478
      %v1536 = vpack.c.b16 %v1513, %v1512
      %v1537 = vpack.c.b16 %v1515, %v1514
      %v1538 = vpack.c.b16 %v1517, %v1516
      %v1539 = vpack.c.b16 %v1519, %v1518
      %v1540 = vpack.c.b16 %v1521, %v1520
      %v1541 = vpack.c.b16 %v1523, %v1522
      %v1542 = vpack.c.b16 %v1525, %v1524
      %v1543 = vpack.c.b16 %v1527, %v1526
      %v1544 = vpack.c.b16 %v1529, %v1528
      %v1545 = vpack.c.b16 %v1531, %v1530
      %v1546 = vpack.c.b16 %v1533, %v1532
      %v1547 = vpack.c.b16 %v1535, %v1534
      %vm1560 = vcmask 523264
      %v1562 = vsel %vm1560, %v1480, 0
      %1564 = vmatprep.subr.bf16.mxu0 0
      %1565 = vmatpush1.bf16.msra.mxu0 %v1536
      %1566 = vmatprep.subr.bf16.mxu0 0
      %1567 = vmatpush1.bf16.msra.mxu0 %v1537
      %1568 = vmatprep.subr.bf16.mxu0 0
      %1569 = vmatpush1.bf16.msra.mxu0 %v1538
      %1570 = vmatprep.subr.bf16.mxu0 0
      %1571 = vmatpush1.bf16.msra.mxu0 %v1539
      %1572 = vmatprep.subr.bf16.mxu0 0
      %1573 = vmatpush1.bf16.msra.mxu0 %v1540
      %1574 = vmatprep.subr.bf16.mxu0 0
      %1575 = vmatpush1.bf16.msra.mxu0 %v1541
      %1576 = vmatprep.subr.bf16.mxu0 0
      %1577 = vmatpush1.bf16.msra.mxu0 %v1542
      %1578 = vmatprep.subr.bf16.mxu0 0
      %1579 = vmatpush1.bf16.msra.mxu0 %v1543
      %1580 = vmatprep.subr.bf16.mxu0 0
      %1581 = vmatpush1.bf16.msra.mxu0 %v1544
      %1582 = vmatprep.subr.bf16.mxu0 0
      %1583 = vmatpush1.bf16.msra.mxu0 %v1545
      %1584 = vmatprep.subr.bf16.mxu0 0
      %1585 = vmatpush1.bf16.msra.mxu0 %v1546
      %1586 = vmatprep.subr.bf16.mxu0 0
      %1587 = vmatpush1.bf16.msra.mxu0 %v1547
      %1588 = vmatprep.subr.bf16.mxu0 0
      %1589 = vmatpush1.bf16.msra.mxu0 0
      %1590 = vmatprep.subr.bf16.mxu0 0
      %1591 = vmatpush1.bf16.msra.mxu0 0
      %1592 = vmatprep.subr.bf16.mxu0 0
      %1593 = vmatpush1.bf16.msra.mxu0 0
      %1594 = vmatprep.subr.bf16.mxu0 0
      %1595 = vmatpush1.bf16.msra.mxu0 0
      %1596 = vmatprep.mubr.bf16.mxu0 %v1562
      %1597 = vmatmul.mubr.bf16.gmra.mrb[0].mxu0 %v1479
      %v1598 = vpop.f32.mrb[0].mxu0
      %v1599 = vadd.f32 %v1486, %v1598
      %v1600 = vpop.f32.mrb[0].mxu0
      %v1601 = vpop.f32.mrb[0].mxu0
      %v1602 = vpop.f32.mrb[0].mxu0
      %1603 = vdwg.mxu0
      %v1604 = vadd.f32 %v1314, %v1599
      %s1605 = scalar_lea.vmem %s1, 1
      %v1606 = vld [vmem:[%s1605] sm:$0x1]
      %s1607 = scalar_lea.vmem %s2, 1
      %v1608 = vld [vmem:[%s1607] sm:$0x1]
      %v1609 = vsel %vm494, %v1604, 0.0
      %1610 = vadd.xlane.f32.xlu0 %v1609
      %v1611 = vpop.xlane.xlu0 %1610
      %v1612 = vmul.f32 %v1611, %v498
      %v1613 = vsub.f32 %v1604, %v1612
      %v1614 = vmul.f32 %v1613, %v1613
      %v1615 = vsel %vm494, %v1614, 0.0
      %1616 = vadd.xlane.f32.xlu0 %v1615
      %v1617 = vpop.xlane.xlu0 %1616
      %v1618 = vmul.f32 %v1617, %v498
      %v1619 = vadd.f32 %v1618, 1e-05
      %v1620 = vrsqrt.pop %v1619
      %v1621 = vmul.f32 %v1613, %v1620
      %v1623 = vlaneseq
      %v1624 = vshrl.u32 %v1623, 7
      %v1625 = vsub.s32 0, %v1624
      %v1626 = vrot.slane %v1606, %v1625
      %v1628 = vmul.f32 %v1621, %v1626
      %v1630 = vlaneseq
      %v1631 = vshrl.u32 %v1630, 7
      %v1632 = vsub.s32 0, %v1631
      %v1633 = vrot.slane %v1608, %v1632
      %v1635 = vadd.f32 %v1628, %v1633
      %s1636 = scalar_lea.vmem %s3, 144
      %v1637 = vld [vmem:[%s1636] sm:$0xf]
      %v1638 = vld [vmem:[%s1636 + $0x4] sm:$0xf]
      %v1639 = vld [vmem:[%s1636 + $0x8] sm:$0xf]
      %v1640 = vld [vmem:[%s1636 + $0xc] sm:$0xf]
      %v1641 = vld [vmem:[%s1636 + $0x10] sm:$0xf]
      %v1642 = vld [vmem:[%s1636 + $0x14] sm:$0xf]
      %v1643 = vpack.c.bf16 %v1635, %v1635
      %s1644 = scalar_lea.vmem %s4, 6
      %v1645 = vld [vmem:[%s1644] sm:$0x1]
      %v1647 = vlaneseq
      %v1648 = vshrl.u32 %v1647, 7
      %v1649 = vsub.s32 0, %v1648
      %v1650 = vrot.slane %v1645, %v1649
      %v1658 = vunpack.c.l.b16 %v1637
      %v1659 = vunpack.c.l.b16 %v1638
      %v1660 = vunpack.c.l.b16 %v1639
      %v1661 = vunpack.c.l.b16 %v1640
      %v1662 = vunpack.c.l.b16 %v1641
      %v1663 = vunpack.c.l.b16 %v1642
      %v1664 = vpack.c.b16 %v1659, %v1658
      %v1665 = vpack.c.b16 %v1661, %v1660
      %v1666 = vpack.c.b16 %v1663, %v1662
      %v1671 = vsel %vm555, %v1643, 0
      %1673 = vmatprep.subr.bf16.mxu0 0
      %1674 = vmatpush1.bf16.msra.mxu0 %v1664
      %1675 = vmatprep.subr.bf16.mxu0 0
      %1676 = vmatpush1.bf16.msra.mxu0 %v1665
      %1677 = vmatprep.subr.bf16.mxu0 0
      %1678 = vmatpush1.bf16.msra.mxu0 %v1666
      %1679 = vmatprep.subr.bf16.mxu0 0
      %1680 = vmatpush1.bf16.msra.mxu0 0
      %1681 = vmatprep.subr.bf16.mxu0 0
      %1682 = vmatpush1.bf16.msra.mxu0 0
      %1683 = vmatprep.subr.bf16.mxu0 0
      %1684 = vmatpush1.bf16.msra.mxu0 0
      %1685 = vmatprep.subr.bf16.mxu0 0
      %1686 = vmatpush1.bf16.msra.mxu0 0
      %1687 = vmatprep.subr.bf16.mxu0 0
      %1688 = vmatpush1.bf16.msra.mxu0 0
      %1689 = vmatprep.subr.bf16.mxu0 0
      %1690 = vmatpush1.bf16.msra.mxu0 0
      %1691 = vmatprep.subr.bf16.mxu0 0
      %1692 = vmatpush1.bf16.msra.mxu0 0
      %1693 = vmatprep.subr.bf16.mxu0 0
      %1694 = vmatpush1.bf16.msra.mxu0 0
      %1695 = vmatprep.subr.bf16.mxu0 0
      %1696 = vmatpush1.bf16.msra.mxu0 0
      %1697 = vmatprep.subr.bf16.mxu0 0
      %1698 = vmatpush1.bf16.msra.mxu0 0
      %1699 = vmatprep.subr.bf16.mxu0 0
      %1700 = vmatpush1.bf16.msra.mxu0 0
      %1701 = vmatprep.subr.bf16.mxu0 0
      %1702 = vmatpush1.bf16.msra.mxu0 0
      %1703 = vmatprep.subr.bf16.mxu0 0
      %1704 = vmatpush1.bf16.msra.mxu0 0
      %1705 = vmatprep.mubr.bf16.mxu0 0
      %1706 = vmatmul.mubr.bf16.gmra.mrb[0].mxu0 %v1671
      %v1707 = vpop.f32.mrb[0].mxu0
      %v1708 = vadd.f32 %v1650, %v1707
      %v1709 = vpop.f32.mrb[0].mxu0
      %v1710 = vpop.f32.mrb[0].mxu0
      %v1711 = vpop.f32.mrb[0].mxu0
      %1712 = vdwg.mxu0
      %s1713 = scalar_lea.vmem %s3, 192
      %v1714 = vld [vmem:[%s1713] sm:$0xf]
      %v1715 = vld [vmem:[%s1713 + $0x4] sm:$0xf]
      %v1716 = vld [vmem:[%s1713 + $0x8] sm:$0xf]
      %v1717 = vld [vmem:[%s1713 + $0xc] sm:$0xf]
      %v1718 = vld [vmem:[%s1713 + $0x10] sm:$0xf]
      %v1719 = vld [vmem:[%s1713 + $0x14] sm:$0xf]
      %s1720 = scalar_lea.vmem %s4, 8
      %v1721 = vld [vmem:[%s1720] sm:$0x1]
      %v1723 = vlaneseq
      %v1724 = vshrl.u32 %v1723, 7
      %v1725 = vsub.s32 0, %v1724
      %v1726 = vrot.slane %v1721, %v1725
      %v1734 = vunpack.c.l.b16 %v1714
      %v1735 = vunpack.c.l.b16 %v1715
      %v1736 = vunpack.c.l.b16 %v1716
      %v1737 = vunpack.c.l.b16 %v1717
      %v1738 = vunpack.c.l.b16 %v1718
      %v1739 = vunpack.c.l.b16 %v1719
      %v1740 = vpack.c.b16 %v1735, %v1734
      %v1741 = vpack.c.b16 %v1737, %v1736
      %v1742 = vpack.c.b16 %v1739, %v1738
      %1746 = vmatprep.subr.bf16.mxu0 0
      %1747 = vmatpush1.bf16.msra.mxu0 %v1740
      %1748 = vmatprep.subr.bf16.mxu0 0
      %1749 = vmatpush1.bf16.msra.mxu0 %v1741
      %1750 = vmatprep.subr.bf16.mxu0 0
      %1751 = vmatpush1.bf16.msra.mxu0 %v1742
      %1752 = vmatprep.subr.bf16.mxu0 0
      %1753 = vmatpush1.bf16.msra.mxu0 0
      %1754 = vmatprep.subr.bf16.mxu0 0
      %1755 = vmatpush1.bf16.msra.mxu0 0
      %1756 = vmatprep.subr.bf16.mxu0 0
      %1757 = vmatpush1.bf16.msra.mxu0 0
      %1758 = vmatprep.subr.bf16.mxu0 0
      %1759 = vmatpush1.bf16.msra.mxu0 0
      %1760 = vmatprep.subr.bf16.mxu0 0
      %1761 = vmatpush1.bf16.msra.mxu0 0
      %1762 = vmatprep.subr.bf16.mxu0 0
      %1763 = vmatpush1.bf16.msra.mxu0 0
      %1764 = vmatprep.subr.bf16.mxu0 0
      %1765 = vmatpush1.bf16.msra.mxu0 0
      %1766 = vmatprep.subr.bf16.mxu0 0
      %1767 = vmatpush1.bf16.msra.mxu0 0
      %1768 = vmatprep.subr.bf16.mxu0 0
      %1769 = vmatpush1.bf16.msra.mxu0 0
      %1770 = vmatprep.subr.bf16.mxu0 0
      %1771 = vmatpush1.bf16.msra.mxu0 0
      %1772 = vmatprep.subr.bf16.mxu0 0
      %1773 = vmatpush1.bf16.msra.mxu0 0
      %1774 = vmatprep.subr.bf16.mxu0 0
      %1775 = vmatpush1.bf16.msra.mxu0 0
      %1776 = vmatprep.subr.bf16.mxu0 0
      %1777 = vmatpush1.bf16.msra.mxu0 0
      %1778 = vmatprep.mubr.bf16.mxu0 0
      %1779 = vmatmul.mubr.bf16.gmra.mrb[0].mxu0 %v1671
      %v1780 = vpop.f32.mrb[0].mxu0
      %v1781 = vadd.f32 %v1726, %v1780
      %v1782 = vpop.f32.mrb[0].mxu0
      %v1783 = vpop.f32.mrb[0].mxu0
      %v1784 = vpop.f32.mrb[0].mxu0
      %1785 = vdwg.mxu0
      %s1786 = scalar_lea.vmem %s3, 240
      %v1787 = vld [vmem:[%s1786] sm:$0xf]
      %v1788 = vld [vmem:[%s1786 + $0x4] sm:$0xf]
      %v1789 = vld [vmem:[%s1786 + $0x8] sm:$0xf]
      %v1790 = vld [vmem:[%s1786 + $0xc] sm:$0xf]
      %v1791 = vld [vmem:[%s1786 + $0x10] sm:$0xf]
      %v1792 = vld [vmem:[%s1786 + $0x14] sm:$0xf]
      %s1793 = scalar_lea.vmem %s4, 10
      %v1794 = vld [vmem:[%s1793] sm:$0x1]
      %v1796 = vlaneseq
      %v1797 = vshrl.u32 %v1796, 7
      %v1798 = vsub.s32 0, %v1797
      %v1799 = vrot.slane %v1794, %v1798
      %v1807 = vunpack.c.l.b16 %v1787
      %v1808 = vunpack.c.l.b16 %v1788
      %v1809 = vunpack.c.l.b16 %v1789
      %v1810 = vunpack.c.l.b16 %v1790
      %v1811 = vunpack.c.l.b16 %v1791
      %v1812 = vunpack.c.l.b16 %v1792
      %v1813 = vpack.c.b16 %v1808, %v1807
      %v1814 = vpack.c.b16 %v1810, %v1809
      %v1815 = vpack.c.b16 %v1812, %v1811
      %1819 = vmatprep.subr.bf16.mxu0 0
      %1820 = vmatpush1.bf16.msra.mxu0 %v1813
      %1821 = vmatprep.subr.bf16.mxu0 0
      %1822 = vmatpush1.bf16.msra.mxu0 %v1814
      %1823 = vmatprep.subr.bf16.mxu0 0
      %1824 = vmatpush1.bf16.msra.mxu0 %v1815
      %1825 = vmatprep.subr.bf16.mxu0 0
      %1826 = vmatpush1.bf16.msra.mxu0 0
      %1827 = vmatprep.subr.bf16.mxu0 0
      %1828 = vmatpush1.bf16.msra.mxu0 0
      %1829 = vmatprep.subr.bf16.mxu0 0
      %1830 = vmatpush1.bf16.msra.mxu0 0
      %1831 = vmatprep.subr.bf16.mxu0 0
      %1832 = vmatpush1.bf16.msra.mxu0 0
      %1833 = vmatprep.subr.bf16.mxu0 0
      %1834 = vmatpush1.bf16.msra.mxu0 0
      %1835 = vmatprep.subr.bf16.mxu0 0
      %1836 = vmatpush1.bf16.msra.mxu0 0
      %1837 = vmatprep.subr.bf16.mxu0 0
      %1838 = vmatpush1.bf16.msra.mxu0 0
      %1839 = vmatprep.subr.bf16.mxu0 0
      %1840 = vmatpush1.bf16.msra.mxu0 0
      %1841 = vmatprep.subr.bf16.mxu0 0
      %1842 = vmatpush1.bf16.msra.mxu0 0
      %1843 = vmatprep.subr.bf16.mxu0 0
      %1844 = vmatpush1.bf16.msra.mxu0 0
      %1845 = vmatprep.subr.bf16.mxu0 0
      %1846 = vmatpush1.bf16.msra.mxu0 0
      %1847 = vmatprep.subr.bf16.mxu0 0
      %1848 = vmatpush1.bf16.msra.mxu0 0
      %1849 = vmatprep.subr.bf16.mxu0 0
      %1850 = vmatpush1.bf16.msra.mxu0 0
      %1851 = vmatprep.mubr.bf16.mxu0 0
      %1852 = vmatmul.mubr.bf16.gmra.mrb[0].mxu0 %v1671
      %v1853 = vpop.f32.mrb[0].mxu0
      %v1854 = vadd.f32 %v1799, %v1853
      %v1855 = vpop.f32.mrb[0].mxu0
      %v1856 = vpop.f32.mrb[0].mxu0
      %v1857 = vpop.f32.mrb[0].mxu0
      %1858 = vdwg.mxu0
      %v1859 = vpack.c.bf16 %v1708, %v1708
      %v1860 = vpack.c.bf16 %v1781, %v1781
      %v1862 = vsel %vm747, %v1859, 0
      %v1865 = vsel %vm747, %v1860, 0
      %1867 = vmatprep.subr.bf16.mxu0 0
      %1868 = vmatpush1.bf16.xpose.msra.mxu0 %v1865
      %1869 = vmatprep.subr.bf16.mxu0 0
      %1870 = vmatpush1.bf16.xpose.msra.mxu0 0
      %1871 = vmatprep.subr.bf16.mxu0 0
      %1872 = vmatpush1.bf16.xpose.msra.mxu0 0
      %1873 = vmatprep.subr.bf16.mxu0 0
      %1874 = vmatpush1.bf16.xpose.msra.mxu0 0
      %1875 = vmatprep.subr.bf16.mxu0 0
      %1876 = vmatpush1.bf16.xpose.msra.mxu0 0
      %1877 = vmatprep.subr.bf16.mxu0 0
      %1878 = vmatpush1.bf16.xpose.msra.mxu0 0
      %1879 = vmatprep.subr.bf16.mxu0 0
      %1880 = vmatpush1.bf16.xpose.msra.mxu0 0
      %1881 = vmatprep.subr.bf16.mxu0 0
      %1882 = vmatpush1.bf16.xpose.msra.mxu0 0
      %1883 = vmatprep.subr.bf16.mxu0 0
      %1884 = vmatpush1.bf16.xpose.msra.mxu0 0
      %1885 = vmatprep.subr.bf16.mxu0 0
      %1886 = vmatpush1.bf16.xpose.msra.mxu0 0
      %1887 = vmatprep.subr.bf16.mxu0 0
      %1888 = vmatpush1.bf16.xpose.msra.mxu0 0
      %1889 = vmatprep.subr.bf16.mxu0 0
      %1890 = vmatpush1.bf16.xpose.msra.mxu0 0
      %1891 = vmatprep.subr.bf16.mxu0 0
      %1892 = vmatpush1.bf16.xpose.msra.mxu0 0
      %1893 = vmatprep.subr.bf16.mxu0 0
      %1894 = vmatpush1.bf16.xpose.msra.mxu0 0
      %1895 = vmatprep.subr.bf16.mxu0 0
      %1896 = vmatpush1.bf16.xpose.msra.mxu0 0
      %1897 = vmatprep.subr.bf16.mxu0 0
      %1898 = vmatpush1.bf16.xpose.msra.mxu0 0
      %1899 = vmatprep.mubr.bf16.mxu0 0
      %1900 = vmatmul.mubr.bf16.gmra.mrb[0].mxu0 %v1862
      %v1901 = vpop.f32.mrb[0].mxu0
      %v1902 = vadd.f32 0.0, %v1901
      %v1903 = vpop.f32.mrb[0].mxu0
      %v1904 = vpop.f32.mrb[0].mxu0
      %v1905 = vpop.f32.mrb[0].mxu0
      %1906 = vdwg.mxu0
      %v1907 = vmul.f32 %v1902, 0.20412415
      %v1908 = vsel %vm795, %v1907, -inf
      %1909 = vmax.xlane.f32.xlu0 %v1908
      %v1910 = vpop.xlane.xlu0 %1909
      %v1911 = vsub.f32 %v1907, %v1910
      %v1912 = vmul.f32 %v1911, 1.442695
      %v1913 = vpow.pop %v1912
      %v1914 = vsel %vm795, %v1913, 0.0
      %1915 = vadd.xlane.f32.xlu0 %v1914
      %v1916 = vpop.xlane.xlu0 %1915
      %v1917 = vrcp.pop %v1916
      %v1918 = vmul.f32 %v1913, %v1917
      %v1919 = vpack.c.bf16 %v1918, %v1918
      %v1920 = vpack.c.bf16 %v1854, %v1854
      %v1922 = vsel %vm809, %v1919, 0
      %v1925 = vand.u32 %v1920, %v816
      %1927 = vmatprep.subr.bf16.mxu0 0
      %1928 = vmatpush1.bf16.msra.mxu0 %v1925
      %1929 = vmatprep.subr.bf16.mxu0 0
      %1930 = vmatpush1.bf16.msra.mxu0 0
      %1931 = vmatprep.subr.bf16.mxu0 0
      %1932 = vmatpush1.bf16.msra.mxu0 0
      %1933 = vmatprep.subr.bf16.mxu0 0
      %1934 = vmatpush1.bf16.msra.mxu0 0
      %1935 = vmatprep.subr.bf16.mxu0 0
      %1936 = vmatpush1.bf16.msra.mxu0 0
      %1937 = vmatprep.subr.bf16.mxu0 0
      %1938 = vmatpush1.bf16.msra.mxu0 0
      %1939 = vmatprep.subr.bf16.mxu0 0
      %1940 = vmatpush1.bf16.msra.mxu0 0
      %1941 = vmatprep.subr.bf16.mxu0 0
      %1942 = vmatpush1.bf16.msra.mxu0 0
      %1943 = vmatprep.subr.bf16.mxu0 0
      %1944 = vmatpush1.bf16.msra.mxu0 0
      %1945 = vmatprep.subr.bf16.mxu0 0
      %1946 = vmatpush1.bf16.msra.mxu0 0
      %1947 = vmatprep.subr.bf16.mxu0 0
      %1948 = vmatpush1.bf16.msra.mxu0 0
      %1949 = vmatprep.subr.bf16.mxu0 0
      %1950 = vmatpush1.bf16.msra.mxu0 0
      %1951 = vmatprep.subr.bf16.mxu0 0
      %1952 = vmatpush1.bf16.msra.mxu0 0
      %1953 = vmatprep.subr.bf16.mxu0 0
      %1954 = vmatpush1.bf16.msra.mxu0 0
      %1955 = vmatprep.subr.bf16.mxu0 0
      %1956 = vmatpush1.bf16.msra.mxu0 0
      %1957 = vmatprep.subr.bf16.mxu0 0
      %1958 = vmatpush1.bf16.msra.mxu0 0
      %1959 = vmatprep.mubr.bf16.mxu0 0
      %1960 = vmatmul.mubr.bf16.gmra.mrb[0].mxu0 %v1922
      %v1961 = vpop.f32.mrb[0].mxu0
      %v1962 = vadd.f32 0.0, %v1961
      %v1963 = vpop.f32.mrb[0].mxu0
      %v1964 = vpop.f32.mrb[0].mxu0
      %v1965 = vpop.f32.mrb[0].mxu0
      %1966 = vdwg.mxu0
      %s1967 = scalar_lea.vmem %s5, 24
      %v1968 = vld [vmem:[%s1967] sm:$0xf]
      %v1969 = vld [vmem:[%s1967 + $0x4] sm:$0xf]
      %v1970 = vld [vmem:[%s1967 + $0x8] sm:$0xf]
      %v1971 = vpack.c.bf16 %v1962, %v1962
      %s1972 = scalar_lea.vmem %s3, 168
      %v1973 = vld [vmem:[%s1972] sm:$0xf]
      %v1974 = vld [vmem:[%s1972 + $0x4] sm:$0xf]
      %v1975 = vld [vmem:[%s1972 + $0x8] sm:$0xf]
      %v1976 = vld [vmem:[%s1972 + $0xc] sm:$0xf]
      %v1977 = vld [vmem:[%s1972 + $0x10] sm:$0xf]
      %v1978 = vld [vmem:[%s1972 + $0x14] sm:$0xf]
      %s1979 = scalar_lea.vmem %s4, 7
      %v1980 = vld [vmem:[%s1979] sm:$0x1]
      %v1982 = vlaneseq
      %v1983 = vshrl.u32 %v1982, 7
      %v1984 = vsub.s32 0, %v1983
      %v1985 = vrot.slane %v1980, %v1984
      %v1993 = vunpack.c.l.b16 %v1973
      %v1994 = vunpack.c.l.b16 %v1974
      %v1995 = vunpack.c.l.b16 %v1975
      %v1996 = vunpack.c.l.b16 %v1976
      %v1997 = vunpack.c.l.b16 %v1977
      %v1998 = vunpack.c.l.b16 %v1978
      %v1999 = vpack.c.b16 %v1994, %v1993
      %v2000 = vpack.c.b16 %v1996, %v1995
      %v2001 = vpack.c.b16 %v1998, %v1997
      %2005 = vmatprep.subr.bf16.mxu0 0
      %2006 = vmatpush1.bf16.msra.mxu0 %v1999
      %2007 = vmatprep.subr.bf16.mxu0 0
      %2008 = vmatpush1.bf16.msra.mxu0 %v2000
      %2009 = vmatprep.subr.bf16.mxu0 0
      %2010 = vmatpush1.bf16.msra.mxu0 %v2001
      %2011 = vmatprep.subr.bf16.mxu0 0
      %2012 = vmatpush1.bf16.msra.mxu0 0
      %2013 = vmatprep.subr.bf16.mxu0 0
      %2014 = vmatpush1.bf16.msra.mxu0 0
      %2015 = vmatprep.subr.bf16.mxu0 0
      %2016 = vmatpush1.bf16.msra.mxu0 0
      %2017 = vmatprep.subr.bf16.mxu0 0
      %2018 = vmatpush1.bf16.msra.mxu0 0
      %2019 = vmatprep.subr.bf16.mxu0 0
      %2020 = vmatpush1.bf16.msra.mxu0 0
      %2021 = vmatprep.subr.bf16.mxu0 0
      %2022 = vmatpush1.bf16.msra.mxu0 0
      %2023 = vmatprep.subr.bf16.mxu0 0
      %2024 = vmatpush1.bf16.msra.mxu0 0
      %2025 = vmatprep.subr.bf16.mxu0 0
      %2026 = vmatpush1.bf16.msra.mxu0 0
      %2027 = vmatprep.subr.bf16.mxu0 0
      %2028 = vmatpush1.bf16.msra.mxu0 0
      %2029 = vmatprep.subr.bf16.mxu0 0
      %2030 = vmatpush1.bf16.msra.mxu0 0
      %2031 = vmatprep.subr.bf16.mxu0 0
      %2032 = vmatpush1.bf16.msra.mxu0 0
      %2033 = vmatprep.subr.bf16.mxu0 0
      %2034 = vmatpush1.bf16.msra.mxu0 0
      %2035 = vmatprep.subr.bf16.mxu0 0
      %2036 = vmatpush1.bf16.msra.mxu0 0
      %2037 = vmatprep.mubr.bf16.mxu0 0
      %2038 = vmatmul.mubr.bf16.gmra.mrb[0].mxu0 %v1671
      %v2039 = vpop.f32.mrb[0].mxu0
      %v2040 = vadd.f32 %v1985, %v2039
      %v2041 = vpop.f32.mrb[0].mxu0
      %v2042 = vpop.f32.mrb[0].mxu0
      %v2043 = vpop.f32.mrb[0].mxu0
      %2044 = vdwg.mxu0
      %s2045 = scalar_lea.vmem %s3, 216
      %v2046 = vld [vmem:[%s2045] sm:$0xf]
      %v2047 = vld [vmem:[%s2045 + $0x4] sm:$0xf]
      %v2048 = vld [vmem:[%s2045 + $0x8] sm:$0xf]
      %v2049 = vld [vmem:[%s2045 + $0xc] sm:$0xf]
      %v2050 = vld [vmem:[%s2045 + $0x10] sm:$0xf]
      %v2051 = vld [vmem:[%s2045 + $0x14] sm:$0xf]
      %s2052 = scalar_lea.vmem %s4, 9
      %v2053 = vld [vmem:[%s2052] sm:$0x1]
      %v2055 = vlaneseq
      %v2056 = vshrl.u32 %v2055, 7
      %v2057 = vsub.s32 0, %v2056
      %v2058 = vrot.slane %v2053, %v2057
      %v2066 = vunpack.c.l.b16 %v2046
      %v2067 = vunpack.c.l.b16 %v2047
      %v2068 = vunpack.c.l.b16 %v2048
      %v2069 = vunpack.c.l.b16 %v2049
      %v2070 = vunpack.c.l.b16 %v2050
      %v2071 = vunpack.c.l.b16 %v2051
      %v2072 = vpack.c.b16 %v2067, %v2066
      %v2073 = vpack.c.b16 %v2069, %v2068
      %v2074 = vpack.c.b16 %v2071, %v2070
      %2078 = vmatprep.subr.bf16.mxu0 0
      %2079 = vmatpush1.bf16.msra.mxu0 %v2072
      %2080 = vmatprep.subr.bf16.mxu0 0
      %2081 = vmatpush1.bf16.msra.mxu0 %v2073
      %2082 = vmatprep.subr.bf16.mxu0 0
      %2083 = vmatpush1.bf16.msra.mxu0 %v2074
      %2084 = vmatprep.subr.bf16.mxu0 0
      %2085 = vmatpush1.bf16.msra.mxu0 0
      %2086 = vmatprep.subr.bf16.mxu0 0
      %2087 = vmatpush1.bf16.msra.mxu0 0
      %2088 = vmatprep.subr.bf16.mxu0 0
      %2089 = vmatpush1.bf16.msra.mxu0 0
      %2090 = vmatprep.subr.bf16.mxu0 0
      %2091 = vmatpush1.bf16.msra.mxu0 0
      %2092 = vmatprep.subr.bf16.mxu0 0
      %2093 = vmatpush1.bf16.msra.mxu0 0
      %2094 = vmatprep.subr.bf16.mxu0 0
      %2095 = vmatpush1.bf16.msra.mxu0 0
      %2096 = vmatprep.subr.bf16.mxu0 0
      %2097 = vmatpush1.bf16.msra.mxu0 0
      %2098 = vmatprep.subr.bf16.mxu0 0
      %2099 = vmatpush1.bf16.msra.mxu0 0
      %2100 = vmatprep.subr.bf16.mxu0 0
      %2101 = vmatpush1.bf16.msra.mxu0 0
      %2102 = vmatprep.subr.bf16.mxu0 0
      %2103 = vmatpush1.bf16.msra.mxu0 0
      %2104 = vmatprep.subr.bf16.mxu0 0
      %2105 = vmatpush1.bf16.msra.mxu0 0
      %2106 = vmatprep.subr.bf16.mxu0 0
      %2107 = vmatpush1.bf16.msra.mxu0 0
      %2108 = vmatprep.subr.bf16.mxu0 0
      %2109 = vmatpush1.bf16.msra.mxu0 0
      %2110 = vmatprep.mubr.bf16.mxu0 0
      %2111 = vmatmul.mubr.bf16.gmra.mrb[0].mxu0 %v1671
      %v2112 = vpop.f32.mrb[0].mxu0
      %v2113 = vadd.f32 %v2058, %v2112
      %v2114 = vpop.f32.mrb[0].mxu0
      %v2115 = vpop.f32.mrb[0].mxu0
      %v2116 = vpop.f32.mrb[0].mxu0
      %2117 = vdwg.mxu0
      %s2118 = scalar_lea.vmem %s3, 264
      %v2119 = vld [vmem:[%s2118] sm:$0xf]
      %v2120 = vld [vmem:[%s2118 + $0x4] sm:$0xf]
      %v2121 = vld [vmem:[%s2118 + $0x8] sm:$0xf]
      %v2122 = vld [vmem:[%s2118 + $0xc] sm:$0xf]
      %v2123 = vld [vmem:[%s2118 + $0x10] sm:$0xf]
      %v2124 = vld [vmem:[%s2118 + $0x14] sm:$0xf]
      %s2125 = scalar_lea.vmem %s4, 11
      %v2126 = vld [vmem:[%s2125] sm:$0x1]
      %v2128 = vlaneseq
      %v2129 = vshrl.u32 %v2128, 7
      %v2130 = vsub.s32 0, %v2129
      %v2131 = vrot.slane %v2126, %v2130
      %v2139 = vunpack.c.l.b16 %v2119
      %v2140 = vunpack.c.l.b16 %v2120
      %v2141 = vunpack.c.l.b16 %v2121
      %v2142 = vunpack.c.l.b16 %v2122
      %v2143 = vunpack.c.l.b16 %v2123
      %v2144 = vunpack.c.l.b16 %v2124
      %v2145 = vpack.c.b16 %v2140, %v2139
      %v2146 = vpack.c.b16 %v2142, %v2141
      %v2147 = vpack.c.b16 %v2144, %v2143
      %2151 = vmatprep.subr.bf16.mxu0 0
      %2152 = vmatpush1.bf16.msra.mxu0 %v2145
      %2153 = vmatprep.subr.bf16.mxu0 0
      %2154 = vmatpush1.bf16.msra.mxu0 %v2146
      %2155 = vmatprep.subr.bf16.mxu0 0
      %2156 = vmatpush1.bf16.msra.mxu0 %v2147
      %2157 = vmatprep.subr.bf16.mxu0 0
      %2158 = vmatpush1.bf16.msra.mxu0 0
      %2159 = vmatprep.subr.bf16.mxu0 0
      %2160 = vmatpush1.bf16.msra.mxu0 0
      %2161 = vmatprep.subr.bf16.mxu0 0
      %2162 = vmatpush1.bf16.msra.mxu0 0
      %2163 = vmatprep.subr.bf16.mxu0 0
      %2164 = vmatpush1.bf16.msra.mxu0 0
      %2165 = vmatprep.subr.bf16.mxu0 0
      %2166 = vmatpush1.bf16.msra.mxu0 0
      %2167 = vmatprep.subr.bf16.mxu0 0
      %2168 = vmatpush1.bf16.msra.mxu0 0
      %2169 = vmatprep.subr.bf16.mxu0 0
      %2170 = vmatpush1.bf16.msra.mxu0 0
      %2171 = vmatprep.subr.bf16.mxu0 0
      %2172 = vmatpush1.bf16.msra.mxu0 0
      %2173 = vmatprep.subr.bf16.mxu0 0
      %2174 = vmatpush1.bf16.msra.mxu0 0
      %2175 = vmatprep.subr.bf16.mxu0 0
      %2176 = vmatpush1.bf16.msra.mxu0 0
      %2177 = vmatprep.subr.bf16.mxu0 0
      %2178 = vmatpush1.bf16.msra.mxu0 0
      %2179 = vmatprep.subr.bf16.mxu0 0
      %2180 = vmatpush1.bf16.msra.mxu0 0
      %2181 = vmatprep.subr.bf16.mxu0 0
      %2182 = vmatpush1.bf16.msra.mxu0 0
      %2183 = vmatprep.mubr.bf16.mxu0 0
      %2184 = vmatmul.mubr.bf16.gmra.mrb[0].mxu0 %v1671
      %v2185 = vpop.f32.mrb[0].mxu0
      %v2186 = vadd.f32 %v2131, %v2185
      %v2187 = vpop.f32.mrb[0].mxu0
      %v2188 = vpop.f32.mrb[0].mxu0
      %v2189 = vpop.f32.mrb[0].mxu0
      %2190 = vdwg.mxu0
      %v2191 = vpack.c.bf16 %v2040, %v2040
      %v2192 = vpack.c.bf16 %v2113, %v2113
      %v2194 = vsel %vm747, %v2191, 0
      %v2197 = vsel %vm747, %v2192, 0
      %2199 = vmatprep.subr.bf16.mxu0 0
      %2200 = vmatpush1.bf16.xpose.msra.mxu0 %v2197
      %2201 = vmatprep.subr.bf16.mxu0 0
      %2202 = vmatpush1.bf16.xpose.msra.mxu0 0
      %2203 = vmatprep.subr.bf16.mxu0 0
      %2204 = vmatpush1.bf16.xpose.msra.mxu0 0
      %2205 = vmatprep.subr.bf16.mxu0 0
      %2206 = vmatpush1.bf16.xpose.msra.mxu0 0
      %2207 = vmatprep.subr.bf16.mxu0 0
      %2208 = vmatpush1.bf16.xpose.msra.mxu0 0
      %2209 = vmatprep.subr.bf16.mxu0 0
      %2210 = vmatpush1.bf16.xpose.msra.mxu0 0
      %2211 = vmatprep.subr.bf16.mxu0 0
      %2212 = vmatpush1.bf16.xpose.msra.mxu0 0
      %2213 = vmatprep.subr.bf16.mxu0 0
      %2214 = vmatpush1.bf16.xpose.msra.mxu0 0
      %2215 = vmatprep.subr.bf16.mxu0 0
      %2216 = vmatpush1.bf16.xpose.msra.mxu0 0
      %2217 = vmatprep.subr.bf16.mxu0 0
      %2218 = vmatpush1.bf16.xpose.msra.mxu0 0
      %2219 = vmatprep.subr.bf16.mxu0 0
      %2220 = vmatpush1.bf16.xpose.msra.mxu0 0
      %2221 = vmatprep.subr.bf16.mxu0 0
      %2222 = vmatpush1.bf16.xpose.msra.mxu0 0
      %2223 = vmatprep.subr.bf16.mxu0 0
      %2224 = vmatpush1.bf16.xpose.msra.mxu0 0
      %2225 = vmatprep.subr.bf16.mxu0 0
      %2226 = vmatpush1.bf16.xpose.msra.mxu0 0
      %2227 = vmatprep.subr.bf16.mxu0 0
      %2228 = vmatpush1.bf16.xpose.msra.mxu0 0
      %2229 = vmatprep.subr.bf16.mxu0 0
      %2230 = vmatpush1.bf16.xpose.msra.mxu0 0
      %2231 = vmatprep.mubr.bf16.mxu0 0
      %2232 = vmatmul.mubr.bf16.gmra.mrb[0].mxu0 %v2194
      %v2233 = vpop.f32.mrb[0].mxu0
      %v2234 = vadd.f32 0.0, %v2233
      %v2235 = vpop.f32.mrb[0].mxu0
      %v2236 = vpop.f32.mrb[0].mxu0
      %v2237 = vpop.f32.mrb[0].mxu0
      %2238 = vdwg.mxu0
      %v2239 = vmul.f32 %v2234, 0.20412415
      %v2240 = vsel %vm795, %v2239, -inf
      %2241 = vmax.xlane.f32.xlu0 %v2240
      %v2242 = vpop.xlane.xlu0 %2241
      %v2243 = vsub.f32 %v2239, %v2242
      %v2244 = vmul.f32 %v2243, 1.442695
      %v2245 = vpow.pop %v2244
      %v2246 = vsel %vm795, %v2245, 0.0
      %2247 = vadd.xlane.f32.xlu0 %v2246
      %v2248 = vpop.xlane.xlu0 %2247
      %v2249 = vrcp.pop %v2248
      %v2250 = vmul.f32 %v2245, %v2249
      %v2251 = vpack.c.bf16 %v2250, %v2250
      %v2252 = vpack.c.bf16 %v2186, %v2186
      %v2254 = vsel %vm809, %v2251, 0
      %v2257 = vand.u32 %v2252, %v816
      %2259 = vmatprep.subr.bf16.mxu0 0
      %2260 = vmatpush1.bf16.msra.mxu0 %v2257
      %2261 = vmatprep.subr.bf16.mxu0 0
      %2262 = vmatpush1.bf16.msra.mxu0 0
      %2263 = vmatprep.subr.bf16.mxu0 0
      %2264 = vmatpush1.bf16.msra.mxu0 0
      %2265 = vmatprep.subr.bf16.mxu0 0
      %2266 = vmatpush1.bf16.msra.mxu0 0
      %2267 = vmatprep.subr.bf16.mxu0 0
      %2268 = vmatpush1.bf16.msra.mxu0 0
      %2269 = vmatprep.subr.bf16.mxu0 0
      %2270 = vmatpush1.bf16.msra.mxu0 0
      %2271 = vmatprep.subr.bf16.mxu0 0
      %2272 = vmatpush1.bf16.msra.mxu0 0
      %2273 = vmatprep.subr.bf16.mxu0 0
      %2274 = vmatpush1.bf16.msra.mxu0 0
      %2275 = vmatprep.subr.bf16.mxu0 0
      %2276 = vmatpush1.bf16.msra.mxu0 0
      %2277 = vmatprep.subr.bf16.mxu0 0
      %2278 = vmatpush1.bf16.msra.mxu0 0
      %2279 = vmatprep.subr.bf16.mxu0 0
      %2280 = vmatpush1.bf16.msra.mxu0 0
      %2281 = vmatprep.subr.bf16.mxu0 0
      %2282 = vmatpush1.bf16.msra.mxu0 0
      %2283 = vmatprep.subr.bf16.mxu0 0
      %2284 = vmatpush1.bf16.msra.mxu0 0
      %2285 = vmatprep.subr.bf16.mxu0 0
      %2286 = vmatpush1.bf16.msra.mxu0 0
      %2287 = vmatprep.subr.bf16.mxu0 0
      %2288 = vmatpush1.bf16.msra.mxu0 0
      %2289 = vmatprep.subr.bf16.mxu0 0
      %2290 = vmatpush1.bf16.msra.mxu0 0
      %2291 = vmatprep.mubr.bf16.mxu0 0
      %2292 = vmatmul.mubr.bf16.gmra.mrb[0].mxu0 %v2254
      %v2293 = vpop.f32.mrb[0].mxu0
      %v2294 = vadd.f32 0.0, %v2293
      %v2295 = vpop.f32.mrb[0].mxu0
      %v2296 = vpop.f32.mrb[0].mxu0
      %v2297 = vpop.f32.mrb[0].mxu0
      %2298 = vdwg.mxu0
      %s2299 = scalar_lea.vmem %s5, 36
      %v2300 = vld [vmem:[%s2299] sm:$0xf]
      %v2301 = vld [vmem:[%s2299 + $0x4] sm:$0xf]
      %v2302 = vld [vmem:[%s2299 + $0x8] sm:$0xf]
      %v2303 = vpack.c.bf16 %v2294, %v2294
      %v2307 = vunpack.c.l.b16 %v2300
      %v2308 = vunpack.c.l.b16 %v2301
      %v2309 = vunpack.c.l.b16 %v2302
      %v2310 = vpack.c.b16 %v2308, %v2307
      %v2311 = vpack.c.b16 %v2309, %v2309
      %v2314 = vsel %vm747, %v2303, 0
      %v2317 = vsel %vm814, %v2311, 0
      %2319 = vmatprep.subr.bf16.mxu0 0
      %2320 = vmatpush1.bf16.msra.mxu0 %v2310
      %2321 = vmatprep.subr.bf16.mxu0 0
      %2322 = vmatpush1.bf16.msra.mxu0 %v2317
      %2323 = vmatprep.subr.bf16.mxu0 0
      %2324 = vmatpush1.bf16.msra.mxu0 0
      %2325 = vmatprep.subr.bf16.mxu0 0
      %2326 = vmatpush1.bf16.msra.mxu0 0
      %2327 = vmatprep.subr.bf16.mxu0 0
      %2328 = vmatpush1.bf16.msra.mxu0 0
      %2329 = vmatprep.subr.bf16.mxu0 0
      %2330 = vmatpush1.bf16.msra.mxu0 0
      %2331 = vmatprep.subr.bf16.mxu0 0
      %2332 = vmatpush1.bf16.msra.mxu0 0
      %2333 = vmatprep.subr.bf16.mxu0 0
      %2334 = vmatpush1.bf16.msra.mxu0 0
      %2335 = vmatprep.subr.bf16.mxu0 0
      %2336 = vmatpush1.bf16.msra.mxu0 0
      %2337 = vmatprep.subr.bf16.mxu0 0
      %2338 = vmatpush1.bf16.msra.mxu0 0
      %2339 = vmatprep.subr.bf16.mxu0 0
      %2340 = vmatpush1.bf16.msra.mxu0 0
      %2341 = vmatprep.subr.bf16.mxu0 0
      %2342 = vmatpush1.bf16.msra.mxu0 0
      %2343 = vmatprep.subr.bf16.mxu0 0
      %2344 = vmatpush1.bf16.msra.mxu0 0
      %2345 = vmatprep.subr.bf16.mxu0 0
      %2346 = vmatpush1.bf16.msra.mxu0 0
      %2347 = vmatprep.subr.bf16.mxu0 0
      %2348 = vmatpush1.bf16.msra.mxu0 0
      %2349 = vmatprep.subr.bf16.mxu0 0
      %2350 = vmatpush1.bf16.msra.mxu0 0
      %2351 = vmatprep.mubr.bf16.mxu0 0
      %2352 = vmatmul.mubr.bf16.gmra.mrb[0].mxu0 %v2314
      %v2353 = vpop.f32.mrb[0].mxu0
      %v2354 = vadd.f32 0.0, %v2353
      %v2355 = vpop.f32.mrb[0].mxu0
      %v2356 = vpop.f32.mrb[0].mxu0
      %v2357 = vpop.f32.mrb[0].mxu0
      %2358 = vdwg.mxu0
      %v2362 = vunpack.c.l.b16 %v1968
      %v2363 = vunpack.c.l.b16 %v1969
      %v2364 = vunpack.c.l.b16 %v1970
      %v2365 = vpack.c.b16 %v2363, %v2362
      %v2366 = vpack.c.b16 %v2364, %v2364
      %v2369 = vsel %vm747, %v1971, 0
      %v2372 = vsel %vm814, %v2366, 0
      %2374 = vmatprep.subr.bf16.mxu0 0
      %2375 = vmatpush1.bf16.msra.mxu0 %v2365
      %2376 = vmatprep.subr.bf16.mxu0 0
      %2377 = vmatpush1.bf16.msra.mxu0 %v2372
      %2378 = vmatprep.subr.bf16.mxu0 0
      %2379 = vmatpush1.bf16.msra.mxu0 0
      %2380 = vmatprep.subr.bf16.mxu0 0
      %2381 = vmatpush1.bf16.msra.mxu0 0
      %2382 = vmatprep.subr.bf16.mxu0 0
      %2383 = vmatpush1.bf16.msra.mxu0 0
      %2384 = vmatprep.subr.bf16.mxu0 0
      %2385 = vmatpush1.bf16.msra.mxu0 0
      %2386 = vmatprep.subr.bf16.mxu0 0
      %2387 = vmatpush1.bf16.msra.mxu0 0
      %2388 = vmatprep.subr.bf16.mxu0 0
      %2389 = vmatpush1.bf16.msra.mxu0 0
      %2390 = vmatprep.subr.bf16.mxu0 0
      %2391 = vmatpush1.bf16.msra.mxu0 0
      %2392 = vmatprep.subr.bf16.mxu0 0
      %2393 = vmatpush1.bf16.msra.mxu0 0
      %2394 = vmatprep.subr.bf16.mxu0 0
      %2395 = vmatpush1.bf16.msra.mxu0 0
      %2396 = vmatprep.subr.bf16.mxu0 0
      %2397 = vmatpush1.bf16.msra.mxu0 0
      %2398 = vmatprep.subr.bf16.mxu0 0
      %2399 = vmatpush1.bf16.msra.mxu0 0
      %2400 = vmatprep.subr.bf16.mxu0 0
      %2401 = vmatpush1.bf16.msra.mxu0 0
      %2402 = vmatprep.subr.bf16.mxu0 0
      %2403 = vmatpush1.bf16.msra.mxu0 0
      %2404 = vmatprep.subr.bf16.mxu0 0
      %2405 = vmatpush1.bf16.msra.mxu0 0
      %2406 = vmatprep.mubr.bf16.mxu0 0
      %2407 = vmatmul.mubr.bf16.gmra.mrb[0].mxu0 %v2369
      %v2408 = vpop.f32.mrb[0].mxu0
      %v2409 = vadd.f32 %v2354, %v2408
      %v2410 = vpop.f32.mrb[0].mxu0
      %v2411 = vpop.f32.mrb[0].mxu0
      %v2412 = vpop.f32.mrb[0].mxu0
      %2413 = vdwg.mxu0
      %s2414 = scalar_lea.vmem %s6, 1
      %v2415 = vld [vmem:[%s2414] sm:$0x1]
      %v2417 = vlaneseq
      %v2418 = vshrl.u32 %v2417, 7
      %v2419 = vsub.s32 0, %v2418
      %v2420 = vrot.slane %v2415, %v2419
      %v2422 = vadd.f32 %v2409, %v2420
      %v2423 = vadd.f32 %v1604, %v2422
      %s2424 = scalar_lea.vmem %s7, 1
      %v2425 = vld [vmem:[%s2424] sm:$0x1]
      %s2426 = scalar_lea.vmem %s8, 1
      %v2427 = vld [vmem:[%s2426] sm:$0x1]
      %v2428 = vsel %vm494, %v2423, 0.0
      %2429 = vadd.xlane.f32.xlu0 %v2428
      %v2430 = vpop.xlane.xlu0 %2429
      %v2431 = vmul.f32 %v2430, %v498
      %v2432 = vsub.f32 %v2423, %v2431
      %v2433 = vmul.f32 %v2432, %v2432
      %v2434 = vsel %vm494, %v2433, 0.0
      %2435 = vadd.xlane.f32.xlu0 %v2434
      %v2436 = vpop.xlane.xlu0 %2435
      %v2437 = vmul.f32 %v2436, %v498
      %v2438 = vadd.f32 %v2437, 1e-05
      %v2439 = vrsqrt.pop %v2438
      %v2440 = vmul.f32 %v2432, %v2439
      %v2442 = vlaneseq
      %v2443 = vshrl.u32 %v2442, 7
      %v2444 = vsub.s32 0, %v2443
      %v2445 = vrot.slane %v2425, %v2444
      %v2447 = vmul.f32 %v2440, %v2445
      %v2449 = vlaneseq
      %v2450 = vshrl.u32 %v2449, 7
      %v2451 = vsub.s32 0, %v2450
      %v2452 = vrot.slane %v2427, %v2451
      %v2454 = vadd.f32 %v2447, %v2452
      %s2455 = scalar_lea.vmem %s9, 48
      %v2456 = vld [vmem:[%s2455] sm:$0xff]
      %v2457 = vld [vmem:[%s2455 + $0x8] sm:$0xff]
      %v2458 = vld [vmem:[%s2455 + $0x10] sm:$0xff]
      %v2459 = vld [vmem:[%s2455 + $0x18] sm:$0xff]
      %v2460 = vld [vmem:[%s2455 + $0x20] sm:$0xff]
      %v2461 = vld [vmem:[%s2455 + $0x28] sm:$0xff]
      %v2462 = vpack.c.bf16 %v2454, %v2454
      %s2463 = scalar_lea.vmem %s10, 2
      %v2464 = vld [vmem:[%s2463] sm:$0x3]
      %v2466 = vlaneseq
      %v2467 = vshrl.u32 %v2466, 7
      %v2468 = vsub.s32 0, %v2467
      %v2469 = vrot.slane %v2464, %v2468
      %v2470 = vlaneseq
      %v2471 = vshrl.u32 %v2470, 7
      %v2472 = vsub.s32 1, %v2471
      %v2473 = vrot.slane %v2464, %v2472
      %v2482 = vunpack.c.l.b16 %v2456
      %v2483 = vunpack.c.h.b16 %v2456
      %v2484 = vunpack.c.l.b16 %v2457
      %v2485 = vunpack.c.h.b16 %v2457
      %v2486 = vunpack.c.l.b16 %v2458
      %v2487 = vunpack.c.h.b16 %v2458
      %v2488 = vunpack.c.l.b16 %v2459
      %v2489 = vunpack.c.h.b16 %v2459
      %v2490 = vunpack.c.l.b16 %v2460
      %v2491 = vunpack.c.h.b16 %v2460
      %v2492 = vunpack.c.l.b16 %v2461
      %v2493 = vunpack.c.h.b16 %v2461
      %v2494 = vpack.c.b16 %v2484, %v2482
      %v2495 = vpack.c.b16 %v2485, %v2483
      %v2496 = vpack.c.b16 %v2488, %v2486
      %v2497 = vpack.c.b16 %v2489, %v2487
      %v2498 = vpack.c.b16 %v2492, %v2490
      %v2499 = vpack.c.b16 %v2493, %v2491
      %v2507 = vsel %vm555, %v2462, 0
      %2509 = vmatprep.subr.bf16.mxu0 %v2495
      %2510 = vmatpush1.bf16.msra.mxu0 %v2494
      %2511 = vmatprep.subr.bf16.mxu0 %v2497
      %2512 = vmatpush1.bf16.msra.mxu0 %v2496
      %2513 = vmatprep.subr.bf16.mxu0 %v2499
      %2514 = vmatpush1.bf16.msra.mxu0 %v2498
      %2515 = vmatprep.subr.bf16.mxu0 0
      %2516 = vmatpush1.bf16.msra.mxu0 0
      %2517 = vmatprep.subr.bf16.mxu0 0
      %2518 = vmatpush1.bf16.msra.mxu0 0
      %2519 = vmatprep.subr.bf16.mxu0 0
      %2520 = vmatpush1.bf16.msra.mxu0 0
      %2521 = vmatprep.subr.bf16.mxu0 0
      %2522 = vmatpush1.bf16.msra.mxu0 0
      %2523 = vmatprep.subr.bf16.mxu0 0
      %2524 = vmatpush1.bf16.msra.mxu0 0
      %2525 = vmatprep.subr.bf16.mxu0 0
      %2526 = vmatpush1.bf16.msra.mxu0 0
      %2527 = vmatprep.subr.bf16.mxu0 0
      %2528 = vmatpush1.bf16.msra.mxu0 0
      %2529 = vmatprep.subr.bf16.mxu0 0
      %2530 = vmatpush1.bf16.msra.mxu0 0
      %2531 = vmatprep.subr.bf16.mxu0 0
      %2532 = vmatpush1.bf16.msra.mxu0 0
      %2533 = vmatprep.subr.bf16.mxu0 0
      %2534 = vmatpush1.bf16.msra.mxu0 0
      %2535 = vmatprep.subr.bf16.mxu0 0
      %2536 = vmatpush1.bf16.msra.mxu0 0
      %2537 = vmatprep.subr.bf16.mxu0 0
      %2538 = vmatpush1.bf16.msra.mxu0 0
      %2539 = vmatprep.subr.bf16.mxu0 0
      %2540 = vmatpush1.bf16.msra.mxu0 0
      %2541 = vmatprep.mubr.bf16.mxu0 0
      %2542 = vmatmul.mubr.bf16.gmra.mrb[0].mxu0 %v2507
      %v2543 = vpop.f32.mrb[0].mxu0
      %v2544 = vadd.f32 %v2469, %v2543
      %v2545 = vpop.f32.mrb[0].mxu0
      %v2546 = vadd.f32 %v2473, %v2545
      %v2547 = vpop.f32.mrb[0].mxu0
      %v2548 = vpop.f32.mrb[0].mxu0
      %2549 = vdwg.mxu0
      %v2550 = vmul.f32 %v2544, 0.5
      %v2551 = vmul.f32 %v2546, 0.5
      %v2552 = vmul.f32 %v2544, %v2544
      %v2553 = vmul.f32 %v2546, %v2546
      %v2554 = vmul.f32 %v2552, %v2544
      %v2555 = vmul.f32 %v2553, %v2546
      %v2556 = vmul.f32 %v2554, 0.044715
      %v2557 = vmul.f32 %v2555, 0.044715
      %v2558 = vadd.f32 %v2544, %v2556
      %v2559 = vadd.f32 %v2546, %v2557
      %v2560 = vmul.f32 %v2558, 0.7978846
      %v2561 = vmul.f32 %v2559, 0.7978846
      %v2562 = vtanh.pop %v2560
      %v2563 = vtanh.pop %v2561
      %v2564 = vadd.f32 %v2562, 1.0
      %v2565 = vadd.f32 %v2563, 1.0
      %v2566 = vmul.f32 %v2550, %v2564
      %v2567 = vmul.f32 %v2551, %v2565
      %s2568 = scalar_lea.vmem %s11, 96
      %v2569 = vld [vmem:[%s2568] sm:$0xf]
      %v2570 = vld [vmem:[%s2568 + $0x4] sm:$0xf]
      %v2571 = vld [vmem:[%s2568 + $0x8] sm:$0xf]
      %v2572 = vld [vmem:[%s2568 + $0xc] sm:$0xf]
      %v2573 = vld [vmem:[%s2568 + $0x10] sm:$0xf]
      %v2574 = vld [vmem:[%s2568 + $0x14] sm:$0xf]
      %v2575 = vld [vmem:[%s2568 + $0x18] sm:$0xf]
      %v2576 = vld [vmem:[%s2568 + $0x1c] sm:$0xf]
      %v2577 = vld [vmem:[%s2568 + $0x20] sm:$0xf]
      %v2578 = vld [vmem:[%s2568 + $0x24] sm:$0xf]
      %v2579 = vld [vmem:[%s2568 + $0x28] sm:$0xf]
      %v2580 = vld [vmem:[%s2568 + $0x2c] sm:$0xf]
      %v2581 = vld [vmem:[%s2568 + $0x30] sm:$0xf]
      %v2582 = vld [vmem:[%s2568 + $0x34] sm:$0xf]
      %v2583 = vld [vmem:[%s2568 + $0x38] sm:$0xf]
      %v2584 = vld [vmem:[%s2568 + $0x3c] sm:$0xf]
      %v2585 = vld [vmem:[%s2568 + $0x40] sm:$0xf]
      %v2586 = vld [vmem:[%s2568 + $0x44] sm:$0xf]
      %v2587 = vld [vmem:[%s2568 + $0x48] sm:$0xf]
      %v2588 = vld [vmem:[%s2568 + $0x4c] sm:$0xf]
      %v2589 = vld [vmem:[%s2568 + $0x50] sm:$0xf]
      %v2590 = vld [vmem:[%s2568 + $0x54] sm:$0xf]
      %v2591 = vld [vmem:[%s2568 + $0x58] sm:$0xf]
      %v2592 = vld [vmem:[%s2568 + $0x5c] sm:$0xf]
      %v2593 = vpack.c.bf16 %v2566, %v2566
      %v2594 = vpack.c.bf16 %v2567, %v2567
      %s2595 = scalar_lea.vmem %s12, 1
      %v2596 = vld [vmem:[%s2595] sm:$0x1]
      %v2598 = vlaneseq
      %v2599 = vshrl.u32 %v2598, 7
      %v2600 = vsub.s32 0, %v2599
      %v2601 = vrot.slane %v2596, %v2600
      %v2627 = vunpack.c.l.b16 %v2569
      %v2628 = vunpack.c.l.b16 %v2570
      %v2629 = vunpack.c.l.b16 %v2571
      %v2630 = vunpack.c.l.b16 %v2572
      %v2631 = vunpack.c.l.b16 %v2573
      %v2632 = vunpack.c.l.b16 %v2574
      %v2633 = vunpack.c.l.b16 %v2575
      %v2634 = vunpack.c.l.b16 %v2576
      %v2635 = vunpack.c.l.b16 %v2577
      %v2636 = vunpack.c.l.b16 %v2578
      %v2637 = vunpack.c.l.b16 %v2579
      %v2638 = vunpack.c.l.b16 %v2580
      %v2639 = vunpack.c.l.b16 %v2581
      %v2640 = vunpack.c.l.b16 %v2582
      %v2641 = vunpack.c.l.b16 %v2583
      %v2642 = vunpack.c.l.b16 %v2584
      %v2643 = vunpack.c.l.b16 %v2585
      %v2644 = vunpack.c.l.b16 %v2586
      %v2645 = vunpack.c.l.b16 %v2587
      %v2646 = vunpack.c.l.b16 %v2588
      %v2647 = vunpack.c.l.b16 %v2589
      %v2648 = vunpack.c.l.b16 %v2590
      %v2649 = vunpack.c.l.b16 %v2591
      %v2650 = vunpack.c.l.b16 %v2592
      %v2651 = vpack.c.b16 %v2628, %v2627
      %v2652 = vpack.c.b16 %v2630, %v2629
      %v2653 = vpack.c.b16 %v2632, %v2631
      %v2654 = vpack.c.b16 %v2634, %v2633
      %v2655 = vpack.c.b16 %v2636, %v2635
      %v2656 = vpack.c.b16 %v2638, %v2637
      %v2657 = vpack.c.b16 %v2640, %v2639
      %v2658 = vpack.c.b16 %v2642, %v2641
      %v2659 = vpack.c.b16 %v2644, %v2643
      %v2660 = vpack.c.b16 %v2646, %v2645
      %v2661 = vpack.c.b16 %v2648, %v2647
      %v2662 = vpack.c.b16 %v2650, %v2649
      %v2676 = vsel %vm1560, %v2594, 0
      %2678 = vmatprep.subr.bf16.mxu0 0
      %2679 = vmatpush1.bf16.msra.mxu0 %v2651
      %2680 = vmatprep.subr.bf16.mxu0 0
      %2681 = vmatpush1.bf16.msra.mxu0 %v2652
      %2682 = vmatprep.subr.bf16.mxu0 0
      %2683 = vmatpush1.bf16.msra.mxu0 %v2653
      %2684 = vmatprep.subr.bf16.mxu0 0
      %2685 = vmatpush1.bf16.msra.mxu0 %v2654
      %2686 = vmatprep.subr.bf16.mxu0 0
      %2687 = vmatpush1.bf16.msra.mxu0 %v2655
      %2688 = vmatprep.subr.bf16.mxu0 0
      %2689 = vmatpush1.bf16.msra.mxu0 %v2656
      %2690 = vmatprep.subr.bf16.mxu0 0
      %2691 = vmatpush1.bf16.msra.mxu0 %v2657
      %2692 = vmatprep.subr.bf16.mxu0 0
      %2693 = vmatpush1.bf16.msra.mxu0 %v2658
      %2694 = vmatprep.subr.bf16.mxu0 0
      %2695 = vmatpush1.bf16.msra.mxu0 %v2659
      %2696 = vmatprep.subr.bf16.mxu0 0
      %2697 = vmatpush1.bf16.msra.mxu0 %v2660
      %2698 = vmatprep.subr.bf16.mxu0 0
      %2699 = vmatpush1.bf16.msra.mxu0 %v2661
      %2700 = vmatprep.subr.bf16.mxu0 0
      %2701 = vmatpush1.bf16.msra.mxu0 %v2662
      %2702 = vmatprep.subr.bf16.mxu0 0
      %2703 = vmatpush1.bf16.msra.mxu0 0
      %2704 = vmatprep.subr.bf16.mxu0 0
      %2705 = vmatpush1.bf16.msra.mxu0 0
      %2706 = vmatprep.subr.bf16.mxu0 0
      %2707 = vmatpush1.bf16.msra.mxu0 0
      %2708 = vmatprep.subr.bf16.mxu0 0
      %2709 = vmatpush1.bf16.msra.mxu0 0
      %2710 = vmatprep.mubr.bf16.mxu0 %v2676
      %2711 = vmatmul.mubr.bf16.gmra.mrb[0].mxu0 %v2593
      %v2712 = vpop.f32.mrb[0].mxu0
      %v2713 = vadd.f32 %v2601, %v2712
      %v2714 = vpop.f32.mrb[0].mxu0
      %v2715 = vpop.f32.mrb[0].mxu0
      %v2716 = vpop.f32.mrb[0].mxu0
      %2717 = vdwg.mxu0
      %v2718 = vadd.f32 %v2423, %v2713
      %v2719 = vld [vmem:[%s13] sm:$0xf]
      %v2720 = vld [vmem:[%s13 + $0x4] sm:$0xf]
      %v2721 = vld [vmem:[%s13 + $0x8] sm:$0xf]
      %v2722 = vld [vmem:[%s13 + $0xc] sm:$0xf]
      %v2723 = vld [vmem:[%s13 + $0x10] sm:$0xf]
      %v2724 = vld [vmem:[%s13 + $0x14] sm:$0xf]
      %v2725 = vpack.c.bf16 %v2718, %v2718
      %v2726 = vld [vmem:[%s14] sm:$0x1]
      %v2728 = vlaneseq
      %v2729 = vshrl.u32 %v2728, 7
      %v2730 = vsub.s32 0, %v2729
      %v2731 = vrot.slane %v2726, %v2730
      %v2739 = vunpack.c.l.b16 %v2719
      %v2740 = vunpack.c.l.b16 %v2720
      %v2741 = vunpack.c.l.b16 %v2721
      %v2742 = vunpack.c.l.b16 %v2722
      %v2743 = vunpack.c.l.b16 %v2723
      %v2744 = vunpack.c.l.b16 %v2724
      %v2745 = vpack.c.b16 %v2740, %v2739
      %v2746 = vpack.c.b16 %v2742, %v2741
      %v2747 = vpack.c.b16 %v2744, %v2743
      %v2752 = vsel %vm555, %v2725, 0
      %2754 = vmatprep.subr.bf16.mxu0 0
      %2755 = vmatpush1.bf16.msra.mxu0 %v2745
      %2756 = vmatprep.subr.bf16.mxu0 0
      %2757 = vmatpush1.bf16.msra.mxu0 %v2746
      %2758 = vmatprep.subr.bf16.mxu0 0
      %2759 = vmatpush1.bf16.msra.mxu0 %v2747
      %2760 = vmatprep.subr.bf16.mxu0 0
      %2761 = vmatpush1.bf16.msra.mxu0 0
      %2762 = vmatprep.subr.bf16.mxu0 0
      %2763 = vmatpush1.bf16.msra.mxu0 0
      %2764 = vmatprep.subr.bf16.mxu0 0
      %2765 = vmatpush1.bf16.msra.mxu0 0
      %2766 = vmatprep.subr.bf16.mxu0 0
      %2767 = vmatpush1.bf16.msra.mxu0 0
      %2768 = vmatprep.subr.bf16.mxu0 0
      %2769 = vmatpush1.bf16.msra.mxu0 0
      %2770 = vmatprep.subr.bf16.mxu0 0
      %2771 = vmatpush1.bf16.msra.mxu0 0
      %2772 = vmatprep.subr.bf16.mxu0 0
      %2773 = vmatpush1.bf16.msra.mxu0 0
      %2774 = vmatprep.subr.bf16.mxu0 0
      %2775 = vmatpush1.bf16.msra.mxu0 0
      %2776 = vmatprep.subr.bf16.mxu0 0
      %2777 = vmatpush1.bf16.msra.mxu0 0
      %2778 = vmatprep.subr.bf16.mxu0 0
      %2779 = vmatpush1.bf16.msra.mxu0 0
      %2780 = vmatprep.subr.bf16.mxu0 0
      %2781 = vmatpush1.bf16.msra.mxu0 0
      %2782 = vmatprep.subr.bf16.mxu0 0
      %2783 = vmatpush1.bf16.msra.mxu0 0
      %2784 = vmatprep.subr.bf16.mxu0 0
      %2785 = vmatpush1.bf16.msra.mxu0 0
      %2786 = vmatprep.mubr.bf16.mxu0 0
      %2787 = vmatmul.mubr.bf16.gmra.mrb[0].mxu0 %v2752
      %v2788 = vpop.f32.mrb[0].mxu0
      %v2789 = vadd.f32 %v2731, %v2788
      %v2790 = vpop.f32.mrb[0].mxu0
      %v2791 = vpop.f32.mrb[0].mxu0
      %v2792 = vpop.f32.mrb[0].mxu0
      %2793 = vdwg.mxu0
      %vm2794 = vcmask 63488
      %2795 = vst.msk [vmem:[%s489] sm:$0x7f] %vm2794, %v2789
      %p2796 = scmp.lt.s32.totalorder %s26, 1
      %s2797 = scalar_select %p2796, %s26, 1
      %s2798 = smul.addr %s2797, 8
      %s2799 = scalar_lea.vmem %s15, %s2798
      // Predicated region
      $region81: #{_lambda_.3} parent=79 // pred_check
        %p2800 = pneg %p364
      $region82: #{_lambda_.3} parent=79 // pred_check_branch
        %2802 = sbr.rel (%p2800) target = $region84
      $region83: #{_lambda_.3} parent=79 // pred_region
        _
      $region84: #{_lambda_.3} parent=79 // pred_fallthru
        _
    $region80: #{_lambda_.3} parent=5 // pred_fallthru
      _
    %p2803 = scmp.le.s32.totalorder 2, %s21
    // Predicated region
    $region85: #{_lambda_.3} parent=5 // pred_check
      %p2804 = pneg %p2803
    $region86: #{_lambda_.3} parent=5 // pred_check_branch
      %2806 = sbr.rel (%p2804) target = $region88
    $region87: #{_lambda_.3} parent=5 // pred_region
      %s2807 = ssub.s32 %s21, 2
      // Predicated region
      $region89: #{_lambda_.3} parent=87 // pred_check
        %p2808 = pneg %p370
      $region90: #{_lambda_.3} parent=87 // pred_check_branch
        %2810 = sbr.rel (%p2808) target = $region92
      $region91: #{_lambda_.3} parent=87 // pred_region
        %p2811 = scmp.lt.s32.totalorder %s27, 1
        %s2812 = scalar_select %p2811, %s27, 1
        %s2813 = smul.addr %s2812, 8
        %s2814 = scalar_lea.vmem %s15, %s2813
      $region92: #{_lambda_.3} parent=87 // pred_fallthru
        _
    $region88: #{_lambda_.3} parent=5 // pred_fallthru
      _
  $region6: #{_lambda_.3} parent=0 // loop_footer
    %s25 = sadd.s32 1, %s21
  $region7: #{_lambda_.3} parent=0 // loop_footer_branch
    %20 = sbr.rel target = $region3
  $region8: #{_lambda_.3} parent=0 // loop_exit
    _

// kernel: _lambda_.2
$region0: #{_lambda_.2}
  #allocation0 [shape = 'u32[]', space=smem, size = 0x4, offset = 0x4, fixed_abs, tag = 'smem constant byte address 0x4 - core index']
  #allocation1 [shape = 'u32[144,128]{1,0:T(1,128)}', space=vmem, size = 0x12000, scoped, tag = 'internal scratch']
  %s0 = inlined_call_operand.vmem [shape: f32[2,4,8], index: 0, kind: input, shape index: {}]
  %s1 = inlined_call_operand.vmem [shape: f32[2,4,48], index: 1, kind: input, shape index: {}]
  %s2 = inlined_call_operand.vmem [shape: bf16[8,48], index: 2, kind: input, shape index: {}]
  %s3 = inlined_call_operand.vmem [shape: f32[1,48], index: 3, kind: input, shape index: {}]
  %s4 = inlined_call_operand.vmem [shape: f32[1,48], index: 4, kind: input, shape index: {}]
  %s5 = inlined_call_operand.vmem [shape: f32[1,48], index: 5, kind: input, shape index: {}]
  %s6 = inlined_call_operand.vmem [shape: bf16[48,192], index: 6, kind: input, shape index: {}]
  %s7 = inlined_call_operand.vmem [shape: f32[1,192], index: 7, kind: input, shape index: {}]
  %s8 = inlined_call_operand.vmem [shape: bf16[192,48], index: 8, kind: input, shape index: {}]
  %s9 = inlined_call_operand.vmem [shape: f32[1,48], index: 9, kind: input, shape index: {}]
  %s10 = inlined_call_operand.vmem [shape: f32[2,1,48], index: 10, kind: input, shape index: {}]
  %s11 = inlined_call_operand.vmem [shape: f32[2,1,48], index: 11, kind: input, shape index: {}]
  %s12 = inlined_call_operand.vmem [shape: bf16[2,3,2,48,24], index: 12, kind: input, shape index: {}]
  %s13 = inlined_call_operand.vmem [shape: f32[2,3,2,1,24], index: 13, kind: input, shape index: {}]
  %s14 = inlined_call_operand.vmem [shape: bf16[2,2,24,48], index: 14, kind: input, shape index: {}]
  %s15 = inlined_call_operand.vmem [shape: f32[2,1,48], index: 15, kind: input, shape index: {}]
  %s16 = inlined_call_operand.vmem [shape: f32[2,1,48], index: 16, kind: input, shape index: {}]
  %s17 = inlined_call_operand.vmem [shape: f32[2,1,48], index: 17, kind: input, shape index: {}]
  %s18 = inlined_call_operand.vmem [shape: bf16[2,48,192], index: 18, kind: input, shape index: {}]
  %s19 = inlined_call_operand.vmem [shape: f32[2,1,192], index: 19, kind: input, shape index: {}]
  %s20 = inlined_call_operand.vmem [shape: bf16[2,192,48], index: 20, kind: input, shape index: {}]
  %s21 = inlined_call_operand.vmem [shape: f32[2,1,48], index: 21, kind: input, shape index: {}]
  %s22 = inlined_call_operand.vmem [shape: f32[1,48], index: 22, kind: input, shape index: {}]
  %s23 = inlined_call_operand.vmem [shape: f32[1,48], index: 23, kind: input, shape index: {}]
  %s24 = inlined_call_operand.vmem [shape: bf16[48,48], index: 24, kind: input, shape index: {}]
  %s25 = inlined_call_operand.vmem [shape: f32[1,48], index: 25, kind: input, shape index: {}]
  %s26 = inlined_call_operand.vmem [shape: f32[2,4,48], index: 26, kind: output, shape index: {}]
  %s27 = sld [smem:[#allocation0]]
  $region137: #{_lambda_.2} parent=0
    _
  %s29 = ssub.s32 1, %s27
  %s30 = scalar_select 0, %s29, %s27
  loop: start=0, step=1, limit=4
  $region2: #{_lambda_.2} parent=0 // loop_pre_header
    _
  $region3: #{_lambda_.2} parent=0 // loop_header
    %s32 = sphi 0, %s36
    %p33 = scmp.ge.s32.totalorder %s32, 4
    %s42 = sphi 0, %s44
    %s45 = sphi 0, %s42
    %s46 = sphi 0, %s45
    %s62 = sphi 0, %s46
    %s68 = sphi 0, %s70
    %s71 = sphi 0, %s68
    %s72 = sphi 0, %s71
    %s88 = sphi 0, %s72
    %s92 = sphi 0, %s92
    %s94 = sphi 0, %s92
    %s95 = sphi 0, %s94
    %s109 = sphi 0, %s95
    %s113 = sphi 0, %s113
    %s115 = sphi 0, %s113
    %s116 = sphi 0, %s115
    %s130 = sphi 0, %s116
    %s134 = sphi 0, %s134
    %s136 = sphi 0, %s134
    %s137 = sphi 0, %s136
    %s151 = sphi 0, %s137
    %s155 = sphi 0, %s155
    %s157 = sphi 0, %s155
    %s158 = sphi 0, %s157
    %s172 = sphi 0, %s158
    %s176 = sphi 0, %s176
    %s178 = sphi 0, %s176
    %s179 = sphi 0, %s178
    %s193 = sphi 0, %s179
    %s197 = sphi 0, %s197
    %s199 = sphi 0, %s197
    %s200 = sphi 0, %s199
    %s214 = sphi 0, %s200
    %s218 = sphi 0, %s218
    %s220 = sphi 0, %s218
    %s221 = sphi 0, %s220
    %s235 = sphi 0, %s221
    %s239 = sphi 0, %s239
    %s241 = sphi 0, %s239
    %s242 = sphi 0, %s241
    %s256 = sphi 0, %s242
    %s260 = sphi 0, %s260
    %s262 = sphi 0, %s260
    %s263 = sphi 0, %s262
    %s277 = sphi 0, %s263
    %s281 = sphi 0, %s281
    %s283 = sphi 0, %s281
    %s284 = sphi 0, %s283
    %s298 = sphi 0, %s284
    %s302 = sphi 0, %s302
    %s304 = sphi 0, %s302
    %s305 = sphi 0, %s304
    %s319 = sphi 0, %s305
    %s323 = sphi 0, %s323
    %s325 = sphi 0, %s323
    %s326 = sphi 0, %s325
    %s340 = sphi 0, %s326
    %s344 = sphi 0, %s344
    %s346 = sphi 0, %s344
    %s347 = sphi 0, %s346
    %s361 = sphi 0, %s347
    %s365 = sphi 0, %s365
    %s367 = sphi 0, %s365
    %s368 = sphi 0, %s367
    %s382 = sphi 0, %s368
    %s386 = sphi 0, %s386
    %s388 = sphi 0, %s386
    %s389 = sphi 0, %s388
    %s403 = sphi 0, %s389
    %s407 = sphi 0, %s407
    %s409 = sphi 0, %s407
    %s410 = sphi 0, %s409
    %s424 = sphi 0, %s410
    %s428 = sphi 0, %s428
    %s430 = sphi 0, %s428
    %s431 = sphi 0, %s430
    %s445 = sphi 0, %s431
    %s449 = sphi 0, %s449
    %s451 = sphi 0, %s449
    %s452 = sphi 0, %s451
    %s466 = sphi 0, %s452
    %s470 = sphi 0, %s470
    %s472 = sphi 0, %s470
    %s473 = sphi 0, %s472
    %s487 = sphi 0, %s473
    %s491 = sphi 0, %s491
    %s493 = sphi 0, %s491
    %s494 = sphi 0, %s493
    %s508 = sphi 0, %s494
    %s512 = sphi 0, %s512
    %s514 = sphi 0, %s512
    %s515 = sphi 0, %s514
    %s529 = sphi 0, %s515
    %s533 = sphi 0, %s533
    %s535 = sphi 0, %s533
    %s536 = sphi 0, %s535
    %s550 = sphi 0, %s536
    %s554 = sphi 0, %s554
    %s556 = sphi 0, %s554
    %s557 = sphi 0, %s556
    %s571 = sphi 0, %s557
    %s575 = sphi 0, %s575
    %s577 = sphi 0, %s575
    %s578 = sphi 0, %s577
    %s592 = sphi 0, %s578
    %s598 = sphi 0, %s600
    %s601 = sphi 0, %s598
    %s602 = sphi 0, %s601
    %s618 = sphi 0, %s602
  $region4: #{_lambda_.2} parent=0 // loop_header_branch
    %35 = sbr.rel (%p33) target = $region8
  $region5: #{_lambda_.2} parent=0 // loop_body
    %s37 = ssub.s32 %s32, 1
    %s38 = ssub.s32 %s32, 2
    %s39 = sadd.s32 %s32, 1
    %s40 = ssub.s32 %s32, %s39
    %p41 = scmp.eq.s32.totalorder %s40, 0
    %s43 = sadd.s32 %s42, 1
    %s44 = scalar_select %p41, %s42, %s43
    %p47 = pneg %p41
    %p48 = scmp.eq.s32.totalorder %s32, 1
    %p49 = por %p47, %p48
    %p50 = scmp.ne.s32.totalorder %s42, %s45
    %p51 = scmp.eq.s32.totalorder %s32, 0
    %p52 = por %p50, %p51
    %p53 = scmp.ne.s32.totalorder %s42, %s45
    %p54 = scmp.eq.s32.totalorder %s37, 1
    %p55 = por %p53, %p54
    %p56 = scmp.ne.s32.totalorder %s45, %s46
    %p57 = scmp.eq.s32.totalorder %s37, 0
    %p58 = por %p56, %p57
    %p59 = scmp.ne.s32.totalorder %s45, %s46
    %p60 = scmp.eq.s32.totalorder %s38, 1
    %p61 = por %p59, %p60
    %p63 = scmp.ne.s32.totalorder %s46, %s62
    %p64 = scmp.eq.s32.totalorder %s38, 0
    %p65 = por %p63, %p64
    %s66 = ssub.s32 %s32, %s39
    %p67 = scmp.eq.s32.totalorder %s66, 0
    %s69 = sadd.s32 %s68, 1
    %s70 = scalar_select %p67, %s68, %s69
    %p73 = pneg %p67
    %p74 = scmp.eq.s32.totalorder %s32, 1
    %p75 = por %p73, %p74
    %p76 = scmp.ne.s32.totalorder %s68, %s71
    %p77 = scmp.eq.s32.totalorder %s32, 0
    %p78 = por %p76, %p77
    %p79 = scmp.ne.s32.totalorder %s68, %s71
    %p80 = scmp.eq.s32.totalorder %s37, 1
    %p81 = por %p79, %p80
    %p82 = scmp.ne.s32.totalorder %s71, %s72
    %p83 = scmp.eq.s32.totalorder %s37, 0
    %p84 = por %p82, %p83
    %p85 = scmp.ne.s32.totalorder %s71, %s72
    %p86 = scmp.eq.s32.totalorder %s38, 1
    %p87 = por %p85, %p86
    %p89 = scmp.ne.s32.totalorder %s72, %s88
    %p90 = scmp.eq.s32.totalorder %s38, 0
    %p91 = por %p89, %p90
    %s93 = sadd.s32 %s92, 1
    %p96 = scmp.eq.s32.totalorder %s32, 1
    %p97 = scmp.ne.s32.totalorder %s92, %s94
    %p98 = scmp.eq.s32.totalorder %s32, 0
    %p99 = por %p97, %p98
    %p100 = scmp.ne.s32.totalorder %s92, %s94
    %p101 = scmp.eq.s32.totalorder %s37, 1
    %p102 = por %p100, %p101
    %p103 = scmp.ne.s32.totalorder %s94, %s95
    %p104 = scmp.eq.s32.totalorder %s37, 0
    %p105 = por %p103, %p104
    %p106 = scmp.ne.s32.totalorder %s94, %s95
    %p107 = scmp.eq.s32.totalorder %s38, 1
    %p108 = por %p106, %p107
    %p110 = scmp.ne.s32.totalorder %s95, %s109
    %p111 = scmp.eq.s32.totalorder %s38, 0
    %p112 = por %p110, %p111
    %s114 = sadd.s32 %s113, 1
    %p117 = scmp.eq.s32.totalorder %s32, 1
    %p118 = scmp.ne.s32.totalorder %s113, %s115
    %p119 = scmp.eq.s32.totalorder %s32, 0
    %p120 = por %p118, %p119
    %p121 = scmp.ne.s32.totalorder %s113, %s115
    %p122 = scmp.eq.s32.totalorder %s37, 1
    %p123 = por %p121, %p122
    %p124 = scmp.ne.s32.totalorder %s115, %s116
    %p125 = scmp.eq.s32.totalorder %s37, 0
    %p126 = por %p124, %p125
    %p127 = scmp.ne.s32.totalorder %s115, %s116
    %p128 = scmp.eq.s32.totalorder %s38, 1
    %p129 = por %p127, %p128
    %p131 = scmp.ne.s32.totalorder %s116, %s130
    %p132 = scmp.eq.s32.totalorder %s38, 0
    %p133 = por %p131, %p132
    %s135 = sadd.s32 %s134, 1
    %p138 = scmp.eq.s32.totalorder %s32, 1
    %p139 = scmp.ne.s32.totalorder %s134, %s136
    %p140 = scmp.eq.s32.totalorder %s32, 0
    %p141 = por %p139, %p140
    %p142 = scmp.ne.s32.totalorder %s134, %s136
    %p143 = scmp.eq.s32.totalorder %s37, 1
    %p144 = por %p142, %p143
    %p145 = scmp.ne.s32.totalorder %s136, %s137
    %p146 = scmp.eq.s32.totalorder %s37, 0
    %p147 = por %p145, %p146
    %p148 = scmp.ne.s32.totalorder %s136, %s137
    %p149 = scmp.eq.s32.totalorder %s38, 1
    %p150 = por %p148, %p149
    %p152 = scmp.ne.s32.totalorder %s137, %s151
    %p153 = scmp.eq.s32.totalorder %s38, 0
    %p154 = por %p152, %p153
    %s156 = sadd.s32 %s155, 1
    %p159 = scmp.eq.s32.totalorder %s32, 1
    %p160 = scmp.ne.s32.totalorder %s155, %s157
    %p161 = scmp.eq.s32.totalorder %s32, 0
    %p162 = por %p160, %p161
    %p163 = scmp.ne.s32.totalorder %s155, %s157
    %p164 = scmp.eq.s32.totalorder %s37, 1
    %p165 = por %p163, %p164
    %p166 = scmp.ne.s32.totalorder %s157, %s158
    %p167 = scmp.eq.s32.totalorder %s37, 0
    %p168 = por %p166, %p167
    %p169 = scmp.ne.s32.totalorder %s157, %s158
    %p170 = scmp.eq.s32.totalorder %s38, 1
    %p171 = por %p169, %p170
    %p173 = scmp.ne.s32.totalorder %s158, %s172
    %p174 = scmp.eq.s32.totalorder %s38, 0
    %p175 = por %p173, %p174
    %s177 = sadd.s32 %s176, 1
    %p180 = scmp.eq.s32.totalorder %s32, 1
    %p181 = scmp.ne.s32.totalorder %s176, %s178
    %p182 = scmp.eq.s32.totalorder %s32, 0
    %p183 = por %p181, %p182
    %p184 = scmp.ne.s32.totalorder %s176, %s178
    %p185 = scmp.eq.s32.totalorder %s37, 1
    %p186 = por %p184, %p185
    %p187 = scmp.ne.s32.totalorder %s178, %s179
    %p188 = scmp.eq.s32.totalorder %s37, 0
    %p189 = por %p187, %p188
    %p190 = scmp.ne.s32.totalorder %s178, %s179
    %p191 = scmp.eq.s32.totalorder %s38, 1
    %p192 = por %p190, %p191
    %p194 = scmp.ne.s32.totalorder %s179, %s193
    %p195 = scmp.eq.s32.totalorder %s38, 0
    %p196 = por %p194, %p195
    %s198 = sadd.s32 %s197, 1
    %p201 = scmp.eq.s32.totalorder %s32, 1
    %p202 = scmp.ne.s32.totalorder %s197, %s199
    %p203 = scmp.eq.s32.totalorder %s32, 0
    %p204 = por %p202, %p203
    %p205 = scmp.ne.s32.totalorder %s197, %s199
    %p206 = scmp.eq.s32.totalorder %s37, 1
    %p207 = por %p205, %p206
    %p208 = scmp.ne.s32.totalorder %s199, %s200
    %p209 = scmp.eq.s32.totalorder %s37, 0
    %p210 = por %p208, %p209
    %p211 = scmp.ne.s32.totalorder %s199, %s200
    %p212 = scmp.eq.s32.totalorder %s38, 1
    %p213 = por %p211, %p212
    %p215 = scmp.ne.s32.totalorder %s200, %s214
    %p216 = scmp.eq.s32.totalorder %s38, 0
    %p217 = por %p215, %p216
    %s219 = sadd.s32 %s218, 1
    %p222 = scmp.eq.s32.totalorder %s32, 1
    %p223 = scmp.ne.s32.totalorder %s218, %s220
    %p224 = scmp.eq.s32.totalorder %s32, 0
    %p225 = por %p223, %p224
    %p226 = scmp.ne.s32.totalorder %s218, %s220
    %p227 = scmp.eq.s32.totalorder %s37, 1
    %p228 = por %p226, %p227
    %p229 = scmp.ne.s32.totalorder %s220, %s221
    %p230 = scmp.eq.s32.totalorder %s37, 0
    %p231 = por %p229, %p230
    %p232 = scmp.ne.s32.totalorder %s220, %s221
    %p233 = scmp.eq.s32.totalorder %s38, 1
    %p234 = por %p232, %p233
    %p236 = scmp.ne.s32.totalorder %s221, %s235
    %p237 = scmp.eq.s32.totalorder %s38, 0
    %p238 = por %p236, %p237
    %s240 = sadd.s32 %s239, 1
    %p243 = scmp.eq.s32.totalorder %s32, 1
    %p244 = scmp.ne.s32.totalorder %s239, %s241
    %p245 = scmp.eq.s32.totalorder %s32, 0
    %p246 = por %p244, %p245
    %p247 = scmp.ne.s32.totalorder %s239, %s241
    %p248 = scmp.eq.s32.totalorder %s37, 1
    %p249 = por %p247, %p248
    %p250 = scmp.ne.s32.totalorder %s241, %s242
    %p251 = scmp.eq.s32.totalorder %s37, 0
    %p252 = por %p250, %p251
    %p253 = scmp.ne.s32.totalorder %s241, %s242
    %p254 = scmp.eq.s32.totalorder %s38, 1
    %p255 = por %p253, %p254
    %p257 = scmp.ne.s32.totalorder %s242, %s256
    %p258 = scmp.eq.s32.totalorder %s38, 0
    %p259 = por %p257, %p258
    %s261 = sadd.s32 %s260, 1
    %p264 = scmp.eq.s32.totalorder %s32, 1
    %p265 = scmp.ne.s32.totalorder %s260, %s262
    %p266 = scmp.eq.s32.totalorder %s32, 0
    %p267 = por %p265, %p266
    %p268 = scmp.ne.s32.totalorder %s260, %s262
    %p269 = scmp.eq.s32.totalorder %s37, 1
    %p270 = por %p268, %p269
    %p271 = scmp.ne.s32.totalorder %s262, %s263
    %p272 = scmp.eq.s32.totalorder %s37, 0
    %p273 = por %p271, %p272
    %p274 = scmp.ne.s32.totalorder %s262, %s263
    %p275 = scmp.eq.s32.totalorder %s38, 1
    %p276 = por %p274, %p275
    %p278 = scmp.ne.s32.totalorder %s263, %s277
    %p279 = scmp.eq.s32.totalorder %s38, 0
    %p280 = por %p278, %p279
    %s282 = sadd.s32 %s281, 1
    %p285 = scmp.eq.s32.totalorder %s32, 1
    %p286 = scmp.ne.s32.totalorder %s281, %s283
    %p287 = scmp.eq.s32.totalorder %s32, 0
    %p288 = por %p286, %p287
    %p289 = scmp.ne.s32.totalorder %s281, %s283
    %p290 = scmp.eq.s32.totalorder %s37, 1
    %p291 = por %p289, %p290
    %p292 = scmp.ne.s32.totalorder %s283, %s284
    %p293 = scmp.eq.s32.totalorder %s37, 0
    %p294 = por %p292, %p293
    %p295 = scmp.ne.s32.totalorder %s283, %s284
    %p296 = scmp.eq.s32.totalorder %s38, 1
    %p297 = por %p295, %p296
    %p299 = scmp.ne.s32.totalorder %s284, %s298
    %p300 = scmp.eq.s32.totalorder %s38, 0
    %p301 = por %p299, %p300
    %s303 = sadd.s32 %s302, 1
    %p306 = scmp.eq.s32.totalorder %s32, 1
    %p307 = scmp.ne.s32.totalorder %s302, %s304
    %p308 = scmp.eq.s32.totalorder %s32, 0
    %p309 = por %p307, %p308
    %p310 = scmp.ne.s32.totalorder %s302, %s304
    %p311 = scmp.eq.s32.totalorder %s37, 1
    %p312 = por %p310, %p311
    %p313 = scmp.ne.s32.totalorder %s304, %s305
    %p314 = scmp.eq.s32.totalorder %s37, 0
    %p315 = por %p313, %p314
    %p316 = scmp.ne.s32.totalorder %s304, %s305
    %p317 = scmp.eq.s32.totalorder %s38, 1
    %p318 = por %p316, %p317
    %p320 = scmp.ne.s32.totalorder %s305, %s319
    %p321 = scmp.eq.s32.totalorder %s38, 0
    %p322 = por %p320, %p321
    %s324 = sadd.s32 %s323, 1
    %p327 = scmp.eq.s32.totalorder %s32, 1
    %p328 = scmp.ne.s32.totalorder %s323, %s325
    %p329 = scmp.eq.s32.totalorder %s32, 0
    %p330 = por %p328, %p329
    %p331 = scmp.ne.s32.totalorder %s323, %s325
    %p332 = scmp.eq.s32.totalorder %s37, 1
    %p333 = por %p331, %p332
    %p334 = scmp.ne.s32.totalorder %s325, %s326
    %p335 = scmp.eq.s32.totalorder %s37, 0
    %p336 = por %p334, %p335
    %p337 = scmp.ne.s32.totalorder %s325, %s326
    %p338 = scmp.eq.s32.totalorder %s38, 1
    %p339 = por %p337, %p338
    %p341 = scmp.ne.s32.totalorder %s326, %s340
    %p342 = scmp.eq.s32.totalorder %s38, 0
    %p343 = por %p341, %p342
    %s345 = sadd.s32 %s344, 1
    %p348 = scmp.eq.s32.totalorder %s32, 1
    %p349 = scmp.ne.s32.totalorder %s344, %s346
    %p350 = scmp.eq.s32.totalorder %s32, 0
    %p351 = por %p349, %p350
    %p352 = scmp.ne.s32.totalorder %s344, %s346
    %p353 = scmp.eq.s32.totalorder %s37, 1
    %p354 = por %p352, %p353
    %p355 = scmp.ne.s32.totalorder %s346, %s347
    %p356 = scmp.eq.s32.totalorder %s37, 0
    %p357 = por %p355, %p356
    %p358 = scmp.ne.s32.totalorder %s346, %s347
    %p359 = scmp.eq.s32.totalorder %s38, 1
    %p360 = por %p358, %p359
    %p362 = scmp.ne.s32.totalorder %s347, %s361
    %p363 = scmp.eq.s32.totalorder %s38, 0
    %p364 = por %p362, %p363
    %s366 = sadd.s32 %s365, 1
    %p369 = scmp.eq.s32.totalorder %s32, 1
    %p370 = scmp.ne.s32.totalorder %s365, %s367
    %p371 = scmp.eq.s32.totalorder %s32, 0
    %p372 = por %p370, %p371
    %p373 = scmp.ne.s32.totalorder %s365, %s367
    %p374 = scmp.eq.s32.totalorder %s37, 1
    %p375 = por %p373, %p374
    %p376 = scmp.ne.s32.totalorder %s367, %s368
    %p377 = scmp.eq.s32.totalorder %s37, 0
    %p378 = por %p376, %p377
    %p379 = scmp.ne.s32.totalorder %s367, %s368
    %p380 = scmp.eq.s32.totalorder %s38, 1
    %p381 = por %p379, %p380
    %p383 = scmp.ne.s32.totalorder %s368, %s382
    %p384 = scmp.eq.s32.totalorder %s38, 0
    %p385 = por %p383, %p384
    %s387 = sadd.s32 %s386, 1
    %p390 = scmp.eq.s32.totalorder %s32, 1
    %p391 = scmp.ne.s32.totalorder %s386, %s388
    %p392 = scmp.eq.s32.totalorder %s32, 0
    %p393 = por %p391, %p392
    %p394 = scmp.ne.s32.totalorder %s386, %s388
    %p395 = scmp.eq.s32.totalorder %s37, 1
    %p396 = por %p394, %p395
    %p397 = scmp.ne.s32.totalorder %s388, %s389
    %p398 = scmp.eq.s32.totalorder %s37, 0
    %p399 = por %p397, %p398
    %p400 = scmp.ne.s32.totalorder %s388, %s389
    %p401 = scmp.eq.s32.totalorder %s38, 1
    %p402 = por %p400, %p401
    %p404 = scmp.ne.s32.totalorder %s389, %s403
    %p405 = scmp.eq.s32.totalorder %s38, 0
    %p406 = por %p404, %p405
    %s408 = sadd.s32 %s407, 1
    %p411 = scmp.eq.s32.totalorder %s32, 1
    %p412 = scmp.ne.s32.totalorder %s407, %s409
    %p413 = scmp.eq.s32.totalorder %s32, 0
    %p414 = por %p412, %p413
    %p415 = scmp.ne.s32.totalorder %s407, %s409
    %p416 = scmp.eq.s32.totalorder %s37, 1
    %p417 = por %p415, %p416
    %p418 = scmp.ne.s32.totalorder %s409, %s410
    %p419 = scmp.eq.s32.totalorder %s37, 0
    %p420 = por %p418, %p419
    %p421 = scmp.ne.s32.totalorder %s409, %s410
    %p422 = scmp.eq.s32.totalorder %s38, 1
    %p423 = por %p421, %p422
    %p425 = scmp.ne.s32.totalorder %s410, %s424
    %p426 = scmp.eq.s32.totalorder %s38, 0
    %p427 = por %p425, %p426
    %s429 = sadd.s32 %s428, 1
    %p432 = scmp.eq.s32.totalorder %s32, 1
    %p433 = scmp.ne.s32.totalorder %s428, %s430
    %p434 = scmp.eq.s32.totalorder %s32, 0
    %p435 = por %p433, %p434
    %p436 = scmp.ne.s32.totalorder %s428, %s430
    %p437 = scmp.eq.s32.totalorder %s37, 1
    %p438 = por %p436, %p437
    %p439 = scmp.ne.s32.totalorder %s430, %s431
    %p440 = scmp.eq.s32.totalorder %s37, 0
    %p441 = por %p439, %p440
    %p442 = scmp.ne.s32.totalorder %s430, %s431
    %p443 = scmp.eq.s32.totalorder %s38, 1
    %p444 = por %p442, %p443
    %p446 = scmp.ne.s32.totalorder %s431, %s445
    %p447 = scmp.eq.s32.totalorder %s38, 0
    %p448 = por %p446, %p447
    %s450 = sadd.s32 %s449, 1
    %p453 = scmp.eq.s32.totalorder %s32, 1
    %p454 = scmp.ne.s32.totalorder %s449, %s451
    %p455 = scmp.eq.s32.totalorder %s32, 0
    %p456 = por %p454, %p455
    %p457 = scmp.ne.s32.totalorder %s449, %s451
    %p458 = scmp.eq.s32.totalorder %s37, 1
    %p459 = por %p457, %p458
    %p460 = scmp.ne.s32.totalorder %s451, %s452
    %p461 = scmp.eq.s32.totalorder %s37, 0
    %p462 = por %p460, %p461
    %p463 = scmp.ne.s32.totalorder %s451, %s452
    %p464 = scmp.eq.s32.totalorder %s38, 1
    %p465 = por %p463, %p464
    %p467 = scmp.ne.s32.totalorder %s452, %s466
    %p468 = scmp.eq.s32.totalorder %s38, 0
    %p469 = por %p467, %p468
    %s471 = sadd.s32 %s470, 1
    %p474 = scmp.eq.s32.totalorder %s32, 1
    %p475 = scmp.ne.s32.totalorder %s470, %s472
    %p476 = scmp.eq.s32.totalorder %s32, 0
    %p477 = por %p475, %p476
    %p478 = scmp.ne.s32.totalorder %s470, %s472
    %p479 = scmp.eq.s32.totalorder %s37, 1
    %p480 = por %p478, %p479
    %p481 = scmp.ne.s32.totalorder %s472, %s473
    %p482 = scmp.eq.s32.totalorder %s37, 0
    %p483 = por %p481, %p482
    %p484 = scmp.ne.s32.totalorder %s472, %s473
    %p485 = scmp.eq.s32.totalorder %s38, 1
    %p486 = por %p484, %p485
    %p488 = scmp.ne.s32.totalorder %s473, %s487
    %p489 = scmp.eq.s32.totalorder %s38, 0
    %p490 = por %p488, %p489
    %s492 = sadd.s32 %s491, 1
    %p495 = scmp.eq.s32.totalorder %s32, 1
    %p496 = scmp.ne.s32.totalorder %s491, %s493
    %p497 = scmp.eq.s32.totalorder %s32, 0
    %p498 = por %p496, %p497
    %p499 = scmp.ne.s32.totalorder %s491, %s493
    %p500 = scmp.eq.s32.totalorder %s37, 1
    %p501 = por %p499, %p500
    %p502 = scmp.ne.s32.totalorder %s493, %s494
    %p503 = scmp.eq.s32.totalorder %s37, 0
    %p504 = por %p502, %p503
    %p505 = scmp.ne.s32.totalorder %s493, %s494
    %p506 = scmp.eq.s32.totalorder %s38, 1
    %p507 = por %p505, %p506
    %p509 = scmp.ne.s32.totalorder %s494, %s508
    %p510 = scmp.eq.s32.totalorder %s38, 0
    %p511 = por %p509, %p510
    %s513 = sadd.s32 %s512, 1
    %p516 = scmp.eq.s32.totalorder %s32, 1
    %p517 = scmp.ne.s32.totalorder %s512, %s514
    %p518 = scmp.eq.s32.totalorder %s32, 0
    %p519 = por %p517, %p518
    %p520 = scmp.ne.s32.totalorder %s512, %s514
    %p521 = scmp.eq.s32.totalorder %s37, 1
    %p522 = por %p520, %p521
    %p523 = scmp.ne.s32.totalorder %s514, %s515
    %p524 = scmp.eq.s32.totalorder %s37, 0
    %p525 = por %p523, %p524
    %p526 = scmp.ne.s32.totalorder %s514, %s515
    %p527 = scmp.eq.s32.totalorder %s38, 1
    %p528 = por %p526, %p527
    %p530 = scmp.ne.s32.totalorder %s515, %s529
    %p531 = scmp.eq.s32.totalorder %s38, 0
    %p532 = por %p530, %p531
    %s534 = sadd.s32 %s533, 1
    %p537 = scmp.eq.s32.totalorder %s32, 1
    %p538 = scmp.ne.s32.totalorder %s533, %s535
    %p539 = scmp.eq.s32.totalorder %s32, 0
    %p540 = por %p538, %p539
    %p541 = scmp.ne.s32.totalorder %s533, %s535
    %p542 = scmp.eq.s32.totalorder %s37, 1
    %p543 = por %p541, %p542
    %p544 = scmp.ne.s32.totalorder %s535, %s536
    %p545 = scmp.eq.s32.totalorder %s37, 0
    %p546 = por %p544, %p545
    %p547 = scmp.ne.s32.totalorder %s535, %s536
    %p548 = scmp.eq.s32.totalorder %s38, 1
    %p549 = por %p547, %p548
    %p551 = scmp.ne.s32.totalorder %s536, %s550
    %p552 = scmp.eq.s32.totalorder %s38, 0
    %p553 = por %p551, %p552
    %s555 = sadd.s32 %s554, 1
    %p558 = scmp.eq.s32.totalorder %s32, 1
    %p559 = scmp.ne.s32.totalorder %s554, %s556
    %p560 = scmp.eq.s32.totalorder %s32, 0
    %p561 = por %p559, %p560
    %p562 = scmp.ne.s32.totalorder %s554, %s556
    %p563 = scmp.eq.s32.totalorder %s37, 1
    %p564 = por %p562, %p563
    %p565 = scmp.ne.s32.totalorder %s556, %s557
    %p566 = scmp.eq.s32.totalorder %s37, 0
    %p567 = por %p565, %p566
    %p568 = scmp.ne.s32.totalorder %s556, %s557
    %p569 = scmp.eq.s32.totalorder %s38, 1
    %p570 = por %p568, %p569
    %p572 = scmp.ne.s32.totalorder %s557, %s571
    %p573 = scmp.eq.s32.totalorder %s38, 0
    %p574 = por %p572, %p573
    %s576 = sadd.s32 %s575, 1
    %p579 = scmp.eq.s32.totalorder %s32, 1
    %p580 = scmp.ne.s32.totalorder %s575, %s577
    %p581 = scmp.eq.s32.totalorder %s32, 0
    %p582 = por %p580, %p581
    %p583 = scmp.ne.s32.totalorder %s575, %s577
    %p584 = scmp.eq.s32.totalorder %s37, 1
    %p585 = por %p583, %p584
    %p586 = scmp.ne.s32.totalorder %s577, %s578
    %p587 = scmp.eq.s32.totalorder %s37, 0
    %p588 = por %p586, %p587
    %p589 = scmp.ne.s32.totalorder %s577, %s578
    %p590 = scmp.eq.s32.totalorder %s38, 1
    %p591 = por %p589, %p590
    %p593 = scmp.ne.s32.totalorder %s578, %s592
    %p594 = scmp.eq.s32.totalorder %s38, 0
    %p595 = por %p593, %p594
    %s596 = ssub.s32 %s32, %s39
    %p597 = scmp.eq.s32.totalorder %s596, 0
    %s599 = sadd.s32 %s598, 1
    %s600 = scalar_select %p597, %s598, %s599
    %p603 = pneg %p597
    %p604 = scmp.eq.s32.totalorder %s32, 1
    %p605 = por %p603, %p604
    %p606 = scmp.ne.s32.totalorder %s598, %s601
    %p607 = scmp.eq.s32.totalorder %s32, 0
    %p608 = por %p606, %p607
    %p609 = scmp.ne.s32.totalorder %s598, %s601
    %p610 = scmp.eq.s32.totalorder %s37, 1
    %p611 = por %p609, %p610
    %p612 = scmp.ne.s32.totalorder %s601, %s602
    %p613 = scmp.eq.s32.totalorder %s37, 0
    %p614 = por %p612, %p613
    %p615 = scmp.ne.s32.totalorder %s601, %s602
    %p616 = scmp.eq.s32.totalorder %s38, 1
    %p617 = por %p615, %p616
    %p619 = scmp.ne.s32.totalorder %s602, %s618
    %p620 = scmp.eq.s32.totalorder %s38, 0
    %p621 = por %p619, %p620
    %p622 = scmp.le.s32.totalorder 1, %s32
    %p623 = scmp.lt.s32.totalorder %s32, 3
    %p624 = pnand %p622, %p623
    %p625 = pneg %p624
    // Predicated region
    $region9: #{_lambda_.2} parent=5 // pred_check
      _
    $region10: #{_lambda_.2} parent=5 // pred_check_branch
      %627 = sbr.rel (%p624) target = $region12
    $region11: #{_lambda_.2} parent=5 // pred_region
      %s628 = ssub.s32 %s32, 1
      // Predicated region
      $region13: #{_lambda_.2} parent=11 // pred_check
        %p629 = pneg %p105
      $region14: #{_lambda_.2} parent=11 // pred_check_branch
        %631 = sbr.rel (%p629) target = $region16
      $region15: #{_lambda_.2} parent=11 // pred_region
        _
      $region16: #{_lambda_.2} parent=11 // pred_fallthru
        _
      // Predicated region
      $region17: #{_lambda_.2} parent=11 // pred_check
        %p632 = pneg %p126
      $region18: #{_lambda_.2} parent=11 // pred_check_branch
        %634 = sbr.rel (%p632) target = $region20
      $region19: #{_lambda_.2} parent=11 // pred_region
        _
      $region20: #{_lambda_.2} parent=11 // pred_fallthru
        _
      // Predicated region
      $region21: #{_lambda_.2} parent=11 // pred_check
        %p635 = pneg %p147
      $region22: #{_lambda_.2} parent=11 // pred_check_branch
        %637 = sbr.rel (%p635) target = $region24
      $region23: #{_lambda_.2} parent=11 // pred_region
        _
      $region24: #{_lambda_.2} parent=11 // pred_fallthru
        _
      // Predicated region
      $region25: #{_lambda_.2} parent=11 // pred_check
        %p638 = pneg %p168
      $region26: #{_lambda_.2} parent=11 // pred_check_branch
        %640 = sbr.rel (%p638) target = $region28
      $region27: #{_lambda_.2} parent=11 // pred_region
        _
      $region28: #{_lambda_.2} parent=11 // pred_fallthru
        _
      // Predicated region
      $region29: #{_lambda_.2} parent=11 // pred_check
        %p641 = pneg %p189
      $region30: #{_lambda_.2} parent=11 // pred_check_branch
        %643 = sbr.rel (%p641) target = $region32
      $region31: #{_lambda_.2} parent=11 // pred_region
        _
      $region32: #{_lambda_.2} parent=11 // pred_fallthru
        _
      // Predicated region
      $region33: #{_lambda_.2} parent=11 // pred_check
        %p644 = pneg %p210
      $region34: #{_lambda_.2} parent=11 // pred_check_branch
        %646 = sbr.rel (%p644) target = $region36
      $region35: #{_lambda_.2} parent=11 // pred_region
        _
      $region36: #{_lambda_.2} parent=11 // pred_fallthru
        _
      // Predicated region
      $region37: #{_lambda_.2} parent=11 // pred_check
        %p647 = pneg %p231
      $region38: #{_lambda_.2} parent=11 // pred_check_branch
        %649 = sbr.rel (%p647) target = $region40
      $region39: #{_lambda_.2} parent=11 // pred_region
        _
      $region40: #{_lambda_.2} parent=11 // pred_fallthru
        _
      // Predicated region
      $region41: #{_lambda_.2} parent=11 // pred_check
        %p650 = pneg %p252
      $region42: #{_lambda_.2} parent=11 // pred_check_branch
        %652 = sbr.rel (%p650) target = $region44
      $region43: #{_lambda_.2} parent=11 // pred_region
        _
      $region44: #{_lambda_.2} parent=11 // pred_fallthru
        _
      // Predicated region
      $region45: #{_lambda_.2} parent=11 // pred_check
        %p653 = pneg %p273
      $region46: #{_lambda_.2} parent=11 // pred_check_branch
        %655 = sbr.rel (%p653) target = $region48
      $region47: #{_lambda_.2} parent=11 // pred_region
        _
      $region48: #{_lambda_.2} parent=11 // pred_fallthru
        _
      // Predicated region
      $region49: #{_lambda_.2} parent=11 // pred_check
        %p656 = pneg %p294
      $region50: #{_lambda_.2} parent=11 // pred_check_branch
        %658 = sbr.rel (%p656) target = $region52
      $region51: #{_lambda_.2} parent=11 // pred_region
        _
      $region52: #{_lambda_.2} parent=11 // pred_fallthru
        _
      // Predicated region
      $region53: #{_lambda_.2} parent=11 // pred_check
        %p659 = pneg %p315
      $region54: #{_lambda_.2} parent=11 // pred_check_branch
        %661 = sbr.rel (%p659) target = $region56
      $region55: #{_lambda_.2} parent=11 // pred_region
        _
      $region56: #{_lambda_.2} parent=11 // pred_fallthru
        _
      // Predicated region
      $region57: #{_lambda_.2} parent=11 // pred_check
        %p662 = pneg %p336
      $region58: #{_lambda_.2} parent=11 // pred_check_branch
        %664 = sbr.rel (%p662) target = $region60
      $region59: #{_lambda_.2} parent=11 // pred_region
        _
      $region60: #{_lambda_.2} parent=11 // pred_fallthru
        _
      // Predicated region
      $region61: #{_lambda_.2} parent=11 // pred_check
        %p665 = pneg %p357
      $region62: #{_lambda_.2} parent=11 // pred_check_branch
        %667 = sbr.rel (%p665) target = $region64
      $region63: #{_lambda_.2} parent=11 // pred_region
        _
      $region64: #{_lambda_.2} parent=11 // pred_fallthru
        _
      // Predicated region
      $region65: #{_lambda_.2} parent=11 // pred_check
        %p668 = pneg %p378
      $region66: #{_lambda_.2} parent=11 // pred_check_branch
        %670 = sbr.rel (%p668) target = $region68
      $region67: #{_lambda_.2} parent=11 // pred_region
        _
      $region68: #{_lambda_.2} parent=11 // pred_fallthru
        _
      // Predicated region
      $region69: #{_lambda_.2} parent=11 // pred_check
        %p671 = pneg %p399
      $region70: #{_lambda_.2} parent=11 // pred_check_branch
        %673 = sbr.rel (%p671) target = $region72
      $region71: #{_lambda_.2} parent=11 // pred_region
        _
      $region72: #{_lambda_.2} parent=11 // pred_fallthru
        _
      // Predicated region
      $region73: #{_lambda_.2} parent=11 // pred_check
        %p674 = pneg %p420
      $region74: #{_lambda_.2} parent=11 // pred_check_branch
        %676 = sbr.rel (%p674) target = $region76
      $region75: #{_lambda_.2} parent=11 // pred_region
        _
      $region76: #{_lambda_.2} parent=11 // pred_fallthru
        _
      // Predicated region
      $region77: #{_lambda_.2} parent=11 // pred_check
        %p677 = pneg %p441
      $region78: #{_lambda_.2} parent=11 // pred_check_branch
        %679 = sbr.rel (%p677) target = $region80
      $region79: #{_lambda_.2} parent=11 // pred_region
        _
      $region80: #{_lambda_.2} parent=11 // pred_fallthru
        _
      // Predicated region
      $region81: #{_lambda_.2} parent=11 // pred_check
        %p680 = pneg %p462
      $region82: #{_lambda_.2} parent=11 // pred_check_branch
        %682 = sbr.rel (%p680) target = $region84
      $region83: #{_lambda_.2} parent=11 // pred_region
        _
      $region84: #{_lambda_.2} parent=11 // pred_fallthru
        _
      // Predicated region
      $region85: #{_lambda_.2} parent=11 // pred_check
        %p683 = pneg %p483
      $region86: #{_lambda_.2} parent=11 // pred_check_branch
        %685 = sbr.rel (%p683) target = $region88
      $region87: #{_lambda_.2} parent=11 // pred_region
        _
      $region88: #{_lambda_.2} parent=11 // pred_fallthru
        _
      // Predicated region
      $region89: #{_lambda_.2} parent=11 // pred_check
        %p686 = pneg %p504
      $region90: #{_lambda_.2} parent=11 // pred_check_branch
        %688 = sbr.rel (%p686) target = $region92
      $region91: #{_lambda_.2} parent=11 // pred_region
        _
      $region92: #{_lambda_.2} parent=11 // pred_fallthru
        _
      // Predicated region
      $region93: #{_lambda_.2} parent=11 // pred_check
        %p689 = pneg %p525
      $region94: #{_lambda_.2} parent=11 // pred_check_branch
        %691 = sbr.rel (%p689) target = $region96
      $region95: #{_lambda_.2} parent=11 // pred_region
        _
      $region96: #{_lambda_.2} parent=11 // pred_fallthru
        _
      // Predicated region
      $region97: #{_lambda_.2} parent=11 // pred_check
        %p692 = pneg %p546
      $region98: #{_lambda_.2} parent=11 // pred_check_branch
        %694 = sbr.rel (%p692) target = $region100
      $region99: #{_lambda_.2} parent=11 // pred_region
        _
      $region100: #{_lambda_.2} parent=11 // pred_fallthru
        _
      // Predicated region
      $region101: #{_lambda_.2} parent=11 // pred_check
        %p695 = pneg %p567
      $region102: #{_lambda_.2} parent=11 // pred_check_branch
        %697 = sbr.rel (%p695) target = $region104
      $region103: #{_lambda_.2} parent=11 // pred_region
        _
      $region104: #{_lambda_.2} parent=11 // pred_fallthru
        _
      // Predicated region
      $region105: #{_lambda_.2} parent=11 // pred_check
        %p698 = pneg %p588
      $region106: #{_lambda_.2} parent=11 // pred_check_branch
        %700 = sbr.rel (%p698) target = $region108
      $region107: #{_lambda_.2} parent=11 // pred_region
        _
      $region108: #{_lambda_.2} parent=11 // pred_fallthru
        _
    $region12: #{_lambda_.2} parent=5 // pred_fallthru
      _
    %p701 = scmp.lt.s32.totalorder %s32, 2
    // Predicated region
    $region109: #{_lambda_.2} parent=5 // pred_check
      %p702 = pneg %p701
    $region110: #{_lambda_.2} parent=5 // pred_check_branch
      %704 = sbr.rel (%p702) target = $region112
    $region111: #{_lambda_.2} parent=5 // pred_region
      // Predicated region
      $region113: #{_lambda_.2} parent=111 // pred_check
        %p705 = pneg %p52
      $region114: #{_lambda_.2} parent=111 // pred_check_branch
        %707 = sbr.rel (%p705) target = $region116
      $region115: #{_lambda_.2} parent=111 // pred_region
        %p708 = scmp.lt.s32.totalorder %s32, 1
        %s709 = scalar_select %p708, %s32, 1
        %s710 = smul.addr %s709, 4
        %s711 = scalar_lea.vmem %s0, %s710
      $region116: #{_lambda_.2} parent=111 // pred_fallthru
        _
      // Predicated region
      $region117: #{_lambda_.2} parent=111 // pred_check
        %p712 = pneg %p78
      $region118: #{_lambda_.2} parent=111 // pred_check_branch
        %714 = sbr.rel (%p712) target = $region120
      $region119: #{_lambda_.2} parent=111 // pred_region
        %p715 = scmp.lt.s32.totalorder %s32, 1
        %s716 = scalar_select %p715, %s32, 1
        %s717 = smul.addr %s716, 4
        %s718 = scalar_lea.vmem %s1, %s717
      $region120: #{_lambda_.2} parent=111 // pred_fallthru
        _
    $region112: #{_lambda_.2} parent=5 // pred_fallthru
      _
    %p719 = scmp.le.s32.totalorder 1, %s32
    %p720 = scmp.lt.s32.totalorder %s32, 3
    %p721 = pnand %p719, %p720
    %p722 = pneg %p721
    // Predicated region
    $region121: #{_lambda_.2} parent=5 // pred_check
      _
    $region122: #{_lambda_.2} parent=5 // pred_check_branch
      %724 = sbr.rel (%p721) target = $region124
    $region123: #{_lambda_.2} parent=5 // pred_region
      %s725 = ssub.s32 %s32, 1
      %p726 = scmp.lt.s32.totalorder %s37, 1
      %s727 = scalar_select %p726, %s37, 1
      %s728 = smul.addr %s727, 4
      %s729 = scalar_lea.vmem %s0, %s728
      %p730 = pneg %p58
      %p731 = pneg %p55
      %p732 = scmp.lt.s32.totalorder %s37, 1
      %s733 = scalar_select %p732, %s37, 1
      %s734 = smul.addr %s733, 4
      %s735 = scalar_lea.vmem %s1, %s734
      %p736 = pneg %p84
      %p737 = pneg %p81
      %p738 = pneg %p105
      %p739 = pneg %p102
      %p740 = pneg %p126
      %p741 = pneg %p123
      %p742 = pneg %p147
      %p743 = pneg %p144
      %p744 = pneg %p168
      %p745 = pneg %p165
      %p746 = pneg %p189
      %p747 = pneg %p186
      %p748 = pneg %p210
      %p749 = pneg %p207
      %p750 = pneg %p231
      %p751 = pneg %p228
      %p752 = pneg %p252
      %p753 = pneg %p249
      %p754 = pneg %p273
      %p755 = pneg %p270
      %p756 = pneg %p294
      %p757 = pneg %p291
      %p758 = pneg %p315
      %p759 = pneg %p312
      %p760 = pneg %p336
      %p761 = pneg %p333
      %p762 = pneg %p357
      %p763 = pneg %p354
      %p764 = pneg %p378
      %p765 = pneg %p375
      %p766 = pneg %p399
      %p767 = pneg %p396
      %p768 = pneg %p420
      %p769 = pneg %p417
      %p770 = pneg %p441
      %p771 = pneg %p438
      %p772 = pneg %p462
      %p773 = pneg %p459
      %p774 = pneg %p483
      %p775 = pneg %p480
      %p776 = pneg %p504
      %p777 = pneg %p501
      %p778 = pneg %p525
      %p779 = pneg %p522
      %p780 = pneg %p546
      %p781 = pneg %p543
      %p782 = pneg %p567
      %p783 = pneg %p564
      %p784 = pneg %p588
      %p785 = pneg %p585
      %p786 = pneg %p614
      %p787 = pneg %p611
      %p788 = scmp.lt.s32.totalorder %s37, 1
      %s789 = scalar_select %p788, %s37, 1
      %s790 = smul.addr %s789, 4
      %s791 = scalar_lea.vmem %s26, %s790
      %p792 = scmp.lt.s32.totalorder %s37, 1
      %s793 = scalar_select %p792, %s37, 1
      %s794 = smul.addr %s793, 4
      %s795 = scalar_lea.vmem %s0, %s794
      %p796 = scmp.lt.s32.totalorder %s37, 1
      %s797 = scalar_select %p796, %s37, 1
      %s798 = smul.addr %s797, 4
      %s799 = scalar_lea.vmem %s1, %s798
      %p800 = scmp.lt.s32.totalorder %s37, 1
      %s801 = scalar_select %p800, %s37, 1
      %s802 = smul.addr %s801, 4
      %s803 = scalar_lea.vmem %s26, %s802
      %v805 = vld [vmem:[%s795] sm:$0xf]
      %v806 = vld [vmem:[%s2] sm:$0xf]
      %v807 = vpack.c.bf16 %v805, %v805
      %v808 = vld [vmem:[%s3] sm:$0x1]
      %v810 = vlaneseq
      %v811 = vshrl.u32 %v810, 7
      %v812 = vsub.s32 0, %v811
      %v813 = vrot.slane %v808, %v812
      %vm815 = vcmask 64512
      %v817 = vsel %vm815, %v807, 0
      %vm819 = vcmask 1043456
      %v821 = vsel %vm819, %v806, 0
      %823 = vmatprep.subr.bf16.mxu0 0
      %824 = vmatpush1.bf16.msra.mxu0 %v821
      %825 = vmatprep.subr.bf16.mxu0 0
      %826 = vmatpush1.bf16.msra.mxu0 0
      %827 = vmatprep.subr.bf16.mxu0 0
      %828 = vmatpush1.bf16.msra.mxu0 0
      %829 = vmatprep.subr.bf16.mxu0 0
      %830 = vmatpush1.bf16.msra.mxu0 0
      %831 = vmatprep.subr.bf16.mxu0 0
      %832 = vmatpush1.bf16.msra.mxu0 0
      %833 = vmatprep.subr.bf16.mxu0 0
      %834 = vmatpush1.bf16.msra.mxu0 0
      %835 = vmatprep.subr.bf16.mxu0 0
      %836 = vmatpush1.bf16.msra.mxu0 0
      %837 = vmatprep.subr.bf16.mxu0 0
      %838 = vmatpush1.bf16.msra.mxu0 0
      %839 = vmatprep.subr.bf16.mxu0 0
      %840 = vmatpush1.bf16.msra.mxu0 0
      %841 = vmatprep.subr.bf16.mxu0 0
      %842 = vmatpush1.bf16.msra.mxu0 0
      %843 = vmatprep.subr.bf16.mxu0 0
      %844 = vmatpush1.bf16.msra.mxu0 0
      %845 = vmatprep.subr.bf16.mxu0 0
      %846 = vmatpush1.bf16.msra.mxu0 0
      %847 = vmatprep.subr.bf16.mxu0 0
      %848 = vmatpush1.bf16.msra.mxu0 0
      %849 = vmatprep.subr.bf16.mxu0 0
      %850 = vmatpush1.bf16.msra.mxu0 0
      %851 = vmatprep.subr.bf16.mxu0 0
      %852 = vmatpush1.bf16.msra.mxu0 0
      %853 = vmatprep.subr.bf16.mxu0 0
      %854 = vmatpush1.bf16.msra.mxu0 0
      %855 = vmatprep.mubr.bf16.mxu0 0
      %856 = vmatmul.mubr.bf16.gmra.mrb[0].mxu0 %v817
      %v857 = vpop.f32.mrb[0].mxu0
      %v858 = vadd.f32 %v813, %v857
      %v859 = vpop.f32.mrb[0].mxu0
      %v860 = vpop.f32.mrb[0].mxu0
      %v861 = vpop.f32.mrb[0].mxu0
      %862 = vdwg.mxu0
      %v863 = vld [vmem:[%s4] sm:$0x1]
      %v864 = vld [vmem:[%s5] sm:$0x1]
      %vm865 = vcmask 388096
      %v866 = vsel %vm865, %v858, 0.0
      %867 = vadd.xlane.f32.xlu0 %v866
      %v868 = vpop.xlane.xlu0 %867
      %v869 = vrcp.pop 48.0
      %v870 = vmul.f32 %v868, %v869
      %v871 = vsub.f32 %v858, %v870
      %v872 = vmul.f32 %v871, %v871
      %v873 = vsel %vm865, %v872, 0.0
      %874 = vadd.xlane.f32.xlu0 %v873
      %v875 = vpop.xlane.xlu0 %874
      %v876 = vmul.f32 %v875, %v869
      %v877 = vadd.f32 %v876, 1e-05
      %v878 = vrsqrt.pop %v877
      %v879 = vmul.f32 %v871, %v878
      %v881 = vlaneseq
      %v882 = vshrl.u32 %v881, 7
      %v883 = vsub.s32 0, %v882
      %v884 = vrot.slane %v863, %v883
      %v886 = vmul.f32 %v879, %v884
      %v888 = vlaneseq
      %v889 = vshrl.u32 %v888, 7
      %v890 = vsub.s32 0, %v889
      %v891 = vrot.slane %v864, %v890
      %v893 = vadd.f32 %v886, %v891
      %v894 = vld [vmem:[%s6] sm:$0xff]
      %v895 = vld [vmem:[%s6 + $0x8] sm:$0xff]
      %v896 = vld [vmem:[%s6 + $0x10] sm:$0xff]
      %v897 = vld [vmem:[%s6 + $0x18] sm:$0xff]
      %v898 = vld [vmem:[%s6 + $0x20] sm:$0xff]
      %v899 = vld [vmem:[%s6 + $0x28] sm:$0xff]
      %v900 = vpack.c.bf16 %v893, %v893
      %v901 = vld [vmem:[%s7] sm:$0x3]
      %v903 = vlaneseq
      %v904 = vshrl.u32 %v903, 7
      %v905 = vsub.s32 0, %v904
      %v906 = vrot.slane %v901, %v905
      %v907 = vlaneseq
      %v908 = vshrl.u32 %v907, 7
      %v909 = vsub.s32 1, %v908
      %v910 = vrot.slane %v901, %v909
      %v919 = vunpack.c.l.b16 %v894
      %v920 = vunpack.c.h.b16 %v894
      %v921 = vunpack.c.l.b16 %v895
      %v922 = vunpack.c.h.b16 %v895
      %v923 = vunpack.c.l.b16 %v896
      %v924 = vunpack.c.h.b16 %v896
      %v925 = vunpack.c.l.b16 %v897
      %v926 = vunpack.c.h.b16 %v897
      %v927 = vunpack.c.l.b16 %v898
      %v928 = vunpack.c.h.b16 %v898
      %v929 = vunpack.c.l.b16 %v899
      %v930 = vunpack.c.h.b16 %v899
      %v931 = vpack.c.b16 %v921, %v919
      %v932 = vpack.c.b16 %v922, %v920
      %v933 = vpack.c.b16 %v925, %v923
      %v934 = vpack.c.b16 %v926, %v924
      %v935 = vpack.c.b16 %v929, %v927
      %v936 = vpack.c.b16 %v930, %v928
      %vm943 = vcmask 392192
      %v945 = vsel %vm943, %v900, 0
      %947 = vmatprep.subr.bf16.mxu0 %v932
      %948 = vmatpush1.bf16.msra.mxu0 %v931
      %949 = vmatprep.subr.bf16.mxu0 %v934
      %950 = vmatpush1.bf16.msra.mxu0 %v933
      %951 = vmatprep.subr.bf16.mxu0 %v936
      %952 = vmatpush1.bf16.msra.mxu0 %v935
      %953 = vmatprep.subr.bf16.mxu0 0
      %954 = vmatpush1.bf16.msra.mxu0 0
      %955 = vmatprep.subr.bf16.mxu0 0
      %956 = vmatpush1.bf16.msra.mxu0 0
      %957 = vmatprep.subr.bf16.mxu0 0
      %958 = vmatpush1.bf16.msra.mxu0 0
      %959 = vmatprep.subr.bf16.mxu0 0
      %960 = vmatpush1.bf16.msra.mxu0 0
      %961 = vmatprep.subr.bf16.mxu0 0
      %962 = vmatpush1.bf16.msra.mxu0 0
      %963 = vmatprep.subr.bf16.mxu0 0
      %964 = vmatpush1.bf16.msra.mxu0 0
      %965 = vmatprep.subr.bf16.mxu0 0
      %966 = vmatpush1.bf16.msra.mxu0 0
      %967 = vmatprep.subr.bf16.mxu0 0
      %968 = vmatpush1.bf16.msra.mxu0 0
      %969 = vmatprep.subr.bf16.mxu0 0
      %970 = vmatpush1.bf16.msra.mxu0 0
      %971 = vmatprep.subr.bf16.mxu0 0
      %972 = vmatpush1.bf16.msra.mxu0 0
      %973 = vmatprep.subr.bf16.mxu0 0
      %974 = vmatpush1.bf16.msra.mxu0 0
      %975 = vmatprep.subr.bf16.mxu0 0
      %976 = vmatpush1.bf16.msra.mxu0 0
      %977 = vmatprep.subr.bf16.mxu0 0
      %978 = vmatpush1.bf16.msra.mxu0 0
      %979 = vmatprep.mubr.bf16.mxu0 0
      %980 = vmatmul.mubr.bf16.gmra.mrb[0].mxu0 %v945
      %v981 = vpop.f32.mrb[0].mxu0
      %v982 = vadd.f32 %v906, %v981
      %v983 = vpop.f32.mrb[0].mxu0
      %v984 = vadd.f32 %v910, %v983
      %v985 = vpop.f32.mrb[0].mxu0
      %v986 = vpop.f32.mrb[0].mxu0
      %987 = vdwg.mxu0
      %v988 = vmul.f32 %v982, 0.5
      %v989 = vmul.f32 %v984, 0.5
      %v990 = vmul.f32 %v982, %v982
      %v991 = vmul.f32 %v984, %v984
      %v992 = vmul.f32 %v990, %v982
      %v993 = vmul.f32 %v991, %v984
      %v994 = vmul.f32 %v992, 0.044715
      %v995 = vmul.f32 %v993, 0.044715
      %v996 = vadd.f32 %v982, %v994
      %v997 = vadd.f32 %v984, %v995
      %v998 = vmul.f32 %v996, 0.7978846
      %v999 = vmul.f32 %v997, 0.7978846
      %v1000 = vtanh.pop %v998
      %v1001 = vtanh.pop %v999
      %v1002 = vadd.f32 %v1000, 1.0
      %v1003 = vadd.f32 %v1001, 1.0
      %v1004 = vmul.f32 %v988, %v1002
      %v1005 = vmul.f32 %v989, %v1003
      %v1006 = vld [vmem:[%s8] sm:$0xf]
      %v1007 = vld [vmem:[%s8 + $0x4] sm:$0xf]
      %v1008 = vld [vmem:[%s8 + $0x8] sm:$0xf]
      %v1009 = vld [vmem:[%s8 + $0xc] sm:$0xf]
      %v1010 = vld [vmem:[%s8 + $0x10] sm:$0xf]
      %v1011 = vld [vmem:[%s8 + $0x14] sm:$0xf]
      %v1012 = vld [vmem:[%s8 + $0x18] sm:$0xf]
      %v1013 = vld [vmem:[%s8 + $0x1c] sm:$0xf]
      %v1014 = vld [vmem:[%s8 + $0x20] sm:$0xf]
      %v1015 = vld [vmem:[%s8 + $0x24] sm:$0xf]
      %v1016 = vld [vmem:[%s8 + $0x28] sm:$0xf]
      %v1017 = vld [vmem:[%s8 + $0x2c] sm:$0xf]
      %v1018 = vld [vmem:[%s8 + $0x30] sm:$0xf]
      %v1019 = vld [vmem:[%s8 + $0x34] sm:$0xf]
      %v1020 = vld [vmem:[%s8 + $0x38] sm:$0xf]
      %v1021 = vld [vmem:[%s8 + $0x3c] sm:$0xf]
      %v1022 = vld [vmem:[%s8 + $0x40] sm:$0xf]
      %v1023 = vld [vmem:[%s8 + $0x44] sm:$0xf]
      %v1024 = vld [vmem:[%s8 + $0x48] sm:$0xf]
      %v1025 = vld [vmem:[%s8 + $0x4c] sm:$0xf]
      %v1026 = vld [vmem:[%s8 + $0x50] sm:$0xf]
      %v1027 = vld [vmem:[%s8 + $0x54] sm:$0xf]
      %v1028 = vld [vmem:[%s8 + $0x58] sm:$0xf]
      %v1029 = vld [vmem:[%s8 + $0x5c] sm:$0xf]
      %v1030 = vpack.c.bf16 %v1004, %v1004
      %v1031 = vpack.c.bf16 %v1005, %v1005
      %v1032 = vld [vmem:[%s9] sm:$0x1]
      %v1034 = vlaneseq
      %v1035 = vshrl.u32 %v1034, 7
      %v1036 = vsub.s32 0, %v1035
      %v1037 = vrot.slane %v1032, %v1036
      %v1063 = vunpack.c.l.b16 %v1006
      %v1064 = vunpack.c.l.b16 %v1007
      %v1065 = vunpack.c.l.b16 %v1008
      %v1066 = vunpack.c.l.b16 %v1009
      %v1067 = vunpack.c.l.b16 %v1010
      %v1068 = vunpack.c.l.b16 %v1011
      %v1069 = vunpack.c.l.b16 %v1012
      %v1070 = vunpack.c.l.b16 %v1013
      %v1071 = vunpack.c.l.b16 %v1014
      %v1072 = vunpack.c.l.b16 %v1015
      %v1073 = vunpack.c.l.b16 %v1016
      %v1074 = vunpack.c.l.b16 %v1017
      %v1075 = vunpack.c.l.b16 %v1018
      %v1076 = vunpack.c.l.b16 %v1019
      %v1077 = vunpack.c.l.b16 %v1020
      %v1078 = vunpack.c.l.b16 %v1021
      %v1079 = vunpack.c.l.b16 %v1022
      %v1080 = vunpack.c.l.b16 %v1023
      %v1081 = vunpack.c.l.b16 %v1024
      %v1082 = vunpack.c.l.b16 %v1025
      %v1083 = vunpack.c.l.b16 %v1026
      %v1084 = vunpack.c.l.b16 %v1027
      %v1085 = vunpack.c.l.b16 %v1028
      %v1086 = vunpack.c.l.b16 %v1029
      %v1087 = vpack.c.b16 %v1064, %v1063
      %v1088 = vpack.c.b16 %v1066, %v1065
      %v1089 = vpack.c.b16 %v1068, %v1067
      %v1090 = vpack.c.b16 %v1070, %v1069
      %v1091 = vpack.c.b16 %v1072, %v1071
      %v1092 = vpack.c.b16 %v1074, %v1073
      %v1093 = vpack.c.b16 %v1076, %v1075
      %v1094 = vpack.c.b16 %v1078, %v1077
      %v1095 = vpack.c.b16 %v1080, %v1079
      %v1096 = vpack.c.b16 %v1082, %v1081
      %v1097 = vpack.c.b16 %v1084, %v1083
      %v1098 = vpack.c.b16 %v1086, %v1085
      %vm1111 = vcmask 523264
      %v1113 = vsel %vm1111, %v1031, 0
      %1115 = vmatprep.subr.bf16.mxu0 0
      %1116 = vmatpush1.bf16.msra.mxu0 %v1087
      %1117 = vmatprep.subr.bf16.mxu0 0
      %1118 = vmatpush1.bf16.msra.mxu0 %v1088
      %1119 = vmatprep.subr.bf16.mxu0 0
      %1120 = vmatpush1.bf16.msra.mxu0 %v1089
      %1121 = vmatprep.subr.bf16.mxu0 0
      %1122 = vmatpush1.bf16.msra.mxu0 %v1090
      %1123 = vmatprep.subr.bf16.mxu0 0
      %1124 = vmatpush1.bf16.msra.mxu0 %v1091
      %1125 = vmatprep.subr.bf16.mxu0 0
      %1126 = vmatpush1.bf16.msra.mxu0 %v1092
      %1127 = vmatprep.subr.bf16.mxu0 0
      %1128 = vmatpush1.bf16.msra.mxu0 %v1093
      %1129 = vmatprep.subr.bf16.mxu0 0
      %1130 = vmatpush1.bf16.msra.mxu0 %v1094
      %1131 = vmatprep.subr.bf16.mxu0 0
      %1132 = vmatpush1.bf16.msra.mxu0 %v1095
      %1133 = vmatprep.subr.bf16.mxu0 0
      %1134 = vmatpush1.bf16.msra.mxu0 %v1096
      %1135 = vmatprep.subr.bf16.mxu0 0
      %1136 = vmatpush1.bf16.msra.mxu0 %v1097
      %1137 = vmatprep.subr.bf16.mxu0 0
      %1138 = vmatpush1.bf16.msra.mxu0 %v1098
      %1139 = vmatprep.subr.bf16.mxu0 0
      %1140 = vmatpush1.bf16.msra.mxu0 0
      %1141 = vmatprep.subr.bf16.mxu0 0
      %1142 = vmatpush1.bf16.msra.mxu0 0
      %1143 = vmatprep.subr.bf16.mxu0 0
      %1144 = vmatpush1.bf16.msra.mxu0 0
      %1145 = vmatprep.subr.bf16.mxu0 0
      %1146 = vmatpush1.bf16.msra.mxu0 0
      %1147 = vmatprep.mubr.bf16.mxu0 %v1113
      %1148 = vmatmul.mubr.bf16.gmra.mrb[0].mxu0 %v1030
      %v1149 = vpop.f32.mrb[0].mxu0
      %v1150 = vadd.f32 %v1037, %v1149
      %v1151 = vpop.f32.mrb[0].mxu0
      %v1152 = vpop.f32.mrb[0].mxu0
      %v1153 = vpop.f32.mrb[0].mxu0
      %1154 = vdwg.mxu0
      %v1155 = vld [vmem:[%s799] sm:$0xf]
      %v1156 = vadd.f32 %v1150, %v1155
      %v1157 = vld [vmem:[%s10] sm:$0x1]
      %v1158 = vld [vmem:[%s11] sm:$0x1]
      %v1159 = vsel %vm865, %v1156, 0.0
      %1160 = vadd.xlane.f32.xlu0 %v1159
      %v1161 = vpop.xlane.xlu0 %1160
      %v1162 = vmul.f32 %v1161, %v869
      %v1163 = vsub.f32 %v1156, %v1162
      %v1164 = vmul.f32 %v1163, %v1163
      %v1165 = vsel %vm865, %v1164, 0.0
      %1166 = vadd.xlane.f32.xlu0 %v1165
      %v1167 = vpop.xlane.xlu0 %1166
      %v1168 = vmul.f32 %v1167, %v869
      %v1169 = vadd.f32 %v1168, 1e-05
      %v1170 = vrsqrt.pop %v1169
      %v1171 = vmul.f32 %v1163, %v1170
      %v1173 = vlaneseq
      %v1174 = vshrl.u32 %v1173, 7
      %v1175 = vsub.s32 0, %v1174
      %v1176 = vrot.slane %v1157, %v1175
      %v1178 = vmul.f32 %v1171, %v1176
      %v1180 = vlaneseq
      %v1181 = vshrl.u32 %v1180, 7
      %v1182 = vsub.s32 0, %v1181
      %v1183 = vrot.slane %v1158, %v1182
      %v1185 = vadd.f32 %v1178, %v1183
      %v1186 = vld [vmem:[%s12] sm:$0xf]
      %v1187 = vld [vmem:[%s12 + $0x4] sm:$0xf]
      %v1188 = vld [vmem:[%s12 + $0x8] sm:$0xf]
      %v1189 = vld [vmem:[%s12 + $0xc] sm:$0xf]
      %v1190 = vld [vmem:[%s12 + $0x10] sm:$0xf]
      %v1191 = vld [vmem:[%s12 + $0x14] sm:$0xf]
      %v1192 = vpack.c.bf16 %v1185, %v1185
      %v1193 = vld [vmem:[%s13] sm:$0x1]
      %v1195 = vlaneseq
      %v1196 = vshrl.u32 %v1195, 7
      %v1197 = vsub.s32 0, %v1196
      %v1198 = vrot.slane %v1193, %v1197
      %v1206 = vunpack.c.l.b16 %v1186
      %v1207 = vunpack.c.l.b16 %v1187
      %v1208 = vunpack.c.l.b16 %v1188
      %v1209 = vunpack.c.l.b16 %v1189
      %v1210 = vunpack.c.l.b16 %v1190
      %v1211 = vunpack.c.l.b16 %v1191
      %v1212 = vpack.c.b16 %v1207, %v1206
      %v1213 = vpack.c.b16 %v1209, %v1208
      %v1214 = vpack.c.b16 %v1211, %v1210
      %v1219 = vsel %vm943, %v1192, 0
      %1221 = vmatprep.subr.bf16.mxu0 0
      %1222 = vmatpush1.bf16.msra.mxu0 %v1212
      %1223 = vmatprep.subr.bf16.mxu0 0
      %1224 = vmatpush1.bf16.msra.mxu0 %v1213
      %1225 = vmatprep.subr.bf16.mxu0 0
      %1226 = vmatpush1.bf16.msra.mxu0 %v1214
      %1227 = vmatprep.subr.bf16.mxu0 0
      %1228 = vmatpush1.bf16.msra.mxu0 0
      %1229 = vmatprep.subr.bf16.mxu0 0
      %1230 = vmatpush1.bf16.msra.mxu0 0
      %1231 = vmatprep.subr.bf16.mxu0 0
      %1232 = vmatpush1.bf16.msra.mxu0 0
      %1233 = vmatprep.subr.bf16.mxu0 0
      %1234 = vmatpush1.bf16.msra.mxu0 0
      %1235 = vmatprep.subr.bf16.mxu0 0
      %1236 = vmatpush1.bf16.msra.mxu0 0
      %1237 = vmatprep.subr.bf16.mxu0 0
      %1238 = vmatpush1.bf16.msra.mxu0 0
      %1239 = vmatprep.subr.bf16.mxu0 0
      %1240 = vmatpush1.bf16.msra.mxu0 0
      %1241 = vmatprep.subr.bf16.mxu0 0
      %1242 = vmatpush1.bf16.msra.mxu0 0
      %1243 = vmatprep.subr.bf16.mxu0 0
      %1244 = vmatpush1.bf16.msra.mxu0 0
      %1245 = vmatprep.subr.bf16.mxu0 0
      %1246 = vmatpush1.bf16.msra.mxu0 0
      %1247 = vmatprep.subr.bf16.mxu0 0
      %1248 = vmatpush1.bf16.msra.mxu0 0
      %1249 = vmatprep.subr.bf16.mxu0 0
      %1250 = vmatpush1.bf16.msra.mxu0 0
      %1251 = vmatprep.subr.bf16.mxu0 0
      %1252 = vmatpush1.bf16.msra.mxu0 0
      %1253 = vmatprep.mubr.bf16.mxu0 0
      %1254 = vmatmul.mubr.bf16.gmra.mrb[0].mxu0 %v1219
      %v1255 = vpop.f32.mrb[0].mxu0
      %v1256 = vadd.f32 %v1198, %v1255
      %v1257 = vpop.f32.mrb[0].mxu0
      %v1258 = vpop.f32.mrb[0].mxu0
      %v1259 = vpop.f32.mrb[0].mxu0
      %1260 = vdwg.mxu0
      %s1261 = scalar_lea.vmem %s12, 48
      %v1262 = vld [vmem:[%s1261] sm:$0xf]
      %v1263 = vld [vmem:[%s1261 + $0x4] sm:$0xf]
      %v1264 = vld [vmem:[%s1261 + $0x8] sm:$0xf]
      %v1265 = vld [vmem:[%s1261 + $0xc] sm:$0xf]
      %v1266 = vld [vmem:[%s1261 + $0x10] sm:$0xf]
      %v1267 = vld [vmem:[%s1261 + $0x14] sm:$0xf]
      %s1268 = scalar_lea.vmem %s13, 2
      %v1269 = vld [vmem:[%s1268] sm:$0x1]
      %v1271 = vlaneseq
      %v1272 = vshrl.u32 %v1271, 7
      %v1273 = vsub.s32 0, %v1272
      %v1274 = vrot.slane %v1269, %v1273
      %v1282 = vunpack.c.l.b16 %v1262
      %v1283 = vunpack.c.l.b16 %v1263
      %v1284 = vunpack.c.l.b16 %v1264
      %v1285 = vunpack.c.l.b16 %v1265
      %v1286 = vunpack.c.l.b16 %v1266
      %v1287 = vunpack.c.l.b16 %v1267
      %v1288 = vpack.c.b16 %v1283, %v1282
      %v1289 = vpack.c.b16 %v1285, %v1284
      %v1290 = vpack.c.b16 %v1287, %v1286
      %1294 = vmatprep.subr.bf16.mxu0 0
      %1295 = vmatpush1.bf16.msra.mxu0 %v1288
      %1296 = vmatprep.subr.bf16.mxu0 0
      %1297 = vmatpush1.bf16.msra.mxu0 %v1289
      %1298 = vmatprep.subr.bf16.mxu0 0
      %1299 = vmatpush1.bf16.msra.mxu0 %v1290
      %1300 = vmatprep.subr.bf16.mxu0 0
      %1301 = vmatpush1.bf16.msra.mxu0 0
      %1302 = vmatprep.subr.bf16.mxu0 0
      %1303 = vmatpush1.bf16.msra.mxu0 0
      %1304 = vmatprep.subr.bf16.mxu0 0
      %1305 = vmatpush1.bf16.msra.mxu0 0
      %1306 = vmatprep.subr.bf16.mxu0 0
      %1307 = vmatpush1.bf16.msra.mxu0 0
      %1308 = vmatprep.subr.bf16.mxu0 0
      %1309 = vmatpush1.bf16.msra.mxu0 0
      %1310 = vmatprep.subr.bf16.mxu0 0
      %1311 = vmatpush1.bf16.msra.mxu0 0
      %1312 = vmatprep.subr.bf16.mxu0 0
      %1313 = vmatpush1.bf16.msra.mxu0 0
      %1314 = vmatprep.subr.bf16.mxu0 0
      %1315 = vmatpush1.bf16.msra.mxu0 0
      %1316 = vmatprep.subr.bf16.mxu0 0
      %1317 = vmatpush1.bf16.msra.mxu0 0
      %1318 = vmatprep.subr.bf16.mxu0 0
      %1319 = vmatpush1.bf16.msra.mxu0 0
      %1320 = vmatprep.subr.bf16.mxu0 0
      %1321 = vmatpush1.bf16.msra.mxu0 0
      %1322 = vmatprep.subr.bf16.mxu0 0
      %1323 = vmatpush1.bf16.msra.mxu0 0
      %1324 = vmatprep.subr.bf16.mxu0 0
      %1325 = vmatpush1.bf16.msra.mxu0 0
      %1326 = vmatprep.mubr.bf16.mxu0 0
      %1327 = vmatmul.mubr.bf16.gmra.mrb[0].mxu0 %v1219
      %v1328 = vpop.f32.mrb[0].mxu0
      %v1329 = vadd.f32 %v1274, %v1328
      %v1330 = vpop.f32.mrb[0].mxu0
      %v1331 = vpop.f32.mrb[0].mxu0
      %v1332 = vpop.f32.mrb[0].mxu0
      %1333 = vdwg.mxu0
      %s1334 = scalar_lea.vmem %s12, 96
      %v1335 = vld [vmem:[%s1334] sm:$0xf]
      %v1336 = vld [vmem:[%s1334 + $0x4] sm:$0xf]
      %v1337 = vld [vmem:[%s1334 + $0x8] sm:$0xf]
      %v1338 = vld [vmem:[%s1334 + $0xc] sm:$0xf]
      %v1339 = vld [vmem:[%s1334 + $0x10] sm:$0xf]
      %v1340 = vld [vmem:[%s1334 + $0x14] sm:$0xf]
      %s1341 = scalar_lea.vmem %s13, 4
      %v1342 = vld [vmem:[%s1341] sm:$0x1]
      %v1344 = vlaneseq
      %v1345 = vshrl.u32 %v1344, 7
      %v1346 = vsub.s32 0, %v1345
      %v1347 = vrot.slane %v1342, %v1346
      %v1355 = vunpack.c.l.b16 %v1335
      %v1356 = vunpack.c.l.b16 %v1336
      %v1357 = vunpack.c.l.b16 %v1337
      %v1358 = vunpack.c.l.b16 %v1338
      %v1359 = vunpack.c.l.b16 %v1339
      %v1360 = vunpack.c.l.b16 %v1340
      %v1361 = vpack.c.b16 %v1356, %v1355
      %v1362 = vpack.c.b16 %v1358, %v1357
      %v1363 = vpack.c.b16 %v1360, %v1359
      %1367 = vmatprep.subr.bf16.mxu0 0
      %1368 = vmatpush1.bf16.msra.mxu0 %v1361
      %1369 = vmatprep.subr.bf16.mxu0 0
      %1370 = vmatpush1.bf16.msra.mxu0 %v1362
      %1371 = vmatprep.subr.bf16.mxu0 0
      %1372 = vmatpush1.bf16.msra.mxu0 %v1363
      %1373 = vmatprep.subr.bf16.mxu0 0
      %1374 = vmatpush1.bf16.msra.mxu0 0
      %1375 = vmatprep.subr.bf16.mxu0 0
      %1376 = vmatpush1.bf16.msra.mxu0 0
      %1377 = vmatprep.subr.bf16.mxu0 0
      %1378 = vmatpush1.bf16.msra.mxu0 0
      %1379 = vmatprep.subr.bf16.mxu0 0
      %1380 = vmatpush1.bf16.msra.mxu0 0
      %1381 = vmatprep.subr.bf16.mxu0 0
      %1382 = vmatpush1.bf16.msra.mxu0 0
      %1383 = vmatprep.subr.bf16.mxu0 0
      %1384 = vmatpush1.bf16.msra.mxu0 0
      %1385 = vmatprep.subr.bf16.mxu0 0
      %1386 = vmatpush1.bf16.msra.mxu0 0
      %1387 = vmatprep.subr.bf16.mxu0 0
      %1388 = vmatpush1.bf16.msra.mxu0 0
      %1389 = vmatprep.subr.bf16.mxu0 0
      %1390 = vmatpush1.bf16.msra.mxu0 0
      %1391 = vmatprep.subr.bf16.mxu0 0
      %1392 = vmatpush1.bf16.msra.mxu0 0
      %1393 = vmatprep.subr.bf16.mxu0 0
      %1394 = vmatpush1.bf16.msra.mxu0 0
      %1395 = vmatprep.subr.bf16.mxu0 0
      %1396 = vmatpush1.bf16.msra.mxu0 0
      %1397 = vmatprep.subr.bf16.mxu0 0
      %1398 = vmatpush1.bf16.msra.mxu0 0
      %1399 = vmatprep.mubr.bf16.mxu0 0
      %1400 = vmatmul.mubr.bf16.gmra.mrb[0].mxu0 %v1219
      %v1401 = vpop.f32.mrb[0].mxu0
      %v1402 = vadd.f32 %v1347, %v1401
      %v1403 = vpop.f32.mrb[0].mxu0
      %v1404 = vpop.f32.mrb[0].mxu0
      %v1405 = vpop.f32.mrb[0].mxu0
      %1406 = vdwg.mxu0
      %v1407 = vpack.c.bf16 %v1256, %v1256
      %v1408 = vpack.c.bf16 %v1329, %v1329
      %vm1409 = vcmask 195584
      %v1411 = vsel %vm1409, %v1407, 0
      %v1414 = vsel %vm1409, %v1408, 0
      %1416 = vmatprep.subr.bf16.mxu0 0
      %1417 = vmatpush1.bf16.xpose.msra.mxu0 %v1414
      %1418 = vmatprep.subr.bf16.mxu0 0
      %1419 = vmatpush1.bf16.xpose.msra.mxu0 0
      %1420 = vmatprep.subr.bf16.mxu0 0
      %1421 = vmatpush1.bf16.xpose.msra.mxu0 0
      %1422 = vmatprep.subr.bf16.mxu0 0
      %1423 = vmatpush1.bf16.xpose.msra.mxu0 0
      %1424 = vmatprep.subr.bf16.mxu0 0
      %1425 = vmatpush1.bf16.xpose.msra.mxu0 0
      %1426 = vmatprep.subr.bf16.mxu0 0
      %1427 = vmatpush1.bf16.xpose.msra.mxu0 0
      %1428 = vmatprep.subr.bf16.mxu0 0
      %1429 = vmatpush1.bf16.xpose.msra.mxu0 0
      %1430 = vmatprep.subr.bf16.mxu0 0
      %1431 = vmatpush1.bf16.xpose.msra.mxu0 0
      %1432 = vmatprep.subr.bf16.mxu0 0
      %1433 = vmatpush1.bf16.xpose.msra.mxu0 0
      %1434 = vmatprep.subr.bf16.mxu0 0
      %1435 = vmatpush1.bf16.xpose.msra.mxu0 0
      %1436 = vmatprep.subr.bf16.mxu0 0
      %1437 = vmatpush1.bf16.xpose.msra.mxu0 0
      %1438 = vmatprep.subr.bf16.mxu0 0
      %1439 = vmatpush1.bf16.xpose.msra.mxu0 0
      %1440 = vmatprep.subr.bf16.mxu0 0
      %1441 = vmatpush1.bf16.xpose.msra.mxu0 0
      %1442 = vmatprep.subr.bf16.mxu0 0
      %1443 = vmatpush1.bf16.xpose.msra.mxu0 0
      %1444 = vmatprep.subr.bf16.mxu0 0
      %1445 = vmatpush1.bf16.xpose.msra.mxu0 0
      %1446 = vmatprep.subr.bf16.mxu0 0
      %1447 = vmatpush1.bf16.xpose.msra.mxu0 0
      %1448 = vmatprep.mubr.bf16.mxu0 0
      %1449 = vmatmul.mubr.bf16.gmra.mrb[0].mxu0 %v1411
      %v1450 = vpop.f32.mrb[0].mxu0
      %v1451 = vadd.f32 0.0, %v1450
      %v1452 = vpop.f32.mrb[0].mxu0
      %v1453 = vpop.f32.mrb[0].mxu0
      %v1454 = vpop.f32.mrb[0].mxu0
      %1455 = vdwg.mxu0
      %v1456 = vmul.f32 %v1451, 0.20412415
      %vm1457 = vcmask 27648
      %v1458 = vsel %vm1457, %v1456, -inf
      %1459 = vmax.xlane.f32.xlu0 %v1458
      %v1460 = vpop.xlane.xlu0 %1459
      %v1461 = vsub.f32 %v1456, %v1460
      %v1462 = vmul.f32 %v1461, 1.442695
      %v1463 = vpow.pop %v1462
      %v1464 = vsel %vm1457, %v1463, 0.0
      %1465 = vadd.xlane.f32.xlu0 %v1464
      %v1466 = vpop.xlane.xlu0 %1465
      %v1467 = vrcp.pop %v1466
      %v1468 = vmul.f32 %v1463, %v1467
      %v1469 = vpack.c.bf16 %v1468, %v1468
      %v1470 = vpack.c.bf16 %v1402, %v1402
      %vm1471 = vcmask 31744
      %v1473 = vsel %vm1471, %v1469, 0
      %vm1475 = vcmask 1041408
      %v1477 = vsel %vm1475, %v1470, 0
      %1479 = vmatprep.subr.bf16.mxu0 0
      %1480 = vmatpush1.bf16.msra.mxu0 %v1477
      %1481 = vmatprep.subr.bf16.mxu0 0
      %1482 = vmatpush1.bf16.msra.mxu0 0
      %1483 = vmatprep.subr.bf16.mxu0 0
      %1484 = vmatpush1.bf16.msra.mxu0 0
      %1485 = vmatprep.subr.bf16.mxu0 0
      %1486 = vmatpush1.bf16.msra.mxu0 0
      %1487 = vmatprep.subr.bf16.mxu0 0
      %1488 = vmatpush1.bf16.msra.mxu0 0
      %1489 = vmatprep.subr.bf16.mxu0 0
      %1490 = vmatpush1.bf16.msra.mxu0 0
      %1491 = vmatprep.subr.bf16.mxu0 0
      %1492 = vmatpush1.bf16.msra.mxu0 0
      %1493 = vmatprep.subr.bf16.mxu0 0
      %1494 = vmatpush1.bf16.msra.mxu0 0
      %1495 = vmatprep.subr.bf16.mxu0 0
      %1496 = vmatpush1.bf16.msra.mxu0 0
      %1497 = vmatprep.subr.bf16.mxu0 0
      %1498 = vmatpush1.bf16.msra.mxu0 0
      %1499 = vmatprep.subr.bf16.mxu0 0
      %1500 = vmatpush1.bf16.msra.mxu0 0
      %1501 = vmatprep.subr.bf16.mxu0 0
      %1502 = vmatpush1.bf16.msra.mxu0 0
      %1503 = vmatprep.subr.bf16.mxu0 0
      %1504 = vmatpush1.bf16.msra.mxu0 0
      %1505 = vmatprep.subr.bf16.mxu0 0
      %1506 = vmatpush1.bf16.msra.mxu0 0
      %1507 = vmatprep.subr.bf16.mxu0 0
      %1508 = vmatpush1.bf16.msra.mxu0 0
      %1509 = vmatprep.subr.bf16.mxu0 0
      %1510 = vmatpush1.bf16.msra.mxu0 0
      %1511 = vmatprep.mubr.bf16.mxu0 0
      %1512 = vmatmul.mubr.bf16.gmra.mrb[0].mxu0 %v1473
      %v1513 = vpop.f32.mrb[0].mxu0
      %v1514 = vadd.f32 0.0, %v1513
      %v1515 = vpop.f32.mrb[0].mxu0
      %v1516 = vpop.f32.mrb[0].mxu0
      %v1517 = vpop.f32.mrb[0].mxu0
      %1518 = vdwg.mxu0
      %v1519 = vld [vmem:[%s14] sm:$0xf]
      %v1520 = vld [vmem:[%s14 + $0x4] sm:$0xf]
      %v1521 = vld [vmem:[%s14 + $0x8] sm:$0xf]
      %v1522 = vpack.c.bf16 %v1514, %v1514
      %s1523 = scalar_lea.vmem %s12, 24
      %v1524 = vld [vmem:[%s1523] sm:$0xf]
      %v1525 = vld [vmem:[%s1523 + $0x4] sm:$0xf]
      %v1526 = vld [vmem:[%s1523 + $0x8] sm:$0xf]
      %v1527 = vld [vmem:[%s1523 + $0xc] sm:$0xf]
      %v1528 = vld [vmem:[%s1523 + $0x10] sm:$0xf]
      %v1529 = vld [vmem:[%s1523 + $0x14] sm:$0xf]
      %s1530 = scalar_lea.vmem %s13, 1
      %v1531 = vld [vmem:[%s1530] sm:$0x1]
      %v1533 = vlaneseq
      %v1534 = vshrl.u32 %v1533, 7
      %v1535 = vsub.s32 0, %v1534
      %v1536 = vrot.slane %v1531, %v1535
      %v1544 = vunpack.c.l.b16 %v1524
      %v1545 = vunpack.c.l.b16 %v1525
      %v1546 = vunpack.c.l.b16 %v1526
      %v1547 = vunpack.c.l.b16 %v1527
      %v1548 = vunpack.c.l.b16 %v1528
      %v1549 = vunpack.c.l.b16 %v1529
      %v1550 = vpack.c.b16 %v1545, %v1544
      %v1551 = vpack.c.b16 %v1547, %v1546
      %v1552 = vpack.c.b16 %v1549, %v1548
      %1556 = vmatprep.subr.bf16.mxu0 0
      %1557 = vmatpush1.bf16.msra.mxu0 %v1550
      %1558 = vmatprep.subr.bf16.mxu0 0
      %1559 = vmatpush1.bf16.msra.mxu0 %v1551
      %1560 = vmatprep.subr.bf16.mxu0 0
      %1561 = vmatpush1.bf16.msra.mxu0 %v1552
      %1562 = vmatprep.subr.bf16.mxu0 0
      %1563 = vmatpush1.bf16.msra.mxu0 0
      %1564 = vmatprep.subr.bf16.mxu0 0
      %1565 = vmatpush1.bf16.msra.mxu0 0
      %1566 = vmatprep.subr.bf16.mxu0 0
      %1567 = vmatpush1.bf16.msra.mxu0 0
      %1568 = vmatprep.subr.bf16.mxu0 0
      %1569 = vmatpush1.bf16.msra.mxu0 0
      %1570 = vmatprep.subr.bf16.mxu0 0
      %1571 = vmatpush1.bf16.msra.mxu0 0
      %1572 = vmatprep.subr.bf16.mxu0 0
      %1573 = vmatpush1.bf16.msra.mxu0 0
      %1574 = vmatprep.subr.bf16.mxu0 0
      %1575 = vmatpush1.bf16.msra.mxu0 0
      %1576 = vmatprep.subr.bf16.mxu0 0
      %1577 = vmatpush1.bf16.msra.mxu0 0
      %1578 = vmatprep.subr.bf16.mxu0 0
      %1579 = vmatpush1.bf16.msra.mxu0 0
      %1580 = vmatprep.subr.bf16.mxu0 0
      %1581 = vmatpush1.bf16.msra.mxu0 0
      %1582 = vmatprep.subr.bf16.mxu0 0
      %1583 = vmatpush1.bf16.msra.mxu0 0
      %1584 = vmatprep.subr.bf16.mxu0 0
      %1585 = vmatpush1.bf16.msra.mxu0 0
      %1586 = vmatprep.subr.bf16.mxu0 0
      %1587 = vmatpush1.bf16.msra.mxu0 0
      %1588 = vmatprep.mubr.bf16.mxu0 0
      %1589 = vmatmul.mubr.bf16.gmra.mrb[0].mxu0 %v1219
      %v1590 = vpop.f32.mrb[0].mxu0
      %v1591 = vadd.f32 %v1536, %v1590
      %v1592 = vpop.f32.mrb[0].mxu0
      %v1593 = vpop.f32.mrb[0].mxu0
      %v1594 = vpop.f32.mrb[0].mxu0
      %1595 = vdwg.mxu0
      %s1596 = scalar_lea.vmem %s12, 72
      %v1597 = vld [vmem:[%s1596] sm:$0xf]
      %v1598 = vld [vmem:[%s1596 + $0x4] sm:$0xf]
      %v1599 = vld [vmem:[%s1596 + $0x8] sm:$0xf]
      %v1600 = vld [vmem:[%s1596 + $0xc] sm:$0xf]
      %v1601 = vld [vmem:[%s1596 + $0x10] sm:$0xf]
      %v1602 = vld [vmem:[%s1596 + $0x14] sm:$0xf]
      %s1603 = scalar_lea.vmem %s13, 3
      %v1604 = vld [vmem:[%s1603] sm:$0x1]
      %v1606 = vlaneseq
      %v1607 = vshrl.u32 %v1606, 7
      %v1608 = vsub.s32 0, %v1607
      %v1609 = vrot.slane %v1604, %v1608
      %v1617 = vunpack.c.l.b16 %v1597
      %v1618 = vunpack.c.l.b16 %v1598
      %v1619 = vunpack.c.l.b16 %v1599
      %v1620 = vunpack.c.l.b16 %v1600
      %v1621 = vunpack.c.l.b16 %v1601
      %v1622 = vunpack.c.l.b16 %v1602
      %v1623 = vpack.c.b16 %v1618, %v1617
      %v1624 = vpack.c.b16 %v1620, %v1619
      %v1625 = vpack.c.b16 %v1622, %v1621
      %1629 = vmatprep.subr.bf16.mxu0 0
      %1630 = vmatpush1.bf16.msra.mxu0 %v1623
      %1631 = vmatprep.subr.bf16.mxu0 0
      %1632 = vmatpush1.bf16.msra.mxu0 %v1624
      %1633 = vmatprep.subr.bf16.mxu0 0
      %1634 = vmatpush1.bf16.msra.mxu0 %v1625
      %1635 = vmatprep.subr.bf16.mxu0 0
      %1636 = vmatpush1.bf16.msra.mxu0 0
      %1637 = vmatprep.subr.bf16.mxu0 0
      %1638 = vmatpush1.bf16.msra.mxu0 0
      %1639 = vmatprep.subr.bf16.mxu0 0
      %1640 = vmatpush1.bf16.msra.mxu0 0
      %1641 = vmatprep.subr.bf16.mxu0 0
      %1642 = vmatpush1.bf16.msra.mxu0 0
      %1643 = vmatprep.subr.bf16.mxu0 0
      %1644 = vmatpush1.bf16.msra.mxu0 0
      %1645 = vmatprep.subr.bf16.mxu0 0
      %1646 = vmatpush1.bf16.msra.mxu0 0
      %1647 = vmatprep.subr.bf16.mxu0 0
      %1648 = vmatpush1.bf16.msra.mxu0 0
      %1649 = vmatprep.subr.bf16.mxu0 0
      %1650 = vmatpush1.bf16.msra.mxu0 0
      %1651 = vmatprep.subr.bf16.mxu0 0
      %1652 = vmatpush1.bf16.msra.mxu0 0
      %1653 = vmatprep.subr.bf16.mxu0 0
      %1654 = vmatpush1.bf16.msra.mxu0 0
      %1655 = vmatprep.subr.bf16.mxu0 0
      %1656 = vmatpush1.bf16.msra.mxu0 0
      %1657 = vmatprep.subr.bf16.mxu0 0
      %1658 = vmatpush1.bf16.msra.mxu0 0
      %1659 = vmatprep.subr.bf16.mxu0 0
      %1660 = vmatpush1.bf16.msra.mxu0 0
      %1661 = vmatprep.mubr.bf16.mxu0 0
      %1662 = vmatmul.mubr.bf16.gmra.mrb[0].mxu0 %v1219
      %v1663 = vpop.f32.mrb[0].mxu0
      %v1664 = vadd.f32 %v1609, %v1663
      %v1665 = vpop.f32.mrb[0].mxu0
      %v1666 = vpop.f32.mrb[0].mxu0
      %v1667 = vpop.f32.mrb[0].mxu0
      %1668 = vdwg.mxu0
      %s1669 = scalar_lea.vmem %s12, 120
      %v1670 = vld [vmem:[%s1669] sm:$0xf]
      %v1671 = vld [vmem:[%s1669 + $0x4] sm:$0xf]
      %v1672 = vld [vmem:[%s1669 + $0x8] sm:$0xf]
      %v1673 = vld [vmem:[%s1669 + $0xc] sm:$0xf]
      %v1674 = vld [vmem:[%s1669 + $0x10] sm:$0xf]
      %v1675 = vld [vmem:[%s1669 + $0x14] sm:$0xf]
      %s1676 = scalar_lea.vmem %s13, 5
      %v1677 = vld [vmem:[%s1676] sm:$0x1]
      %v1679 = vlaneseq
      %v1680 = vshrl.u32 %v1679, 7
      %v1681 = vsub.s32 0, %v1680
      %v1682 = vrot.slane %v1677, %v1681
      %v1690 = vunpack.c.l.b16 %v1670
      %v1691 = vunpack.c.l.b16 %v1671
      %v1692 = vunpack.c.l.b16 %v1672
      %v1693 = vunpack.c.l.b16 %v1673
      %v1694 = vunpack.c.l.b16 %v1674
      %v1695 = vunpack.c.l.b16 %v1675
      %v1696 = vpack.c.b16 %v1691, %v1690
      %v1697 = vpack.c.b16 %v1693, %v1692
      %v1698 = vpack.c.b16 %v1695, %v1694
      %1702 = vmatprep.subr.bf16.mxu0 0
      %1703 = vmatpush1.bf16.msra.mxu0 %v1696
      %1704 = vmatprep.subr.bf16.mxu0 0
      %1705 = vmatpush1.bf16.msra.mxu0 %v1697
      %1706 = vmatprep.subr.bf16.mxu0 0
      %1707 = vmatpush1.bf16.msra.mxu0 %v1698
      %1708 = vmatprep.subr.bf16.mxu0 0
      %1709 = vmatpush1.bf16.msra.mxu0 0
      %1710 = vmatprep.subr.bf16.mxu0 0
      %1711 = vmatpush1.bf16.msra.mxu0 0
      %1712 = vmatprep.subr.bf16.mxu0 0
      %1713 = vmatpush1.bf16.msra.mxu0 0
      %1714 = vmatprep.subr.bf16.mxu0 0
      %1715 = vmatpush1.bf16.msra.mxu0 0
      %1716 = vmatprep.subr.bf16.mxu0 0
      %1717 = vmatpush1.bf16.msra.mxu0 0
      %1718 = vmatprep.subr.bf16.mxu0 0
      %1719 = vmatpush1.bf16.msra.mxu0 0
      %1720 = vmatprep.subr.bf16.mxu0 0
      %1721 = vmatpush1.bf16.msra.mxu0 0
      %1722 = vmatprep.subr.bf16.mxu0 0
      %1723 = vmatpush1.bf16.msra.mxu0 0
      %1724 = vmatprep.subr.bf16.mxu0 0
      %1725 = vmatpush1.bf16.msra.mxu0 0
      %1726 = vmatprep.subr.bf16.mxu0 0
      %1727 = vmatpush1.bf16.msra.mxu0 0
      %1728 = vmatprep.subr.bf16.mxu0 0
      %1729 = vmatpush1.bf16.msra.mxu0 0
      %1730 = vmatprep.subr.bf16.mxu0 0
      %1731 = vmatpush1.bf16.msra.mxu0 0
      %1732 = vmatprep.subr.bf16.mxu0 0
      %1733 = vmatpush1.bf16.msra.mxu0 0
      %1734 = vmatprep.mubr.bf16.mxu0 0
      %1735 = vmatmul.mubr.bf16.gmra.mrb[0].mxu0 %v1219
      %v1736 = vpop.f32.mrb[0].mxu0
      %v1737 = vadd.f32 %v1682, %v1736
      %v1738 = vpop.f32.mrb[0].mxu0
      %v1739 = vpop.f32.mrb[0].mxu0
      %v1740 = vpop.f32.mrb[0].mxu0
      %1741 = vdwg.mxu0
      %v1742 = vpack.c.bf16 %v1591, %v1591
      %v1743 = vpack.c.bf16 %v1664, %v1664
      %v1745 = vsel %vm1409, %v1742, 0
      %v1748 = vsel %vm1409, %v1743, 0
      %1750 = vmatprep.subr.bf16.mxu0 0
      %1751 = vmatpush1.bf16.xpose.msra.mxu0 %v1748
      %1752 = vmatprep.subr.bf16.mxu0 0
      %1753 = vmatpush1.bf16.xpose.msra.mxu0 0
      %1754 = vmatprep.subr.bf16.mxu0 0
      %1755 = vmatpush1.bf16.xpose.msra.mxu0 0
      %1756 = vmatprep.subr.bf16.mxu0 0
      %1757 = vmatpush1.bf16.xpose.msra.mxu0 0
      %1758 = vmatprep.subr.bf16.mxu0 0
      %1759 = vmatpush1.bf16.xpose.msra.mxu0 0
      %1760 = vmatprep.subr.bf16.mxu0 0
      %1761 = vmatpush1.bf16.xpose.msra.mxu0 0
      %1762 = vmatprep.subr.bf16.mxu0 0
      %1763 = vmatpush1.bf16.xpose.msra.mxu0 0
      %1764 = vmatprep.subr.bf16.mxu0 0
      %1765 = vmatpush1.bf16.xpose.msra.mxu0 0
      %1766 = vmatprep.subr.bf16.mxu0 0
      %1767 = vmatpush1.bf16.xpose.msra.mxu0 0
      %1768 = vmatprep.subr.bf16.mxu0 0
      %1769 = vmatpush1.bf16.xpose.msra.mxu0 0
      %1770 = vmatprep.subr.bf16.mxu0 0
      %1771 = vmatpush1.bf16.xpose.msra.mxu0 0
      %1772 = vmatprep.subr.bf16.mxu0 0
      %1773 = vmatpush1.bf16.xpose.msra.mxu0 0
      %1774 = vmatprep.subr.bf16.mxu0 0
      %1775 = vmatpush1.bf16.xpose.msra.mxu0 0
      %1776 = vmatprep.subr.bf16.mxu0 0
      %1777 = vmatpush1.bf16.xpose.msra.mxu0 0
      %1778 = vmatprep.subr.bf16.mxu0 0
      %1779 = vmatpush1.bf16.xpose.msra.mxu0 0
      %1780 = vmatprep.subr.bf16.mxu0 0
      %1781 = vmatpush1.bf16.xpose.msra.mxu0 0
      %1782 = vmatprep.mubr.bf16.mxu0 0
      %1783 = vmatmul.mubr.bf16.gmra.mrb[0].mxu0 %v1745
      %v1784 = vpop.f32.mrb[0].mxu0
      %v1785 = vadd.f32 0.0, %v1784
      %v1786 = vpop.f32.mrb[0].mxu0
      %v1787 = vpop.f32.mrb[0].mxu0
      %v1788 = vpop.f32.mrb[0].mxu0
      %1789 = vdwg.mxu0
      %v1790 = vmul.f32 %v1785, 0.20412415
      %v1791 = vsel %vm1457, %v1790, -inf
      %1792 = vmax.xlane.f32.xlu0 %v1791
      %v1793 = vpop.xlane.xlu0 %1792
      %v1794 = vsub.f32 %v1790, %v1793
      %v1795 = vmul.f32 %v1794, 1.442695
      %v1796 = vpow.pop %v1795
      %v1797 = vsel %vm1457, %v1796, 0.0
      %1798 = vadd.xlane.f32.xlu0 %v1797
      %v1799 = vpop.xlane.xlu0 %1798
      %v1800 = vrcp.pop %v1799
      %v1801 = vmul.f32 %v1796, %v1800
      %v1802 = vpack.c.bf16 %v1801, %v1801
      %v1803 = vpack.c.bf16 %v1737, %v1737
      %v1805 = vsel %vm1471, %v1802, 0
      %v1808 = vsel %vm1475, %v1803, 0
      %1810 = vmatprep.subr.bf16.mxu0 0
      %1811 = vmatpush1.bf16.msra.mxu0 %v1808
      %1812 = vmatprep.subr.bf16.mxu0 0
      %1813 = vmatpush1.bf16.msra.mxu0 0
      %1814 = vmatprep.subr.bf16.mxu0 0
      %1815 = vmatpush1.bf16.msra.mxu0 0
      %1816 = vmatprep.subr.bf16.mxu0 0
      %1817 = vmatpush1.bf16.msra.mxu0 0
      %1818 = vmatprep.subr.bf16.mxu0 0
      %1819 = vmatpush1.bf16.msra.mxu0 0
      %1820 = vmatprep.subr.bf16.mxu0 0
      %1821 = vmatpush1.bf16.msra.mxu0 0
      %1822 = vmatprep.subr.bf16.mxu0 0
      %1823 = vmatpush1.bf16.msra.mxu0 0
      %1824 = vmatprep.subr.bf16.mxu0 0
      %1825 = vmatpush1.bf16.msra.mxu0 0
      %1826 = vmatprep.subr.bf16.mxu0 0
      %1827 = vmatpush1.bf16.msra.mxu0 0
      %1828 = vmatprep.subr.bf16.mxu0 0
      %1829 = vmatpush1.bf16.msra.mxu0 0
      %1830 = vmatprep.subr.bf16.mxu0 0
      %1831 = vmatpush1.bf16.msra.mxu0 0
      %1832 = vmatprep.subr.bf16.mxu0 0
      %1833 = vmatpush1.bf16.msra.mxu0 0
      %1834 = vmatprep.subr.bf16.mxu0 0
      %1835 = vmatpush1.bf16.msra.mxu0 0
      %1836 = vmatprep.subr.bf16.mxu0 0
      %1837 = vmatpush1.bf16.msra.mxu0 0
      %1838 = vmatprep.subr.bf16.mxu0 0
      %1839 = vmatpush1.bf16.msra.mxu0 0
      %1840 = vmatprep.subr.bf16.mxu0 0
      %1841 = vmatpush1.bf16.msra.mxu0 0
      %1842 = vmatprep.mubr.bf16.mxu0 0
      %1843 = vmatmul.mubr.bf16.gmra.mrb[0].mxu0 %v1805
      %v1844 = vpop.f32.mrb[0].mxu0
      %v1845 = vadd.f32 0.0, %v1844
      %v1846 = vpop.f32.mrb[0].mxu0
      %v1847 = vpop.f32.mrb[0].mxu0
      %v1848 = vpop.f32.mrb[0].mxu0
      %1849 = vdwg.mxu0
      %s1850 = scalar_lea.vmem %s14, 12
      %v1851 = vld [vmem:[%s1850] sm:$0xf]
      %v1852 = vld [vmem:[%s1850 + $0x4] sm:$0xf]
      %v1853 = vld [vmem:[%s1850 + $0x8] sm:$0xf]
      %v1854 = vpack.c.bf16 %v1845, %v1845
      %v1858 = vunpack.c.l.b16 %v1851
      %v1859 = vunpack.c.l.b16 %v1852
      %v1860 = vunpack.c.l.b16 %v1853
      %v1861 = vpack.c.b16 %v1859, %v1858
      %v1862 = vpack.c.b16 %v1860, %v1860
      %v1865 = vsel %vm1409, %v1854, 0
      %v1868 = vsel %vm819, %v1862, 0
      %1870 = vmatprep.subr.bf16.mxu0 0
      %1871 = vmatpush1.bf16.msra.mxu0 %v1861
      %1872 = vmatprep.subr.bf16.mxu0 0
      %1873 = vmatpush1.bf16.msra.mxu0 %v1868
      %1874 = vmatprep.subr.bf16.mxu0 0
      %1875 = vmatpush1.bf16.msra.mxu0 0
      %1876 = vmatprep.subr.bf16.mxu0 0
      %1877 = vmatpush1.bf16.msra.mxu0 0
      %1878 = vmatprep.subr.bf16.mxu0 0
      %1879 = vmatpush1.bf16.msra.mxu0 0
      %1880 = vmatprep.subr.bf16.mxu0 0
      %1881 = vmatpush1.bf16.msra.mxu0 0
      %1882 = vmatprep.subr.bf16.mxu0 0
      %1883 = vmatpush1.bf16.msra.mxu0 0
      %1884 = vmatprep.subr.bf16.mxu0 0
      %1885 = vmatpush1.bf16.msra.mxu0 0
      %1886 = vmatprep.subr.bf16.mxu0 0
      %1887 = vmatpush1.bf16.msra.mxu0 0
      %1888 = vmatprep.subr.bf16.mxu0 0
      %1889 = vmatpush1.bf16.msra.mxu0 0
      %1890 = vmatprep.subr.bf16.mxu0 0
      %1891 = vmatpush1.bf16.msra.mxu0 0
      %1892 = vmatprep.subr.bf16.mxu0 0
      %1893 = vmatpush1.bf16.msra.mxu0 0
      %1894 = vmatprep.subr.bf16.mxu0 0
      %1895 = vmatpush1.bf16.msra.mxu0 0
      %1896 = vmatprep.subr.bf16.mxu0 0
      %1897 = vmatpush1.bf16.msra.mxu0 0
      %1898 = vmatprep.subr.bf16.mxu0 0
      %1899 = vmatpush1.bf16.msra.mxu0 0
      %1900 = vmatprep.subr.bf16.mxu0 0
      %1901 = vmatpush1.bf16.msra.mxu0 0
      %1902 = vmatprep.mubr.bf16.mxu0 0
      %1903 = vmatmul.mubr.bf16.gmra.mrb[0].mxu0 %v1865
      %v1904 = vpop.f32.mrb[0].mxu0
      %v1905 = vadd.f32 0.0, %v1904
      %v1906 = vpop.f32.mrb[0].mxu0
      %v1907 = vpop.f32.mrb[0].mxu0
      %v1908 = vpop.f32.mrb[0].mxu0
      %1909 = vdwg.mxu0
      %v1913 = vunpack.c.l.b16 %v1519
      %v1914 = vunpack.c.l.b16 %v1520
      %v1915 = vunpack.c.l.b16 %v1521
      %v1916 = vpack.c.b16 %v1914, %v1913
      %v1917 = vpack.c.b16 %v1915, %v1915
      %v1920 = vsel %vm1409, %v1522, 0
      %v1923 = vsel %vm819, %v1917, 0
      %1925 = vmatprep.subr.bf16.mxu0 0
      %1926 = vmatpush1.bf16.msra.mxu0 %v1916
      %1927 = vmatprep.subr.bf16.mxu0 0
      %1928 = vmatpush1.bf16.msra.mxu0 %v1923
      %1929 = vmatprep.subr.bf16.mxu0 0
      %1930 = vmatpush1.bf16.msra.mxu0 0
      %1931 = vmatprep.subr.bf16.mxu0 0
      %1932 = vmatpush1.bf16.msra.mxu0 0
      %1933 = vmatprep.subr.bf16.mxu0 0
      %1934 = vmatpush1.bf16.msra.mxu0 0
      %1935 = vmatprep.subr.bf16.mxu0 0
      %1936 = vmatpush1.bf16.msra.mxu0 0
      %1937 = vmatprep.subr.bf16.mxu0 0
      %1938 = vmatpush1.bf16.msra.mxu0 0
      %1939 = vmatprep.subr.bf16.mxu0 0
      %1940 = vmatpush1.bf16.msra.mxu0 0
      %1941 = vmatprep.subr.bf16.mxu0 0
      %1942 = vmatpush1.bf16.msra.mxu0 0
      %1943 = vmatprep.subr.bf16.mxu0 0
      %1944 = vmatpush1.bf16.msra.mxu0 0
      %1945 = vmatprep.subr.bf16.mxu0 0
      %1946 = vmatpush1.bf16.msra.mxu0 0
      %1947 = vmatprep.subr.bf16.mxu0 0
      %1948 = vmatpush1.bf16.msra.mxu0 0
      %1949 = vmatprep.subr.bf16.mxu0 0
      %1950 = vmatpush1.bf16.msra.mxu0 0
      %1951 = vmatprep.subr.bf16.mxu0 0
      %1952 = vmatpush1.bf16.msra.mxu0 0
      %1953 = vmatprep.subr.bf16.mxu0 0
      %1954 = vmatpush1.bf16.msra.mxu0 0
      %1955 = vmatprep.subr.bf16.mxu0 0
      %1956 = vmatpush1.bf16.msra.mxu0 0
      %1957 = vmatprep.mubr.bf16.mxu0 0
      %1958 = vmatmul.mubr.bf16.gmra.mrb[0].mxu0 %v1920
      %v1959 = vpop.f32.mrb[0].mxu0
      %v1960 = vadd.f32 %v1905, %v1959
      %v1961 = vpop.f32.mrb[0].mxu0
      %v1962 = vpop.f32.mrb[0].mxu0
      %v1963 = vpop.f32.mrb[0].mxu0
      %1964 = vdwg.mxu0
      %v1965 = vld [vmem:[%s15] sm:$0x1]
      %v1967 = vlaneseq
      %v1968 = vshrl.u32 %v1967, 7
      %v1969 = vsub.s32 0, %v1968
      %v1970 = vrot.slane %v1965, %v1969
      %v1972 = vadd.f32 %v1960, %v1970
      %v1973 = vadd.f32 %v1156, %v1972
      %v1974 = vld [vmem:[%s16] sm:$0x1]
      %v1975 = vld [vmem:[%s17] sm:$0x1]
      %v1976 = vsel %vm865, %v1973, 0.0
      %1977 = vadd.xlane.f32.xlu0 %v1976
      %v1978 = vpop.xlane.xlu0 %1977
      %v1979 = vmul.f32 %v1978, %v869
      %v1980 = vsub.f32 %v1973, %v1979
      %v1981 = vmul.f32 %v1980, %v1980
      %v1982 = vsel %vm865, %v1981, 0.0
      %1983 = vadd.xlane.f32.xlu0 %v1982
      %v1984 = vpop.xlane.xlu0 %1983
      %v1985 = vmul.f32 %v1984, %v869
      %v1986 = vadd.f32 %v1985, 1e-05
      %v1987 = vrsqrt.pop %v1986
      %v1988 = vmul.f32 %v1980, %v1987
      %v1990 = vlaneseq
      %v1991 = vshrl.u32 %v1990, 7
      %v1992 = vsub.s32 0, %v1991
      %v1993 = vrot.slane %v1974, %v1992
      %v1995 = vmul.f32 %v1988, %v1993
      %v1997 = vlaneseq
      %v1998 = vshrl.u32 %v1997, 7
      %v1999 = vsub.s32 0, %v1998
      %v2000 = vrot.slane %v1975, %v1999
      %v2002 = vadd.f32 %v1995, %v2000
      %v2003 = vld [vmem:[%s18] sm:$0xff]
      %v2004 = vld [vmem:[%s18 + $0x8] sm:$0xff]
      %v2005 = vld [vmem:[%s18 + $0x10] sm:$0xff]
      %v2006 = vld [vmem:[%s18 + $0x18] sm:$0xff]
      %v2007 = vld [vmem:[%s18 + $0x20] sm:$0xff]
      %v2008 = vld [vmem:[%s18 + $0x28] sm:$0xff]
      %v2009 = vpack.c.bf16 %v2002, %v2002
      %v2010 = vld [vmem:[%s19] sm:$0x3]
      %v2012 = vlaneseq
      %v2013 = vshrl.u32 %v2012, 7
      %v2014 = vsub.s32 0, %v2013
      %v2015 = vrot.slane %v2010, %v2014
      %v2016 = vlaneseq
      %v2017 = vshrl.u32 %v2016, 7
      %v2018 = vsub.s32 1, %v2017
      %v2019 = vrot.slane %v2010, %v2018
      %v2028 = vunpack.c.l.b16 %v2003
      %v2029 = vunpack.c.h.b16 %v2003
      %v2030 = vunpack.c.l.b16 %v2004
      %v2031 = vunpack.c.h.b16 %v2004
      %v2032 = vunpack.c.l.b16 %v2005
      %v2033 = vunpack.c.h.b16 %v2005
      %v2034 = vunpack.c.l.b16 %v2006
      %v2035 = vunpack.c.h.b16 %v2006
      %v2036 = vunpack.c.l.b16 %v2007
      %v2037 = vunpack.c.h.b16 %v2007
      %v2038 = vunpack.c.l.b16 %v2008
      %v2039 = vunpack.c.h.b16 %v2008
      %v2040 = vpack.c.b16 %v2030, %v2028
      %v2041 = vpack.c.b16 %v2031, %v2029
      %v2042 = vpack.c.b16 %v2034, %v2032
      %v2043 = vpack.c.b16 %v2035, %v2033
      %v2044 = vpack.c.b16 %v2038, %v2036
      %v2045 = vpack.c.b16 %v2039, %v2037
      %v2053 = vsel %vm943, %v2009, 0
      %2055 = vmatprep.subr.bf16.mxu0 %v2041
      %2056 = vmatpush1.bf16.msra.mxu0 %v2040
      %2057 = vmatprep.subr.bf16.mxu0 %v2043
      %2058 = vmatpush1.bf16.msra.mxu0 %v2042
      %2059 = vmatprep.subr.bf16.mxu0 %v2045
      %2060 = vmatpush1.bf16.msra.mxu0 %v2044
      %2061 = vmatprep.subr.bf16.mxu0 0
      %2062 = vmatpush1.bf16.msra.mxu0 0
      %2063 = vmatprep.subr.bf16.mxu0 0
      %2064 = vmatpush1.bf16.msra.mxu0 0
      %2065 = vmatprep.subr.bf16.mxu0 0
      %2066 = vmatpush1.bf16.msra.mxu0 0
      %2067 = vmatprep.subr.bf16.mxu0 0
      %2068 = vmatpush1.bf16.msra.mxu0 0
      %2069 = vmatprep.subr.bf16.mxu0 0
      %2070 = vmatpush1.bf16.msra.mxu0 0
      %2071 = vmatprep.subr.bf16.mxu0 0
      %2072 = vmatpush1.bf16.msra.mxu0 0
      %2073 = vmatprep.subr.bf16.mxu0 0
      %2074 = vmatpush1.bf16.msra.mxu0 0
      %2075 = vmatprep.subr.bf16.mxu0 0
      %2076 = vmatpush1.bf16.msra.mxu0 0
      %2077 = vmatprep.subr.bf16.mxu0 0
      %2078 = vmatpush1.bf16.msra.mxu0 0
      %2079 = vmatprep.subr.bf16.mxu0 0
      %2080 = vmatpush1.bf16.msra.mxu0 0
      %2081 = vmatprep.subr.bf16.mxu0 0
      %2082 = vmatpush1.bf16.msra.mxu0 0
      %2083 = vmatprep.subr.bf16.mxu0 0
      %2084 = vmatpush1.bf16.msra.mxu0 0
      %2085 = vmatprep.subr.bf16.mxu0 0
      %2086 = vmatpush1.bf16.msra.mxu0 0
      %2087 = vmatprep.mubr.bf16.mxu0 0
      %2088 = vmatmul.mubr.bf16.gmra.mrb[0].mxu0 %v2053
      %v2089 = vpop.f32.mrb[0].mxu0
      %v2090 = vadd.f32 %v2015, %v2089
      %v2091 = vpop.f32.mrb[0].mxu0
      %v2092 = vadd.f32 %v2019, %v2091
      %v2093 = vpop.f32.mrb[0].mxu0
      %v2094 = vpop.f32.mrb[0].mxu0
      %2095 = vdwg.mxu0
      %v2096 = vmul.f32 %v2090, 0.5
      %v2097 = vmul.f32 %v2092, 0.5
      %v2098 = vmul.f32 %v2090, %v2090
      %v2099 = vmul.f32 %v2092, %v2092
      %v2100 = vmul.f32 %v2098, %v2090
      %v2101 = vmul.f32 %v2099, %v2092
      %v2102 = vmul.f32 %v2100, 0.044715
      %v2103 = vmul.f32 %v2101, 0.044715
      %v2104 = vadd.f32 %v2090, %v2102
      %v2105 = vadd.f32 %v2092, %v2103
      %v2106 = vmul.f32 %v2104, 0.7978846
      %v2107 = vmul.f32 %v2105, 0.7978846
      %v2108 = vtanh.pop %v2106
      %v2109 = vtanh.pop %v2107
      %v2110 = vadd.f32 %v2108, 1.0
      %v2111 = vadd.f32 %v2109, 1.0
      %v2112 = vmul.f32 %v2096, %v2110
      %v2113 = vmul.f32 %v2097, %v2111
      %v2114 = vld [vmem:[%s20] sm:$0xf]
      %v2115 = vld [vmem:[%s20 + $0x4] sm:$0xf]
      %v2116 = vld [vmem:[%s20 + $0x8] sm:$0xf]
      %v2117 = vld [vmem:[%s20 + $0xc] sm:$0xf]
      %v2118 = vld [vmem:[%s20 + $0x10] sm:$0xf]
      %v2119 = vld [vmem:[%s20 + $0x14] sm:$0xf]
      %v2120 = vld [vmem:[%s20 + $0x18] sm:$0xf]
      %v2121 = vld [vmem:[%s20 + $0x1c] sm:$0xf]
      %v2122 = vld [vmem:[%s20 + $0x20] sm:$0xf]
      %v2123 = vld [vmem:[%s20 + $0x24] sm:$0xf]
      %v2124 = vld [vmem:[%s20 + $0x28] sm:$0xf]
      %v2125 = vld [vmem:[%s20 + $0x2c] sm:$0xf]
      %v2126 = vld [vmem:[%s20 + $0x30] sm:$0xf]
      %v2127 = vld [vmem:[%s20 + $0x34] sm:$0xf]
      %v2128 = vld [vmem:[%s20 + $0x38] sm:$0xf]
      %v2129 = vld [vmem:[%s20 + $0x3c] sm:$0xf]
      %v2130 = vld [vmem:[%s20 + $0x40] sm:$0xf]
      %v2131 = vld [vmem:[%s20 + $0x44] sm:$0xf]
      %v2132 = vld [vmem:[%s20 + $0x48] sm:$0xf]
      %v2133 = vld [vmem:[%s20 + $0x4c] sm:$0xf]
      %v2134 = vld [vmem:[%s20 + $0x50] sm:$0xf]
      %v2135 = vld [vmem:[%s20 + $0x54] sm:$0xf]
      %v2136 = vld [vmem:[%s20 + $0x58] sm:$0xf]
      %v2137 = vld [vmem:[%s20 + $0x5c] sm:$0xf]
      %v2138 = vpack.c.bf16 %v2112, %v2112
      %v2139 = vpack.c.bf16 %v2113, %v2113
      %v2140 = vld [vmem:[%s21] sm:$0x1]
      %v2142 = vlaneseq
      %v2143 = vshrl.u32 %v2142, 7
      %v2144 = vsub.s32 0, %v2143
      %v2145 = vrot.slane %v2140, %v2144
      %v2171 = vunpack.c.l.b16 %v2114
      %v2172 = vunpack.c.l.b16 %v2115
      %v2173 = vunpack.c.l.b16 %v2116
      %v2174 = vunpack.c.l.b16 %v2117
      %v2175 = vunpack.c.l.b16 %v2118
      %v2176 = vunpack.c.l.b16 %v2119
      %v2177 = vunpack.c.l.b16 %v2120
      %v2178 = vunpack.c.l.b16 %v2121
      %v2179 = vunpack.c.l.b16 %v2122
      %v2180 = vunpack.c.l.b16 %v2123
      %v2181 = vunpack.c.l.b16 %v2124
      %v2182 = vunpack.c.l.b16 %v2125
      %v2183 = vunpack.c.l.b16 %v2126
      %v2184 = vunpack.c.l.b16 %v2127
      %v2185 = vunpack.c.l.b16 %v2128
      %v2186 = vunpack.c.l.b16 %v2129
      %v2187 = vunpack.c.l.b16 %v2130
      %v2188 = vunpack.c.l.b16 %v2131
      %v2189 = vunpack.c.l.b16 %v2132
      %v2190 = vunpack.c.l.b16 %v2133
      %v2191 = vunpack.c.l.b16 %v2134
      %v2192 = vunpack.c.l.b16 %v2135
      %v2193 = vunpack.c.l.b16 %v2136
      %v2194 = vunpack.c.l.b16 %v2137
      %v2195 = vpack.c.b16 %v2172, %v2171
      %v2196 = vpack.c.b16 %v2174, %v2173
      %v2197 = vpack.c.b16 %v2176, %v2175
      %v2198 = vpack.c.b16 %v2178, %v2177
      %v2199 = vpack.c.b16 %v2180, %v2179
      %v2200 = vpack.c.b16 %v2182, %v2181
      %v2201 = vpack.c.b16 %v2184, %v2183
      %v2202 = vpack.c.b16 %v2186, %v2185
      %v2203 = vpack.c.b16 %v2188, %v2187
      %v2204 = vpack.c.b16 %v2190, %v2189
      %v2205 = vpack.c.b16 %v2192, %v2191
      %v2206 = vpack.c.b16 %v2194, %v2193
      %v2220 = vsel %vm1111, %v2139, 0
      %2222 = vmatprep.subr.bf16.mxu0 0
      %2223 = vmatpush1.bf16.msra.mxu0 %v2195
      %2224 = vmatprep.subr.bf16.mxu0 0
      %2225 = vmatpush1.bf16.msra.mxu0 %v2196
      %2226 = vmatprep.subr.bf16.mxu0 0
      %2227 = vmatpush1.bf16.msra.mxu0 %v2197
      %2228 = vmatprep.subr.bf16.mxu0 0
      %2229 = vmatpush1.bf16.msra.mxu0 %v2198
      %2230 = vmatprep.subr.bf16.mxu0 0
      %2231 = vmatpush1.bf16.msra.mxu0 %v2199
      %2232 = vmatprep.subr.bf16.mxu0 0
      %2233 = vmatpush1.bf16.msra.mxu0 %v2200
      %2234 = vmatprep.subr.bf16.mxu0 0
      %2235 = vmatpush1.bf16.msra.mxu0 %v2201
      %2236 = vmatprep.subr.bf16.mxu0 0
      %2237 = vmatpush1.bf16.msra.mxu0 %v2202
      %2238 = vmatprep.subr.bf16.mxu0 0
      %2239 = vmatpush1.bf16.msra.mxu0 %v2203
      %2240 = vmatprep.subr.bf16.mxu0 0
      %2241 = vmatpush1.bf16.msra.mxu0 %v2204
      %2242 = vmatprep.subr.bf16.mxu0 0
      %2243 = vmatpush1.bf16.msra.mxu0 %v2205
      %2244 = vmatprep.subr.bf16.mxu0 0
      %2245 = vmatpush1.bf16.msra.mxu0 %v2206
      %2246 = vmatprep.subr.bf16.mxu0 0
      %2247 = vmatpush1.bf16.msra.mxu0 0
      %2248 = vmatprep.subr.bf16.mxu0 0
      %2249 = vmatpush1.bf16.msra.mxu0 0
      %2250 = vmatprep.subr.bf16.mxu0 0
      %2251 = vmatpush1.bf16.msra.mxu0 0
      %2252 = vmatprep.subr.bf16.mxu0 0
      %2253 = vmatpush1.bf16.msra.mxu0 0
      %2254 = vmatprep.mubr.bf16.mxu0 %v2220
      %2255 = vmatmul.mubr.bf16.gmra.mrb[0].mxu0 %v2138
      %v2256 = vpop.f32.mrb[0].mxu0
      %v2257 = vadd.f32 %v2145, %v2256
      %v2258 = vpop.f32.mrb[0].mxu0
      %v2259 = vpop.f32.mrb[0].mxu0
      %v2260 = vpop.f32.mrb[0].mxu0
      %2261 = vdwg.mxu0
      %v2262 = vadd.f32 %v1973, %v2257
      %s2263 = scalar_lea.vmem %s10, 1
      %v2264 = vld [vmem:[%s2263] sm:$0x1]
      %s2265 = scalar_lea.vmem %s11, 1
      %v2266 = vld [vmem:[%s2265] sm:$0x1]
      %v2267 = vsel %vm865, %v2262, 0.0
      %2268 = vadd.xlane.f32.xlu0 %v2267
      %v2269 = vpop.xlane.xlu0 %2268
      %v2270 = vmul.f32 %v2269, %v869
      %v2271 = vsub.f32 %v2262, %v2270
      %v2272 = vmul.f32 %v2271, %v2271
      %v2273 = vsel %vm865, %v2272, 0.0
      %2274 = vadd.xlane.f32.xlu0 %v2273
      %v2275 = vpop.xlane.xlu0 %2274
      %v2276 = vmul.f32 %v2275, %v869
      %v2277 = vadd.f32 %v2276, 1e-05
      %v2278 = vrsqrt.pop %v2277
      %v2279 = vmul.f32 %v2271, %v2278
      %v2281 = vlaneseq
      %v2282 = vshrl.u32 %v2281, 7
      %v2283 = vsub.s32 0, %v2282
      %v2284 = vrot.slane %v2264, %v2283
      %v2286 = vmul.f32 %v2279, %v2284
      %v2288 = vlaneseq
      %v2289 = vshrl.u32 %v2288, 7
      %v2290 = vsub.s32 0, %v2289
      %v2291 = vrot.slane %v2266, %v2290
      %v2293 = vadd.f32 %v2286, %v2291
      %s2294 = scalar_lea.vmem %s12, 144
      %v2295 = vld [vmem:[%s2294] sm:$0xf]
      %v2296 = vld [vmem:[%s2294 + $0x4] sm:$0xf]
      %v2297 = vld [vmem:[%s2294 + $0x8] sm:$0xf]
      %v2298 = vld [vmem:[%s2294 + $0xc] sm:$0xf]
      %v2299 = vld [vmem:[%s2294 + $0x10] sm:$0xf]
      %v2300 = vld [vmem:[%s2294 + $0x14] sm:$0xf]
      %v2301 = vpack.c.bf16 %v2293, %v2293
      %s2302 = scalar_lea.vmem %s13, 6
      %v2303 = vld [vmem:[%s2302] sm:$0x1]
      %v2305 = vlaneseq
      %v2306 = vshrl.u32 %v2305, 7
      %v2307 = vsub.s32 0, %v2306
      %v2308 = vrot.slane %v2303, %v2307
      %v2316 = vunpack.c.l.b16 %v2295
      %v2317 = vunpack.c.l.b16 %v2296
      %v2318 = vunpack.c.l.b16 %v2297
      %v2319 = vunpack.c.l.b16 %v2298
      %v2320 = vunpack.c.l.b16 %v2299
      %v2321 = vunpack.c.l.b16 %v2300
      %v2322 = vpack.c.b16 %v2317, %v2316
      %v2323 = vpack.c.b16 %v2319, %v2318
      %v2324 = vpack.c.b16 %v2321, %v2320
      %v2329 = vsel %vm943, %v2301, 0
      %2331 = vmatprep.subr.bf16.mxu0 0
      %2332 = vmatpush1.bf16.msra.mxu0 %v2322
      %2333 = vmatprep.subr.bf16.mxu0 0
      %2334 = vmatpush1.bf16.msra.mxu0 %v2323
      %2335 = vmatprep.subr.bf16.mxu0 0
      %2336 = vmatpush1.bf16.msra.mxu0 %v2324
      %2337 = vmatprep.subr.bf16.mxu0 0
      %2338 = vmatpush1.bf16.msra.mxu0 0
      %2339 = vmatprep.subr.bf16.mxu0 0
      %2340 = vmatpush1.bf16.msra.mxu0 0
      %2341 = vmatprep.subr.bf16.mxu0 0
      %2342 = vmatpush1.bf16.msra.mxu0 0
      %2343 = vmatprep.subr.bf16.mxu0 0
      %2344 = vmatpush1.bf16.msra.mxu0 0
      %2345 = vmatprep.subr.bf16.mxu0 0
      %2346 = vmatpush1.bf16.msra.mxu0 0
      %2347 = vmatprep.subr.bf16.mxu0 0
      %2348 = vmatpush1.bf16.msra.mxu0 0
      %2349 = vmatprep.subr.bf16.mxu0 0
      %2350 = vmatpush1.bf16.msra.mxu0 0
      %2351 = vmatprep.subr.bf16.mxu0 0
      %2352 = vmatpush1.bf16.msra.mxu0 0
      %2353 = vmatprep.subr.bf16.mxu0 0
      %2354 = vmatpush1.bf16.msra.mxu0 0
      %2355 = vmatprep.subr.bf16.mxu0 0
      %2356 = vmatpush1.bf16.msra.mxu0 0
      %2357 = vmatprep.subr.bf16.mxu0 0
      %2358 = vmatpush1.bf16.msra.mxu0 0
      %2359 = vmatprep.subr.bf16.mxu0 0
      %2360 = vmatpush1.bf16.msra.mxu0 0
      %2361 = vmatprep.subr.bf16.mxu0 0
      %2362 = vmatpush1.bf16.msra.mxu0 0
      %2363 = vmatprep.mubr.bf16.mxu0 0
      %2364 = vmatmul.mubr.bf16.gmra.mrb[0].mxu0 %v2329
      %v2365 = vpop.f32.mrb[0].mxu0
      %v2366 = vadd.f32 %v2308, %v2365
      %v2367 = vpop.f32.mrb[0].mxu0
      %v2368 = vpop.f32.mrb[0].mxu0
      %v2369 = vpop.f32.mrb[0].mxu0
      %2370 = vdwg.mxu0
      %s2371 = scalar_lea.vmem %s12, 192
      %v2372 = vld [vmem:[%s2371] sm:$0xf]
      %v2373 = vld [vmem:[%s2371 + $0x4] sm:$0xf]
      %v2374 = vld [vmem:[%s2371 + $0x8] sm:$0xf]
      %v2375 = vld [vmem:[%s2371 + $0xc] sm:$0xf]
      %v2376 = vld [vmem:[%s2371 + $0x10] sm:$0xf]
      %v2377 = vld [vmem:[%s2371 + $0x14] sm:$0xf]
      %s2378 = scalar_lea.vmem %s13, 8
      %v2379 = vld [vmem:[%s2378] sm:$0x1]
      %v2381 = vlaneseq
      %v2382 = vshrl.u32 %v2381, 7
      %v2383 = vsub.s32 0, %v2382
      %v2384 = vrot.slane %v2379, %v2383
      %v2392 = vunpack.c.l.b16 %v2372
      %v2393 = vunpack.c.l.b16 %v2373
      %v2394 = vunpack.c.l.b16 %v2374
      %v2395 = vunpack.c.l.b16 %v2375
      %v2396 = vunpack.c.l.b16 %v2376
      %v2397 = vunpack.c.l.b16 %v2377
      %v2398 = vpack.c.b16 %v2393, %v2392
      %v2399 = vpack.c.b16 %v2395, %v2394
      %v2400 = vpack.c.b16 %v2397, %v2396
      %2404 = vmatprep.subr.bf16.mxu0 0
      %2405 = vmatpush1.bf16.msra.mxu0 %v2398
      %2406 = vmatprep.subr.bf16.mxu0 0
      %2407 = vmatpush1.bf16.msra.mxu0 %v2399
      %2408 = vmatprep.subr.bf16.mxu0 0
      %2409 = vmatpush1.bf16.msra.mxu0 %v2400
      %2410 = vmatprep.subr.bf16.mxu0 0
      %2411 = vmatpush1.bf16.msra.mxu0 0
      %2412 = vmatprep.subr.bf16.mxu0 0
      %2413 = vmatpush1.bf16.msra.mxu0 0
      %2414 = vmatprep.subr.bf16.mxu0 0
      %2415 = vmatpush1.bf16.msra.mxu0 0
      %2416 = vmatprep.subr.bf16.mxu0 0
      %2417 = vmatpush1.bf16.msra.mxu0 0
      %2418 = vmatprep.subr.bf16.mxu0 0
      %2419 = vmatpush1.bf16.msra.mxu0 0
      %2420 = vmatprep.subr.bf16.mxu0 0
      %2421 = vmatpush1.bf16.msra.mxu0 0
      %2422 = vmatprep.subr.bf16.mxu0 0
      %2423 = vmatpush1.bf16.msra.mxu0 0
      %2424 = vmatprep.subr.bf16.mxu0 0
      %2425 = vmatpush1.bf16.msra.mxu0 0
      %2426 = vmatprep.subr.bf16.mxu0 0
      %2427 = vmatpush1.bf16.msra.mxu0 0
      %2428 = vmatprep.subr.bf16.mxu0 0
      %2429 = vmatpush1.bf16.msra.mxu0 0
      %2430 = vmatprep.subr.bf16.mxu0 0
      %2431 = vmatpush1.bf16.msra.mxu0 0
      %2432 = vmatprep.subr.bf16.mxu0 0
      %2433 = vmatpush1.bf16.msra.mxu0 0
      %2434 = vmatprep.subr.bf16.mxu0 0
      %2435 = vmatpush1.bf16.msra.mxu0 0
      %2436 = vmatprep.mubr.bf16.mxu0 0
      %2437 = vmatmul.mubr.bf16.gmra.mrb[0].mxu0 %v2329
      %v2438 = vpop.f32.mrb[0].mxu0
      %v2439 = vadd.f32 %v2384, %v2438
      %v2440 = vpop.f32.mrb[0].mxu0
      %v2441 = vpop.f32.mrb[0].mxu0
      %v2442 = vpop.f32.mrb[0].mxu0
      %2443 = vdwg.mxu0
      %s2444 = scalar_lea.vmem %s12, 240
      %v2445 = vld [vmem:[%s2444] sm:$0xf]
      %v2446 = vld [vmem:[%s2444 + $0x4] sm:$0xf]
      %v2447 = vld [vmem:[%s2444 + $0x8] sm:$0xf]
      %v2448 = vld [vmem:[%s2444 + $0xc] sm:$0xf]
      %v2449 = vld [vmem:[%s2444 + $0x10] sm:$0xf]
      %v2450 = vld [vmem:[%s2444 + $0x14] sm:$0xf]
      %s2451 = scalar_lea.vmem %s13, 10
      %v2452 = vld [vmem:[%s2451] sm:$0x1]
      %v2454 = vlaneseq
      %v2455 = vshrl.u32 %v2454, 7
      %v2456 = vsub.s32 0, %v2455
      %v2457 = vrot.slane %v2452, %v2456
      %v2465 = vunpack.c.l.b16 %v2445
      %v2466 = vunpack.c.l.b16 %v2446
      %v2467 = vunpack.c.l.b16 %v2447
      %v2468 = vunpack.c.l.b16 %v2448
      %v2469 = vunpack.c.l.b16 %v2449
      %v2470 = vunpack.c.l.b16 %v2450
      %v2471 = vpack.c.b16 %v2466, %v2465
      %v2472 = vpack.c.b16 %v2468, %v2467
      %v2473 = vpack.c.b16 %v2470, %v2469
      %2477 = vmatprep.subr.bf16.mxu0 0
      %2478 = vmatpush1.bf16.msra.mxu0 %v2471
      %2479 = vmatprep.subr.bf16.mxu0 0
      %2480 = vmatpush1.bf16.msra.mxu0 %v2472
      %2481 = vmatprep.subr.bf16.mxu0 0
      %2482 = vmatpush1.bf16.msra.mxu0 %v2473
      %2483 = vmatprep.subr.bf16.mxu0 0
      %2484 = vmatpush1.bf16.msra.mxu0 0
      %2485 = vmatprep.subr.bf16.mxu0 0
      %2486 = vmatpush1.bf16.msra.mxu0 0
      %2487 = vmatprep.subr.bf16.mxu0 0
      %2488 = vmatpush1.bf16.msra.mxu0 0
      %2489 = vmatprep.subr.bf16.mxu0 0
      %2490 = vmatpush1.bf16.msra.mxu0 0
      %2491 = vmatprep.subr.bf16.mxu0 0
      %2492 = vmatpush1.bf16.msra.mxu0 0
      %2493 = vmatprep.subr.bf16.mxu0 0
      %2494 = vmatpush1.bf16.msra.mxu0 0
      %2495 = vmatprep.subr.bf16.mxu0 0
      %2496 = vmatpush1.bf16.msra.mxu0 0
      %2497 = vmatprep.subr.bf16.mxu0 0
      %2498 = vmatpush1.bf16.msra.mxu0 0
      %2499 = vmatprep.subr.bf16.mxu0 0
      %2500 = vmatpush1.bf16.msra.mxu0 0
      %2501 = vmatprep.subr.bf16.mxu0 0
      %2502 = vmatpush1.bf16.msra.mxu0 0
      %2503 = vmatprep.subr.bf16.mxu0 0
      %2504 = vmatpush1.bf16.msra.mxu0 0
      %2505 = vmatprep.subr.bf16.mxu0 0
      %2506 = vmatpush1.bf16.msra.mxu0 0
      %2507 = vmatprep.subr.bf16.mxu0 0
      %2508 = vmatpush1.bf16.msra.mxu0 0
      %2509 = vmatprep.mubr.bf16.mxu0 0
      %2510 = vmatmul.mubr.bf16.gmra.mrb[0].mxu0 %v2329
      %v2511 = vpop.f32.mrb[0].mxu0
      %v2512 = vadd.f32 %v2457, %v2511
      %v2513 = vpop.f32.mrb[0].mxu0
      %v2514 = vpop.f32.mrb[0].mxu0
      %v2515 = vpop.f32.mrb[0].mxu0
      %2516 = vdwg.mxu0
      %v2517 = vpack.c.bf16 %v2366, %v2366
      %v2518 = vpack.c.bf16 %v2439, %v2439
      %v2520 = vsel %vm1409, %v2517, 0
      %v2523 = vsel %vm1409, %v2518, 0
      %2525 = vmatprep.subr.bf16.mxu0 0
      %2526 = vmatpush1.bf16.xpose.msra.mxu0 %v2523
      %2527 = vmatprep.subr.bf16.mxu0 0
      %2528 = vmatpush1.bf16.xpose.msra.mxu0 0
      %2529 = vmatprep.subr.bf16.mxu0 0
      %2530 = vmatpush1.bf16.xpose.msra.mxu0 0
      %2531 = vmatprep.subr.bf16.mxu0 0
      %2532 = vmatpush1.bf16.xpose.msra.mxu0 0
      %2533 = vmatprep.subr.bf16.mxu0 0
      %2534 = vmatpush1.bf16.xpose.msra.mxu0 0
      %2535 = vmatprep.subr.bf16.mxu0 0
      %2536 = vmatpush1.bf16.xpose.msra.mxu0 0
      %2537 = vmatprep.subr.bf16.mxu0 0
      %2538 = vmatpush1.bf16.xpose.msra.mxu0 0
      %2539 = vmatprep.subr.bf16.mxu0 0
      %2540 = vmatpush1.bf16.xpose.msra.mxu0 0
      %2541 = vmatprep.subr.bf16.mxu0 0
      %2542 = vmatpush1.bf16.xpose.msra.mxu0 0
      %2543 = vmatprep.subr.bf16.mxu0 0
      %2544 = vmatpush1.bf16.xpose.msra.mxu0 0
      %2545 = vmatprep.subr.bf16.mxu0 0
      %2546 = vmatpush1.bf16.xpose.msra.mxu0 0
      %2547 = vmatprep.subr.bf16.mxu0 0
      %2548 = vmatpush1.bf16.xpose.msra.mxu0 0
      %2549 = vmatprep.subr.bf16.mxu0 0
      %2550 = vmatpush1.bf16.xpose.msra.mxu0 0
      %2551 = vmatprep.subr.bf16.mxu0 0
      %2552 = vmatpush1.bf16.xpose.msra.mxu0 0
      %2553 = vmatprep.subr.bf16.mxu0 0
      %2554 = vmatpush1.bf16.xpose.msra.mxu0 0
      %2555 = vmatprep.subr.bf16.mxu0 0
      %2556 = vmatpush1.bf16.xpose.msra.mxu0 0
      %2557 = vmatprep.mubr.bf16.mxu0 0
      %2558 = vmatmul.mubr.bf16.gmra.mrb[0].mxu0 %v2520
      %v2559 = vpop.f32.mrb[0].mxu0
      %v2560 = vadd.f32 0.0, %v2559
      %v2561 = vpop.f32.mrb[0].mxu0
      %v2562 = vpop.f32.mrb[0].mxu0
      %v2563 = vpop.f32.mrb[0].mxu0
      %2564 = vdwg.mxu0
      %v2565 = vmul.f32 %v2560, 0.20412415
      %v2566 = vsel %vm1457, %v2565, -inf
      %2567 = vmax.xlane.f32.xlu0 %v2566
      %v2568 = vpop.xlane.xlu0 %2567
      %v2569 = vsub.f32 %v2565, %v2568
      %v2570 = vmul.f32 %v2569, 1.442695
      %v2571 = vpow.pop %v2570
      %v2572 = vsel %vm1457, %v2571, 0.0
      %2573 = vadd.xlane.f32.xlu0 %v2572
      %v2574 = vpop.xlane.xlu0 %2573
      %v2575 = vrcp.pop %v2574
      %v2576 = vmul.f32 %v2571, %v2575
      %v2577 = vpack.c.bf16 %v2576, %v2576
      %v2578 = vpack.c.bf16 %v2512, %v2512
      %v2580 = vsel %vm1471, %v2577, 0
      %v2583 = vsel %vm1475, %v2578, 0
      %2585 = vmatprep.subr.bf16.mxu0 0
      %2586 = vmatpush1.bf16.msra.mxu0 %v2583
      %2587 = vmatprep.subr.bf16.mxu0 0
      %2588 = vmatpush1.bf16.msra.mxu0 0
      %2589 = vmatprep.subr.bf16.mxu0 0
      %2590 = vmatpush1.bf16.msra.mxu0 0
      %2591 = vmatprep.subr.bf16.mxu0 0
      %2592 = vmatpush1.bf16.msra.mxu0 0
      %2593 = vmatprep.subr.bf16.mxu0 0
      %2594 = vmatpush1.bf16.msra.mxu0 0
      %2595 = vmatprep.subr.bf16.mxu0 0
      %2596 = vmatpush1.bf16.msra.mxu0 0
      %2597 = vmatprep.subr.bf16.mxu0 0
      %2598 = vmatpush1.bf16.msra.mxu0 0
      %2599 = vmatprep.subr.bf16.mxu0 0
      %2600 = vmatpush1.bf16.msra.mxu0 0
      %2601 = vmatprep.subr.bf16.mxu0 0
      %2602 = vmatpush1.bf16.msra.mxu0 0
      %2603 = vmatprep.subr.bf16.mxu0 0
      %2604 = vmatpush1.bf16.msra.mxu0 0
      %2605 = vmatprep.subr.bf16.mxu0 0
      %2606 = vmatpush1.bf16.msra.mxu0 0
      %2607 = vmatprep.subr.bf16.mxu0 0
      %2608 = vmatpush1.bf16.msra.mxu0 0
      %2609 = vmatprep.subr.bf16.mxu0 0
      %2610 = vmatpush1.bf16.msra.mxu0 0
      %2611 = vmatprep.subr.bf16.mxu0 0
      %2612 = vmatpush1.bf16.msra.mxu0 0
      %2613 = vmatprep.subr.bf16.mxu0 0
      %2614 = vmatpush1.bf16.msra.mxu0 0
      %2615 = vmatprep.subr.bf16.mxu0 0
      %2616 = vmatpush1.bf16.msra.mxu0 0
      %2617 = vmatprep.mubr.bf16.mxu0 0
      %2618 = vmatmul.mubr.bf16.gmra.mrb[0].mxu0 %v2580
      %v2619 = vpop.f32.mrb[0].mxu0
      %v2620 = vadd.f32 0.0, %v2619
      %v2621 = vpop.f32.mrb[0].mxu0
      %v2622 = vpop.f32.mrb[0].mxu0
      %v2623 = vpop.f32.mrb[0].mxu0
      %2624 = vdwg.mxu0
      %s2625 = scalar_lea.vmem %s14, 24
      %v2626 = vld [vmem:[%s2625] sm:$0xf]
      %v2627 = vld [vmem:[%s2625 + $0x4] sm:$0xf]
      %v2628 = vld [vmem:[%s2625 + $0x8] sm:$0xf]
      %v2629 = vpack.c.bf16 %v2620, %v2620
      %s2630 = scalar_lea.vmem %s12, 168
      %v2631 = vld [vmem:[%s2630] sm:$0xf]
      %v2632 = vld [vmem:[%s2630 + $0x4] sm:$0xf]
      %v2633 = vld [vmem:[%s2630 + $0x8] sm:$0xf]
      %v2634 = vld [vmem:[%s2630 + $0xc] sm:$0xf]
      %v2635 = vld [vmem:[%s2630 + $0x10] sm:$0xf]
      %v2636 = vld [vmem:[%s2630 + $0x14] sm:$0xf]
      %s2637 = scalar_lea.vmem %s13, 7
      %v2638 = vld [vmem:[%s2637] sm:$0x1]
      %v2640 = vlaneseq
      %v2641 = vshrl.u32 %v2640, 7
      %v2642 = vsub.s32 0, %v2641
      %v2643 = vrot.slane %v2638, %v2642
      %v2651 = vunpack.c.l.b16 %v2631
      %v2652 = vunpack.c.l.b16 %v2632
      %v2653 = vunpack.c.l.b16 %v2633
      %v2654 = vunpack.c.l.b16 %v2634
      %v2655 = vunpack.c.l.b16 %v2635
      %v2656 = vunpack.c.l.b16 %v2636
      %v2657 = vpack.c.b16 %v2652, %v2651
      %v2658 = vpack.c.b16 %v2654, %v2653
      %v2659 = vpack.c.b16 %v2656, %v2655
      %2663 = vmatprep.subr.bf16.mxu0 0
      %2664 = vmatpush1.bf16.msra.mxu0 %v2657
      %2665 = vmatprep.subr.bf16.mxu0 0
      %2666 = vmatpush1.bf16.msra.mxu0 %v2658
      %2667 = vmatprep.subr.bf16.mxu0 0
      %2668 = vmatpush1.bf16.msra.mxu0 %v2659
      %2669 = vmatprep.subr.bf16.mxu0 0
      %2670 = vmatpush1.bf16.msra.mxu0 0
      %2671 = vmatprep.subr.bf16.mxu0 0
      %2672 = vmatpush1.bf16.msra.mxu0 0
      %2673 = vmatprep.subr.bf16.mxu0 0
      %2674 = vmatpush1.bf16.msra.mxu0 0
      %2675 = vmatprep.subr.bf16.mxu0 0
      %2676 = vmatpush1.bf16.msra.mxu0 0
      %2677 = vmatprep.subr.bf16.mxu0 0
      %2678 = vmatpush1.bf16.msra.mxu0 0
      %2679 = vmatprep.subr.bf16.mxu0 0
      %2680 = vmatpush1.bf16.msra.mxu0 0
      %2681 = vmatprep.subr.bf16.mxu0 0
      %2682 = vmatpush1.bf16.msra.mxu0 0
      %2683 = vmatprep.subr.bf16.mxu0 0
      %2684 = vmatpush1.bf16.msra.mxu0 0
      %2685 = vmatprep.subr.bf16.mxu0 0
      %2686 = vmatpush1.bf16.msra.mxu0 0
      %2687 = vmatprep.subr.bf16.mxu0 0
      %2688 = vmatpush1.bf16.msra.mxu0 0
      %2689 = vmatprep.subr.bf16.mxu0 0
      %2690 = vmatpush1.bf16.msra.mxu0 0
      %2691 = vmatprep.subr.bf16.mxu0 0
      %2692 = vmatpush1.bf16.msra.mxu0 0
      %2693 = vmatprep.subr.bf16.mxu0 0
      %2694 = vmatpush1.bf16.msra.mxu0 0
      %2695 = vmatprep.mubr.bf16.mxu0 0
      %2696 = vmatmul.mubr.bf16.gmra.mrb[0].mxu0 %v2329
      %v2697 = vpop.f32.mrb[0].mxu0
      %v2698 = vadd.f32 %v2643, %v2697
      %v2699 = vpop.f32.mrb[0].mxu0
      %v2700 = vpop.f32.mrb[0].mxu0
      %v2701 = vpop.f32.mrb[0].mxu0
      %2702 = vdwg.mxu0
      %s2703 = scalar_lea.vmem %s12, 216
      %v2704 = vld [vmem:[%s2703] sm:$0xf]
      %v2705 = vld [vmem:[%s2703 + $0x4] sm:$0xf]
      %v2706 = vld [vmem:[%s2703 + $0x8] sm:$0xf]
      %v2707 = vld [vmem:[%s2703 + $0xc] sm:$0xf]
      %v2708 = vld [vmem:[%s2703 + $0x10] sm:$0xf]
      %v2709 = vld [vmem:[%s2703 + $0x14] sm:$0xf]
      %s2710 = scalar_lea.vmem %s13, 9
      %v2711 = vld [vmem:[%s2710] sm:$0x1]
      %v2713 = vlaneseq
      %v2714 = vshrl.u32 %v2713, 7
      %v2715 = vsub.s32 0, %v2714
      %v2716 = vrot.slane %v2711, %v2715
      %v2724 = vunpack.c.l.b16 %v2704
      %v2725 = vunpack.c.l.b16 %v2705
      %v2726 = vunpack.c.l.b16 %v2706
      %v2727 = vunpack.c.l.b16 %v2707
      %v2728 = vunpack.c.l.b16 %v2708
      %v2729 = vunpack.c.l.b16 %v2709
      %v2730 = vpack.c.b16 %v2725, %v2724
      %v2731 = vpack.c.b16 %v2727, %v2726
      %v2732 = vpack.c.b16 %v2729, %v2728
      %2736 = vmatprep.subr.bf16.mxu0 0
      %2737 = vmatpush1.bf16.msra.mxu0 %v2730
      %2738 = vmatprep.subr.bf16.mxu0 0
      %2739 = vmatpush1.bf16.msra.mxu0 %v2731
      %2740 = vmatprep.subr.bf16.mxu0 0
      %2741 = vmatpush1.bf16.msra.mxu0 %v2732
      %2742 = vmatprep.subr.bf16.mxu0 0
      %2743 = vmatpush1.bf16.msra.mxu0 0
      %2744 = vmatprep.subr.bf16.mxu0 0
      %2745 = vmatpush1.bf16.msra.mxu0 0
      %2746 = vmatprep.subr.bf16.mxu0 0
      %2747 = vmatpush1.bf16.msra.mxu0 0
      %2748 = vmatprep.subr.bf16.mxu0 0
      %2749 = vmatpush1.bf16.msra.mxu0 0
      %2750 = vmatprep.subr.bf16.mxu0 0
      %2751 = vmatpush1.bf16.msra.mxu0 0
      %2752 = vmatprep.subr.bf16.mxu0 0
      %2753 = vmatpush1.bf16.msra.mxu0 0
      %2754 = vmatprep.subr.bf16.mxu0 0
      %2755 = vmatpush1.bf16.msra.mxu0 0
      %2756 = vmatprep.subr.bf16.mxu0 0
      %2757 = vmatpush1.bf16.msra.mxu0 0
      %2758 = vmatprep.subr.bf16.mxu0 0
      %2759 = vmatpush1.bf16.msra.mxu0 0
      %2760 = vmatprep.subr.bf16.mxu0 0
      %2761 = vmatpush1.bf16.msra.mxu0 0
      %2762 = vmatprep.subr.bf16.mxu0 0
      %2763 = vmatpush1.bf16.msra.mxu0 0
      %2764 = vmatprep.subr.bf16.mxu0 0
      %2765 = vmatpush1.bf16.msra.mxu0 0
      %2766 = vmatprep.subr.bf16.mxu0 0
      %2767 = vmatpush1.bf16.msra.mxu0 0
      %2768 = vmatprep.mubr.bf16.mxu0 0
      %2769 = vmatmul.mubr.bf16.gmra.mrb[0].mxu0 %v2329
      %v2770 = vpop.f32.mrb[0].mxu0
      %v2771 = vadd.f32 %v2716, %v2770
      %v2772 = vpop.f32.mrb[0].mxu0
      %v2773 = vpop.f32.mrb[0].mxu0
      %v2774 = vpop.f32.mrb[0].mxu0
      %2775 = vdwg.mxu0
      %s2776 = scalar_lea.vmem %s12, 264
      %v2777 = vld [vmem:[%s2776] sm:$0xf]
      %v2778 = vld [vmem:[%s2776 + $0x4] sm:$0xf]
      %v2779 = vld [vmem:[%s2776 + $0x8] sm:$0xf]
      %v2780 = vld [vmem:[%s2776 + $0xc] sm:$0xf]
      %v2781 = vld [vmem:[%s2776 + $0x10] sm:$0xf]
      %v2782 = vld [vmem:[%s2776 + $0x14] sm:$0xf]
      %s2783 = scalar_lea.vmem %s13, 11
      %v2784 = vld [vmem:[%s2783] sm:$0x1]
      %v2786 = vlaneseq
      %v2787 = vshrl.u32 %v2786, 7
      %v2788 = vsub.s32 0, %v2787
      %v2789 = vrot.slane %v2784, %v2788
      %v2797 = vunpack.c.l.b16 %v2777
      %v2798 = vunpack.c.l.b16 %v2778
      %v2799 = vunpack.c.l.b16 %v2779
      %v2800 = vunpack.c.l.b16 %v2780
      %v2801 = vunpack.c.l.b16 %v2781
      %v2802 = vunpack.c.l.b16 %v2782
      %v2803 = vpack.c.b16 %v2798, %v2797
      %v2804 = vpack.c.b16 %v2800, %v2799
      %v2805 = vpack.c.b16 %v2802, %v2801
      %2809 = vmatprep.subr.bf16.mxu0 0
      %2810 = vmatpush1.bf16.msra.mxu0 %v2803
      %2811 = vmatprep.subr.bf16.mxu0 0
      %2812 = vmatpush1.bf16.msra.mxu0 %v2804
      %2813 = vmatprep.subr.bf16.mxu0 0
      %2814 = vmatpush1.bf16.msra.mxu0 %v2805
      %2815 = vmatprep.subr.bf16.mxu0 0
      %2816 = vmatpush1.bf16.msra.mxu0 0
      %2817 = vmatprep.subr.bf16.mxu0 0
      %2818 = vmatpush1.bf16.msra.mxu0 0
      %2819 = vmatprep.subr.bf16.mxu0 0
      %2820 = vmatpush1.bf16.msra.mxu0 0
      %2821 = vmatprep.subr.bf16.mxu0 0
      %2822 = vmatpush1.bf16.msra.mxu0 0
      %2823 = vmatprep.subr.bf16.mxu0 0
      %2824 = vmatpush1.bf16.msra.mxu0 0
      %2825 = vmatprep.subr.bf16.mxu0 0
      %2826 = vmatpush1.bf16.msra.mxu0 0
      %2827 = vmatprep.subr.bf16.mxu0 0
      %2828 = vmatpush1.bf16.msra.mxu0 0
      %2829 = vmatprep.subr.bf16.mxu0 0
      %2830 = vmatpush1.bf16.msra.mxu0 0
      %2831 = vmatprep.subr.bf16.mxu0 0
      %2832 = vmatpush1.bf16.msra.mxu0 0
      %2833 = vmatprep.subr.bf16.mxu0 0
      %2834 = vmatpush1.bf16.msra.mxu0 0
      %2835 = vmatprep.subr.bf16.mxu0 0
      %2836 = vmatpush1.bf16.msra.mxu0 0
      %2837 = vmatprep.subr.bf16.mxu0 0
      %2838 = vmatpush1.bf16.msra.mxu0 0
      %2839 = vmatprep.subr.bf16.mxu0 0
      %2840 = vmatpush1.bf16.msra.mxu0 0
      %2841 = vmatprep.mubr.bf16.mxu0 0
      %2842 = vmatmul.mubr.bf16.gmra.mrb[0].mxu0 %v2329
      %v2843 = vpop.f32.mrb[0].mxu0
      %v2844 = vadd.f32 %v2789, %v2843
      %v2845 = vpop.f32.mrb[0].mxu0
      %v2846 = vpop.f32.mrb[0].mxu0
      %v2847 = vpop.f32.mrb[0].mxu0
      %2848 = vdwg.mxu0
      %v2849 = vpack.c.bf16 %v2698, %v2698
      %v2850 = vpack.c.bf16 %v2771, %v2771
      %v2852 = vsel %vm1409, %v2849, 0
      %v2855 = vsel %vm1409, %v2850, 0
      %2857 = vmatprep.subr.bf16.mxu0 0
      %2858 = vmatpush1.bf16.xpose.msra.mxu0 %v2855
      %2859 = vmatprep.subr.bf16.mxu0 0
      %2860 = vmatpush1.bf16.xpose.msra.mxu0 0
      %2861 = vmatprep.subr.bf16.mxu0 0
      %2862 = vmatpush1.bf16.xpose.msra.mxu0 0
      %2863 = vmatprep.subr.bf16.mxu0 0
      %2864 = vmatpush1.bf16.xpose.msra.mxu0 0
      %2865 = vmatprep.subr.bf16.mxu0 0
      %2866 = vmatpush1.bf16.xpose.msra.mxu0 0
      %2867 = vmatprep.subr.bf16.mxu0 0
      %2868 = vmatpush1.bf16.xpose.msra.mxu0 0
      %2869 = vmatprep.subr.bf16.mxu0 0
      %2870 = vmatpush1.bf16.xpose.msra.mxu0 0
      %2871 = vmatprep.subr.bf16.mxu0 0
      %2872 = vmatpush1.bf16.xpose.msra.mxu0 0
      %2873 = vmatprep.subr.bf16.mxu0 0
      %2874 = vmatpush1.bf16.xpose.msra.mxu0 0
      %2875 = vmatprep.subr.bf16.mxu0 0
      %2876 = vmatpush1.bf16.xpose.msra.mxu0 0
      %2877 = vmatprep.subr.bf16.mxu0 0
      %2878 = vmatpush1.bf16.xpose.msra.mxu0 0
      %2879 = vmatprep.subr.bf16.mxu0 0
      %2880 = vmatpush1.bf16.xpose.msra.mxu0 0
      %2881 = vmatprep.subr.bf16.mxu0 0
      %2882 = vmatpush1.bf16.xpose.msra.mxu0 0
      %2883 = vmatprep.subr.bf16.mxu0 0
      %2884 = vmatpush1.bf16.xpose.msra.mxu0 0
      %2885 = vmatprep.subr.bf16.mxu0 0
      %2886 = vmatpush1.bf16.xpose.msra.mxu0 0
      %2887 = vmatprep.subr.bf16.mxu0 0
      %2888 = vmatpush1.bf16.xpose.msra.mxu0 0
      %2889 = vmatprep.mubr.bf16.mxu0 0
      %2890 = vmatmul.mubr.bf16.gmra.mrb[0].mxu0 %v2852
      %v2891 = vpop.f32.mrb[0].mxu0
      %v2892 = vadd.f32 0.0, %v2891
      %v2893 = vpop.f32.mrb[0].mxu0
      %v2894 = vpop.f32.mrb[0].mxu0
      %v2895 = vpop.f32.mrb[0].mxu0
      %2896 = vdwg.mxu0
      %v2897 = vmul.f32 %v2892, 0.20412415
      %v2898 = vsel %vm1457, %v2897, -inf
      %2899 = vmax.xlane.f32.xlu0 %v2898
      %v2900 = vpop.xlane.xlu0 %2899
      %v2901 = vsub.f32 %v2897, %v2900
      %v2902 = vmul.f32 %v2901, 1.442695
      %v2903 = vpow.pop %v2902
      %v2904 = vsel %vm1457, %v2903, 0.0
      %2905 = vadd.xlane.f32.xlu0 %v2904
      %v2906 = vpop.xlane.xlu0 %2905
      %v2907 = vrcp.pop %v2906
      %v2908 = vmul.f32 %v2903, %v2907
      %v2909 = vpack.c.bf16 %v2908, %v2908
      %v2910 = vpack.c.bf16 %v2844, %v2844
      %v2912 = vsel %vm1471, %v2909, 0
      %v2915 = vsel %vm1475, %v2910, 0
      %2917 = vmatprep.subr.bf16.mxu0 0
      %2918 = vmatpush1.bf16.msra.mxu0 %v2915
      %2919 = vmatprep.subr.bf16.mxu0 0
      %2920 = vmatpush1.bf16.msra.mxu0 0
      %2921 = vmatprep.subr.bf16.mxu0 0
      %2922 = vmatpush1.bf16.msra.mxu0 0
      %2923 = vmatprep.subr.bf16.mxu0 0
      %2924 = vmatpush1.bf16.msra.mxu0 0
      %2925 = vmatprep.subr.bf16.mxu0 0
      %2926 = vmatpush1.bf16.msra.mxu0 0
      %2927 = vmatprep.subr.bf16.mxu0 0
      %2928 = vmatpush1.bf16.msra.mxu0 0
      %2929 = vmatprep.subr.bf16.mxu0 0
      %2930 = vmatpush1.bf16.msra.mxu0 0
      %2931 = vmatprep.subr.bf16.mxu0 0
      %2932 = vmatpush1.bf16.msra.mxu0 0
      %2933 = vmatprep.subr.bf16.mxu0 0
      %2934 = vmatpush1.bf16.msra.mxu0 0
      %2935 = vmatprep.subr.bf16.mxu0 0
      %2936 = vmatpush1.bf16.msra.mxu0 0
      %2937 = vmatprep.subr.bf16.mxu0 0
      %2938 = vmatpush1.bf16.msra.mxu0 0
      %2939 = vmatprep.subr.bf16.mxu0 0
      %2940 = vmatpush1.bf16.msra.mxu0 0
      %2941 = vmatprep.subr.bf16.mxu0 0
      %2942 = vmatpush1.bf16.msra.mxu0 0
      %2943 = vmatprep.subr.bf16.mxu0 0
      %2944 = vmatpush1.bf16.msra.mxu0 0
      %2945 = vmatprep.subr.bf16.mxu0 0
      %2946 = vmatpush1.bf16.msra.mxu0 0
      %2947 = vmatprep.subr.bf16.mxu0 0
      %2948 = vmatpush1.bf16.msra.mxu0 0
      %2949 = vmatprep.mubr.bf16.mxu0 0
      %2950 = vmatmul.mubr.bf16.gmra.mrb[0].mxu0 %v2912
      %v2951 = vpop.f32.mrb[0].mxu0
      %v2952 = vadd.f32 0.0, %v2951
      %v2953 = vpop.f32.mrb[0].mxu0
      %v2954 = vpop.f32.mrb[0].mxu0
      %v2955 = vpop.f32.mrb[0].mxu0
      %2956 = vdwg.mxu0
      %s2957 = scalar_lea.vmem %s14, 36
      %v2958 = vld [vmem:[%s2957] sm:$0xf]
      %v2959 = vld [vmem:[%s2957 + $0x4] sm:$0xf]
      %v2960 = vld [vmem:[%s2957 + $0x8] sm:$0xf]
      %v2961 = vpack.c.bf16 %v2952, %v2952
      %v2965 = vunpack.c.l.b16 %v2958
      %v2966 = vunpack.c.l.b16 %v2959
      %v2967 = vunpack.c.l.b16 %v2960
      %v2968 = vpack.c.b16 %v2966, %v2965
      %v2969 = vpack.c.b16 %v2967, %v2967
      %v2972 = vsel %vm1409, %v2961, 0
      %v2975 = vsel %vm819, %v2969, 0
      %2977 = vmatprep.subr.bf16.mxu0 0
      %2978 = vmatpush1.bf16.msra.mxu0 %v2968
      %2979 = vmatprep.subr.bf16.mxu0 0
      %2980 = vmatpush1.bf16.msra.mxu0 %v2975
      %2981 = vmatprep.subr.bf16.mxu0 0
      %2982 = vmatpush1.bf16.msra.mxu0 0
      %2983 = vmatprep.subr.bf16.mxu0 0
      %2984 = vmatpush1.bf16.msra.mxu0 0
      %2985 = vmatprep.subr.bf16.mxu0 0
      %2986 = vmatpush1.bf16.msra.mxu0 0
      %2987 = vmatprep.subr.bf16.mxu0 0
      %2988 = vmatpush1.bf16.msra.mxu0 0
      %2989 = vmatprep.subr.bf16.mxu0 0
      %2990 = vmatpush1.bf16.msra.mxu0 0
      %2991 = vmatprep.subr.bf16.mxu0 0
      %2992 = vmatpush1.bf16.msra.mxu0 0
      %2993 = vmatprep.subr.bf16.mxu0 0
      %2994 = vmatpush1.bf16.msra.mxu0 0
      %2995 = vmatprep.subr.bf16.mxu0 0
      %2996 = vmatpush1.bf16.msra.mxu0 0
      %2997 = vmatprep.subr.bf16.mxu0 0
      %2998 = vmatpush1.bf16.msra.mxu0 0
      %2999 = vmatprep.subr.bf16.mxu0 0
      %3000 = vmatpush1.bf16.msra.mxu0 0
      %3001 = vmatprep.subr.bf16.mxu0 0
      %3002 = vmatpush1.bf16.msra.mxu0 0
      %3003 = vmatprep.subr.bf16.mxu0 0
      %3004 = vmatpush1.bf16.msra.mxu0 0
      %3005 = vmatprep.subr.bf16.mxu0 0
      %3006 = vmatpush1.bf16.msra.mxu0 0
      %3007 = vmatprep.subr.bf16.mxu0 0
      %3008 = vmatpush1.bf16.msra.mxu0 0
      %3009 = vmatprep.mubr.bf16.mxu0 0
      %3010 = vmatmul.mubr.bf16.gmra.mrb[0].mxu0 %v2972
      %v3011 = vpop.f32.mrb[0].mxu0
      %v3012 = vadd.f32 0.0, %v3011
      %v3013 = vpop.f32.mrb[0].mxu0
      %v3014 = vpop.f32.mrb[0].mxu0
      %v3015 = vpop.f32.mrb[0].mxu0
      %3016 = vdwg.mxu0
      %v3020 = vunpack.c.l.b16 %v2626
      %v3021 = vunpack.c.l.b16 %v2627
      %v3022 = vunpack.c.l.b16 %v2628
      %v3023 = vpack.c.b16 %v3021, %v3020
      %v3024 = vpack.c.b16 %v3022, %v3022
      %v3027 = vsel %vm1409, %v2629, 0
      %v3030 = vsel %vm819, %v3024, 0
      %3032 = vmatprep.subr.bf16.mxu0 0
      %3033 = vmatpush1.bf16.msra.mxu0 %v3023
      %3034 = vmatprep.subr.bf16.mxu0 0
      %3035 = vmatpush1.bf16.msra.mxu0 %v3030
      %3036 = vmatprep.subr.bf16.mxu0 0
      %3037 = vmatpush1.bf16.msra.mxu0 0
      %3038 = vmatprep.subr.bf16.mxu0 0
      %3039 = vmatpush1.bf16.msra.mxu0 0
      %3040 = vmatprep.subr.bf16.mxu0 0
      %3041 = vmatpush1.bf16.msra.mxu0 0
      %3042 = vmatprep.subr.bf16.mxu0 0
      %3043 = vmatpush1.bf16.msra.mxu0 0
      %3044 = vmatprep.subr.bf16.mxu0 0
      %3045 = vmatpush1.bf16.msra.mxu0 0
      %3046 = vmatprep.subr.bf16.mxu0 0
      %3047 = vmatpush1.bf16.msra.mxu0 0
      %3048 = vmatprep.subr.bf16.mxu0 0
      %3049 = vmatpush1.bf16.msra.mxu0 0
      %3050 = vmatprep.subr.bf16.mxu0 0
      %3051 = vmatpush1.bf16.msra.mxu0 0
      %3052 = vmatprep.subr.bf16.mxu0 0
      %3053 = vmatpush1.bf16.msra.mxu0 0
      %3054 = vmatprep.subr.bf16.mxu0 0
      %3055 = vmatpush1.bf16.msra.mxu0 0
      %3056 = vmatprep.subr.bf16.mxu0 0
      %3057 = vmatpush1.bf16.msra.mxu0 0
      %3058 = vmatprep.subr.bf16.mxu0 0
      %3059 = vmatpush1.bf16.msra.mxu0 0
      %3060 = vmatprep.subr.bf16.mxu0 0
      %3061 = vmatpush1.bf16.msra.mxu0 0
      %3062 = vmatprep.subr.bf16.mxu0 0
      %3063 = vmatpush1.bf16.msra.mxu0 0
      %3064 = vmatprep.mubr.bf16.mxu0 0
      %3065 = vmatmul.mubr.bf16.gmra.mrb[0].mxu0 %v3027
      %v3066 = vpop.f32.mrb[0].mxu0
      %v3067 = vadd.f32 %v3012, %v3066
      %v3068 = vpop.f32.mrb[0].mxu0
      %v3069 = vpop.f32.mrb[0].mxu0
      %v3070 = vpop.f32.mrb[0].mxu0
      %3071 = vdwg.mxu0
      %s3072 = scalar_lea.vmem %s15, 1
      %v3073 = vld [vmem:[%s3072] sm:$0x1]
      %v3075 = vlaneseq
      %v3076 = vshrl.u32 %v3075, 7
      %v3077 = vsub.s32 0, %v3076
      %v3078 = vrot.slane %v3073, %v3077
      %v3080 = vadd.f32 %v3067, %v3078
      %v3081 = vadd.f32 %v2262, %v3080
      %s3082 = scalar_lea.vmem %s16, 1
      %v3083 = vld [vmem:[%s3082] sm:$0x1]
      %s3084 = scalar_lea.vmem %s17, 1
      %v3085 = vld [vmem:[%s3084] sm:$0x1]
      %v3086 = vsel %vm865, %v3081, 0.0
      %3087 = vadd.xlane.f32.xlu0 %v3086
      %v3088 = vpop.xlane.xlu0 %3087
      %v3089 = vmul.f32 %v3088, %v869
      %v3090 = vsub.f32 %v3081, %v3089
      %v3091 = vmul.f32 %v3090, %v3090
      %v3092 = vsel %vm865, %v3091, 0.0
      %3093 = vadd.xlane.f32.xlu0 %v3092
      %v3094 = vpop.xlane.xlu0 %3093
      %v3095 = vmul.f32 %v3094, %v869
      %v3096 = vadd.f32 %v3095, 1e-05
      %v3097 = vrsqrt.pop %v3096
      %v3098 = vmul.f32 %v3090, %v3097
      %v3100 = vlaneseq
      %v3101 = vshrl.u32 %v3100, 7
      %v3102 = vsub.s32 0, %v3101
      %v3103 = vrot.slane %v3083, %v3102
      %v3105 = vmul.f32 %v3098, %v3103
      %v3107 = vlaneseq
      %v3108 = vshrl.u32 %v3107, 7
      %v3109 = vsub.s32 0, %v3108
      %v3110 = vrot.slane %v3085, %v3109
      %v3112 = vadd.f32 %v3105, %v3110
      %s3113 = scalar_lea.vmem %s18, 48
      %v3114 = vld [vmem:[%s3113] sm:$0xff]
      %v3115 = vld [vmem:[%s3113 + $0x8] sm:$0xff]
      %v3116 = vld [vmem:[%s3113 + $0x10] sm:$0xff]
      %v3117 = vld [vmem:[%s3113 + $0x18] sm:$0xff]
      %v3118 = vld [vmem:[%s3113 + $0x20] sm:$0xff]
      %v3119 = vld [vmem:[%s3113 + $0x28] sm:$0xff]
      %v3120 = vpack.c.bf16 %v3112, %v3112
      %s3121 = scalar_lea.vmem %s19, 2
      %v3122 = vld [vmem:[%s3121] sm:$0x3]
      %v3124 = vlaneseq
      %v3125 = vshrl.u32 %v3124, 7
      %v3126 = vsub.s32 0, %v3125
      %v3127 = vrot.slane %v3122, %v3126
      %v3128 = vlaneseq
      %v3129 = vshrl.u32 %v3128, 7
      %v3130 = vsub.s32 1, %v3129
      %v3131 = vrot.slane %v3122, %v3130
      %v3140 = vunpack.c.l.b16 %v3114
      %v3141 = vunpack.c.h.b16 %v3114
      %v3142 = vunpack.c.l.b16 %v3115
      %v3143 = vunpack.c.h.b16 %v3115
      %v3144 = vunpack.c.l.b16 %v3116
      %v3145 = vunpack.c.h.b16 %v3116
      %v3146 = vunpack.c.l.b16 %v3117
      %v3147 = vunpack.c.h.b16 %v3117
      %v3148 = vunpack.c.l.b16 %v3118
      %v3149 = vunpack.c.h.b16 %v3118
      %v3150 = vunpack.c.l.b16 %v3119
      %v3151 = vunpack.c.h.b16 %v3119
      %v3152 = vpack.c.b16 %v3142, %v3140
      %v3153 = vpack.c.b16 %v3143, %v3141
      %v3154 = vpack.c.b16 %v3146, %v3144
      %v3155 = vpack.c.b16 %v3147, %v3145
      %v3156 = vpack.c.b16 %v3150, %v3148
      %v3157 = vpack.c.b16 %v3151, %v3149
      %v3165 = vsel %vm943, %v3120, 0
      %3167 = vmatprep.subr.bf16.mxu0 %v3153
      %3168 = vmatpush1.bf16.msra.mxu0 %v3152
      %3169 = vmatprep.subr.bf16.mxu0 %v3155
      %3170 = vmatpush1.bf16.msra.mxu0 %v3154
      %3171 = vmatprep.subr.bf16.mxu0 %v3157
      %3172 = vmatpush1.bf16.msra.mxu0 %v3156
      %3173 = vmatprep.subr.bf16.mxu0 0
      %3174 = vmatpush1.bf16.msra.mxu0 0
      %3175 = vmatprep.subr.bf16.mxu0 0
      %3176 = vmatpush1.bf16.msra.mxu0 0
      %3177 = vmatprep.subr.bf16.mxu0 0
      %3178 = vmatpush1.bf16.msra.mxu0 0
      %3179 = vmatprep.subr.bf16.mxu0 0
      %3180 = vmatpush1.bf16.msra.mxu0 0
      %3181 = vmatprep.subr.bf16.mxu0 0
      %3182 = vmatpush1.bf16.msra.mxu0 0
      %3183 = vmatprep.subr.bf16.mxu0 0
      %3184 = vmatpush1.bf16.msra.mxu0 0
      %3185 = vmatprep.subr.bf16.mxu0 0
      %3186 = vmatpush1.bf16.msra.mxu0 0
      %3187 = vmatprep.subr.bf16.mxu0 0
      %3188 = vmatpush1.bf16.msra.mxu0 0
      %3189 = vmatprep.subr.bf16.mxu0 0
      %3190 = vmatpush1.bf16.msra.mxu0 0
      %3191 = vmatprep.subr.bf16.mxu0 0
      %3192 = vmatpush1.bf16.msra.mxu0 0
      %3193 = vmatprep.subr.bf16.mxu0 0
      %3194 = vmatpush1.bf16.msra.mxu0 0
      %3195 = vmatprep.subr.bf16.mxu0 0
      %3196 = vmatpush1.bf16.msra.mxu0 0
      %3197 = vmatprep.subr.bf16.mxu0 0
      %3198 = vmatpush1.bf16.msra.mxu0 0
      %3199 = vmatprep.mubr.bf16.mxu0 0
      %3200 = vmatmul.mubr.bf16.gmra.mrb[0].mxu0 %v3165
      %v3201 = vpop.f32.mrb[0].mxu0
      %v3202 = vadd.f32 %v3127, %v3201
      %v3203 = vpop.f32.mrb[0].mxu0
      %v3204 = vadd.f32 %v3131, %v3203
      %v3205 = vpop.f32.mrb[0].mxu0
      %v3206 = vpop.f32.mrb[0].mxu0
      %3207 = vdwg.mxu0
      %v3208 = vmul.f32 %v3202, 0.5
      %v3209 = vmul.f32 %v3204, 0.5
      %v3210 = vmul.f32 %v3202, %v3202
      %v3211 = vmul.f32 %v3204, %v3204
      %v3212 = vmul.f32 %v3210, %v3202
      %v3213 = vmul.f32 %v3211, %v3204
      %v3214 = vmul.f32 %v3212, 0.044715
      %v3215 = vmul.f32 %v3213, 0.044715
      %v3216 = vadd.f32 %v3202, %v3214
      %v3217 = vadd.f32 %v3204, %v3215
      %v3218 = vmul.f32 %v3216, 0.7978846
      %v3219 = vmul.f32 %v3217, 0.7978846
      %v3220 = vtanh.pop %v3218
      %v3221 = vtanh.pop %v3219
      %v3222 = vadd.f32 %v3220, 1.0
      %v3223 = vadd.f32 %v3221, 1.0
      %v3224 = vmul.f32 %v3208, %v3222
      %v3225 = vmul.f32 %v3209, %v3223
      %s3226 = scalar_lea.vmem %s20, 96
      %v3227 = vld [vmem:[%s3226] sm:$0xf]
      %v3228 = vld [vmem:[%s3226 + $0x4] sm:$0xf]
      %v3229 = vld [vmem:[%s3226 + $0x8] sm:$0xf]
      %v3230 = vld [vmem:[%s3226 + $0xc] sm:$0xf]
      %v3231 = vld [vmem:[%s3226 + $0x10] sm:$0xf]
      %v3232 = vld [vmem:[%s3226 + $0x14] sm:$0xf]
      %v3233 = vld [vmem:[%s3226 + $0x18] sm:$0xf]
      %v3234 = vld [vmem:[%s3226 + $0x1c] sm:$0xf]
      %v3235 = vld [vmem:[%s3226 + $0x20] sm:$0xf]
      %v3236 = vld [vmem:[%s3226 + $0x24] sm:$0xf]
      %v3237 = vld [vmem:[%s3226 + $0x28] sm:$0xf]
      %v3238 = vld [vmem:[%s3226 + $0x2c] sm:$0xf]
      %v3239 = vld [vmem:[%s3226 + $0x30] sm:$0xf]
      %v3240 = vld [vmem:[%s3226 + $0x34] sm:$0xf]
      %v3241 = vld [vmem:[%s3226 + $0x38] sm:$0xf]
      %v3242 = vld [vmem:[%s3226 + $0x3c] sm:$0xf]
      %v3243 = vld [vmem:[%s3226 + $0x40] sm:$0xf]
      %v3244 = vld [vmem:[%s3226 + $0x44] sm:$0xf]
      %v3245 = vld [vmem:[%s3226 + $0x48] sm:$0xf]
      %v3246 = vld [vmem:[%s3226 + $0x4c] sm:$0xf]
      %v3247 = vld [vmem:[%s3226 + $0x50] sm:$0xf]
      %v3248 = vld [vmem:[%s3226 + $0x54] sm:$0xf]
      %v3249 = vld [vmem:[%s3226 + $0x58] sm:$0xf]
      %v3250 = vld [vmem:[%s3226 + $0x5c] sm:$0xf]
      %v3251 = vpack.c.bf16 %v3224, %v3224
      %v3252 = vpack.c.bf16 %v3225, %v3225
      %s3253 = scalar_lea.vmem %s21, 1
      %v3254 = vld [vmem:[%s3253] sm:$0x1]
      %v3256 = vlaneseq
      %v3257 = vshrl.u32 %v3256, 7
      %v3258 = vsub.s32 0, %v3257
      %v3259 = vrot.slane %v3254, %v3258
      %v3285 = vunpack.c.l.b16 %v3227
      %v3286 = vunpack.c.l.b16 %v3228
      %v3287 = vunpack.c.l.b16 %v3229
      %v3288 = vunpack.c.l.b16 %v3230
      %v3289 = vunpack.c.l.b16 %v3231
      %v3290 = vunpack.c.l.b16 %v3232
      %v3291 = vunpack.c.l.b16 %v3233
      %v3292 = vunpack.c.l.b16 %v3234
      %v3293 = vunpack.c.l.b16 %v3235
      %v3294 = vunpack.c.l.b16 %v3236
      %v3295 = vunpack.c.l.b16 %v3237
      %v3296 = vunpack.c.l.b16 %v3238
      %v3297 = vunpack.c.l.b16 %v3239
      %v3298 = vunpack.c.l.b16 %v3240
      %v3299 = vunpack.c.l.b16 %v3241
      %v3300 = vunpack.c.l.b16 %v3242
      %v3301 = vunpack.c.l.b16 %v3243
      %v3302 = vunpack.c.l.b16 %v3244
      %v3303 = vunpack.c.l.b16 %v3245
      %v3304 = vunpack.c.l.b16 %v3246
      %v3305 = vunpack.c.l.b16 %v3247
      %v3306 = vunpack.c.l.b16 %v3248
      %v3307 = vunpack.c.l.b16 %v3249
      %v3308 = vunpack.c.l.b16 %v3250
      %v3309 = vpack.c.b16 %v3286, %v3285
      %v3310 = vpack.c.b16 %v3288, %v3287
      %v3311 = vpack.c.b16 %v3290, %v3289
      %v3312 = vpack.c.b16 %v3292, %v3291
      %v3313 = vpack.c.b16 %v3294, %v3293
      %v3314 = vpack.c.b16 %v3296, %v3295
      %v3315 = vpack.c.b16 %v3298, %v3297
      %v3316 = vpack.c.b16 %v3300, %v3299
      %v3317 = vpack.c.b16 %v3302, %v3301
      %v3318 = vpack.c.b16 %v3304, %v3303
      %v3319 = vpack.c.b16 %v3306, %v3305
      %v3320 = vpack.c.b16 %v3308, %v3307
      %v3334 = vsel %vm1111, %v3252, 0
      %3336 = vmatprep.subr.bf16.mxu0 0
      %3337 = vmatpush1.bf16.msra.mxu0 %v3309
      %3338 = vmatprep.subr.bf16.mxu0 0
      %3339 = vmatpush1.bf16.msra.mxu0 %v3310
      %3340 = vmatprep.subr.bf16.mxu0 0
      %3341 = vmatpush1.bf16.msra.mxu0 %v3311
      %3342 = vmatprep.subr.bf16.mxu0 0
      %3343 = vmatpush1.bf16.msra.mxu0 %v3312
      %3344 = vmatprep.subr.bf16.mxu0 0
      %3345 = vmatpush1.bf16.msra.mxu0 %v3313
      %3346 = vmatprep.subr.bf16.mxu0 0
      %3347 = vmatpush1.bf16.msra.mxu0 %v3314
      %3348 = vmatprep.subr.bf16.mxu0 0
      %3349 = vmatpush1.bf16.msra.mxu0 %v3315
      %3350 = vmatprep.subr.bf16.mxu0 0
      %3351 = vmatpush1.bf16.msra.mxu0 %v3316
      %3352 = vmatprep.subr.bf16.mxu0 0
      %3353 = vmatpush1.bf16.msra.mxu0 %v3317
      %3354 = vmatprep.subr.bf16.mxu0 0
      %3355 = vmatpush1.bf16.msra.mxu0 %v3318
      %3356 = vmatprep.subr.bf16.mxu0 0
      %3357 = vmatpush1.bf16.msra.mxu0 %v3319
      %3358 = vmatprep.subr.bf16.mxu0 0
      %3359 = vmatpush1.bf16.msra.mxu0 %v3320
      %3360 = vmatprep.subr.bf16.mxu0 0
      %3361 = vmatpush1.bf16.msra.mxu0 0
      %3362 = vmatprep.subr.bf16.mxu0 0
      %3363 = vmatpush1.bf16.msra.mxu0 0
      %3364 = vmatprep.subr.bf16.mxu0 0
      %3365 = vmatpush1.bf16.msra.mxu0 0
      %3366 = vmatprep.subr.bf16.mxu0 0
      %3367 = vmatpush1.bf16.msra.mxu0 0
      %3368 = vmatprep.mubr.bf16.mxu0 %v3334
      %3369 = vmatmul.mubr.bf16.gmra.mrb[0].mxu0 %v3251
      %v3370 = vpop.f32.mrb[0].mxu0
      %v3371 = vadd.f32 %v3259, %v3370
      %v3372 = vpop.f32.mrb[0].mxu0
      %v3373 = vpop.f32.mrb[0].mxu0
      %v3374 = vpop.f32.mrb[0].mxu0
      %3375 = vdwg.mxu0
      %v3376 = vadd.f32 %v3081, %v3371
      %v3377 = vld [vmem:[%s22] sm:$0x1]
      %v3378 = vld [vmem:[%s23] sm:$0x1]
      %v3379 = vsel %vm865, %v3376, 0.0
      %3380 = vadd.xlane.f32.xlu0 %v3379
      %v3381 = vpop.xlane.xlu0 %3380
      %v3382 = vmul.f32 %v3381, %v869
      %v3383 = vsub.f32 %v3376, %v3382
      %v3384 = vmul.f32 %v3383, %v3383
      %v3385 = vsel %vm865, %v3384, 0.0
      %3386 = vadd.xlane.f32.xlu0 %v3385
      %v3387 = vpop.xlane.xlu0 %3386
      %v3388 = vmul.f32 %v3387, %v869
      %v3389 = vadd.f32 %v3388, 1e-05
      %v3390 = vrsqrt.pop %v3389
      %v3391 = vmul.f32 %v3383, %v3390
      %v3393 = vlaneseq
      %v3394 = vshrl.u32 %v3393, 7
      %v3395 = vsub.s32 0, %v3394
      %v3396 = vrot.slane %v3377, %v3395
      %v3398 = vmul.f32 %v3391, %v3396
      %v3400 = vlaneseq
      %v3401 = vshrl.u32 %v3400, 7
      %v3402 = vsub.s32 0, %v3401
      %v3403 = vrot.slane %v3378, %v3402
      %v3405 = vadd.f32 %v3398, %v3403
      %v3406 = vld [vmem:[%s24] sm:$0xf]
      %v3407 = vld [vmem:[%s24 + $0x4] sm:$0xf]
      %v3408 = vld [vmem:[%s24 + $0x8] sm:$0xf]
      %v3409 = vld [vmem:[%s24 + $0xc] sm:$0xf]
      %v3410 = vld [vmem:[%s24 + $0x10] sm:$0xf]
      %v3411 = vld [vmem:[%s24 + $0x14] sm:$0xf]
      %v3412 = vpack.c.bf16 %v3405, %v3405
      %v3413 = vld [vmem:[%s25] sm:$0x1]
      %v3415 = vlaneseq
      %v3416 = vshrl.u32 %v3415, 7
      %v3417 = vsub.s32 0, %v3416
      %v3418 = vrot.slane %v3413, %v3417
      %v3426 = vunpack.c.l.b16 %v3406
      %v3427 = vunpack.c.l.b16 %v3407
      %v3428 = vunpack.c.l.b16 %v3408
      %v3429 = vunpack.c.l.b16 %v3409
      %v3430 = vunpack.c.l.b16 %v3410
      %v3431 = vunpack.c.l.b16 %v3411
      %v3432 = vpack.c.b16 %v3427, %v3426
      %v3433 = vpack.c.b16 %v3429, %v3428
      %v3434 = vpack.c.b16 %v3431, %v3430
      %v3439 = vsel %vm943, %v3412, 0
      %3441 = vmatprep.subr.bf16.mxu0 0
      %3442 = vmatpush1.bf16.msra.mxu0 %v3432
      %3443 = vmatprep.subr.bf16.mxu0 0
      %3444 = vmatpush1.bf16.msra.mxu0 %v3433
      %3445 = vmatprep.subr.bf16.mxu0 0
      %3446 = vmatpush1.bf16.msra.mxu0 %v3434
      %3447 = vmatprep.subr.bf16.mxu0 0
      %3448 = vmatpush1.bf16.msra.mxu0 0
      %3449 = vmatprep.subr.bf16.mxu0 0
      %3450 = vmatpush1.bf16.msra.mxu0 0
      %3451 = vmatprep.subr.bf16.mxu0 0
      %3452 = vmatpush1.bf16.msra.mxu0 0
      %3453 = vmatprep.subr.bf16.mxu0 0
      %3454 = vmatpush1.bf16.msra.mxu0 0
      %3455 = vmatprep.subr.bf16.mxu0 0
      %3456 = vmatpush1.bf16.msra.mxu0 0
      %3457 = vmatprep.subr.bf16.mxu0 0
      %3458 = vmatpush1.bf16.msra.mxu0 0
      %3459 = vmatprep.subr.bf16.mxu0 0
      %3460 = vmatpush1.bf16.msra.mxu0 0
      %3461 = vmatprep.subr.bf16.mxu0 0
      %3462 = vmatpush1.bf16.msra.mxu0 0
      %3463 = vmatprep.subr.bf16.mxu0 0
      %3464 = vmatpush1.bf16.msra.mxu0 0
      %3465 = vmatprep.subr.bf16.mxu0 0
      %3466 = vmatpush1.bf16.msra.mxu0 0
      %3467 = vmatprep.subr.bf16.mxu0 0
      %3468 = vmatpush1.bf16.msra.mxu0 0
      %3469 = vmatprep.subr.bf16.mxu0 0
      %3470 = vmatpush1.bf16.msra.mxu0 0
      %3471 = vmatprep.subr.bf16.mxu0 0
      %3472 = vmatpush1.bf16.msra.mxu0 0
      %3473 = vmatprep.mubr.bf16.mxu0 0
      %3474 = vmatmul.mubr.bf16.gmra.mrb[0].mxu0 %v3439
      %v3475 = vpop.f32.mrb[0].mxu0
      %v3476 = vadd.f32 %v3418, %v3475
      %v3477 = vpop.f32.mrb[0].mxu0
      %v3478 = vpop.f32.mrb[0].mxu0
      %v3479 = vpop.f32.mrb[0].mxu0
      %3480 = vdwg.mxu0
      %3481 = vst.msk [vmem:[%s803] sm:$0xf] %vm865, %v3476
      %p3482 = scmp.lt.s32.totalorder %s37, 1
      %s3483 = scalar_select %p3482, %s37, 1
      %s3484 = smul.addr %s3483, 4
      %s3485 = scalar_lea.vmem %s26, %s3484
      // Predicated region
      $region125: #{_lambda_.2} parent=123 // pred_check
        %p3486 = pneg %p611
      $region126: #{_lambda_.2} parent=123 // pred_check_branch
        %3488 = sbr.rel (%p3486) target = $region128
      $region127: #{_lambda_.2} parent=123 // pred_region
        _
      $region128: #{_lambda_.2} parent=123 // pred_fallthru
        _
    $region124: #{_lambda_.2} parent=5 // pred_fallthru
      _
    %p3489 = scmp.le.s32.totalorder 2, %s32
    // Predicated region
    $region129: #{_lambda_.2} parent=5 // pred_check
      %p3490 = pneg %p3489
    $region130: #{_lambda_.2} parent=5 // pred_check_branch
      %3492 = sbr.rel (%p3490) target = $region132
    $region131: #{_lambda_.2} parent=5 // pred_region
      %s3493 = ssub.s32 %s32, 2
      // Predicated region
      $region133: #{_lambda_.2} parent=131 // pred_check
        %p3494 = pneg %p617
      $region134: #{_lambda_.2} parent=131 // pred_check_branch
        %3496 = sbr.rel (%p3494) target = $region136
      $region135: #{_lambda_.2} parent=131 // pred_region
        %p3497 = scmp.lt.s32.totalorder %s38, 1
        %s3498 = scalar_select %p3497, %s38, 1
        %s3499 = smul.addr %s3498, 4
        %s3500 = scalar_lea.vmem %s26, %s3499
      $region136: #{_lambda_.2} parent=131 // pred_fallthru
        _
    $region132: #{_lambda_.2} parent=5 // pred_fallthru
      _
  $region6: #{_lambda_.2} parent=0 // loop_footer
    %s36 = sadd.s32 1, %s32
  $region7: #{_lambda_.2} parent=0 // loop_footer_branch
    %31 = sbr.rel target = $region3
  $region8: #{_lambda_.2} parent=0 // loop_exit
    _

</llo_original>
